<compile_context>
chip_gen: v6e
topology: v6e:2x2x1
jax: 0.10.0
libtpu: 0.0.40
codegen_flags: <defaults>
</compile_context>

<pallas_src>
import jax
import jax.numpy as jnp
from jax import lax
from jax.experimental import pallas as pl
from jax.experimental.pallas import tpu as pltpu

D = 2                  # moon data dimensionality
N_CLASSES = 2
EMB_G = 2              # generator label-embedding width
EMB_D = 2              # discriminator label-embedding width
H = 32                 # generator hidden width
HD = 32                # discriminator hidden width
B = 8                  # opt.batch_size
N = 64                 # dataset size -> nb_batch = 8
N_UNROLL = 3           # opt.n_unroll_blocks
GIN = 3 * D + EMB_G    # generator input width after label concat (= 8)
DIN = D + EMB_D        # discriminator input width after label concat (= 4)
LR = 1e-3
LEAKY = 0.2
MISC_W = 128           # lane-dense packed misc output width


def _softplus(z):
    return jnp.maximum(z, 0.0) + jnp.log(1.0 + jnp.exp(-jnp.abs(z)))


def _bce_mean_logits(z, t):
    # mean_b BCE(sigmoid(z), t) in logits form; d/dz == (sigmoid(z) - t)/B
    per = t * _softplus(-z) + (1.0 - t) * _softplus(z)
    return jnp.sum(per, axis=0, keepdims=True) * (1.0 / B)          # (1, 1)


def _tn(a, b):
    # a^T @ b, contracting the batch (leading) axis: (B, M), (B, N) -> (M, N)
    return lax.dot_general(a, b, (((0,), (0,)), ((), ())),
                           preferred_element_type=jnp.float32)


def _dot(a, b):
    return jnp.dot(a, b, preferred_element_type=jnp.float32)


# --------------------------------------------------------------------------- #
# Single fused kernel: N_UNROLL student-update steps + final GAN step,
# forward values AND the full grad_stu wrt the generator parameters.
# --------------------------------------------------------------------------- #
def _fused_kernel(bids_ref,                                   # SMEM (N_UNROLL+1,) int32
                  X_ref, YF_ref,                              # dataset (N,D), (N,1)
                  w0_ref, bs_ref, wstar_ref, btea_ref,        # student / teacher
                  embG_ref, W1_ref, b1_ref, W2_ref, b2_ref, W3_ref, b3_ref,
                  W1T_ref, W2T_ref, W3T_ref,                  # pre-transposed
                  embD_ref, D1_ref, bd1_ref, D1T_ref, D2T_ref, bd2_ref,
                  valid_ref,
                  misc_ref, demb_ref, dW1_ref, db1_ref, dW2_ref, db2_ref,
                  dW3_ref, db3_ref):
    # weights resident in registers/VMEM for the whole fused chain
    W1 = W1_ref[...]; b1 = b1_ref[...]
    W2 = W2_ref[...]; b2 = b2_ref[...]
    W3 = W3_ref[...]; b3 = b3_ref[...]
    W1T = W1T_ref[...]; W2T = W2T_ref[...]; W3T = W3T_ref[...]
    embG = embG_ref[...]
    w_star = wstar_ref[...]
    b_s = bs_ref[...]
    b_tea = btea_ref[...]

    w = w0_ref[...]                                           # student weight (1, D)
    loss_acc = jnp.zeros((1, 1), jnp.float32)

    # grad_stu accumulators (generator parameters only)
    d_emb = jnp.zeros((N_CLASSES, EMB_G), jnp.float32)
    dW1 = jnp.zeros((GIN, H), jnp.float32); db1 = jnp.zeros((1, H), jnp.float32)
    dW2 = jnp.zeros((H, H), jnp.float32);   db2 = jnp.zeros((1, H), jnp.float32)
    dW3 = jnp.zeros((H, D), jnp.float32);   db3 = jnp.zeros((1, D), jnp.float32)

    def gen_fwd(u):
        a1 = _dot(u, W1) + b1
        s1 = jnp.where(a1 > 0, 1.0, LEAKY)
        h1 = a1 * s1
        a2 = _dot(h1, W2) + b2
        s2 = jnp.where(a2 > 0, 1.0, LEAKY)
        h2 = a2 * s2
        g = _dot(h2, W3) + b3
        return s1, h1, s2, h2, g

    def gen_bwd_to_u(dg, s1, s2):
        dh2 = _dot(dg, W3T)
        da2 = s2 * dh2
        dh1 = _dot(da2, W2T)
        da1 = s1 * dh1
        du = _dot(da1, W1T)
        return da2, da1, du

    def load_batch(t):
        start = pl.multiple_of(bids_ref[t] * B, B)
        xb = X_ref[pl.ds(start, B), :]                        # (B, D)
        yf = YF_ref[pl.ds(start, B), :]                       # (B, 1)
        y1h = jnp.concatenate([1.0 - yf, yf], axis=1)         # (B, N_CLASSES)
        return xb, yf, y1h

    def build_u(w_t, xb, y1h):
        e = _dot(y1h, embG)                                   # (B, EMB_G)
        return jnp.concatenate(
            [jnp.broadcast_to(w_t, (B, D)),
             jnp.broadcast_to(w_t - w_star, (B, D)),
             xb, e], axis=1)                                  # (B, GIN)

    # ---------------- unrolled student-update steps ---------------- #
    residuals = []
    for t in range(N_UNROLL):
        xb, yf, y1h = load_batch(t)
        u = build_u(w, xb, y1h)
        s1, h1, s2, h2, g = gen_fwd(u)

        # analytic grad of the student BCE wrt the student weight
        # (direct path through the linear layer + path through the generator input)
        z = jnp.sum(g * w, axis=1, keepdims=True) + b_s       # (B, 1)
        p = jax.nn.sigmoid(z)
        q = (p - yf) * (1.0 / B)                              # dL_s/dz
        dg_s = q * w                                          # dL_s/dgen
        da2_s, da1_s, du_s = gen_bwd_to_u(dg_s, s1, s2)
        grad_w = (jnp.sum(q * g, axis=0, keepdims=True)
                  + jnp.sum(du_s[:, 0:D] + du_s[:, D:2 * D], axis=0, keepdims=True))

        # teacher BCE on the same generated batch (tau == 1) + its theta-grad
        zT = jnp.sum(g * w_star, axis=1, keepdims=True) + b_tea
        pT = jax.nn.sigmoid(zT)
        loss_acc = loss_acc + _bce_mean_logits(zT, yf)
        qT = (pT - yf) * (1.0 / B)
        dg_T = qT * w_star
        da2_T, da1_T, du_T = gen_bwd_to_u(dg_T, s1, s2)
        dW3 = dW3 + _tn(h2, dg_T); db3 = db3 + jnp.sum(dg_T, axis=0, keepdims=True)
        dW2 = dW2 + _tn(h1, da2_T); db2 = db2 + jnp.sum(da2_T, axis=0, keepdims=True)
        dW1 = dW1 + _tn(u, da1_T);  db1 = db1 + jnp.sum(da1_T, axis=0, keepdims=True)
        d_emb = d_emb + _tn(y1h, du_T[:, 3 * D:])

        residuals.append((u, s1, h1, s2, h2, g, p, q, y1h, w, dg_s, da2_s, da1_s))

        w = w - LR * grad_w                                   # SGD step

    new_w = w
    # squared spectral norm of the (1, D) matrix == squared L2 norm of the row
    w_loss = jnp.sum((w_star - new_w) ** 2, axis=1, keepdims=True)     # (1, 1)

    # ---- w_loss backward: mixed 2nd-order terms sum_t <d grad_w_t / d theta, mu> ----
    # computed as the forward-mode (w-direction mu) tangent of each step's
    # theta-gradient of the student loss; w_t is a detached leaf each step
    # (nn.Parameter in the reference), so steps contribute independently.
    mu = 2.0 * LR * (w_star - new_w)                          # (1, D)
    udot = jnp.concatenate(
        [jnp.broadcast_to(mu, (B, D)),
         jnp.broadcast_to(mu, (B, D)),
         jnp.zeros((B, D), jnp.float32),
         jnp.zeros((B, EMB_G), jnp.float32)], axis=1)          # (B, GIN)
    a1dot = _dot(udot, W1)                                    # same for every step
    for (u, s1, h1, s2, h2, g, p, q, y1h, w_t, dg_s, da2_s, da1_s) in residuals:
        h1d = s1 * a1dot
        a2d = _dot(h1d, W2)
        h2d = s2 * a2d
        gd = _dot(h2d, W3)
        zdot = (jnp.sum(gd * w_t, axis=1, keepdims=True)
                + jnp.sum(g * mu, axis=1, keepdims=True))
        qdot = p * (1.0 - p) * zdot * (1.0 / B)
        dg_dot = qdot * w_t + q * mu
        da2_dot, da1_dot, du_dot = gen_bwd_to_u(dg_dot, s1, s2)
        dW3 = dW3 + _tn(h2d, dg_s) + _tn(h2, dg_dot)
        db3 = db3 + jnp.sum(dg_dot, axis=0, keepdims=True)
        dW2 = dW2 + _tn(h1d, da2_s) + _tn(h1, da2_dot)
        db2 = db2 + jnp.sum(da2_dot, axis=0, keepdims=True)
        dW1 = dW1 + _tn(udot, da1_s) + _tn(u, da1_dot)
        db1 = db1 + jnp.sum(da1_dot, axis=0, keepdims=True)
        d_emb = d_emb + _tn(y1h, du_dot[:, 3 * D:])

    # ---------------- final GAN step ---------------- #
    xb, yf, y1h = load_batch(N_UNROLL)
    u = build_u(new_w, xb, y1h)
    s1, h1, s2, h2, gK = gen_fwd(u)

    embD = embD_ref[...]
    D1 = D1_ref[...]; bd1 = bd1_ref[...]
    D1T = D1T_ref[...]; D2T = D2T_ref[...]; bd2 = bd2_ref[...]
    valid = valid_ref[...]

    eD = _dot(y1h, embD)
    d_in = jnp.concatenate([gK, eD], axis=1)                  # (B, DIN)
    ad = _dot(d_in, D1) + bd1
    sd = jnp.where(ad > 0, 1.0, LEAKY)
    hd = ad * sd
    zd = jnp.sum(hd * D2T, axis=1, keepdims=True) + bd2       # (B, 1)
    v = jax.nn.sigmoid(zd)
    g_loss = _bce_mean_logits(zd, valid)                      # (1, 1)

    # adversarial-loss gradient wrt the generator params (through gen samples only)
    dzd = (v - valid) * (1.0 / B)
    dhd = dzd * D2T
    dad = sd * dhd
    ddin = _dot(dad, D1T)                                     # (B, DIN)
    dg_C = ddin[:, 0:D]
    da2_C, da1_C, du_C = gen_bwd_to_u(dg_C, s1, s2)
    dW3 = dW3 + _tn(h2, dg_C); db3 = db3 + jnp.sum(dg_C, axis=0, keepdims=True)
    dW2 = dW2 + _tn(h1, da2_C); db2 = db2 + jnp.sum(da2_C, axis=0, keepdims=True)
    dW1 = dW1 + _tn(u, da1_C);  db1 = db1 + jnp.sum(da1_C, axis=0, keepdims=True)
    d_emb = d_emb + _tn(y1h, du_C[:, 3 * D:])

    loss_total = loss_acc + w_loss + g_loss                   # alpha == 1

    # lane-dense packed output row: one full (8,128) store
    misc = jnp.concatenate(
        [gK,                                                  # cols 0:D   gen samples
         v,                                                   # col  D     validity
         jnp.broadcast_to(loss_total, (B, 1)),                # col  D+1   loss_stu
         jnp.broadcast_to(g_loss, (B, 1)),                    # col  D+2   g_loss
         jnp.broadcast_to(new_w, (B, D)),                     # cols D+3:2D+3 final w
         jnp.zeros((B, MISC_W - (2 * D + 3)), jnp.float32)], axis=1)
    misc_ref[...] = misc
    demb_ref[...] = d_emb
    dW1_ref[...] = dW1; db1_ref[...] = db1
    dW2_ref[...] = dW2; db2_ref[...] = db2
    dW3_ref[...] = dW3; db3_ref[...] = db3


_VMEM = pl.BlockSpec(memory_space=pltpu.MemorySpace.VMEM)
_SMEM = pl.BlockSpec(memory_space=pltpu.MemorySpace.SMEM)


# --------------------------------------------------------------------------- #
# UnrolledOptimizer_moon.forward
# --------------------------------------------------------------------------- #
@jax.jit
def unrolled_optimizer_forward(gp, dp, w0, b_s, w_star, b_tea, X, Y, batch_ids, valid):
    YF = Y.astype(jnp.float32)[:, None]                       # (N, 1)
    out_shapes = (
        jax.ShapeDtypeStruct((B, MISC_W), jnp.float32),       # packed misc
        jax.ShapeDtypeStruct((N_CLASSES, EMB_G), jnp.float32),
        jax.ShapeDtypeStruct((GIN, H), jnp.float32),
        jax.ShapeDtypeStruct((1, H), jnp.float32),
        jax.ShapeDtypeStruct((H, H), jnp.float32),
        jax.ShapeDtypeStruct((1, H), jnp.float32),
        jax.ShapeDtypeStruct((H, D), jnp.float32),
        jax.ShapeDtypeStruct((1, D), jnp.float32),
    )
    outs = pl.pallas_call(
        _fused_kernel,
        out_shape=out_shapes,
        in_specs=[_SMEM] + [_VMEM] * 23,
        out_specs=(_VMEM,) * 8,
    )(batch_ids.astype(jnp.int32),
      X, YF, w0, b_s, w_star, b_tea,
      gp['emb'], gp['W1'], gp['b1'], gp['W2'], gp['b2'], gp['W3'], gp['b3'],
      gp['W1'].T, gp['W2'].T, gp['W3'].T,                     # pre-transposed once
      dp['emb'], dp['D1'], dp['bd1'], dp['D1'].T, dp['D2'].T, dp['bd2'],
      valid)
    misc, d_emb, dW1, db1, dW2, db2, dW3, db3 = outs

    gen_samples = misc[:, 0:D]                                # (B, D)
    validity = misc[:, D:D + 1]                               # (B, 1)
    loss_stu = misc[0, D + 1]                                 # scalar
    g_loss = misc[0, D + 2].reshape(1)                        # g_loss.unsqueeze(0)
    grad_stu = {'emb': d_emb, 'W1': dW1, 'b1': db1,
                'W2': dW2, 'b2': db2, 'W3': dW3, 'b3': db3}
    gen_labels = lax.dynamic_slice_in_dim(Y, batch_ids[N_UNROLL] * B, B)

    return grad_stu, loss_stu, g_loss, validity, gen_samples, gen_labels


if __name__ == "__main__":
    key = jax.random.PRNGKey(0)
    ks = jax.random.split(key, 20)

    def init(k, shape, scale=0.3):
        return (scale * jax.random.normal(k, shape)).astype(jnp.float32)

    # generator parameters (model_paramters in the PyTorch code)
    gen_params = {
        'emb': init(ks[0], (N_CLASSES, EMB_G)),
        'W1': init(ks[1], (GIN, H)), 'b1': init(ks[2], (1, H), 0.05),
        'W2': init(ks[3], (H, H)),   'b2': init(ks[4], (1, H), 0.05),
        'W3': init(ks[5], (H, D)),   'b3': init(ks[6], (1, D), 0.05),
    }
    # discriminator (netD) parameters
    disc_params = {
        'emb': init(ks[7], (N_CLASSES, EMB_D)),
        'D1': init(ks[8], (DIN, HD)), 'bd1': init(ks[9], (1, HD), 0.05),
        'D2': init(ks[10], (HD, 1)),  'bd2': init(ks[11], (1, 1), 0.05),
    }
    # student ('teacher_w0.pth') and teacher ('teacher_wstar.pth') -- TODO(synk):
    # state-dict file loads replaced by deterministically initialized arrays.
    w0 = init(ks[12], (1, D))          # student.lin.weight
    b_s = init(ks[13], (1, 1), 0.05)   # student.lin.bias
    w_star = init(ks[14], (1, D))      # teacher weight == w_star argument
    b_tea = init(ks[15], (1, 1), 0.05)

    # dataset self.X / self.Y
    X = init(ks[16], (N, D), 1.0)
    Y = jax.random.bernoulli(ks[17], 0.5, (N,)).astype(jnp.int32)

    nb_batch = N // B
    # torch.randint batch indices (device array, consumed from SMEM inside the kernel)
    batch_ids = jax.random.randint(ks[18], (N_UNROLL + 1,), 0, nb_batch,
                                   dtype=jnp.int32)
    valid = jnp.ones((B, 1), jnp.float32)

    outs = unrolled_optimizer_forward(gen_params, disc_params, w0, b_s, w_star,
                                      b_tea, X, Y, batch_ids, valid)
    jax.block_until_ready(outs)
    print("KERNEL_OK")
</pallas_src>

<mosaic_0001>
module attributes {stable_mosaic.version = 11 : i64} {
  func.func @_fused_kernel(%arg0: memref<4xi32, #tpu.memory_space<smem>>, %arg1: memref<64x2xf32, #tpu.memory_space<vmem>>, %arg2: memref<64x1xf32, #tpu.memory_space<vmem>>, %arg3: memref<1x2xf32, #tpu.memory_space<vmem>>, %arg4: memref<1x1xf32, #tpu.memory_space<vmem>>, %arg5: memref<1x2xf32, #tpu.memory_space<vmem>>, %arg6: memref<1x1xf32, #tpu.memory_space<vmem>>, %arg7: memref<2x2xf32, #tpu.memory_space<vmem>>, %arg8: memref<8x32xf32, #tpu.memory_space<vmem>>, %arg9: memref<1x32xf32, #tpu.memory_space<vmem>>, %arg10: memref<32x32xf32, #tpu.memory_space<vmem>>, %arg11: memref<1x32xf32, #tpu.memory_space<vmem>>, %arg12: memref<32x2xf32, #tpu.memory_space<vmem>>, %arg13: memref<1x2xf32, #tpu.memory_space<vmem>>, %arg14: memref<32x8xf32, #tpu.memory_space<vmem>>, %arg15: memref<32x32xf32, #tpu.memory_space<vmem>>, %arg16: memref<2x32xf32, #tpu.memory_space<vmem>>, %arg17: memref<2x2xf32, #tpu.memory_space<vmem>>, %arg18: memref<4x32xf32, #tpu.memory_space<vmem>>, %arg19: memref<1x32xf32, #tpu.memory_space<vmem>>, %arg20: memref<32x4xf32, #tpu.memory_space<vmem>>, %arg21: memref<1x32xf32, #tpu.memory_space<vmem>>, %arg22: memref<1x1xf32, #tpu.memory_space<vmem>>, %arg23: memref<8x1xf32, #tpu.memory_space<vmem>>, %arg24: memref<8x128xf32, #tpu.memory_space<vmem>>, %arg25: memref<2x2xf32, #tpu.memory_space<vmem>>, %arg26: memref<8x32xf32, #tpu.memory_space<vmem>>, %arg27: memref<1x32xf32, #tpu.memory_space<vmem>>, %arg28: memref<32x32xf32, #tpu.memory_space<vmem>>, %arg29: memref<1x32xf32, #tpu.memory_space<vmem>>, %arg30: memref<32x2xf32, #tpu.memory_space<vmem>>, %arg31: memref<1x2xf32, #tpu.memory_space<vmem>>) attributes {dimension_semantics = [], scalar_prefetch = 0 : i64, scratch_operands = 0 : i64, tpu.core_type = #tpu.core_type<tc>} {
    %c0 = arith.constant 0 : index
    %c0_0 = arith.constant 0 : index
    %0 = vector.load %arg8[%c0, %c0_0] : memref<8x32xf32, #tpu.memory_space<vmem>>, vector<8x32xf32>
    %c0_1 = arith.constant 0 : index
    %c0_2 = arith.constant 0 : index
    %1 = vector.load %arg9[%c0_1, %c0_2] : memref<1x32xf32, #tpu.memory_space<vmem>>, vector<1x32xf32>
    %c0_3 = arith.constant 0 : index
    %c0_4 = arith.constant 0 : index
    %2 = vector.load %arg10[%c0_3, %c0_4] : memref<32x32xf32, #tpu.memory_space<vmem>>, vector<32x32xf32>
    %c0_5 = arith.constant 0 : index
    %c0_6 = arith.constant 0 : index
    %3 = vector.load %arg11[%c0_5, %c0_6] : memref<1x32xf32, #tpu.memory_space<vmem>>, vector<1x32xf32>
    %c0_7 = arith.constant 0 : index
    %c0_8 = arith.constant 0 : index
    %4 = vector.load %arg12[%c0_7, %c0_8] : memref<32x2xf32, #tpu.memory_space<vmem>>, vector<32x2xf32>
    %c0_9 = arith.constant 0 : index
    %c0_10 = arith.constant 0 : index
    %5 = vector.load %arg13[%c0_9, %c0_10] : memref<1x2xf32, #tpu.memory_space<vmem>>, vector<1x2xf32>
    %c0_11 = arith.constant 0 : index
    %c0_12 = arith.constant 0 : index
    %6 = vector.load %arg14[%c0_11, %c0_12] : memref<32x8xf32, #tpu.memory_space<vmem>>, vector<32x8xf32>
    %c0_13 = arith.constant 0 : index
    %c0_14 = arith.constant 0 : index
    %7 = vector.load %arg15[%c0_13, %c0_14] : memref<32x32xf32, #tpu.memory_space<vmem>>, vector<32x32xf32>
    %c0_15 = arith.constant 0 : index
    %c0_16 = arith.constant 0 : index
    %8 = vector.load %arg16[%c0_15, %c0_16] : memref<2x32xf32, #tpu.memory_space<vmem>>, vector<2x32xf32>
    %c0_17 = arith.constant 0 : index
    %c0_18 = arith.constant 0 : index
    %9 = vector.load %arg7[%c0_17, %c0_18] : memref<2x2xf32, #tpu.memory_space<vmem>>, vector<2x2xf32>
    %c0_19 = arith.constant 0 : index
    %c0_20 = arith.constant 0 : index
    %10 = vector.load %arg5[%c0_19, %c0_20] : memref<1x2xf32, #tpu.memory_space<vmem>>, vector<1x2xf32>
    %c0_21 = arith.constant 0 : index
    %c0_22 = arith.constant 0 : index
    %11 = vector.load %arg4[%c0_21, %c0_22] : memref<1x1xf32, #tpu.memory_space<vmem>>, vector<1x1xf32>
    %c0_23 = arith.constant 0 : index
    %c0_24 = arith.constant 0 : index
    %12 = vector.load %arg6[%c0_23, %c0_24] : memref<1x1xf32, #tpu.memory_space<vmem>>, vector<1x1xf32>
    %c0_25 = arith.constant 0 : index
    %c0_26 = arith.constant 0 : index
    %13 = vector.load %arg3[%c0_25, %c0_26] : memref<1x2xf32, #tpu.memory_space<vmem>>, vector<1x2xf32>
    %cst = arith.constant 0.000000e+00 : f32
    %14 = vector.broadcast %cst : f32 to vector<1x1xf32>
    %cst_27 = arith.constant 0.000000e+00 : f32
    %15 = vector.broadcast %cst_27 : f32 to vector<2x2xf32>
    %cst_28 = arith.constant 0.000000e+00 : f32
    %16 = vector.broadcast %cst_28 : f32 to vector<8x32xf32>
    %cst_29 = arith.constant 0.000000e+00 : f32
    %17 = vector.broadcast %cst_29 : f32 to vector<1x32xf32>
    %cst_30 = arith.constant 0.000000e+00 : f32
    %18 = vector.broadcast %cst_30 : f32 to vector<32x32xf32>
    %cst_31 = arith.constant 0.000000e+00 : f32
    %19 = vector.broadcast %cst_31 : f32 to vector<1x32xf32>
    %cst_32 = arith.constant 0.000000e+00 : f32
    %20 = vector.broadcast %cst_32 : f32 to vector<32x2xf32>
    %cst_33 = arith.constant 0.000000e+00 : f32
    %21 = vector.broadcast %cst_33 : f32 to vector<1x2xf32>
    %c0_34 = arith.constant 0 : index
    %22 = memref.load %arg0[%c0_34] : memref<4xi32, #tpu.memory_space<smem>>
    %c8_i32 = arith.constant 8 : i32
    %23 = arith.muli %22, %c8_i32 : i32
    %24 = tpu.assume_multiple %23, 8 : i32
    %25 = arith.index_cast %24 : i32 to index
    %c0_35 = arith.constant 0 : index
    %26 = vector.load %arg1[%25, %c0_35] : memref<64x2xf32, #tpu.memory_space<vmem>>, vector<8x2xf32>
    %27 = arith.index_cast %24 : i32 to index
    %c0_36 = arith.constant 0 : index
    %28 = vector.load %arg2[%27, %c0_36] : memref<64x1xf32, #tpu.memory_space<vmem>>, vector<8x1xf32>
    %cst_37 = arith.constant 1.000000e+00 : f32
    %29 = vector.broadcast %cst_37 : f32 to vector<8x1xf32>
    %30 = arith.subf %29, %28 : vector<8x1xf32>
    %31 = tpu.concatenate %30, %28 in 1 : vector<8x1xf32>, vector<8x1xf32> -> vector<8x2xf32>
    %cst_38 = arith.constant dense<0.000000e+00> : vector<8x2xf32>
    %32 = tpu.matmul %31, %9, %cst_38 {dimension_numbers = #tpu.dot_dimension_numbers<[1], [0], [0], [1], [0, 0, 1, 1], [], []>} : vector<8x2xf32>, vector<2x2xf32>, vector<8x2xf32> -> vector<8x2xf32>
    %33 = vector.shape_cast %13 : vector<1x2xf32> to vector<1x2xf32>
    %34 = vector.broadcast %33 : vector<1x2xf32> to vector<8x2xf32>
    %35 = arith.subf %13, %10 : vector<1x2xf32>
    %36 = vector.shape_cast %35 : vector<1x2xf32> to vector<1x2xf32>
    %37 = vector.broadcast %36 : vector<1x2xf32> to vector<8x2xf32>
    %38 = tpu.concatenate %34, %37, %26, %32 in 1 : vector<8x2xf32>, vector<8x2xf32>, vector<8x2xf32>, vector<8x2xf32> -> vector<8x8xf32>
    %cst_39 = arith.constant dense<0.000000e+00> : vector<8x32xf32>
    %39 = tpu.matmul %38, %0, %cst_39 {dimension_numbers = #tpu.dot_dimension_numbers<[1], [0], [0], [1], [0, 0, 1, 1], [], []>} : vector<8x8xf32>, vector<8x32xf32>, vector<8x32xf32> -> vector<8x32xf32>
    %40 = vector.broadcast %1 : vector<1x32xf32> to vector<8x32xf32>
    %41 = arith.addf %39, %40 : vector<8x32xf32>
    %cst_40 = arith.constant 0.000000e+00 : f32
    %42 = vector.broadcast %cst_40 : f32 to vector<8x32xf32>
    %43 = arith.cmpf ogt, %41, %42 : vector<8x32xf32>
    %cst_41 = arith.constant 1.000000e+00 : f32
    %cst_42 = arith.constant 2.000000e-01 : f32
    %44 = vector.broadcast %cst_41 : f32 to vector<8x32xf32>
    %45 = vector.broadcast %cst_42 : f32 to vector<8x32xf32>
    %46 = arith.select %43, %44, %45 : vector<8x32xi1>, vector<8x32xf32>
    %47 = arith.mulf %41, %46 : vector<8x32xf32>
    %cst_43 = arith.constant dense<0.000000e+00> : vector<8x32xf32>
    %48 = tpu.matmul %47, %2, %cst_43 {dimension_numbers = #tpu.dot_dimension_numbers<[1], [0], [0], [1], [0, 0, 1, 1], [], []>} : vector<8x32xf32>, vector<32x32xf32>, vector<8x32xf32> -> vector<8x32xf32>
    %49 = vector.broadcast %3 : vector<1x32xf32> to vector<8x32xf32>
    %50 = arith.addf %48, %49 : vector<8x32xf32>
    %cst_44 = arith.constant 0.000000e+00 : f32
    %51 = vector.broadcast %cst_44 : f32 to vector<8x32xf32>
    %52 = arith.cmpf ogt, %50, %51 : vector<8x32xf32>
    %cst_45 = arith.constant 1.000000e+00 : f32
    %cst_46 = arith.constant 2.000000e-01 : f32
    %53 = vector.broadcast %cst_45 : f32 to vector<8x32xf32>
    %54 = vector.broadcast %cst_46 : f32 to vector<8x32xf32>
    %55 = arith.select %52, %53, %54 : vector<8x32xi1>, vector<8x32xf32>
    %56 = arith.mulf %50, %55 : vector<8x32xf32>
    %cst_47 = arith.constant dense<0.000000e+00> : vector<8x2xf32>
    %57 = tpu.matmul %56, %4, %cst_47 {dimension_numbers = #tpu.dot_dimension_numbers<[1], [0], [0], [1], [0, 0, 1, 1], [], []>} : vector<8x32xf32>, vector<32x2xf32>, vector<8x2xf32> -> vector<8x2xf32>
    %58 = vector.broadcast %5 : vector<1x2xf32> to vector<8x2xf32>
    %59 = arith.addf %57, %58 : vector<8x2xf32>
    %60 = vector.broadcast %13 : vector<1x2xf32> to vector<8x2xf32>
    %61 = arith.mulf %59, %60 : vector<8x2xf32>
    %cst_48 = arith.constant dense<0.000000e+00> : vector<8xf32>
    %62 = vector.multi_reduction <add>, %61, %cst_48 [1] : vector<8x2xf32> to vector<8xf32>
    %63 = vector.shape_cast %62 : vector<8xf32> to vector<8x1xf32>
    %64 = vector.broadcast %11 : vector<1x1xf32> to vector<8x1xf32>
    %65 = arith.addf %63, %64 : vector<8x1xf32>
    %66 = arith.negf %65 : vector<8x1xf32>
    %67 = math.exp %66 : vector<8x1xf32>
    %cst_49 = arith.constant 1.000000e+00 : f32
    %68 = vector.broadcast %cst_49 : f32 to vector<8x1xf32>
    %69 = arith.addf %68, %67 : vector<8x1xf32>
    %70 = arith.divf %68, %69 : vector<8x1xf32>
    %71 = arith.subf %70, %28 : vector<8x1xf32>
    %cst_50 = arith.constant 1.250000e-01 : f32
    %72 = vector.broadcast %cst_50 : f32 to vector<8x1xf32>
    %73 = arith.mulf %71, %72 : vector<8x1xf32>
    %74 = vector.broadcast %73 : vector<8x1xf32> to vector<8x2xf32>
    %75 = vector.broadcast %13 : vector<1x2xf32> to vector<8x2xf32>
    %76 = arith.mulf %74, %75 : vector<8x2xf32>
    %cst_51 = arith.constant dense<0.000000e+00> : vector<8x32xf32>
    %77 = tpu.matmul %76, %8, %cst_51 {dimension_numbers = #tpu.dot_dimension_numbers<[1], [0], [0], [1], [0, 0, 1, 1], [], []>} : vector<8x2xf32>, vector<2x32xf32>, vector<8x32xf32> -> vector<8x32xf32>
    %78 = arith.mulf %55, %77 : vector<8x32xf32>
    %cst_52 = arith.constant dense<0.000000e+00> : vector<8x32xf32>
    %79 = tpu.matmul %78, %7, %cst_52 {dimension_numbers = #tpu.dot_dimension_numbers<[1], [0], [0], [1], [0, 0, 1, 1], [], []>} : vector<8x32xf32>, vector<32x32xf32>, vector<8x32xf32> -> vector<8x32xf32>
    %80 = arith.mulf %46, %79 : vector<8x32xf32>
    %cst_53 = arith.constant dense<0.000000e+00> : vector<8x8xf32>
    %81 = tpu.matmul %80, %6, %cst_53 {dimension_numbers = #tpu.dot_dimension_numbers<[1], [0], [0], [1], [0, 0, 1, 1], [], []>} : vector<8x32xf32>, vector<32x8xf32>, vector<8x8xf32> -> vector<8x8xf32>
    %82 = vector.broadcast %73 : vector<8x1xf32> to vector<8x2xf32>
    %83 = arith.mulf %82, %59 : vector<8x2xf32>
    %cst_54 = arith.constant dense<0.000000e+00> : vector<2xf32>
    %84 = vector.multi_reduction <add>, %83, %cst_54 [0] : vector<8x2xf32> to vector<2xf32>
    %85 = vector.shape_cast %84 : vector<2xf32> to vector<1x2xf32>
    %86 = vector.extract_strided_slice %81 {offsets = [0, 0], sizes = [8, 2], strides = [1, 1]} : vector<8x8xf32> to vector<8x2xf32>
    %87 = vector.extract_strided_slice %81 {offsets = [0, 2], sizes = [8, 2], strides = [1, 1]} : vector<8x8xf32> to vector<8x2xf32>
    %88 = arith.addf %86, %87 : vector<8x2xf32>
    %cst_55 = arith.constant dense<0.000000e+00> : vector<2xf32>
    %89 = vector.multi_reduction <add>, %88, %cst_55 [0] : vector<8x2xf32> to vector<2xf32>
    %90 = vector.shape_cast %89 : vector<2xf32> to vector<1x2xf32>
    %91 = arith.addf %85, %90 : vector<1x2xf32>
    %92 = vector.broadcast %10 : vector<1x2xf32> to vector<8x2xf32>
    %93 = arith.mulf %59, %92 : vector<8x2xf32>
    %cst_56 = arith.constant dense<0.000000e+00> : vector<8xf32>
    %94 = vector.multi_reduction <add>, %93, %cst_56 [1] : vector<8x2xf32> to vector<8xf32>
    %95 = vector.shape_cast %94 : vector<8xf32> to vector<8x1xf32>
    %96 = vector.broadcast %12 : vector<1x1xf32> to vector<8x1xf32>
    %97 = arith.addf %95, %96 : vector<8x1xf32>
    %98 = arith.negf %97 : vector<8x1xf32>
    %99 = math.exp %98 : vector<8x1xf32>
    %cst_57 = arith.constant 1.000000e+00 : f32
    %100 = vector.broadcast %cst_57 : f32 to vector<8x1xf32>
    %101 = arith.addf %100, %99 : vector<8x1xf32>
    %102 = arith.divf %100, %101 : vector<8x1xf32>
    %cst_58 = arith.constant 0.000000e+00 : f32
    %103 = vector.broadcast %cst_58 : f32 to vector<8x1xf32>
    %104 = arith.subf %103, %97 : vector<8x1xf32>
    %cst_59 = arith.constant 0.000000e+00 : f32
    %105 = vector.broadcast %cst_59 : f32 to vector<8x1xf32>
    %106 = arith.maximumf %104, %105 : vector<8x1xf32>
    %107 = math.absf %104 : vector<8x1xf32>
    %cst_60 = arith.constant 0.000000e+00 : f32
    %108 = vector.broadcast %cst_60 : f32 to vector<8x1xf32>
    %109 = arith.subf %108, %107 : vector<8x1xf32>
    %110 = math.exp %109 : vector<8x1xf32>
    %cst_61 = arith.constant 1.000000e+00 : f32
    %111 = vector.broadcast %cst_61 : f32 to vector<8x1xf32>
    %112 = arith.addf %111, %110 : vector<8x1xf32>
    %113 = math.log %112 : vector<8x1xf32>
    %114 = arith.addf %106, %113 : vector<8x1xf32>
    %115 = arith.mulf %28, %114 : vector<8x1xf32>
    %cst_62 = arith.constant 1.000000e+00 : f32
    %116 = vector.broadcast %cst_62 : f32 to vector<8x1xf32>
    %117 = arith.subf %116, %28 : vector<8x1xf32>
    %cst_63 = arith.constant 0.000000e+00 : f32
    %118 = vector.broadcast %cst_63 : f32 to vector<8x1xf32>
    %119 = arith.maximumf %97, %118 : vector<8x1xf32>
    %120 = math.absf %97 : vector<8x1xf32>
    %cst_64 = arith.constant 0.000000e+00 : f32
    %121 = vector.broadcast %cst_64 : f32 to vector<8x1xf32>
    %122 = arith.subf %121, %120 : vector<8x1xf32>
    %123 = math.exp %122 : vector<8x1xf32>
    %cst_65 = arith.constant 1.000000e+00 : f32
    %124 = vector.broadcast %cst_65 : f32 to vector<8x1xf32>
    %125 = arith.addf %124, %123 : vector<8x1xf32>
    %126 = math.log %125 : vector<8x1xf32>
    %127 = arith.addf %119, %126 : vector<8x1xf32>
    %128 = arith.mulf %117, %127 : vector<8x1xf32>
    %129 = arith.addf %115, %128 : vector<8x1xf32>
    %cst_66 = arith.constant dense<0.000000e+00> : vector<1xf32>
    %130 = vector.multi_reduction <add>, %129, %cst_66 [0] : vector<8x1xf32> to vector<1xf32>
    %131 = vector.shape_cast %130 : vector<1xf32> to vector<1x1xf32>
    %cst_67 = arith.constant 1.250000e-01 : f32
    %132 = vector.broadcast %cst_67 : f32 to vector<1x1xf32>
    %133 = arith.mulf %131, %132 : vector<1x1xf32>
    %134 = arith.addf %14, %133 : vector<1x1xf32>
    %135 = arith.subf %102, %28 : vector<8x1xf32>
    %cst_68 = arith.constant 1.250000e-01 : f32
    %136 = vector.broadcast %cst_68 : f32 to vector<8x1xf32>
    %137 = arith.mulf %135, %136 : vector<8x1xf32>
    %138 = vector.broadcast %137 : vector<8x1xf32> to vector<8x2xf32>
    %139 = vector.broadcast %10 : vector<1x2xf32> to vector<8x2xf32>
    %140 = arith.mulf %138, %139 : vector<8x2xf32>
    %cst_69 = arith.constant dense<0.000000e+00> : vector<8x32xf32>
    %141 = tpu.matmul %140, %8, %cst_69 {dimension_numbers = #tpu.dot_dimension_numbers<[1], [0], [0], [1], [0, 0, 1, 1], [], []>} : vector<8x2xf32>, vector<2x32xf32>, vector<8x32xf32> -> vector<8x32xf32>
    %142 = arith.mulf %55, %141 : vector<8x32xf32>
    %cst_70 = arith.constant dense<0.000000e+00> : vector<8x32xf32>
    %143 = tpu.matmul %142, %7, %cst_70 {dimension_numbers = #tpu.dot_dimension_numbers<[1], [0], [0], [1], [0, 0, 1, 1], [], []>} : vector<8x32xf32>, vector<32x32xf32>, vector<8x32xf32> -> vector<8x32xf32>
    %144 = arith.mulf %46, %143 : vector<8x32xf32>
    %cst_71 = arith.constant dense<0.000000e+00> : vector<8x8xf32>
    %145 = tpu.matmul %144, %6, %cst_71 {dimension_numbers = #tpu.dot_dimension_numbers<[1], [0], [0], [1], [0, 0, 1, 1], [], []>} : vector<8x32xf32>, vector<32x8xf32>, vector<8x8xf32> -> vector<8x8xf32>
    %cst_72 = arith.constant dense<0.000000e+00> : vector<32x2xf32>
    %146 = tpu.matmul %56, %140, %cst_72 {dimension_numbers = #tpu.dot_dimension_numbers<[0], [0], [1], [1], [0, 1, 1, 1], [], []>} : vector<8x32xf32>, vector<8x2xf32>, vector<32x2xf32> -> vector<32x2xf32>
    %147 = arith.addf %20, %146 : vector<32x2xf32>
    %cst_73 = arith.constant dense<0.000000e+00> : vector<2xf32>
    %148 = vector.multi_reduction <add>, %140, %cst_73 [0] : vector<8x2xf32> to vector<2xf32>
    %149 = vector.shape_cast %148 : vector<2xf32> to vector<1x2xf32>
    %150 = arith.addf %21, %149 : vector<1x2xf32>
    %cst_74 = arith.constant dense<0.000000e+00> : vector<32x32xf32>
    %151 = tpu.matmul %47, %142, %cst_74 {dimension_numbers = #tpu.dot_dimension_numbers<[0], [0], [1], [1], [0, 1, 1, 1], [], []>} : vector<8x32xf32>, vector<8x32xf32>, vector<32x32xf32> -> vector<32x32xf32>
    %152 = arith.addf %18, %151 : vector<32x32xf32>
    %cst_75 = arith.constant dense<0.000000e+00> : vector<32xf32>
    %153 = vector.multi_reduction <add>, %142, %cst_75 [0] : vector<8x32xf32> to vector<32xf32>
    %154 = vector.shape_cast %153 : vector<32xf32> to vector<1x32xf32>
    %155 = arith.addf %19, %154 : vector<1x32xf32>
    %cst_76 = arith.constant dense<0.000000e+00> : vector<8x32xf32>
    %156 = tpu.matmul %38, %144, %cst_76 {dimension_numbers = #tpu.dot_dimension_numbers<[0], [0], [1], [1], [0, 1, 1, 1], [], []>} : vector<8x8xf32>, vector<8x32xf32>, vector<8x32xf32> -> vector<8x32xf32>
    %157 = arith.addf %16, %156 : vector<8x32xf32>
    %cst_77 = arith.constant dense<0.000000e+00> : vector<32xf32>
    %158 = vector.multi_reduction <add>, %144, %cst_77 [0] : vector<8x32xf32> to vector<32xf32>
    %159 = vector.shape_cast %158 : vector<32xf32> to vector<1x32xf32>
    %160 = arith.addf %17, %159 : vector<1x32xf32>
    %161 = vector.extract_strided_slice %145 {offsets = [0, 6], sizes = [8, 2], strides = [1, 1]} : vector<8x8xf32> to vector<8x2xf32>
    %cst_78 = arith.constant dense<0.000000e+00> : vector<2x2xf32>
    %162 = tpu.matmul %31, %161, %cst_78 {dimension_numbers = #tpu.dot_dimension_numbers<[0], [0], [1], [1], [0, 1, 1, 1], [], []>} : vector<8x2xf32>, vector<8x2xf32>, vector<2x2xf32> -> vector<2x2xf32>
    %163 = arith.addf %15, %162 : vector<2x2xf32>
    %cst_79 = arith.constant 1.000000e-03 : f32
    %164 = vector.broadcast %cst_79 : f32 to vector<1x2xf32>
    %165 = arith.mulf %164, %91 : vector<1x2xf32>
    %166 = arith.subf %13, %165 : vector<1x2xf32>
    %c1 = arith.constant 1 : index
    %167 = memref.load %arg0[%c1] : memref<4xi32, #tpu.memory_space<smem>>
    %c8_i32_80 = arith.constant 8 : i32
    %168 = arith.muli %167, %c8_i32_80 : i32
    %169 = tpu.assume_multiple %168, 8 : i32
    %170 = arith.index_cast %169 : i32 to index
    %c0_81 = arith.constant 0 : index
    %171 = vector.load %arg1[%170, %c0_81] : memref<64x2xf32, #tpu.memory_space<vmem>>, vector<8x2xf32>
    %172 = arith.index_cast %169 : i32 to index
    %c0_82 = arith.constant 0 : index
    %173 = vector.load %arg2[%172, %c0_82] : memref<64x1xf32, #tpu.memory_space<vmem>>, vector<8x1xf32>
    %cst_83 = arith.constant 1.000000e+00 : f32
    %174 = vector.broadcast %cst_83 : f32 to vector<8x1xf32>
    %175 = arith.subf %174, %173 : vector<8x1xf32>
    %176 = tpu.concatenate %175, %173 in 1 : vector<8x1xf32>, vector<8x1xf32> -> vector<8x2xf32>
    %cst_84 = arith.constant dense<0.000000e+00> : vector<8x2xf32>
    %177 = tpu.matmul %176, %9, %cst_84 {dimension_numbers = #tpu.dot_dimension_numbers<[1], [0], [0], [1], [0, 0, 1, 1], [], []>} : vector<8x2xf32>, vector<2x2xf32>, vector<8x2xf32> -> vector<8x2xf32>
    %178 = vector.shape_cast %166 : vector<1x2xf32> to vector<1x2xf32>
    %179 = vector.broadcast %178 : vector<1x2xf32> to vector<8x2xf32>
    %180 = arith.subf %166, %10 : vector<1x2xf32>
    %181 = vector.shape_cast %180 : vector<1x2xf32> to vector<1x2xf32>
    %182 = vector.broadcast %181 : vector<1x2xf32> to vector<8x2xf32>
    %183 = tpu.concatenate %179, %182, %171, %177 in 1 : vector<8x2xf32>, vector<8x2xf32>, vector<8x2xf32>, vector<8x2xf32> -> vector<8x8xf32>
    %cst_85 = arith.constant dense<0.000000e+00> : vector<8x32xf32>
    %184 = tpu.matmul %183, %0, %cst_85 {dimension_numbers = #tpu.dot_dimension_numbers<[1], [0], [0], [1], [0, 0, 1, 1], [], []>} : vector<8x8xf32>, vector<8x32xf32>, vector<8x32xf32> -> vector<8x32xf32>
    %185 = vector.broadcast %1 : vector<1x32xf32> to vector<8x32xf32>
    %186 = arith.addf %184, %185 : vector<8x32xf32>
    %cst_86 = arith.constant 0.000000e+00 : f32
    %187 = vector.broadcast %cst_86 : f32 to vector<8x32xf32>
    %188 = arith.cmpf ogt, %186, %187 : vector<8x32xf32>
    %cst_87 = arith.constant 1.000000e+00 : f32
    %cst_88 = arith.constant 2.000000e-01 : f32
    %189 = vector.broadcast %cst_87 : f32 to vector<8x32xf32>
    %190 = vector.broadcast %cst_88 : f32 to vector<8x32xf32>
    %191 = arith.select %188, %189, %190 : vector<8x32xi1>, vector<8x32xf32>
    %192 = arith.mulf %186, %191 : vector<8x32xf32>
    %cst_89 = arith.constant dense<0.000000e+00> : vector<8x32xf32>
    %193 = tpu.matmul %192, %2, %cst_89 {dimension_numbers = #tpu.dot_dimension_numbers<[1], [0], [0], [1], [0, 0, 1, 1], [], []>} : vector<8x32xf32>, vector<32x32xf32>, vector<8x32xf32> -> vector<8x32xf32>
    %194 = vector.broadcast %3 : vector<1x32xf32> to vector<8x32xf32>
    %195 = arith.addf %193, %194 : vector<8x32xf32>
    %cst_90 = arith.constant 0.000000e+00 : f32
    %196 = vector.broadcast %cst_90 : f32 to vector<8x32xf32>
    %197 = arith.cmpf ogt, %195, %196 : vector<8x32xf32>
    %cst_91 = arith.constant 1.000000e+00 : f32
    %cst_92 = arith.constant 2.000000e-01 : f32
    %198 = vector.broadcast %cst_91 : f32 to vector<8x32xf32>
    %199 = vector.broadcast %cst_92 : f32 to vector<8x32xf32>
    %200 = arith.select %197, %198, %199 : vector<8x32xi1>, vector<8x32xf32>
    %201 = arith.mulf %195, %200 : vector<8x32xf32>
    %cst_93 = arith.constant dense<0.000000e+00> : vector<8x2xf32>
    %202 = tpu.matmul %201, %4, %cst_93 {dimension_numbers = #tpu.dot_dimension_numbers<[1], [0], [0], [1], [0, 0, 1, 1], [], []>} : vector<8x32xf32>, vector<32x2xf32>, vector<8x2xf32> -> vector<8x2xf32>
    %203 = vector.broadcast %5 : vector<1x2xf32> to vector<8x2xf32>
    %204 = arith.addf %202, %203 : vector<8x2xf32>
    %205 = vector.broadcast %166 : vector<1x2xf32> to vector<8x2xf32>
    %206 = arith.mulf %204, %205 : vector<8x2xf32>
    %cst_94 = arith.constant dense<0.000000e+00> : vector<8xf32>
    %207 = vector.multi_reduction <add>, %206, %cst_94 [1] : vector<8x2xf32> to vector<8xf32>
    %208 = vector.shape_cast %207 : vector<8xf32> to vector<8x1xf32>
    %209 = vector.broadcast %11 : vector<1x1xf32> to vector<8x1xf32>
    %210 = arith.addf %208, %209 : vector<8x1xf32>
    %211 = arith.negf %210 : vector<8x1xf32>
    %212 = math.exp %211 : vector<8x1xf32>
    %cst_95 = arith.constant 1.000000e+00 : f32
    %213 = vector.broadcast %cst_95 : f32 to vector<8x1xf32>
    %214 = arith.addf %213, %212 : vector<8x1xf32>
    %215 = arith.divf %213, %214 : vector<8x1xf32>
    %216 = arith.subf %215, %173 : vector<8x1xf32>
    %cst_96 = arith.constant 1.250000e-01 : f32
    %217 = vector.broadcast %cst_96 : f32 to vector<8x1xf32>
    %218 = arith.mulf %216, %217 : vector<8x1xf32>
    %219 = vector.broadcast %218 : vector<8x1xf32> to vector<8x2xf32>
    %220 = vector.broadcast %166 : vector<1x2xf32> to vector<8x2xf32>
    %221 = arith.mulf %219, %220 : vector<8x2xf32>
    %cst_97 = arith.constant dense<0.000000e+00> : vector<8x32xf32>
    %222 = tpu.matmul %221, %8, %cst_97 {dimension_numbers = #tpu.dot_dimension_numbers<[1], [0], [0], [1], [0, 0, 1, 1], [], []>} : vector<8x2xf32>, vector<2x32xf32>, vector<8x32xf32> -> vector<8x32xf32>
    %223 = arith.mulf %200, %222 : vector<8x32xf32>
    %cst_98 = arith.constant dense<0.000000e+00> : vector<8x32xf32>
    %224 = tpu.matmul %223, %7, %cst_98 {dimension_numbers = #tpu.dot_dimension_numbers<[1], [0], [0], [1], [0, 0, 1, 1], [], []>} : vector<8x32xf32>, vector<32x32xf32>, vector<8x32xf32> -> vector<8x32xf32>
    %225 = arith.mulf %191, %224 : vector<8x32xf32>
    %cst_99 = arith.constant dense<0.000000e+00> : vector<8x8xf32>
    %226 = tpu.matmul %225, %6, %cst_99 {dimension_numbers = #tpu.dot_dimension_numbers<[1], [0], [0], [1], [0, 0, 1, 1], [], []>} : vector<8x32xf32>, vector<32x8xf32>, vector<8x8xf32> -> vector<8x8xf32>
    %227 = vector.broadcast %218 : vector<8x1xf32> to vector<8x2xf32>
    %228 = arith.mulf %227, %204 : vector<8x2xf32>
    %cst_100 = arith.constant dense<0.000000e+00> : vector<2xf32>
    %229 = vector.multi_reduction <add>, %228, %cst_100 [0] : vector<8x2xf32> to vector<2xf32>
    %230 = vector.shape_cast %229 : vector<2xf32> to vector<1x2xf32>
    %231 = vector.extract_strided_slice %226 {offsets = [0, 0], sizes = [8, 2], strides = [1, 1]} : vector<8x8xf32> to vector<8x2xf32>
    %232 = vector.extract_strided_slice %226 {offsets = [0, 2], sizes = [8, 2], strides = [1, 1]} : vector<8x8xf32> to vector<8x2xf32>
    %233 = arith.addf %231, %232 : vector<8x2xf32>
    %cst_101 = arith.constant dense<0.000000e+00> : vector<2xf32>
    %234 = vector.multi_reduction <add>, %233, %cst_101 [0] : vector<8x2xf32> to vector<2xf32>
    %235 = vector.shape_cast %234 : vector<2xf32> to vector<1x2xf32>
    %236 = arith.addf %230, %235 : vector<1x2xf32>
    %237 = vector.broadcast %10 : vector<1x2xf32> to vector<8x2xf32>
    %238 = arith.mulf %204, %237 : vector<8x2xf32>
    %cst_102 = arith.constant dense<0.000000e+00> : vector<8xf32>
    %239 = vector.multi_reduction <add>, %238, %cst_102 [1] : vector<8x2xf32> to vector<8xf32>
    %240 = vector.shape_cast %239 : vector<8xf32> to vector<8x1xf32>
    %241 = vector.broadcast %12 : vector<1x1xf32> to vector<8x1xf32>
    %242 = arith.addf %240, %241 : vector<8x1xf32>
    %243 = arith.negf %242 : vector<8x1xf32>
    %244 = math.exp %243 : vector<8x1xf32>
    %cst_103 = arith.constant 1.000000e+00 : f32
    %245 = vector.broadcast %cst_103 : f32 to vector<8x1xf32>
    %246 = arith.addf %245, %244 : vector<8x1xf32>
    %247 = arith.divf %245, %246 : vector<8x1xf32>
    %cst_104 = arith.constant 0.000000e+00 : f32
    %248 = vector.broadcast %cst_104 : f32 to vector<8x1xf32>
    %249 = arith.subf %248, %242 : vector<8x1xf32>
    %cst_105 = arith.constant 0.000000e+00 : f32
    %250 = vector.broadcast %cst_105 : f32 to vector<8x1xf32>
    %251 = arith.maximumf %249, %250 : vector<8x1xf32>
    %252 = math.absf %249 : vector<8x1xf32>
    %cst_106 = arith.constant 0.000000e+00 : f32
    %253 = vector.broadcast %cst_106 : f32 to vector<8x1xf32>
    %254 = arith.subf %253, %252 : vector<8x1xf32>
    %255 = math.exp %254 : vector<8x1xf32>
    %cst_107 = arith.constant 1.000000e+00 : f32
    %256 = vector.broadcast %cst_107 : f32 to vector<8x1xf32>
    %257 = arith.addf %256, %255 : vector<8x1xf32>
    %258 = math.log %257 : vector<8x1xf32>
    %259 = arith.addf %251, %258 : vector<8x1xf32>
    %260 = arith.mulf %173, %259 : vector<8x1xf32>
    %cst_108 = arith.constant 1.000000e+00 : f32
    %261 = vector.broadcast %cst_108 : f32 to vector<8x1xf32>
    %262 = arith.subf %261, %173 : vector<8x1xf32>
    %cst_109 = arith.constant 0.000000e+00 : f32
    %263 = vector.broadcast %cst_109 : f32 to vector<8x1xf32>
    %264 = arith.maximumf %242, %263 : vector<8x1xf32>
    %265 = math.absf %242 : vector<8x1xf32>
    %cst_110 = arith.constant 0.000000e+00 : f32
    %266 = vector.broadcast %cst_110 : f32 to vector<8x1xf32>
    %267 = arith.subf %266, %265 : vector<8x1xf32>
    %268 = math.exp %267 : vector<8x1xf32>
    %cst_111 = arith.constant 1.000000e+00 : f32
    %269 = vector.broadcast %cst_111 : f32 to vector<8x1xf32>
    %270 = arith.addf %269, %268 : vector<8x1xf32>
    %271 = math.log %270 : vector<8x1xf32>
    %272 = arith.addf %264, %271 : vector<8x1xf32>
    %273 = arith.mulf %262, %272 : vector<8x1xf32>
    %274 = arith.addf %260, %273 : vector<8x1xf32>
    %cst_112 = arith.constant dense<0.000000e+00> : vector<1xf32>
    %275 = vector.multi_reduction <add>, %274, %cst_112 [0] : vector<8x1xf32> to vector<1xf32>
    %276 = vector.shape_cast %275 : vector<1xf32> to vector<1x1xf32>
    %cst_113 = arith.constant 1.250000e-01 : f32
    %277 = vector.broadcast %cst_113 : f32 to vector<1x1xf32>
    %278 = arith.mulf %276, %277 : vector<1x1xf32>
    %279 = arith.addf %134, %278 : vector<1x1xf32>
    %280 = arith.subf %247, %173 : vector<8x1xf32>
    %cst_114 = arith.constant 1.250000e-01 : f32
    %281 = vector.broadcast %cst_114 : f32 to vector<8x1xf32>
    %282 = arith.mulf %280, %281 : vector<8x1xf32>
    %283 = vector.broadcast %282 : vector<8x1xf32> to vector<8x2xf32>
    %284 = vector.broadcast %10 : vector<1x2xf32> to vector<8x2xf32>
    %285 = arith.mulf %283, %284 : vector<8x2xf32>
    %cst_115 = arith.constant dense<0.000000e+00> : vector<8x32xf32>
    %286 = tpu.matmul %285, %8, %cst_115 {dimension_numbers = #tpu.dot_dimension_numbers<[1], [0], [0], [1], [0, 0, 1, 1], [], []>} : vector<8x2xf32>, vector<2x32xf32>, vector<8x32xf32> -> vector<8x32xf32>
    %287 = arith.mulf %200, %286 : vector<8x32xf32>
    %cst_116 = arith.constant dense<0.000000e+00> : vector<8x32xf32>
    %288 = tpu.matmul %287, %7, %cst_116 {dimension_numbers = #tpu.dot_dimension_numbers<[1], [0], [0], [1], [0, 0, 1, 1], [], []>} : vector<8x32xf32>, vector<32x32xf32>, vector<8x32xf32> -> vector<8x32xf32>
    %289 = arith.mulf %191, %288 : vector<8x32xf32>
    %cst_117 = arith.constant dense<0.000000e+00> : vector<8x8xf32>
    %290 = tpu.matmul %289, %6, %cst_117 {dimension_numbers = #tpu.dot_dimension_numbers<[1], [0], [0], [1], [0, 0, 1, 1], [], []>} : vector<8x32xf32>, vector<32x8xf32>, vector<8x8xf32> -> vector<8x8xf32>
    %cst_118 = arith.constant dense<0.000000e+00> : vector<32x2xf32>
    %291 = tpu.matmul %201, %285, %cst_118 {dimension_numbers = #tpu.dot_dimension_numbers<[0], [0], [1], [1], [0, 1, 1, 1], [], []>} : vector<8x32xf32>, vector<8x2xf32>, vector<32x2xf32> -> vector<32x2xf32>
    %292 = arith.addf %147, %291 : vector<32x2xf32>
    %cst_119 = arith.constant dense<0.000000e+00> : vector<2xf32>
    %293 = vector.multi_reduction <add>, %285, %cst_119 [0] : vector<8x2xf32> to vector<2xf32>
    %294 = vector.shape_cast %293 : vector<2xf32> to vector<1x2xf32>
    %295 = arith.addf %150, %294 : vector<1x2xf32>
    %cst_120 = arith.constant dense<0.000000e+00> : vector<32x32xf32>
    %296 = tpu.matmul %192, %287, %cst_120 {dimension_numbers = #tpu.dot_dimension_numbers<[0], [0], [1], [1], [0, 1, 1, 1], [], []>} : vector<8x32xf32>, vector<8x32xf32>, vector<32x32xf32> -> vector<32x32xf32>
    %297 = arith.addf %152, %296 : vector<32x32xf32>
    %cst_121 = arith.constant dense<0.000000e+00> : vector<32xf32>
    %298 = vector.multi_reduction <add>, %287, %cst_121 [0] : vector<8x32xf32> to vector<32xf32>
    %299 = vector.shape_cast %298 : vector<32xf32> to vector<1x32xf32>
    %300 = arith.addf %155, %299 : vector<1x32xf32>
    %cst_122 = arith.constant dense<0.000000e+00> : vector<8x32xf32>
    %301 = tpu.matmul %183, %289, %cst_122 {dimension_numbers = #tpu.dot_dimension_numbers<[0], [0], [1], [1], [0, 1, 1, 1], [], []>} : vector<8x8xf32>, vector<8x32xf32>, vector<8x32xf32> -> vector<8x32xf32>
    %302 = arith.addf %157, %301 : vector<8x32xf32>
    %cst_123 = arith.constant dense<0.000000e+00> : vector<32xf32>
    %303 = vector.multi_reduction <add>, %289, %cst_123 [0] : vector<8x32xf32> to vector<32xf32>
    %304 = vector.shape_cast %303 : vector<32xf32> to vector<1x32xf32>
    %305 = arith.addf %160, %304 : vector<1x32xf32>
    %306 = vector.extract_strided_slice %290 {offsets = [0, 6], sizes = [8, 2], strides = [1, 1]} : vector<8x8xf32> to vector<8x2xf32>
    %cst_124 = arith.constant dense<0.000000e+00> : vector<2x2xf32>
    %307 = tpu.matmul %176, %306, %cst_124 {dimension_numbers = #tpu.dot_dimension_numbers<[0], [0], [1], [1], [0, 1, 1, 1], [], []>} : vector<8x2xf32>, vector<8x2xf32>, vector<2x2xf32> -> vector<2x2xf32>
    %308 = arith.addf %163, %307 : vector<2x2xf32>
    %cst_125 = arith.constant 1.000000e-03 : f32
    %309 = vector.broadcast %cst_125 : f32 to vector<1x2xf32>
    %310 = arith.mulf %309, %236 : vector<1x2xf32>
    %311 = arith.subf %166, %310 : vector<1x2xf32>
    %c2 = arith.constant 2 : index
    %312 = memref.load %arg0[%c2] : memref<4xi32, #tpu.memory_space<smem>>
    %c8_i32_126 = arith.constant 8 : i32
    %313 = arith.muli %312, %c8_i32_126 : i32
    %314 = tpu.assume_multiple %313, 8 : i32
    %315 = arith.index_cast %314 : i32 to index
    %c0_127 = arith.constant 0 : index
    %316 = vector.load %arg1[%315, %c0_127] : memref<64x2xf32, #tpu.memory_space<vmem>>, vector<8x2xf32>
    %317 = arith.index_cast %314 : i32 to index
    %c0_128 = arith.constant 0 : index
    %318 = vector.load %arg2[%317, %c0_128] : memref<64x1xf32, #tpu.memory_space<vmem>>, vector<8x1xf32>
    %cst_129 = arith.constant 1.000000e+00 : f32
    %319 = vector.broadcast %cst_129 : f32 to vector<8x1xf32>
    %320 = arith.subf %319, %318 : vector<8x1xf32>
    %321 = tpu.concatenate %320, %318 in 1 : vector<8x1xf32>, vector<8x1xf32> -> vector<8x2xf32>
    %cst_130 = arith.constant dense<0.000000e+00> : vector<8x2xf32>
    %322 = tpu.matmul %321, %9, %cst_130 {dimension_numbers = #tpu.dot_dimension_numbers<[1], [0], [0], [1], [0, 0, 1, 1], [], []>} : vector<8x2xf32>, vector<2x2xf32>, vector<8x2xf32> -> vector<8x2xf32>
    %323 = vector.shape_cast %311 : vector<1x2xf32> to vector<1x2xf32>
    %324 = vector.broadcast %323 : vector<1x2xf32> to vector<8x2xf32>
    %325 = arith.subf %311, %10 : vector<1x2xf32>
    %326 = vector.shape_cast %325 : vector<1x2xf32> to vector<1x2xf32>
    %327 = vector.broadcast %326 : vector<1x2xf32> to vector<8x2xf32>
    %328 = tpu.concatenate %324, %327, %316, %322 in 1 : vector<8x2xf32>, vector<8x2xf32>, vector<8x2xf32>, vector<8x2xf32> -> vector<8x8xf32>
    %cst_131 = arith.constant dense<0.000000e+00> : vector<8x32xf32>
    %329 = tpu.matmul %328, %0, %cst_131 {dimension_numbers = #tpu.dot_dimension_numbers<[1], [0], [0], [1], [0, 0, 1, 1], [], []>} : vector<8x8xf32>, vector<8x32xf32>, vector<8x32xf32> -> vector<8x32xf32>
    %330 = vector.broadcast %1 : vector<1x32xf32> to vector<8x32xf32>
    %331 = arith.addf %329, %330 : vector<8x32xf32>
    %cst_132 = arith.constant 0.000000e+00 : f32
    %332 = vector.broadcast %cst_132 : f32 to vector<8x32xf32>
    %333 = arith.cmpf ogt, %331, %332 : vector<8x32xf32>
    %cst_133 = arith.constant 1.000000e+00 : f32
    %cst_134 = arith.constant 2.000000e-01 : f32
    %334 = vector.broadcast %cst_133 : f32 to vector<8x32xf32>
    %335 = vector.broadcast %cst_134 : f32 to vector<8x32xf32>
    %336 = arith.select %333, %334, %335 : vector<8x32xi1>, vector<8x32xf32>
    %337 = arith.mulf %331, %336 : vector<8x32xf32>
    %cst_135 = arith.constant dense<0.000000e+00> : vector<8x32xf32>
    %338 = tpu.matmul %337, %2, %cst_135 {dimension_numbers = #tpu.dot_dimension_numbers<[1], [0], [0], [1], [0, 0, 1, 1], [], []>} : vector<8x32xf32>, vector<32x32xf32>, vector<8x32xf32> -> vector<8x32xf32>
    %339 = vector.broadcast %3 : vector<1x32xf32> to vector<8x32xf32>
    %340 = arith.addf %338, %339 : vector<8x32xf32>
    %cst_136 = arith.constant 0.000000e+00 : f32
    %341 = vector.broadcast %cst_136 : f32 to vector<8x32xf32>
    %342 = arith.cmpf ogt, %340, %341 : vector<8x32xf32>
    %cst_137 = arith.constant 1.000000e+00 : f32
    %cst_138 = arith.constant 2.000000e-01 : f32
    %343 = vector.broadcast %cst_137 : f32 to vector<8x32xf32>
    %344 = vector.broadcast %cst_138 : f32 to vector<8x32xf32>
    %345 = arith.select %342, %343, %344 : vector<8x32xi1>, vector<8x32xf32>
    %346 = arith.mulf %340, %345 : vector<8x32xf32>
    %cst_139 = arith.constant dense<0.000000e+00> : vector<8x2xf32>
    %347 = tpu.matmul %346, %4, %cst_139 {dimension_numbers = #tpu.dot_dimension_numbers<[1], [0], [0], [1], [0, 0, 1, 1], [], []>} : vector<8x32xf32>, vector<32x2xf32>, vector<8x2xf32> -> vector<8x2xf32>
    %348 = vector.broadcast %5 : vector<1x2xf32> to vector<8x2xf32>
    %349 = arith.addf %347, %348 : vector<8x2xf32>
    %350 = vector.broadcast %311 : vector<1x2xf32> to vector<8x2xf32>
    %351 = arith.mulf %349, %350 : vector<8x2xf32>
    %cst_140 = arith.constant dense<0.000000e+00> : vector<8xf32>
    %352 = vector.multi_reduction <add>, %351, %cst_140 [1] : vector<8x2xf32> to vector<8xf32>
    %353 = vector.shape_cast %352 : vector<8xf32> to vector<8x1xf32>
    %354 = vector.broadcast %11 : vector<1x1xf32> to vector<8x1xf32>
    %355 = arith.addf %353, %354 : vector<8x1xf32>
    %356 = arith.negf %355 : vector<8x1xf32>
    %357 = math.exp %356 : vector<8x1xf32>
    %cst_141 = arith.constant 1.000000e+00 : f32
    %358 = vector.broadcast %cst_141 : f32 to vector<8x1xf32>
    %359 = arith.addf %358, %357 : vector<8x1xf32>
    %360 = arith.divf %358, %359 : vector<8x1xf32>
    %361 = arith.subf %360, %318 : vector<8x1xf32>
    %cst_142 = arith.constant 1.250000e-01 : f32
    %362 = vector.broadcast %cst_142 : f32 to vector<8x1xf32>
    %363 = arith.mulf %361, %362 : vector<8x1xf32>
    %364 = vector.broadcast %363 : vector<8x1xf32> to vector<8x2xf32>
    %365 = vector.broadcast %311 : vector<1x2xf32> to vector<8x2xf32>
    %366 = arith.mulf %364, %365 : vector<8x2xf32>
    %cst_143 = arith.constant dense<0.000000e+00> : vector<8x32xf32>
    %367 = tpu.matmul %366, %8, %cst_143 {dimension_numbers = #tpu.dot_dimension_numbers<[1], [0], [0], [1], [0, 0, 1, 1], [], []>} : vector<8x2xf32>, vector<2x32xf32>, vector<8x32xf32> -> vector<8x32xf32>
    %368 = arith.mulf %345, %367 : vector<8x32xf32>
    %cst_144 = arith.constant dense<0.000000e+00> : vector<8x32xf32>
    %369 = tpu.matmul %368, %7, %cst_144 {dimension_numbers = #tpu.dot_dimension_numbers<[1], [0], [0], [1], [0, 0, 1, 1], [], []>} : vector<8x32xf32>, vector<32x32xf32>, vector<8x32xf32> -> vector<8x32xf32>
    %370 = arith.mulf %336, %369 : vector<8x32xf32>
    %cst_145 = arith.constant dense<0.000000e+00> : vector<8x8xf32>
    %371 = tpu.matmul %370, %6, %cst_145 {dimension_numbers = #tpu.dot_dimension_numbers<[1], [0], [0], [1], [0, 0, 1, 1], [], []>} : vector<8x32xf32>, vector<32x8xf32>, vector<8x8xf32> -> vector<8x8xf32>
    %372 = vector.broadcast %363 : vector<8x1xf32> to vector<8x2xf32>
    %373 = arith.mulf %372, %349 : vector<8x2xf32>
    %cst_146 = arith.constant dense<0.000000e+00> : vector<2xf32>
    %374 = vector.multi_reduction <add>, %373, %cst_146 [0] : vector<8x2xf32> to vector<2xf32>
    %375 = vector.shape_cast %374 : vector<2xf32> to vector<1x2xf32>
    %376 = vector.extract_strided_slice %371 {offsets = [0, 0], sizes = [8, 2], strides = [1, 1]} : vector<8x8xf32> to vector<8x2xf32>
    %377 = vector.extract_strided_slice %371 {offsets = [0, 2], sizes = [8, 2], strides = [1, 1]} : vector<8x8xf32> to vector<8x2xf32>
    %378 = arith.addf %376, %377 : vector<8x2xf32>
    %cst_147 = arith.constant dense<0.000000e+00> : vector<2xf32>
    %379 = vector.multi_reduction <add>, %378, %cst_147 [0] : vector<8x2xf32> to vector<2xf32>
    %380 = vector.shape_cast %379 : vector<2xf32> to vector<1x2xf32>
    %381 = arith.addf %375, %380 : vector<1x2xf32>
    %382 = vector.broadcast %10 : vector<1x2xf32> to vector<8x2xf32>
    %383 = arith.mulf %349, %382 : vector<8x2xf32>
    %cst_148 = arith.constant dense<0.000000e+00> : vector<8xf32>
    %384 = vector.multi_reduction <add>, %383, %cst_148 [1] : vector<8x2xf32> to vector<8xf32>
    %385 = vector.shape_cast %384 : vector<8xf32> to vector<8x1xf32>
    %386 = vector.broadcast %12 : vector<1x1xf32> to vector<8x1xf32>
    %387 = arith.addf %385, %386 : vector<8x1xf32>
    %388 = arith.negf %387 : vector<8x1xf32>
    %389 = math.exp %388 : vector<8x1xf32>
    %cst_149 = arith.constant 1.000000e+00 : f32
    %390 = vector.broadcast %cst_149 : f32 to vector<8x1xf32>
    %391 = arith.addf %390, %389 : vector<8x1xf32>
    %392 = arith.divf %390, %391 : vector<8x1xf32>
    %cst_150 = arith.constant 0.000000e+00 : f32
    %393 = vector.broadcast %cst_150 : f32 to vector<8x1xf32>
    %394 = arith.subf %393, %387 : vector<8x1xf32>
    %cst_151 = arith.constant 0.000000e+00 : f32
    %395 = vector.broadcast %cst_151 : f32 to vector<8x1xf32>
    %396 = arith.maximumf %394, %395 : vector<8x1xf32>
    %397 = math.absf %394 : vector<8x1xf32>
    %cst_152 = arith.constant 0.000000e+00 : f32
    %398 = vector.broadcast %cst_152 : f32 to vector<8x1xf32>
    %399 = arith.subf %398, %397 : vector<8x1xf32>
    %400 = math.exp %399 : vector<8x1xf32>
    %cst_153 = arith.constant 1.000000e+00 : f32
    %401 = vector.broadcast %cst_153 : f32 to vector<8x1xf32>
    %402 = arith.addf %401, %400 : vector<8x1xf32>
    %403 = math.log %402 : vector<8x1xf32>
    %404 = arith.addf %396, %403 : vector<8x1xf32>
    %405 = arith.mulf %318, %404 : vector<8x1xf32>
    %cst_154 = arith.constant 1.000000e+00 : f32
    %406 = vector.broadcast %cst_154 : f32 to vector<8x1xf32>
    %407 = arith.subf %406, %318 : vector<8x1xf32>
    %cst_155 = arith.constant 0.000000e+00 : f32
    %408 = vector.broadcast %cst_155 : f32 to vector<8x1xf32>
    %409 = arith.maximumf %387, %408 : vector<8x1xf32>
    %410 = math.absf %387 : vector<8x1xf32>
    %cst_156 = arith.constant 0.000000e+00 : f32
    %411 = vector.broadcast %cst_156 : f32 to vector<8x1xf32>
    %412 = arith.subf %411, %410 : vector<8x1xf32>
    %413 = math.exp %412 : vector<8x1xf32>
    %cst_157 = arith.constant 1.000000e+00 : f32
    %414 = vector.broadcast %cst_157 : f32 to vector<8x1xf32>
    %415 = arith.addf %414, %413 : vector<8x1xf32>
    %416 = math.log %415 : vector<8x1xf32>
    %417 = arith.addf %409, %416 : vector<8x1xf32>
    %418 = arith.mulf %407, %417 : vector<8x1xf32>
    %419 = arith.addf %405, %418 : vector<8x1xf32>
    %cst_158 = arith.constant dense<0.000000e+00> : vector<1xf32>
    %420 = vector.multi_reduction <add>, %419, %cst_158 [0] : vector<8x1xf32> to vector<1xf32>
    %421 = vector.shape_cast %420 : vector<1xf32> to vector<1x1xf32>
    %cst_159 = arith.constant 1.250000e-01 : f32
    %422 = vector.broadcast %cst_159 : f32 to vector<1x1xf32>
    %423 = arith.mulf %421, %422 : vector<1x1xf32>
    %424 = arith.addf %279, %423 : vector<1x1xf32>
    %425 = arith.subf %392, %318 : vector<8x1xf32>
    %cst_160 = arith.constant 1.250000e-01 : f32
    %426 = vector.broadcast %cst_160 : f32 to vector<8x1xf32>
    %427 = arith.mulf %425, %426 : vector<8x1xf32>
    %428 = vector.broadcast %427 : vector<8x1xf32> to vector<8x2xf32>
    %429 = vector.broadcast %10 : vector<1x2xf32> to vector<8x2xf32>
    %430 = arith.mulf %428, %429 : vector<8x2xf32>
    %cst_161 = arith.constant dense<0.000000e+00> : vector<8x32xf32>
    %431 = tpu.matmul %430, %8, %cst_161 {dimension_numbers = #tpu.dot_dimension_numbers<[1], [0], [0], [1], [0, 0, 1, 1], [], []>} : vector<8x2xf32>, vector<2x32xf32>, vector<8x32xf32> -> vector<8x32xf32>
    %432 = arith.mulf %345, %431 : vector<8x32xf32>
    %cst_162 = arith.constant dense<0.000000e+00> : vector<8x32xf32>
    %433 = tpu.matmul %432, %7, %cst_162 {dimension_numbers = #tpu.dot_dimension_numbers<[1], [0], [0], [1], [0, 0, 1, 1], [], []>} : vector<8x32xf32>, vector<32x32xf32>, vector<8x32xf32> -> vector<8x32xf32>
    %434 = arith.mulf %336, %433 : vector<8x32xf32>
    %cst_163 = arith.constant dense<0.000000e+00> : vector<8x8xf32>
    %435 = tpu.matmul %434, %6, %cst_163 {dimension_numbers = #tpu.dot_dimension_numbers<[1], [0], [0], [1], [0, 0, 1, 1], [], []>} : vector<8x32xf32>, vector<32x8xf32>, vector<8x8xf32> -> vector<8x8xf32>
    %cst_164 = arith.constant dense<0.000000e+00> : vector<32x2xf32>
    %436 = tpu.matmul %346, %430, %cst_164 {dimension_numbers = #tpu.dot_dimension_numbers<[0], [0], [1], [1], [0, 1, 1, 1], [], []>} : vector<8x32xf32>, vector<8x2xf32>, vector<32x2xf32> -> vector<32x2xf32>
    %437 = arith.addf %292, %436 : vector<32x2xf32>
    %cst_165 = arith.constant dense<0.000000e+00> : vector<2xf32>
    %438 = vector.multi_reduction <add>, %430, %cst_165 [0] : vector<8x2xf32> to vector<2xf32>
    %439 = vector.shape_cast %438 : vector<2xf32> to vector<1x2xf32>
    %440 = arith.addf %295, %439 : vector<1x2xf32>
    %cst_166 = arith.constant dense<0.000000e+00> : vector<32x32xf32>
    %441 = tpu.matmul %337, %432, %cst_166 {dimension_numbers = #tpu.dot_dimension_numbers<[0], [0], [1], [1], [0, 1, 1, 1], [], []>} : vector<8x32xf32>, vector<8x32xf32>, vector<32x32xf32> -> vector<32x32xf32>
    %442 = arith.addf %297, %441 : vector<32x32xf32>
    %cst_167 = arith.constant dense<0.000000e+00> : vector<32xf32>
    %443 = vector.multi_reduction <add>, %432, %cst_167 [0] : vector<8x32xf32> to vector<32xf32>
    %444 = vector.shape_cast %443 : vector<32xf32> to vector<1x32xf32>
    %445 = arith.addf %300, %444 : vector<1x32xf32>
    %cst_168 = arith.constant dense<0.000000e+00> : vector<8x32xf32>
    %446 = tpu.matmul %328, %434, %cst_168 {dimension_numbers = #tpu.dot_dimension_numbers<[0], [0], [1], [1], [0, 1, 1, 1], [], []>} : vector<8x8xf32>, vector<8x32xf32>, vector<8x32xf32> -> vector<8x32xf32>
    %447 = arith.addf %302, %446 : vector<8x32xf32>
    %cst_169 = arith.constant dense<0.000000e+00> : vector<32xf32>
    %448 = vector.multi_reduction <add>, %434, %cst_169 [0] : vector<8x32xf32> to vector<32xf32>
    %449 = vector.shape_cast %448 : vector<32xf32> to vector<1x32xf32>
    %450 = arith.addf %305, %449 : vector<1x32xf32>
    %451 = vector.extract_strided_slice %435 {offsets = [0, 6], sizes = [8, 2], strides = [1, 1]} : vector<8x8xf32> to vector<8x2xf32>
    %cst_170 = arith.constant dense<0.000000e+00> : vector<2x2xf32>
    %452 = tpu.matmul %321, %451, %cst_170 {dimension_numbers = #tpu.dot_dimension_numbers<[0], [0], [1], [1], [0, 1, 1, 1], [], []>} : vector<8x2xf32>, vector<8x2xf32>, vector<2x2xf32> -> vector<2x2xf32>
    %453 = arith.addf %308, %452 : vector<2x2xf32>
    %cst_171 = arith.constant 1.000000e-03 : f32
    %454 = vector.broadcast %cst_171 : f32 to vector<1x2xf32>
    %455 = arith.mulf %454, %381 : vector<1x2xf32>
    %456 = arith.subf %311, %455 : vector<1x2xf32>
    %457 = arith.subf %10, %456 : vector<1x2xf32>
    %458 = arith.mulf %457, %457 : vector<1x2xf32>
    %cst_172 = arith.constant dense<0.000000e+00> : vector<1xf32>
    %459 = vector.multi_reduction <add>, %458, %cst_172 [1] : vector<1x2xf32> to vector<1xf32>
    %460 = vector.shape_cast %459 : vector<1xf32> to vector<1x1xf32>
    %461 = arith.subf %10, %456 : vector<1x2xf32>
    %cst_173 = arith.constant 2.000000e-03 : f32
    %462 = vector.broadcast %cst_173 : f32 to vector<1x2xf32>
    %463 = arith.mulf %462, %461 : vector<1x2xf32>
    %464 = vector.shape_cast %463 : vector<1x2xf32> to vector<1x2xf32>
    %465 = vector.broadcast %464 : vector<1x2xf32> to vector<8x2xf32>
    %466 = vector.shape_cast %463 : vector<1x2xf32> to vector<1x2xf32>
    %467 = vector.broadcast %466 : vector<1x2xf32> to vector<8x2xf32>
    %cst_174 = arith.constant 0.000000e+00 : f32
    %468 = vector.broadcast %cst_174 : f32 to vector<8x2xf32>
    %cst_175 = arith.constant 0.000000e+00 : f32
    %469 = vector.broadcast %cst_175 : f32 to vector<8x2xf32>
    %470 = tpu.concatenate %465, %467, %468, %469 in 1 : vector<8x2xf32>, vector<8x2xf32>, vector<8x2xf32>, vector<8x2xf32> -> vector<8x8xf32>
    %cst_176 = arith.constant dense<0.000000e+00> : vector<8x32xf32>
    %471 = tpu.matmul %470, %0, %cst_176 {dimension_numbers = #tpu.dot_dimension_numbers<[1], [0], [0], [1], [0, 0, 1, 1], [], []>} : vector<8x8xf32>, vector<8x32xf32>, vector<8x32xf32> -> vector<8x32xf32>
    %472 = arith.mulf %46, %471 : vector<8x32xf32>
    %cst_177 = arith.constant dense<0.000000e+00> : vector<8x32xf32>
    %473 = tpu.matmul %472, %2, %cst_177 {dimension_numbers = #tpu.dot_dimension_numbers<[1], [0], [0], [1], [0, 0, 1, 1], [], []>} : vector<8x32xf32>, vector<32x32xf32>, vector<8x32xf32> -> vector<8x32xf32>
    %474 = arith.mulf %55, %473 : vector<8x32xf32>
    %cst_178 = arith.constant dense<0.000000e+00> : vector<8x2xf32>
    %475 = tpu.matmul %474, %4, %cst_178 {dimension_numbers = #tpu.dot_dimension_numbers<[1], [0], [0], [1], [0, 0, 1, 1], [], []>} : vector<8x32xf32>, vector<32x2xf32>, vector<8x2xf32> -> vector<8x2xf32>
    %476 = vector.broadcast %13 : vector<1x2xf32> to vector<8x2xf32>
    %477 = arith.mulf %475, %476 : vector<8x2xf32>
    %cst_179 = arith.constant dense<0.000000e+00> : vector<8xf32>
    %478 = vector.multi_reduction <add>, %477, %cst_179 [1] : vector<8x2xf32> to vector<8xf32>
    %479 = vector.shape_cast %478 : vector<8xf32> to vector<8x1xf32>
    %480 = vector.broadcast %463 : vector<1x2xf32> to vector<8x2xf32>
    %481 = arith.mulf %59, %480 : vector<8x2xf32>
    %cst_180 = arith.constant dense<0.000000e+00> : vector<8xf32>
    %482 = vector.multi_reduction <add>, %481, %cst_180 [1] : vector<8x2xf32> to vector<8xf32>
    %483 = vector.shape_cast %482 : vector<8xf32> to vector<8x1xf32>
    %484 = arith.addf %479, %483 : vector<8x1xf32>
    %cst_181 = arith.constant 1.000000e+00 : f32
    %485 = vector.broadcast %cst_181 : f32 to vector<8x1xf32>
    %486 = arith.subf %485, %70 : vector<8x1xf32>
    %487 = arith.mulf %70, %486 : vector<8x1xf32>
    %488 = arith.mulf %487, %484 : vector<8x1xf32>
    %cst_182 = arith.constant 1.250000e-01 : f32
    %489 = vector.broadcast %cst_182 : f32 to vector<8x1xf32>
    %490 = arith.mulf %488, %489 : vector<8x1xf32>
    %491 = vector.broadcast %490 : vector<8x1xf32> to vector<8x2xf32>
    %492 = vector.broadcast %13 : vector<1x2xf32> to vector<8x2xf32>
    %493 = arith.mulf %491, %492 : vector<8x2xf32>
    %494 = vector.broadcast %73 : vector<8x1xf32> to vector<8x2xf32>
    %495 = vector.broadcast %463 : vector<1x2xf32> to vector<8x2xf32>
    %496 = arith.mulf %494, %495 : vector<8x2xf32>
    %497 = arith.addf %493, %496 : vector<8x2xf32>
    %cst_183 = arith.constant dense<0.000000e+00> : vector<8x32xf32>
    %498 = tpu.matmul %497, %8, %cst_183 {dimension_numbers = #tpu.dot_dimension_numbers<[1], [0], [0], [1], [0, 0, 1, 1], [], []>} : vector<8x2xf32>, vector<2x32xf32>, vector<8x32xf32> -> vector<8x32xf32>
    %499 = arith.mulf %55, %498 : vector<8x32xf32>
    %cst_184 = arith.constant dense<0.000000e+00> : vector<8x32xf32>
    %500 = tpu.matmul %499, %7, %cst_184 {dimension_numbers = #tpu.dot_dimension_numbers<[1], [0], [0], [1], [0, 0, 1, 1], [], []>} : vector<8x32xf32>, vector<32x32xf32>, vector<8x32xf32> -> vector<8x32xf32>
    %501 = arith.mulf %46, %500 : vector<8x32xf32>
    %cst_185 = arith.constant dense<0.000000e+00> : vector<8x8xf32>
    %502 = tpu.matmul %501, %6, %cst_185 {dimension_numbers = #tpu.dot_dimension_numbers<[1], [0], [0], [1], [0, 0, 1, 1], [], []>} : vector<8x32xf32>, vector<32x8xf32>, vector<8x8xf32> -> vector<8x8xf32>
    %cst_186 = arith.constant dense<0.000000e+00> : vector<32x2xf32>
    %503 = tpu.matmul %474, %76, %cst_186 {dimension_numbers = #tpu.dot_dimension_numbers<[0], [0], [1], [1], [0, 1, 1, 1], [], []>} : vector<8x32xf32>, vector<8x2xf32>, vector<32x2xf32> -> vector<32x2xf32>
    %504 = arith.addf %437, %503 : vector<32x2xf32>
    %cst_187 = arith.constant dense<0.000000e+00> : vector<32x2xf32>
    %505 = tpu.matmul %56, %497, %cst_187 {dimension_numbers = #tpu.dot_dimension_numbers<[0], [0], [1], [1], [0, 1, 1, 1], [], []>} : vector<8x32xf32>, vector<8x2xf32>, vector<32x2xf32> -> vector<32x2xf32>
    %506 = arith.addf %504, %505 : vector<32x2xf32>
    %cst_188 = arith.constant dense<0.000000e+00> : vector<2xf32>
    %507 = vector.multi_reduction <add>, %497, %cst_188 [0] : vector<8x2xf32> to vector<2xf32>
    %508 = vector.shape_cast %507 : vector<2xf32> to vector<1x2xf32>
    %509 = arith.addf %440, %508 : vector<1x2xf32>
    %cst_189 = arith.constant dense<0.000000e+00> : vector<32x32xf32>
    %510 = tpu.matmul %472, %78, %cst_189 {dimension_numbers = #tpu.dot_dimension_numbers<[0], [0], [1], [1], [0, 1, 1, 1], [], []>} : vector<8x32xf32>, vector<8x32xf32>, vector<32x32xf32> -> vector<32x32xf32>
    %511 = arith.addf %442, %510 : vector<32x32xf32>
    %cst_190 = arith.constant dense<0.000000e+00> : vector<32x32xf32>
    %512 = tpu.matmul %47, %499, %cst_190 {dimension_numbers = #tpu.dot_dimension_numbers<[0], [0], [1], [1], [0, 1, 1, 1], [], []>} : vector<8x32xf32>, vector<8x32xf32>, vector<32x32xf32> -> vector<32x32xf32>
    %513 = arith.addf %511, %512 : vector<32x32xf32>
    %cst_191 = arith.constant dense<0.000000e+00> : vector<32xf32>
    %514 = vector.multi_reduction <add>, %499, %cst_191 [0] : vector<8x32xf32> to vector<32xf32>
    %515 = vector.shape_cast %514 : vector<32xf32> to vector<1x32xf32>
    %516 = arith.addf %445, %515 : vector<1x32xf32>
    %cst_192 = arith.constant dense<0.000000e+00> : vector<8x32xf32>
    %517 = tpu.matmul %470, %80, %cst_192 {dimension_numbers = #tpu.dot_dimension_numbers<[0], [0], [1], [1], [0, 1, 1, 1], [], []>} : vector<8x8xf32>, vector<8x32xf32>, vector<8x32xf32> -> vector<8x32xf32>
    %518 = arith.addf %447, %517 : vector<8x32xf32>
    %cst_193 = arith.constant dense<0.000000e+00> : vector<8x32xf32>
    %519 = tpu.matmul %38, %501, %cst_193 {dimension_numbers = #tpu.dot_dimension_numbers<[0], [0], [1], [1], [0, 1, 1, 1], [], []>} : vector<8x8xf32>, vector<8x32xf32>, vector<8x32xf32> -> vector<8x32xf32>
    %520 = arith.addf %518, %519 : vector<8x32xf32>
    %cst_194 = arith.constant dense<0.000000e+00> : vector<32xf32>
    %521 = vector.multi_reduction <add>, %501, %cst_194 [0] : vector<8x32xf32> to vector<32xf32>
    %522 = vector.shape_cast %521 : vector<32xf32> to vector<1x32xf32>
    %523 = arith.addf %450, %522 : vector<1x32xf32>
    %524 = vector.extract_strided_slice %502 {offsets = [0, 6], sizes = [8, 2], strides = [1, 1]} : vector<8x8xf32> to vector<8x2xf32>
    %cst_195 = arith.constant dense<0.000000e+00> : vector<2x2xf32>
    %525 = tpu.matmul %31, %524, %cst_195 {dimension_numbers = #tpu.dot_dimension_numbers<[0], [0], [1], [1], [0, 1, 1, 1], [], []>} : vector<8x2xf32>, vector<8x2xf32>, vector<2x2xf32> -> vector<2x2xf32>
    %526 = arith.addf %453, %525 : vector<2x2xf32>
    %527 = arith.mulf %191, %471 : vector<8x32xf32>
    %cst_196 = arith.constant dense<0.000000e+00> : vector<8x32xf32>
    %528 = tpu.matmul %527, %2, %cst_196 {dimension_numbers = #tpu.dot_dimension_numbers<[1], [0], [0], [1], [0, 0, 1, 1], [], []>} : vector<8x32xf32>, vector<32x32xf32>, vector<8x32xf32> -> vector<8x32xf32>
    %529 = arith.mulf %200, %528 : vector<8x32xf32>
    %cst_197 = arith.constant dense<0.000000e+00> : vector<8x2xf32>
    %530 = tpu.matmul %529, %4, %cst_197 {dimension_numbers = #tpu.dot_dimension_numbers<[1], [0], [0], [1], [0, 0, 1, 1], [], []>} : vector<8x32xf32>, vector<32x2xf32>, vector<8x2xf32> -> vector<8x2xf32>
    %531 = vector.broadcast %166 : vector<1x2xf32> to vector<8x2xf32>
    %532 = arith.mulf %530, %531 : vector<8x2xf32>
    %cst_198 = arith.constant dense<0.000000e+00> : vector<8xf32>
    %533 = vector.multi_reduction <add>, %532, %cst_198 [1] : vector<8x2xf32> to vector<8xf32>
    %534 = vector.shape_cast %533 : vector<8xf32> to vector<8x1xf32>
    %535 = vector.broadcast %463 : vector<1x2xf32> to vector<8x2xf32>
    %536 = arith.mulf %204, %535 : vector<8x2xf32>
    %cst_199 = arith.constant dense<0.000000e+00> : vector<8xf32>
    %537 = vector.multi_reduction <add>, %536, %cst_199 [1] : vector<8x2xf32> to vector<8xf32>
    %538 = vector.shape_cast %537 : vector<8xf32> to vector<8x1xf32>
    %539 = arith.addf %534, %538 : vector<8x1xf32>
    %cst_200 = arith.constant 1.000000e+00 : f32
    %540 = vector.broadcast %cst_200 : f32 to vector<8x1xf32>
    %541 = arith.subf %540, %215 : vector<8x1xf32>
    %542 = arith.mulf %215, %541 : vector<8x1xf32>
    %543 = arith.mulf %542, %539 : vector<8x1xf32>
    %cst_201 = arith.constant 1.250000e-01 : f32
    %544 = vector.broadcast %cst_201 : f32 to vector<8x1xf32>
    %545 = arith.mulf %543, %544 : vector<8x1xf32>
    %546 = vector.broadcast %545 : vector<8x1xf32> to vector<8x2xf32>
    %547 = vector.broadcast %166 : vector<1x2xf32> to vector<8x2xf32>
    %548 = arith.mulf %546, %547 : vector<8x2xf32>
    %549 = vector.broadcast %218 : vector<8x1xf32> to vector<8x2xf32>
    %550 = vector.broadcast %463 : vector<1x2xf32> to vector<8x2xf32>
    %551 = arith.mulf %549, %550 : vector<8x2xf32>
    %552 = arith.addf %548, %551 : vector<8x2xf32>
    %cst_202 = arith.constant dense<0.000000e+00> : vector<8x32xf32>
    %553 = tpu.matmul %552, %8, %cst_202 {dimension_numbers = #tpu.dot_dimension_numbers<[1], [0], [0], [1], [0, 0, 1, 1], [], []>} : vector<8x2xf32>, vector<2x32xf32>, vector<8x32xf32> -> vector<8x32xf32>
    %554 = arith.mulf %200, %553 : vector<8x32xf32>
    %cst_203 = arith.constant dense<0.000000e+00> : vector<8x32xf32>
    %555 = tpu.matmul %554, %7, %cst_203 {dimension_numbers = #tpu.dot_dimension_numbers<[1], [0], [0], [1], [0, 0, 1, 1], [], []>} : vector<8x32xf32>, vector<32x32xf32>, vector<8x32xf32> -> vector<8x32xf32>
    %556 = arith.mulf %191, %555 : vector<8x32xf32>
    %cst_204 = arith.constant dense<0.000000e+00> : vector<8x8xf32>
    %557 = tpu.matmul %556, %6, %cst_204 {dimension_numbers = #tpu.dot_dimension_numbers<[1], [0], [0], [1], [0, 0, 1, 1], [], []>} : vector<8x32xf32>, vector<32x8xf32>, vector<8x8xf32> -> vector<8x8xf32>
    %cst_205 = arith.constant dense<0.000000e+00> : vector<32x2xf32>
    %558 = tpu.matmul %529, %221, %cst_205 {dimension_numbers = #tpu.dot_dimension_numbers<[0], [0], [1], [1], [0, 1, 1, 1], [], []>} : vector<8x32xf32>, vector<8x2xf32>, vector<32x2xf32> -> vector<32x2xf32>
    %559 = arith.addf %506, %558 : vector<32x2xf32>
    %cst_206 = arith.constant dense<0.000000e+00> : vector<32x2xf32>
    %560 = tpu.matmul %201, %552, %cst_206 {dimension_numbers = #tpu.dot_dimension_numbers<[0], [0], [1], [1], [0, 1, 1, 1], [], []>} : vector<8x32xf32>, vector<8x2xf32>, vector<32x2xf32> -> vector<32x2xf32>
    %561 = arith.addf %559, %560 : vector<32x2xf32>
    %cst_207 = arith.constant dense<0.000000e+00> : vector<2xf32>
    %562 = vector.multi_reduction <add>, %552, %cst_207 [0] : vector<8x2xf32> to vector<2xf32>
    %563 = vector.shape_cast %562 : vector<2xf32> to vector<1x2xf32>
    %564 = arith.addf %509, %563 : vector<1x2xf32>
    %cst_208 = arith.constant dense<0.000000e+00> : vector<32x32xf32>
    %565 = tpu.matmul %527, %223, %cst_208 {dimension_numbers = #tpu.dot_dimension_numbers<[0], [0], [1], [1], [0, 1, 1, 1], [], []>} : vector<8x32xf32>, vector<8x32xf32>, vector<32x32xf32> -> vector<32x32xf32>
    %566 = arith.addf %513, %565 : vector<32x32xf32>
    %cst_209 = arith.constant dense<0.000000e+00> : vector<32x32xf32>
    %567 = tpu.matmul %192, %554, %cst_209 {dimension_numbers = #tpu.dot_dimension_numbers<[0], [0], [1], [1], [0, 1, 1, 1], [], []>} : vector<8x32xf32>, vector<8x32xf32>, vector<32x32xf32> -> vector<32x32xf32>
    %568 = arith.addf %566, %567 : vector<32x32xf32>
    %cst_210 = arith.constant dense<0.000000e+00> : vector<32xf32>
    %569 = vector.multi_reduction <add>, %554, %cst_210 [0] : vector<8x32xf32> to vector<32xf32>
    %570 = vector.shape_cast %569 : vector<32xf32> to vector<1x32xf32>
    %571 = arith.addf %516, %570 : vector<1x32xf32>
    %cst_211 = arith.constant dense<0.000000e+00> : vector<8x32xf32>
    %572 = tpu.matmul %470, %225, %cst_211 {dimension_numbers = #tpu.dot_dimension_numbers<[0], [0], [1], [1], [0, 1, 1, 1], [], []>} : vector<8x8xf32>, vector<8x32xf32>, vector<8x32xf32> -> vector<8x32xf32>
    %573 = arith.addf %520, %572 : vector<8x32xf32>
    %cst_212 = arith.constant dense<0.000000e+00> : vector<8x32xf32>
    %574 = tpu.matmul %183, %556, %cst_212 {dimension_numbers = #tpu.dot_dimension_numbers<[0], [0], [1], [1], [0, 1, 1, 1], [], []>} : vector<8x8xf32>, vector<8x32xf32>, vector<8x32xf32> -> vector<8x32xf32>
    %575 = arith.addf %573, %574 : vector<8x32xf32>
    %cst_213 = arith.constant dense<0.000000e+00> : vector<32xf32>
    %576 = vector.multi_reduction <add>, %556, %cst_213 [0] : vector<8x32xf32> to vector<32xf32>
    %577 = vector.shape_cast %576 : vector<32xf32> to vector<1x32xf32>
    %578 = arith.addf %523, %577 : vector<1x32xf32>
    %579 = vector.extract_strided_slice %557 {offsets = [0, 6], sizes = [8, 2], strides = [1, 1]} : vector<8x8xf32> to vector<8x2xf32>
    %cst_214 = arith.constant dense<0.000000e+00> : vector<2x2xf32>
    %580 = tpu.matmul %176, %579, %cst_214 {dimension_numbers = #tpu.dot_dimension_numbers<[0], [0], [1], [1], [0, 1, 1, 1], [], []>} : vector<8x2xf32>, vector<8x2xf32>, vector<2x2xf32> -> vector<2x2xf32>
    %581 = arith.addf %526, %580 : vector<2x2xf32>
    %582 = arith.mulf %336, %471 : vector<8x32xf32>
    %cst_215 = arith.constant dense<0.000000e+00> : vector<8x32xf32>
    %583 = tpu.matmul %582, %2, %cst_215 {dimension_numbers = #tpu.dot_dimension_numbers<[1], [0], [0], [1], [0, 0, 1, 1], [], []>} : vector<8x32xf32>, vector<32x32xf32>, vector<8x32xf32> -> vector<8x32xf32>
    %584 = arith.mulf %345, %583 : vector<8x32xf32>
    %cst_216 = arith.constant dense<0.000000e+00> : vector<8x2xf32>
    %585 = tpu.matmul %584, %4, %cst_216 {dimension_numbers = #tpu.dot_dimension_numbers<[1], [0], [0], [1], [0, 0, 1, 1], [], []>} : vector<8x32xf32>, vector<32x2xf32>, vector<8x2xf32> -> vector<8x2xf32>
    %586 = vector.broadcast %311 : vector<1x2xf32> to vector<8x2xf32>
    %587 = arith.mulf %585, %586 : vector<8x2xf32>
    %cst_217 = arith.constant dense<0.000000e+00> : vector<8xf32>
    %588 = vector.multi_reduction <add>, %587, %cst_217 [1] : vector<8x2xf32> to vector<8xf32>
    %589 = vector.shape_cast %588 : vector<8xf32> to vector<8x1xf32>
    %590 = vector.broadcast %463 : vector<1x2xf32> to vector<8x2xf32>
    %591 = arith.mulf %349, %590 : vector<8x2xf32>
    %cst_218 = arith.constant dense<0.000000e+00> : vector<8xf32>
    %592 = vector.multi_reduction <add>, %591, %cst_218 [1] : vector<8x2xf32> to vector<8xf32>
    %593 = vector.shape_cast %592 : vector<8xf32> to vector<8x1xf32>
    %594 = arith.addf %589, %593 : vector<8x1xf32>
    %cst_219 = arith.constant 1.000000e+00 : f32
    %595 = vector.broadcast %cst_219 : f32 to vector<8x1xf32>
    %596 = arith.subf %595, %360 : vector<8x1xf32>
    %597 = arith.mulf %360, %596 : vector<8x1xf32>
    %598 = arith.mulf %597, %594 : vector<8x1xf32>
    %cst_220 = arith.constant 1.250000e-01 : f32
    %599 = vector.broadcast %cst_220 : f32 to vector<8x1xf32>
    %600 = arith.mulf %598, %599 : vector<8x1xf32>
    %601 = vector.broadcast %600 : vector<8x1xf32> to vector<8x2xf32>
    %602 = vector.broadcast %311 : vector<1x2xf32> to vector<8x2xf32>
    %603 = arith.mulf %601, %602 : vector<8x2xf32>
    %604 = vector.broadcast %363 : vector<8x1xf32> to vector<8x2xf32>
    %605 = vector.broadcast %463 : vector<1x2xf32> to vector<8x2xf32>
    %606 = arith.mulf %604, %605 : vector<8x2xf32>
    %607 = arith.addf %603, %606 : vector<8x2xf32>
    %cst_221 = arith.constant dense<0.000000e+00> : vector<8x32xf32>
    %608 = tpu.matmul %607, %8, %cst_221 {dimension_numbers = #tpu.dot_dimension_numbers<[1], [0], [0], [1], [0, 0, 1, 1], [], []>} : vector<8x2xf32>, vector<2x32xf32>, vector<8x32xf32> -> vector<8x32xf32>
    %609 = arith.mulf %345, %608 : vector<8x32xf32>
    %cst_222 = arith.constant dense<0.000000e+00> : vector<8x32xf32>
    %610 = tpu.matmul %609, %7, %cst_222 {dimension_numbers = #tpu.dot_dimension_numbers<[1], [0], [0], [1], [0, 0, 1, 1], [], []>} : vector<8x32xf32>, vector<32x32xf32>, vector<8x32xf32> -> vector<8x32xf32>
    %611 = arith.mulf %336, %610 : vector<8x32xf32>
    %cst_223 = arith.constant dense<0.000000e+00> : vector<8x8xf32>
    %612 = tpu.matmul %611, %6, %cst_223 {dimension_numbers = #tpu.dot_dimension_numbers<[1], [0], [0], [1], [0, 0, 1, 1], [], []>} : vector<8x32xf32>, vector<32x8xf32>, vector<8x8xf32> -> vector<8x8xf32>
    %cst_224 = arith.constant dense<0.000000e+00> : vector<32x2xf32>
    %613 = tpu.matmul %584, %366, %cst_224 {dimension_numbers = #tpu.dot_dimension_numbers<[0], [0], [1], [1], [0, 1, 1, 1], [], []>} : vector<8x32xf32>, vector<8x2xf32>, vector<32x2xf32> -> vector<32x2xf32>
    %614 = arith.addf %561, %613 : vector<32x2xf32>
    %cst_225 = arith.constant dense<0.000000e+00> : vector<32x2xf32>
    %615 = tpu.matmul %346, %607, %cst_225 {dimension_numbers = #tpu.dot_dimension_numbers<[0], [0], [1], [1], [0, 1, 1, 1], [], []>} : vector<8x32xf32>, vector<8x2xf32>, vector<32x2xf32> -> vector<32x2xf32>
    %616 = arith.addf %614, %615 : vector<32x2xf32>
    %cst_226 = arith.constant dense<0.000000e+00> : vector<2xf32>
    %617 = vector.multi_reduction <add>, %607, %cst_226 [0] : vector<8x2xf32> to vector<2xf32>
    %618 = vector.shape_cast %617 : vector<2xf32> to vector<1x2xf32>
    %619 = arith.addf %564, %618 : vector<1x2xf32>
    %cst_227 = arith.constant dense<0.000000e+00> : vector<32x32xf32>
    %620 = tpu.matmul %582, %368, %cst_227 {dimension_numbers = #tpu.dot_dimension_numbers<[0], [0], [1], [1], [0, 1, 1, 1], [], []>} : vector<8x32xf32>, vector<8x32xf32>, vector<32x32xf32> -> vector<32x32xf32>
    %621 = arith.addf %568, %620 : vector<32x32xf32>
    %cst_228 = arith.constant dense<0.000000e+00> : vector<32x32xf32>
    %622 = tpu.matmul %337, %609, %cst_228 {dimension_numbers = #tpu.dot_dimension_numbers<[0], [0], [1], [1], [0, 1, 1, 1], [], []>} : vector<8x32xf32>, vector<8x32xf32>, vector<32x32xf32> -> vector<32x32xf32>
    %623 = arith.addf %621, %622 : vector<32x32xf32>
    %cst_229 = arith.constant dense<0.000000e+00> : vector<32xf32>
    %624 = vector.multi_reduction <add>, %609, %cst_229 [0] : vector<8x32xf32> to vector<32xf32>
    %625 = vector.shape_cast %624 : vector<32xf32> to vector<1x32xf32>
    %626 = arith.addf %571, %625 : vector<1x32xf32>
    %cst_230 = arith.constant dense<0.000000e+00> : vector<8x32xf32>
    %627 = tpu.matmul %470, %370, %cst_230 {dimension_numbers = #tpu.dot_dimension_numbers<[0], [0], [1], [1], [0, 1, 1, 1], [], []>} : vector<8x8xf32>, vector<8x32xf32>, vector<8x32xf32> -> vector<8x32xf32>
    %628 = arith.addf %575, %627 : vector<8x32xf32>
    %cst_231 = arith.constant dense<0.000000e+00> : vector<8x32xf32>
    %629 = tpu.matmul %328, %611, %cst_231 {dimension_numbers = #tpu.dot_dimension_numbers<[0], [0], [1], [1], [0, 1, 1, 1], [], []>} : vector<8x8xf32>, vector<8x32xf32>, vector<8x32xf32> -> vector<8x32xf32>
    %630 = arith.addf %628, %629 : vector<8x32xf32>
    %cst_232 = arith.constant dense<0.000000e+00> : vector<32xf32>
    %631 = vector.multi_reduction <add>, %611, %cst_232 [0] : vector<8x32xf32> to vector<32xf32>
    %632 = vector.shape_cast %631 : vector<32xf32> to vector<1x32xf32>
    %633 = arith.addf %578, %632 : vector<1x32xf32>
    %634 = vector.extract_strided_slice %612 {offsets = [0, 6], sizes = [8, 2], strides = [1, 1]} : vector<8x8xf32> to vector<8x2xf32>
    %cst_233 = arith.constant dense<0.000000e+00> : vector<2x2xf32>
    %635 = tpu.matmul %321, %634, %cst_233 {dimension_numbers = #tpu.dot_dimension_numbers<[0], [0], [1], [1], [0, 1, 1, 1], [], []>} : vector<8x2xf32>, vector<8x2xf32>, vector<2x2xf32> -> vector<2x2xf32>
    %636 = arith.addf %581, %635 : vector<2x2xf32>
    %c3 = arith.constant 3 : index
    %637 = memref.load %arg0[%c3] : memref<4xi32, #tpu.memory_space<smem>>
    %c8_i32_234 = arith.constant 8 : i32
    %638 = arith.muli %637, %c8_i32_234 : i32
    %639 = tpu.assume_multiple %638, 8 : i32
    %640 = arith.index_cast %639 : i32 to index
    %c0_235 = arith.constant 0 : index
    %641 = vector.load %arg1[%640, %c0_235] : memref<64x2xf32, #tpu.memory_space<vmem>>, vector<8x2xf32>
    %642 = arith.index_cast %639 : i32 to index
    %c0_236 = arith.constant 0 : index
    %643 = vector.load %arg2[%642, %c0_236] : memref<64x1xf32, #tpu.memory_space<vmem>>, vector<8x1xf32>
    %cst_237 = arith.constant 1.000000e+00 : f32
    %644 = vector.broadcast %cst_237 : f32 to vector<8x1xf32>
    %645 = arith.subf %644, %643 : vector<8x1xf32>
    %646 = tpu.concatenate %645, %643 in 1 : vector<8x1xf32>, vector<8x1xf32> -> vector<8x2xf32>
    %cst_238 = arith.constant dense<0.000000e+00> : vector<8x2xf32>
    %647 = tpu.matmul %646, %9, %cst_238 {dimension_numbers = #tpu.dot_dimension_numbers<[1], [0], [0], [1], [0, 0, 1, 1], [], []>} : vector<8x2xf32>, vector<2x2xf32>, vector<8x2xf32> -> vector<8x2xf32>
    %648 = vector.shape_cast %456 : vector<1x2xf32> to vector<1x2xf32>
    %649 = vector.broadcast %648 : vector<1x2xf32> to vector<8x2xf32>
    %650 = arith.subf %456, %10 : vector<1x2xf32>
    %651 = vector.shape_cast %650 : vector<1x2xf32> to vector<1x2xf32>
    %652 = vector.broadcast %651 : vector<1x2xf32> to vector<8x2xf32>
    %653 = tpu.concatenate %649, %652, %641, %647 in 1 : vector<8x2xf32>, vector<8x2xf32>, vector<8x2xf32>, vector<8x2xf32> -> vector<8x8xf32>
    %cst_239 = arith.constant dense<0.000000e+00> : vector<8x32xf32>
    %654 = tpu.matmul %653, %0, %cst_239 {dimension_numbers = #tpu.dot_dimension_numbers<[1], [0], [0], [1], [0, 0, 1, 1], [], []>} : vector<8x8xf32>, vector<8x32xf32>, vector<8x32xf32> -> vector<8x32xf32>
    %655 = vector.broadcast %1 : vector<1x32xf32> to vector<8x32xf32>
    %656 = arith.addf %654, %655 : vector<8x32xf32>
    %cst_240 = arith.constant 0.000000e+00 : f32
    %657 = vector.broadcast %cst_240 : f32 to vector<8x32xf32>
    %658 = arith.cmpf ogt, %656, %657 : vector<8x32xf32>
    %cst_241 = arith.constant 1.000000e+00 : f32
    %cst_242 = arith.constant 2.000000e-01 : f32
    %659 = vector.broadcast %cst_241 : f32 to vector<8x32xf32>
    %660 = vector.broadcast %cst_242 : f32 to vector<8x32xf32>
    %661 = arith.select %658, %659, %660 : vector<8x32xi1>, vector<8x32xf32>
    %662 = arith.mulf %656, %661 : vector<8x32xf32>
    %cst_243 = arith.constant dense<0.000000e+00> : vector<8x32xf32>
    %663 = tpu.matmul %662, %2, %cst_243 {dimension_numbers = #tpu.dot_dimension_numbers<[1], [0], [0], [1], [0, 0, 1, 1], [], []>} : vector<8x32xf32>, vector<32x32xf32>, vector<8x32xf32> -> vector<8x32xf32>
    %664 = vector.broadcast %3 : vector<1x32xf32> to vector<8x32xf32>
    %665 = arith.addf %663, %664 : vector<8x32xf32>
    %cst_244 = arith.constant 0.000000e+00 : f32
    %666 = vector.broadcast %cst_244 : f32 to vector<8x32xf32>
    %667 = arith.cmpf ogt, %665, %666 : vector<8x32xf32>
    %cst_245 = arith.constant 1.000000e+00 : f32
    %cst_246 = arith.constant 2.000000e-01 : f32
    %668 = vector.broadcast %cst_245 : f32 to vector<8x32xf32>
    %669 = vector.broadcast %cst_246 : f32 to vector<8x32xf32>
    %670 = arith.select %667, %668, %669 : vector<8x32xi1>, vector<8x32xf32>
    %671 = arith.mulf %665, %670 : vector<8x32xf32>
    %cst_247 = arith.constant dense<0.000000e+00> : vector<8x2xf32>
    %672 = tpu.matmul %671, %4, %cst_247 {dimension_numbers = #tpu.dot_dimension_numbers<[1], [0], [0], [1], [0, 0, 1, 1], [], []>} : vector<8x32xf32>, vector<32x2xf32>, vector<8x2xf32> -> vector<8x2xf32>
    %673 = vector.broadcast %5 : vector<1x2xf32> to vector<8x2xf32>
    %674 = arith.addf %672, %673 : vector<8x2xf32>
    %c0_248 = arith.constant 0 : index
    %c0_249 = arith.constant 0 : index
    %675 = vector.load %arg17[%c0_248, %c0_249] : memref<2x2xf32, #tpu.memory_space<vmem>>, vector<2x2xf32>
    %c0_250 = arith.constant 0 : index
    %c0_251 = arith.constant 0 : index
    %676 = vector.load %arg18[%c0_250, %c0_251] : memref<4x32xf32, #tpu.memory_space<vmem>>, vector<4x32xf32>
    %c0_252 = arith.constant 0 : index
    %c0_253 = arith.constant 0 : index
    %677 = vector.load %arg19[%c0_252, %c0_253] : memref<1x32xf32, #tpu.memory_space<vmem>>, vector<1x32xf32>
    %c0_254 = arith.constant 0 : index
    %c0_255 = arith.constant 0 : index
    %678 = vector.load %arg20[%c0_254, %c0_255] : memref<32x4xf32, #tpu.memory_space<vmem>>, vector<32x4xf32>
    %c0_256 = arith.constant 0 : index
    %c0_257 = arith.constant 0 : index
    %679 = vector.load %arg21[%c0_256, %c0_257] : memref<1x32xf32, #tpu.memory_space<vmem>>, vector<1x32xf32>
    %c0_258 = arith.constant 0 : index
    %c0_259 = arith.constant 0 : index
    %680 = vector.load %arg22[%c0_258, %c0_259] : memref<1x1xf32, #tpu.memory_space<vmem>>, vector<1x1xf32>
    %c0_260 = arith.constant 0 : index
    %c0_261 = arith.constant 0 : index
    %681 = vector.load %arg23[%c0_260, %c0_261] : memref<8x1xf32, #tpu.memory_space<vmem>>, vector<8x1xf32>
    %cst_262 = arith.constant dense<0.000000e+00> : vector<8x2xf32>
    %682 = tpu.matmul %646, %675, %cst_262 {dimension_numbers = #tpu.dot_dimension_numbers<[1], [0], [0], [1], [0, 0, 1, 1], [], []>} : vector<8x2xf32>, vector<2x2xf32>, vector<8x2xf32> -> vector<8x2xf32>
    %683 = tpu.concatenate %674, %682 in 1 : vector<8x2xf32>, vector<8x2xf32> -> vector<8x4xf32>
    %cst_263 = arith.constant dense<0.000000e+00> : vector<8x32xf32>
    %684 = tpu.matmul %683, %676, %cst_263 {dimension_numbers = #tpu.dot_dimension_numbers<[1], [0], [0], [1], [0, 0, 1, 1], [], []>} : vector<8x4xf32>, vector<4x32xf32>, vector<8x32xf32> -> vector<8x32xf32>
    %685 = vector.broadcast %677 : vector<1x32xf32> to vector<8x32xf32>
    %686 = arith.addf %684, %685 : vector<8x32xf32>
    %cst_264 = arith.constant 0.000000e+00 : f32
    %687 = vector.broadcast %cst_264 : f32 to vector<8x32xf32>
    %688 = arith.cmpf ogt, %686, %687 : vector<8x32xf32>
    %cst_265 = arith.constant 1.000000e+00 : f32
    %cst_266 = arith.constant 2.000000e-01 : f32
    %689 = vector.broadcast %cst_265 : f32 to vector<8x32xf32>
    %690 = vector.broadcast %cst_266 : f32 to vector<8x32xf32>
    %691 = arith.select %688, %689, %690 : vector<8x32xi1>, vector<8x32xf32>
    %692 = arith.mulf %686, %691 : vector<8x32xf32>
    %693 = vector.broadcast %679 : vector<1x32xf32> to vector<8x32xf32>
    %694 = arith.mulf %692, %693 : vector<8x32xf32>
    %cst_267 = arith.constant dense<0.000000e+00> : vector<8xf32>
    %695 = vector.multi_reduction <add>, %694, %cst_267 [1] : vector<8x32xf32> to vector<8xf32>
    %696 = vector.shape_cast %695 : vector<8xf32> to vector<8x1xf32>
    %697 = vector.broadcast %680 : vector<1x1xf32> to vector<8x1xf32>
    %698 = arith.addf %696, %697 : vector<8x1xf32>
    %699 = arith.negf %698 : vector<8x1xf32>
    %700 = math.exp %699 : vector<8x1xf32>
    %cst_268 = arith.constant 1.000000e+00 : f32
    %701 = vector.broadcast %cst_268 : f32 to vector<8x1xf32>
    %702 = arith.addf %701, %700 : vector<8x1xf32>
    %703 = arith.divf %701, %702 : vector<8x1xf32>
    %cst_269 = arith.constant 0.000000e+00 : f32
    %704 = vector.broadcast %cst_269 : f32 to vector<8x1xf32>
    %705 = arith.subf %704, %698 : vector<8x1xf32>
    %cst_270 = arith.constant 0.000000e+00 : f32
    %706 = vector.broadcast %cst_270 : f32 to vector<8x1xf32>
    %707 = arith.maximumf %705, %706 : vector<8x1xf32>
    %708 = math.absf %705 : vector<8x1xf32>
    %cst_271 = arith.constant 0.000000e+00 : f32
    %709 = vector.broadcast %cst_271 : f32 to vector<8x1xf32>
    %710 = arith.subf %709, %708 : vector<8x1xf32>
    %711 = math.exp %710 : vector<8x1xf32>
    %cst_272 = arith.constant 1.000000e+00 : f32
    %712 = vector.broadcast %cst_272 : f32 to vector<8x1xf32>
    %713 = arith.addf %712, %711 : vector<8x1xf32>
    %714 = math.log %713 : vector<8x1xf32>
    %715 = arith.addf %707, %714 : vector<8x1xf32>
    %716 = arith.mulf %681, %715 : vector<8x1xf32>
    %cst_273 = arith.constant 1.000000e+00 : f32
    %717 = vector.broadcast %cst_273 : f32 to vector<8x1xf32>
    %718 = arith.subf %717, %681 : vector<8x1xf32>
    %cst_274 = arith.constant 0.000000e+00 : f32
    %719 = vector.broadcast %cst_274 : f32 to vector<8x1xf32>
    %720 = arith.maximumf %698, %719 : vector<8x1xf32>
    %721 = math.absf %698 : vector<8x1xf32>
    %cst_275 = arith.constant 0.000000e+00 : f32
    %722 = vector.broadcast %cst_275 : f32 to vector<8x1xf32>
    %723 = arith.subf %722, %721 : vector<8x1xf32>
    %724 = math.exp %723 : vector<8x1xf32>
    %cst_276 = arith.constant 1.000000e+00 : f32
    %725 = vector.broadcast %cst_276 : f32 to vector<8x1xf32>
    %726 = arith.addf %725, %724 : vector<8x1xf32>
    %727 = math.log %726 : vector<8x1xf32>
    %728 = arith.addf %720, %727 : vector<8x1xf32>
    %729 = arith.mulf %718, %728 : vector<8x1xf32>
    %730 = arith.addf %716, %729 : vector<8x1xf32>
    %cst_277 = arith.constant dense<0.000000e+00> : vector<1xf32>
    %731 = vector.multi_reduction <add>, %730, %cst_277 [0] : vector<8x1xf32> to vector<1xf32>
    %732 = vector.shape_cast %731 : vector<1xf32> to vector<1x1xf32>
    %cst_278 = arith.constant 1.250000e-01 : f32
    %733 = vector.broadcast %cst_278 : f32 to vector<1x1xf32>
    %734 = arith.mulf %732, %733 : vector<1x1xf32>
    %735 = arith.subf %703, %681 : vector<8x1xf32>
    %cst_279 = arith.constant 1.250000e-01 : f32
    %736 = vector.broadcast %cst_279 : f32 to vector<8x1xf32>
    %737 = arith.mulf %735, %736 : vector<8x1xf32>
    %738 = vector.broadcast %737 : vector<8x1xf32> to vector<8x32xf32>
    %739 = vector.broadcast %679 : vector<1x32xf32> to vector<8x32xf32>
    %740 = arith.mulf %738, %739 : vector<8x32xf32>
    %741 = arith.mulf %691, %740 : vector<8x32xf32>
    %cst_280 = arith.constant dense<0.000000e+00> : vector<8x4xf32>
    %742 = tpu.matmul %741, %678, %cst_280 {dimension_numbers = #tpu.dot_dimension_numbers<[1], [0], [0], [1], [0, 0, 1, 1], [], []>} : vector<8x32xf32>, vector<32x4xf32>, vector<8x4xf32> -> vector<8x4xf32>
    %743 = vector.extract_strided_slice %742 {offsets = [0, 0], sizes = [8, 2], strides = [1, 1]} : vector<8x4xf32> to vector<8x2xf32>
    %cst_281 = arith.constant dense<0.000000e+00> : vector<8x32xf32>
    %744 = tpu.matmul %743, %8, %cst_281 {dimension_numbers = #tpu.dot_dimension_numbers<[1], [0], [0], [1], [0, 0, 1, 1], [], []>} : vector<8x2xf32>, vector<2x32xf32>, vector<8x32xf32> -> vector<8x32xf32>
    %745 = arith.mulf %670, %744 : vector<8x32xf32>
    %cst_282 = arith.constant dense<0.000000e+00> : vector<8x32xf32>
    %746 = tpu.matmul %745, %7, %cst_282 {dimension_numbers = #tpu.dot_dimension_numbers<[1], [0], [0], [1], [0, 0, 1, 1], [], []>} : vector<8x32xf32>, vector<32x32xf32>, vector<8x32xf32> -> vector<8x32xf32>
    %747 = arith.mulf %661, %746 : vector<8x32xf32>
    %cst_283 = arith.constant dense<0.000000e+00> : vector<8x8xf32>
    %748 = tpu.matmul %747, %6, %cst_283 {dimension_numbers = #tpu.dot_dimension_numbers<[1], [0], [0], [1], [0, 0, 1, 1], [], []>} : vector<8x32xf32>, vector<32x8xf32>, vector<8x8xf32> -> vector<8x8xf32>
    %cst_284 = arith.constant dense<0.000000e+00> : vector<32x2xf32>
    %749 = tpu.matmul %671, %743, %cst_284 {dimension_numbers = #tpu.dot_dimension_numbers<[0], [0], [1], [1], [0, 1, 1, 1], [], []>} : vector<8x32xf32>, vector<8x2xf32>, vector<32x2xf32> -> vector<32x2xf32>
    %750 = arith.addf %616, %749 : vector<32x2xf32>
    %cst_285 = arith.constant dense<0.000000e+00> : vector<2xf32>
    %751 = vector.multi_reduction <add>, %743, %cst_285 [0] : vector<8x2xf32> to vector<2xf32>
    %752 = vector.shape_cast %751 : vector<2xf32> to vector<1x2xf32>
    %753 = arith.addf %619, %752 : vector<1x2xf32>
    %cst_286 = arith.constant dense<0.000000e+00> : vector<32x32xf32>
    %754 = tpu.matmul %662, %745, %cst_286 {dimension_numbers = #tpu.dot_dimension_numbers<[0], [0], [1], [1], [0, 1, 1, 1], [], []>} : vector<8x32xf32>, vector<8x32xf32>, vector<32x32xf32> -> vector<32x32xf32>
    %755 = arith.addf %623, %754 : vector<32x32xf32>
    %cst_287 = arith.constant dense<0.000000e+00> : vector<32xf32>
    %756 = vector.multi_reduction <add>, %745, %cst_287 [0] : vector<8x32xf32> to vector<32xf32>
    %757 = vector.shape_cast %756 : vector<32xf32> to vector<1x32xf32>
    %758 = arith.addf %626, %757 : vector<1x32xf32>
    %cst_288 = arith.constant dense<0.000000e+00> : vector<8x32xf32>
    %759 = tpu.matmul %653, %747, %cst_288 {dimension_numbers = #tpu.dot_dimension_numbers<[0], [0], [1], [1], [0, 1, 1, 1], [], []>} : vector<8x8xf32>, vector<8x32xf32>, vector<8x32xf32> -> vector<8x32xf32>
    %760 = arith.addf %630, %759 : vector<8x32xf32>
    %cst_289 = arith.constant dense<0.000000e+00> : vector<32xf32>
    %761 = vector.multi_reduction <add>, %747, %cst_289 [0] : vector<8x32xf32> to vector<32xf32>
    %762 = vector.shape_cast %761 : vector<32xf32> to vector<1x32xf32>
    %763 = arith.addf %633, %762 : vector<1x32xf32>
    %764 = vector.extract_strided_slice %748 {offsets = [0, 6], sizes = [8, 2], strides = [1, 1]} : vector<8x8xf32> to vector<8x2xf32>
    %cst_290 = arith.constant dense<0.000000e+00> : vector<2x2xf32>
    %765 = tpu.matmul %646, %764, %cst_290 {dimension_numbers = #tpu.dot_dimension_numbers<[0], [0], [1], [1], [0, 1, 1, 1], [], []>} : vector<8x2xf32>, vector<8x2xf32>, vector<2x2xf32> -> vector<2x2xf32>
    %766 = arith.addf %636, %765 : vector<2x2xf32>
    %767 = arith.addf %424, %460 : vector<1x1xf32>
    %768 = arith.addf %767, %734 : vector<1x1xf32>
    %769 = vector.shape_cast %768 : vector<1x1xf32> to vector<1x1xf32>
    %770 = vector.broadcast %769 : vector<1x1xf32> to vector<8x1xf32>
    %771 = vector.shape_cast %734 : vector<1x1xf32> to vector<1x1xf32>
    %772 = vector.broadcast %771 : vector<1x1xf32> to vector<8x1xf32>
    %773 = vector.shape_cast %456 : vector<1x2xf32> to vector<1x2xf32>
    %774 = vector.broadcast %773 : vector<1x2xf32> to vector<8x2xf32>
    %cst_291 = arith.constant 0.000000e+00 : f32
    %775 = vector.broadcast %cst_291 : f32 to vector<8x121xf32>
    %776 = tpu.concatenate %674, %703, %770, %772, %774, %775 in 1 : vector<8x2xf32>, vector<8x1xf32>, vector<8x1xf32>, vector<8x1xf32>, vector<8x2xf32>, vector<8x121xf32> -> vector<8x128xf32>
    %c0_292 = arith.constant 0 : index
    %c0_293 = arith.constant 0 : index
    %777 = vector.load %arg24[%c0_292, %c0_293] : memref<8x128xf32, #tpu.memory_space<vmem>>, vector<8x128xf32>
    tpu.vector_store %arg24[%c0_292, %c0_293], %776 {strides = array<i32>} : memref<8x128xf32, #tpu.memory_space<vmem>>, vector<8x128xf32>,
    %c0_294 = arith.constant 0 : index
    %c0_295 = arith.constant 0 : index
    %778 = vector.load %arg25[%c0_294, %c0_295] : memref<2x2xf32, #tpu.memory_space<vmem>>, vector<2x2xf32>
    tpu.vector_store %arg25[%c0_294, %c0_295], %766 {strides = array<i32>} : memref<2x2xf32, #tpu.memory_space<vmem>>, vector<2x2xf32>,
    %c0_296 = arith.constant 0 : index
    %c0_297 = arith.constant 0 : index
    %779 = vector.load %arg26[%c0_296, %c0_297] : memref<8x32xf32, #tpu.memory_space<vmem>>, vector<8x32xf32>
    tpu.vector_store %arg26[%c0_296, %c0_297], %760 {strides = array<i32>} : memref<8x32xf32, #tpu.memory_space<vmem>>, vector<8x32xf32>,
    %c0_298 = arith.constant 0 : index
    %c0_299 = arith.constant 0 : index
    %780 = vector.load %arg27[%c0_298, %c0_299] : memref<1x32xf32, #tpu.memory_space<vmem>>, vector<1x32xf32>
    tpu.vector_store %arg27[%c0_298, %c0_299], %763 {strides = array<i32>} : memref<1x32xf32, #tpu.memory_space<vmem>>, vector<1x32xf32>,
    %c0_300 = arith.constant 0 : index
    %c0_301 = arith.constant 0 : index
    %781 = vector.load %arg28[%c0_300, %c0_301] : memref<32x32xf32, #tpu.memory_space<vmem>>, vector<32x32xf32>
    tpu.vector_store %arg28[%c0_300, %c0_301], %755 {strides = array<i32>} : memref<32x32xf32, #tpu.memory_space<vmem>>, vector<32x32xf32>,
    %c0_302 = arith.constant 0 : index
    %c0_303 = arith.constant 0 : index
    %782 = vector.load %arg29[%c0_302, %c0_303] : memref<1x32xf32, #tpu.memory_space<vmem>>, vector<1x32xf32>
    tpu.vector_store %arg29[%c0_302, %c0_303], %758 {strides = array<i32>} : memref<1x32xf32, #tpu.memory_space<vmem>>, vector<1x32xf32>,
    %c0_304 = arith.constant 0 : index
    %c0_305 = arith.constant 0 : index
    %783 = vector.load %arg30[%c0_304, %c0_305] : memref<32x2xf32, #tpu.memory_space<vmem>>, vector<32x2xf32>
    tpu.vector_store %arg30[%c0_304, %c0_305], %750 {strides = array<i32>} : memref<32x2xf32, #tpu.memory_space<vmem>>, vector<32x2xf32>,
    %c0_306 = arith.constant 0 : index
    %c0_307 = arith.constant 0 : index
    %784 = vector.load %arg31[%c0_306, %c0_307] : memref<1x2xf32, #tpu.memory_space<vmem>>, vector<1x2xf32>
    tpu.vector_store %arg31[%c0_306, %c0_307], %753 {strides = array<i32>} : memref<1x2xf32, #tpu.memory_space<vmem>>, vector<1x2xf32>,
    return
  }
}

</mosaic_0001>

<llo_original>
// kernel: unrolled_optimizer_forward.1
$region0: #{unrolled_optimizer_forward.1}
  #allocation0 [shape = 'u32[]', space=smem, size = 0x4, offset = 0x4, fixed_abs, tag = 'smem constant byte address 0x4 - core index']
  #allocation1 [shape = 'u32[144,128]{1,0:T(1,128)}', space=vmem, size = 0x12000, scoped, tag = 'internal scratch']
  #allocation2 [shape = 'f32[1,1]{1,0:T(1,128)S(1)}', space=vmem, size = 0x200, scoped, tag = 'scoped memory for unrolled_optimizer_forward.1']
  #allocation3 [shape = 'f32[1,1]{1,0:T(1,128)S(1)}', space=vmem, size = 0x200, scoped, tag = 'scoped memory for unrolled_optimizer_forward.1']
  #allocation4 [shape = 'f32[1,1]{1,0:T(1,128)S(1)}', space=vmem, size = 0x200, scoped, tag = 'scoped memory for unrolled_optimizer_forward.1']
  %s0 = inlined_call_operand.smem [shape: u32[32], index: -1, kind: input, shape index: {}]
  %s1 = sld [smem:[%s0]]
  %s2 = scalar_lea.smem %s0, 1
  %s3 = sld [smem:[%s2]]
  %s4 = scalar_lea.smem %s0, 2
  %s5 = sld [smem:[%s4]]
  %s6 = scalar_lea.smem %s0, 3
  %s7 = sld [smem:[%s6]]
  %s8 = scalar_lea.smem %s0, 4
  %s9 = sld [smem:[%s8]]
  %s10 = scalar_lea.smem %s0, 5
  %s11 = sld [smem:[%s10]]
  %s12 = scalar_lea.smem %s0, 6
  %s13 = sld [smem:[%s12]]
  %s14 = scalar_lea.smem %s0, 7
  %s15 = sld [smem:[%s14]]
  %s16 = scalar_lea.smem %s0, 8
  %s17 = sld [smem:[%s16]]
  %s18 = scalar_lea.smem %s0, 9
  %s19 = sld [smem:[%s18]]
  %s20 = scalar_lea.smem %s0, 10
  %s21 = sld [smem:[%s20]]
  %s22 = scalar_lea.smem %s0, 11
  %s23 = sld [smem:[%s22]]
  %s24 = scalar_lea.smem %s0, 12
  %s25 = sld [smem:[%s24]]
  %s26 = scalar_lea.smem %s0, 13
  %s27 = sld [smem:[%s26]]
  %s28 = scalar_lea.smem %s0, 14
  %s29 = sld [smem:[%s28]]
  %s30 = scalar_lea.smem %s0, 15
  %s31 = sld [smem:[%s30]]
  %s32 = scalar_lea.smem %s0, 16
  %s33 = sld [smem:[%s32]]
  %s34 = scalar_lea.smem %s0, 17
  %s35 = sld [smem:[%s34]]
  %s36 = scalar_lea.smem %s0, 18
  %s37 = sld [smem:[%s36]]
  %s38 = scalar_lea.smem %s0, 19
  %s39 = sld [smem:[%s38]]
  %s40 = scalar_lea.smem %s0, 20
  %s41 = sld [smem:[%s40]]
  %s42 = scalar_lea.smem %s0, 21
  %s43 = sld [smem:[%s42]]
  %s44 = scalar_lea.smem %s0, 22
  %s45 = sld [smem:[%s44]]
  %s46 = scalar_lea.smem %s0, 23
  %s47 = sld [smem:[%s46]]
  %s48 = scalar_lea.smem %s0, 24
  %s49 = sld [smem:[%s48]]
  %s50 = scalar_lea.smem %s0, 25
  %s51 = sld [smem:[%s50]]
  %s52 = scalar_lea.smem %s0, 26
  %s53 = sld [smem:[%s52]]
  %s54 = scalar_lea.smem %s0, 27
  %s55 = sld [smem:[%s54]]
  %s56 = scalar_lea.smem %s0, 28
  %s57 = sld [smem:[%s56]]
  %s58 = scalar_lea.smem %s0, 29
  %s59 = sld [smem:[%s58]]
  %s60 = scalar_lea.smem %s0, 30
  %s61 = sld [smem:[%s60]]
  %s62 = scalar_lea.smem %s0, 31
  %s63 = sld [smem:[%s62]]
  %64 = xla_tuple %s49, %s51, %s53, %s55, %s57, %s59, %s61, %s63
  %s65 = sld [smem:[#allocation0]]
  $region166: #{unrolled_optimizer_forward.1} parent=0
    _
  %s67 = ssub.s32 1, %s65
  %s68 = scalar_select 0, %s67, %s65
  %v69 = vstv %s9
  %70 = vst [vmem:[#allocation2] sm:$0x1] %v69
  %v71 = vstv %s13
  %72 = vst [vmem:[#allocation3] sm:$0x1] %v71
  %v73 = vstv %s45
  %74 = vst [vmem:[#allocation4] sm:$0x1] %v73
  $region1: #{unrolled_optimizer_forward.1} parent=0
    #allocation5 [shape = 'u8[512]{0}', space=smem, size = 0x200, scoped, tag = 'input window, operand 0, single buffered']
    #allocation6 [shape = 's32[1]{0}', space=sflag, size = 0x4, scoped, tag = 'scoped memory for unrolled_optimizer_forward.1']
    #allocation7 [shape = 's32[1]{0}', space=sflag, size = 0x4, scoped, tag = 'scoped memory for unrolled_optimizer_forward.1']
    #allocation8 [shape = 'u8[1024]{0}', space=vmem, size = 0x400, scoped, tag = 'output window, operand 1, single buffered']
    #allocation9 [shape = 'u8[4096]{0}', space=vmem, size = 0x1000, scoped, tag = 'output window, operand 2, single buffered']
    #allocation10 [shape = 's32[1]{0}', space=sflag, size = 0x4, scoped, tag = 'scoped memory for unrolled_optimizer_forward.1']
    #allocation11 [shape = 'u8[512]{0}', space=vmem, size = 0x400, scoped, tag = 'output window, operand 3, single buffered']
    #allocation12 [shape = 'u8[16384]{0}', space=vmem, size = 0x4000, scoped, tag = 'output window, operand 4, single buffered']
    #allocation13 [shape = 's32[1]{0}', space=sflag, size = 0x4, scoped, tag = 'scoped memory for unrolled_optimizer_forward.1']
    #allocation14 [shape = 'u8[512]{0}', space=vmem, size = 0x400, scoped, tag = 'output window, operand 5, single buffered']
    #allocation15 [shape = 'u8[512]{0}', space=vmem, size = 0x400, scoped, tag = 'output window, operand 7, single buffered']
    #allocation16 [shape = 's32[1]{0}', space=sflag, size = 0x4, scoped, tag = 'scoped memory for unrolled_optimizer_forward.1']
    %75 = vsyncpa [#allocation7], 0
    %76 = vsyncpa [#allocation6], 0
    %77 = vsyncpa [#allocation10], 0
    %78 = vsyncpa [#allocation13], 0
    %79 = vsyncpa [#allocation16], 0
    // Predicated region
    $region2: #{unrolled_optimizer_forward.1} parent=1 // pred_check
      _
    $region3: #{unrolled_optimizer_forward.1} parent=1 // pred_check_branch
      %81 = sbr.rel (0) target = $region5
    $region4: #{unrolled_optimizer_forward.1} parent=1 // pred_region
      %s83 = ssub.s32 16, 16
      %84 = vsyncadd [#allocation7], %s83
      %s86 = sshll.u32 %s1, 4
      %s87 = int_to_ptr.vmem [resolvable:$true] %s86
      %89 = dma.vmem_to_smem %s87, 16, [#allocation5], [#allocation7]
    $region5: #{unrolled_optimizer_forward.1} parent=1 // pred_fallthru
      _
    // Predicated region
    $region6: #{unrolled_optimizer_forward.1} parent=1 // pred_check
      _
    $region7: #{unrolled_optimizer_forward.1} parent=1 // pred_check_branch
      %91 = sbr.rel (0) target = $region9
    $region8: #{unrolled_optimizer_forward.1} parent=1 // pred_region
      _
    $region9: #{unrolled_optimizer_forward.1} parent=1 // pred_fallthru
      _
    // Predicated region
    $region10: #{unrolled_optimizer_forward.1} parent=1 // pred_check
      _
    $region11: #{unrolled_optimizer_forward.1} parent=1 // pred_check_branch
      %93 = sbr.rel (0) target = $region13
    $region12: #{unrolled_optimizer_forward.1} parent=1 // pred_region
      _
    $region13: #{unrolled_optimizer_forward.1} parent=1 // pred_fallthru
      _
    // Predicated region
    $region14: #{unrolled_optimizer_forward.1} parent=1 // pred_check
      _
    $region15: #{unrolled_optimizer_forward.1} parent=1 // pred_check_branch
      %95 = sbr.rel (0) target = $region17
    $region16: #{unrolled_optimizer_forward.1} parent=1 // pred_region
      _
    $region17: #{unrolled_optimizer_forward.1} parent=1 // pred_fallthru
      _
    // Predicated region
    $region18: #{unrolled_optimizer_forward.1} parent=1 // pred_check
      _
    $region19: #{unrolled_optimizer_forward.1} parent=1 // pred_check_branch
      %97 = sbr.rel (0) target = $region21
    $region20: #{unrolled_optimizer_forward.1} parent=1 // pred_region
      _
    $region21: #{unrolled_optimizer_forward.1} parent=1 // pred_fallthru
      _
    // Predicated region
    $region22: #{unrolled_optimizer_forward.1} parent=1 // pred_check
      _
    $region23: #{unrolled_optimizer_forward.1} parent=1 // pred_check_branch
      %99 = sbr.rel (0) target = $region25
    $region24: #{unrolled_optimizer_forward.1} parent=1 // pred_region
      _
    $region25: #{unrolled_optimizer_forward.1} parent=1 // pred_fallthru
      _
    // Predicated region
    $region26: #{unrolled_optimizer_forward.1} parent=1 // pred_check
      _
    $region27: #{unrolled_optimizer_forward.1} parent=1 // pred_check_branch
      %101 = sbr.rel (0) target = $region29
    $region28: #{unrolled_optimizer_forward.1} parent=1 // pred_region
      _
    $region29: #{unrolled_optimizer_forward.1} parent=1 // pred_fallthru
      _
    // Predicated region
    $region30: #{unrolled_optimizer_forward.1} parent=1 // pred_check
      _
    $region31: #{unrolled_optimizer_forward.1} parent=1 // pred_check_branch
      %103 = sbr.rel (0) target = $region33
    $region32: #{unrolled_optimizer_forward.1} parent=1 // pred_region
      _
    $region33: #{unrolled_optimizer_forward.1} parent=1 // pred_fallthru
      _
    // Predicated region
    $region34: #{unrolled_optimizer_forward.1} parent=1 // pred_check
      _
    $region35: #{unrolled_optimizer_forward.1} parent=1 // pred_check_branch
      %105 = sbr.rel (0) target = $region37
    $region36: #{unrolled_optimizer_forward.1} parent=1 // pred_region
      _
    $region37: #{unrolled_optimizer_forward.1} parent=1 // pred_fallthru
      _
    // Predicated region
    $region38: #{unrolled_optimizer_forward.1} parent=1 // pred_check
      _
    $region39: #{unrolled_optimizer_forward.1} parent=1 // pred_check_branch
      %107 = sbr.rel (0) target = $region41
    $region40: #{unrolled_optimizer_forward.1} parent=1 // pred_region
      _
    $region41: #{unrolled_optimizer_forward.1} parent=1 // pred_fallthru
      _
    // Predicated region
    $region42: #{unrolled_optimizer_forward.1} parent=1 // pred_check
      _
    $region43: #{unrolled_optimizer_forward.1} parent=1 // pred_check_branch
      %109 = sbr.rel (0) target = $region45
    $region44: #{unrolled_optimizer_forward.1} parent=1 // pred_region
      _
    $region45: #{unrolled_optimizer_forward.1} parent=1 // pred_fallthru
      _
    // Predicated region
    $region46: #{unrolled_optimizer_forward.1} parent=1 // pred_check
      _
    $region47: #{unrolled_optimizer_forward.1} parent=1 // pred_check_branch
      %111 = sbr.rel (0) target = $region49
    $region48: #{unrolled_optimizer_forward.1} parent=1 // pred_region
      _
    $region49: #{unrolled_optimizer_forward.1} parent=1 // pred_fallthru
      _
    // Predicated region
    $region50: #{unrolled_optimizer_forward.1} parent=1 // pred_check
      _
    $region51: #{unrolled_optimizer_forward.1} parent=1 // pred_check_branch
      %113 = sbr.rel (0) target = $region53
    $region52: #{unrolled_optimizer_forward.1} parent=1 // pred_region
      _
    $region53: #{unrolled_optimizer_forward.1} parent=1 // pred_fallthru
      _
    // Predicated region
    $region54: #{unrolled_optimizer_forward.1} parent=1 // pred_check
      _
    $region55: #{unrolled_optimizer_forward.1} parent=1 // pred_check_branch
      %115 = sbr.rel (0) target = $region57
    $region56: #{unrolled_optimizer_forward.1} parent=1 // pred_region
      _
    $region57: #{unrolled_optimizer_forward.1} parent=1 // pred_fallthru
      _
    // Predicated region
    $region58: #{unrolled_optimizer_forward.1} parent=1 // pred_check
      _
    $region59: #{unrolled_optimizer_forward.1} parent=1 // pred_check_branch
      %117 = sbr.rel (0) target = $region61
    $region60: #{unrolled_optimizer_forward.1} parent=1 // pred_region
      _
    $region61: #{unrolled_optimizer_forward.1} parent=1 // pred_fallthru
      _
    // Predicated region
    $region62: #{unrolled_optimizer_forward.1} parent=1 // pred_check
      _
    $region63: #{unrolled_optimizer_forward.1} parent=1 // pred_check_branch
      %119 = sbr.rel (0) target = $region65
    $region64: #{unrolled_optimizer_forward.1} parent=1 // pred_region
      _
    $region65: #{unrolled_optimizer_forward.1} parent=1 // pred_fallthru
      _
    // Predicated region
    $region66: #{unrolled_optimizer_forward.1} parent=1 // pred_check
      _
    $region67: #{unrolled_optimizer_forward.1} parent=1 // pred_check_branch
      %121 = sbr.rel (0) target = $region69
    $region68: #{unrolled_optimizer_forward.1} parent=1 // pred_region
      _
    $region69: #{unrolled_optimizer_forward.1} parent=1 // pred_fallthru
      _
    // Predicated region
    $region70: #{unrolled_optimizer_forward.1} parent=1 // pred_check
      _
    $region71: #{unrolled_optimizer_forward.1} parent=1 // pred_check_branch
      %123 = sbr.rel (0) target = $region73
    $region72: #{unrolled_optimizer_forward.1} parent=1 // pred_region
      _
    $region73: #{unrolled_optimizer_forward.1} parent=1 // pred_fallthru
      _
    // Predicated region
    $region74: #{unrolled_optimizer_forward.1} parent=1 // pred_check
      _
    $region75: #{unrolled_optimizer_forward.1} parent=1 // pred_check_branch
      %125 = sbr.rel (0) target = $region77
    $region76: #{unrolled_optimizer_forward.1} parent=1 // pred_region
      _
    $region77: #{unrolled_optimizer_forward.1} parent=1 // pred_fallthru
      _
    // Predicated region
    $region78: #{unrolled_optimizer_forward.1} parent=1 // pred_check
      _
    $region79: #{unrolled_optimizer_forward.1} parent=1 // pred_check_branch
      %127 = sbr.rel (0) target = $region81
    $region80: #{unrolled_optimizer_forward.1} parent=1 // pred_region
      _
    $region81: #{unrolled_optimizer_forward.1} parent=1 // pred_fallthru
      _
    // Predicated region
    $region82: #{unrolled_optimizer_forward.1} parent=1 // pred_check
      _
    $region83: #{unrolled_optimizer_forward.1} parent=1 // pred_check_branch
      %129 = sbr.rel (0) target = $region85
    $region84: #{unrolled_optimizer_forward.1} parent=1 // pred_region
      _
    $region85: #{unrolled_optimizer_forward.1} parent=1 // pred_fallthru
      _
    // Predicated region
    $region86: #{unrolled_optimizer_forward.1} parent=1 // pred_check
      _
    $region87: #{unrolled_optimizer_forward.1} parent=1 // pred_check_branch
      %131 = sbr.rel (0) target = $region89
    $region88: #{unrolled_optimizer_forward.1} parent=1 // pred_region
      _
    $region89: #{unrolled_optimizer_forward.1} parent=1 // pred_fallthru
      _
    // Predicated region
    $region90: #{unrolled_optimizer_forward.1} parent=1 // pred_check
      _
    $region91: #{unrolled_optimizer_forward.1} parent=1 // pred_check_branch
      %133 = sbr.rel (0) target = $region93
    $region92: #{unrolled_optimizer_forward.1} parent=1 // pred_region
      _
    $region93: #{unrolled_optimizer_forward.1} parent=1 // pred_fallthru
      _
    // Predicated region
    $region94: #{unrolled_optimizer_forward.1} parent=1 // pred_check
      _
    $region95: #{unrolled_optimizer_forward.1} parent=1 // pred_check_branch
      %135 = sbr.rel (0) target = $region97
    $region96: #{unrolled_optimizer_forward.1} parent=1 // pred_region
      _
    $region97: #{unrolled_optimizer_forward.1} parent=1 // pred_fallthru
      _
    // Predicated region
    $region98: #{unrolled_optimizer_forward.1} parent=1 // pred_check
      _
    $region99: #{unrolled_optimizer_forward.1} parent=1 // pred_check_branch
      %137 = sbr.rel (0) target = $region101
    $region100: #{unrolled_optimizer_forward.1} parent=1 // pred_region
      %138 = dma.done [#allocation7], 16
    $region101: #{unrolled_optimizer_forward.1} parent=1 // pred_fallthru
      _
    %139 = sfence
    %v140 = vld [vmem:[%s17] sm:$0xff]
    %v141 = vld [vmem:[%s19] sm:$0x1]
    %v142 = vld [vmem:[%s21] sm:$0xff]
    %v143 = vld [vmem:[%s21 + $0x8] sm:$0xff]
    %v144 = vld [vmem:[%s21 + $0x10] sm:$0xff]
    %v145 = vld [vmem:[%s21 + $0x18] sm:$0xff]
    %v146 = vld [vmem:[%s23] sm:$0x1]
    %v147 = vld [vmem:[%s25] sm:$0xff]
    %v148 = vld [vmem:[%s25 + $0x8] sm:$0xff]
    %v149 = vld [vmem:[%s25 + $0x10] sm:$0xff]
    %v150 = vld [vmem:[%s25 + $0x18] sm:$0xff]
    %v151 = vld [vmem:[%s27] sm:$0x1]
    %v152 = vld [vmem:[%s29] sm:$0xff]
    %v153 = vld [vmem:[%s29 + $0x8] sm:$0xff]
    %v154 = vld [vmem:[%s29 + $0x10] sm:$0xff]
    %v155 = vld [vmem:[%s29 + $0x18] sm:$0xff]
    %v156 = vld [vmem:[%s31] sm:$0xff]
    %v157 = vld [vmem:[%s31 + $0x8] sm:$0xff]
    %v158 = vld [vmem:[%s31 + $0x10] sm:$0xff]
    %v159 = vld [vmem:[%s31 + $0x18] sm:$0xff]
    %v160 = vld [vmem:[%s33] sm:$0x3]
    %v161 = vld [vmem:[%s15] sm:$0x3]
    %v162 = vld [vmem:[%s11] sm:$0x1]
    %v163 = vld [vmem:[#allocation2] sm:$0x1]
    %v164 = vld [vmem:[#allocation3] sm:$0x1]
    %v165 = vld [vmem:[%s7] sm:$0x1]
    %s166 = sld [smem:[#allocation5]]
    %s167 = smul.u32 %s166, 8
    %s168 = scalar_lea.vmem %s3, %s167
    %v169 = vld [vmem:[%s168] sm:$0xff]
    %s170 = scalar_lea.vmem %s5, %s167
    %v171 = vld [vmem:[%s170] sm:$0xff]
    %v172 = vsub.f32 1.0, %v171
    %174 = vrot.lane.b32.xlu0 %v171, 1
    %v175 = vpop.permute.xlu0 %174
    %vm177 = vcmask 7168
    %v178 = vsel %vm177, %v172, %v175
    %vm179 = vcmask 15360
    %v181 = vsel %vm179, %v178, 0
    %vm183 = vcmask 1041408
    %v185 = vsel %vm183, %v161, 0
    %187 = vmatprep.subr.mxu0 0.0
    %188 = vmatpush1.msra.mxu0 0.0
    %189 = vmatprep.subr.mxu0 0.0
    %190 = vmatpush1.msra.mxu0 0.0
    %191 = vmatprep.subr.mxu0 0.0
    %192 = vmatpush1.msra.mxu0 0.0
    %193 = vmatprep.subr.mxu0 0.0
    %194 = vmatpush1.msra.mxu0 0.0
    %195 = vmatprep.subr.mxu0 0.0
    %196 = vmatpush1.msra.mxu0 0.0
    %197 = vmatprep.subr.mxu0 0.0
    %198 = vmatpush1.msra.mxu0 0.0
    %199 = vmatprep.subr.mxu0 0.0
    %200 = vmatpush1.msra.mxu0 0.0
    %201 = vmatprep.subr.mxu0 0.0
    %202 = vmatpush1.msra.mxu0 0.0
    %203 = vmatprep.subr.mxu0 0.0
    %204 = vmatpush1.msra.mxu0 0.0
    %205 = vmatprep.subr.mxu0 0.0
    %206 = vmatpush1.msra.mxu0 0.0
    %207 = vmatprep.subr.mxu0 0.0
    %208 = vmatpush1.msra.mxu0 0.0
    %209 = vmatprep.subr.mxu0 0.0
    %210 = vmatpush1.msra.mxu0 0.0
    %211 = vmatprep.subr.mxu0 0.0
    %212 = vmatpush1.msra.mxu0 0.0
    %213 = vmatprep.subr.mxu0 0.0
    %214 = vmatpush1.msra.mxu0 0.0
    %215 = vmatprep.subr.mxu0 0.0
    %216 = vmatpush1.msra.mxu0 0.0
    %217 = vmatprep.subr.mxu0 0.0
    %218 = vmatpush1.msra.mxu0 %v185
    %219 = vmatprep.subr.mxu0 0.0
    %220 = vmatpush2.msra.mxu0 0.0
    %221 = vmatprep.subr.mxu0 0.0
    %222 = vmatpush2.msra.mxu0 0.0
    %223 = vmatprep.subr.mxu0 0.0
    %224 = vmatpush2.msra.mxu0 0.0
    %225 = vmatprep.subr.mxu0 0.0
    %226 = vmatpush2.msra.mxu0 0.0
    %227 = vmatprep.subr.mxu0 0.0
    %228 = vmatpush2.msra.mxu0 0.0
    %229 = vmatprep.subr.mxu0 0.0
    %230 = vmatpush2.msra.mxu0 0.0
    %231 = vmatprep.subr.mxu0 0.0
    %232 = vmatpush2.msra.mxu0 0.0
    %233 = vmatprep.subr.mxu0 0.0
    %234 = vmatpush2.msra.mxu0 0.0
    %235 = vmatprep.subr.mxu0 0.0
    %236 = vmatpush2.msra.mxu0 0.0
    %237 = vmatprep.subr.mxu0 0.0
    %238 = vmatpush2.msra.mxu0 0.0
    %239 = vmatprep.subr.mxu0 0.0
    %240 = vmatpush2.msra.mxu0 0.0
    %241 = vmatprep.subr.mxu0 0.0
    %242 = vmatpush2.msra.mxu0 0.0
    %243 = vmatprep.subr.mxu0 0.0
    %244 = vmatpush2.msra.mxu0 0.0
    %245 = vmatprep.subr.mxu0 0.0
    %246 = vmatpush2.msra.mxu0 0.0
    %247 = vmatprep.subr.mxu0 0.0
    %248 = vmatpush2.msra.mxu0 0.0
    %249 = vmatprep.subr.mxu0 0.0
    %250 = vmatpush2.msra.mxu0 0.0
    %251 = vmatprep.mubr.f32.mxu0 0.0
    %252 = vmatmul.mubr.f32.gmra.mxu0 %v181
    %v253 = vpop.f32.mrf.mxu0
    %v254 = vadd.f32 0.0, %v253
    %v255 = vpop.f32.mrf.mxu0
    %256 = vdwg.mxu0
    %v258 = vlaneseq
    %v259 = vshrl.u32 %v258, 7
    %v260 = vsub.s32 0, %v259
    %v261 = vrot.slane %v165, %v260
    %v263 = vsub.f32 %v165, %v162
    %v265 = vlaneseq
    %v266 = vshrl.u32 %v265, 7
    %v267 = vsub.s32 0, %v266
    %v268 = vrot.slane %v263, %v267
    %269 = vrot.lane.b32.xlu0 %v268, 2
    %v270 = vpop.permute.xlu0 %269
    %273 = vrot.lane.b32.xlu0 %v169, 4
    %v274 = vpop.permute.xlu0 %273
    %277 = vrot.lane.b32.xlu0 %v254, 6
    %v278 = vpop.permute.xlu0 %277
    %v280 = vsel %vm179, %v261, %v270
    %vm281 = vcmask 31744
    %v282 = vsel %vm281, %v280, %v274
    %vm283 = vcmask 48128
    %v284 = vsel %vm283, %v282, %v278
    %v286 = vlaneseq
    %v287 = vshrl.u32 %v286, 7
    %v288 = vsub.s32 0, %v287
    %v289 = vrot.slane %v141, %v288
    %vm291 = vcmask 64512
    %v293 = vsel %vm291, %v284, 0
    %295 = vmatprep.subr.mxu0 0.0
    %296 = vmatpush1.msra.mxu0 0.0
    %297 = vmatprep.subr.mxu0 0.0
    %298 = vmatpush1.msra.mxu0 0.0
    %299 = vmatprep.subr.mxu0 0.0
    %300 = vmatpush1.msra.mxu0 0.0
    %301 = vmatprep.subr.mxu0 0.0
    %302 = vmatpush1.msra.mxu0 0.0
    %303 = vmatprep.subr.mxu0 0.0
    %304 = vmatpush1.msra.mxu0 0.0
    %305 = vmatprep.subr.mxu0 0.0
    %306 = vmatpush1.msra.mxu0 0.0
    %307 = vmatprep.subr.mxu0 0.0
    %308 = vmatpush1.msra.mxu0 0.0
    %309 = vmatprep.subr.mxu0 0.0
    %310 = vmatpush1.msra.mxu0 0.0
    %311 = vmatprep.subr.mxu0 0.0
    %312 = vmatpush1.msra.mxu0 0.0
    %313 = vmatprep.subr.mxu0 0.0
    %314 = vmatpush1.msra.mxu0 0.0
    %315 = vmatprep.subr.mxu0 0.0
    %316 = vmatpush1.msra.mxu0 0.0
    %317 = vmatprep.subr.mxu0 0.0
    %318 = vmatpush1.msra.mxu0 0.0
    %319 = vmatprep.subr.mxu0 0.0
    %320 = vmatpush1.msra.mxu0 0.0
    %321 = vmatprep.subr.mxu0 0.0
    %322 = vmatpush1.msra.mxu0 0.0
    %323 = vmatprep.subr.mxu0 0.0
    %324 = vmatpush1.msra.mxu0 0.0
    %325 = vmatprep.subr.mxu0 0.0
    %326 = vmatpush1.msra.mxu0 %v140
    %327 = vmatprep.subr.mxu0 0.0
    %328 = vmatpush2.msra.mxu0 0.0
    %329 = vmatprep.subr.mxu0 0.0
    %330 = vmatpush2.msra.mxu0 0.0
    %331 = vmatprep.subr.mxu0 0.0
    %332 = vmatpush2.msra.mxu0 0.0
    %333 = vmatprep.subr.mxu0 0.0
    %334 = vmatpush2.msra.mxu0 0.0
    %335 = vmatprep.subr.mxu0 0.0
    %336 = vmatpush2.msra.mxu0 0.0
    %337 = vmatprep.subr.mxu0 0.0
    %338 = vmatpush2.msra.mxu0 0.0
    %339 = vmatprep.subr.mxu0 0.0
    %340 = vmatpush2.msra.mxu0 0.0
    %341 = vmatprep.subr.mxu0 0.0
    %342 = vmatpush2.msra.mxu0 0.0
    %343 = vmatprep.subr.mxu0 0.0
    %344 = vmatpush2.msra.mxu0 0.0
    %345 = vmatprep.subr.mxu0 0.0
    %346 = vmatpush2.msra.mxu0 0.0
    %347 = vmatprep.subr.mxu0 0.0
    %348 = vmatpush2.msra.mxu0 0.0
    %349 = vmatprep.subr.mxu0 0.0
    %350 = vmatpush2.msra.mxu0 0.0
    %351 = vmatprep.subr.mxu0 0.0
    %352 = vmatpush2.msra.mxu0 0.0
    %353 = vmatprep.subr.mxu0 0.0
    %354 = vmatpush2.msra.mxu0 0.0
    %355 = vmatprep.subr.mxu0 0.0
    %356 = vmatpush2.msra.mxu0 0.0
    %357 = vmatprep.subr.mxu0 0.0
    %358 = vmatpush2.msra.mxu0 0.0
    %359 = vmatprep.mubr.f32.mxu0 0.0
    %360 = vmatmul.mubr.f32.gmra.mxu0 %v293
    %v361 = vpop.f32.mrf.mxu0
    %v362 = vadd.f32 %v289, %v361
    %v363 = vpop.f32.mrf.mxu0
    %364 = vdwg.mxu0
    %vm365 = vcmp.gt.f32.partialorder %v362, 0.0
    %v366 = vsel %vm365, 1.0, 0.2
    %v367 = vmul.f32 %v362, %v366
    %v369 = vlaneseq
    %v370 = vshrl.u32 %v369, 7
    %v371 = vsub.s32 0, %v370
    %v372 = vrot.slane %v146, %v371
    %vm374 = vcmask 261120
    %v376 = vsel %vm374, %v367, 0
    %378 = vmatprep.subr.mxu0 0.0
    %379 = vmatpush1.msra.mxu0 0.0
    %380 = vmatprep.subr.mxu0 0.0
    %381 = vmatpush1.msra.mxu0 0.0
    %382 = vmatprep.subr.mxu0 0.0
    %383 = vmatpush1.msra.mxu0 0.0
    %384 = vmatprep.subr.mxu0 0.0
    %385 = vmatpush1.msra.mxu0 0.0
    %386 = vmatprep.subr.mxu0 0.0
    %387 = vmatpush1.msra.mxu0 0.0
    %388 = vmatprep.subr.mxu0 0.0
    %389 = vmatpush1.msra.mxu0 0.0
    %390 = vmatprep.subr.mxu0 0.0
    %391 = vmatpush1.msra.mxu0 0.0
    %392 = vmatprep.subr.mxu0 0.0
    %393 = vmatpush1.msra.mxu0 0.0
    %394 = vmatprep.subr.mxu0 0.0
    %395 = vmatpush1.msra.mxu0 0.0
    %396 = vmatprep.subr.mxu0 0.0
    %397 = vmatpush1.msra.mxu0 0.0
    %398 = vmatprep.subr.mxu0 0.0
    %399 = vmatpush1.msra.mxu0 0.0
    %400 = vmatprep.subr.mxu0 0.0
    %401 = vmatpush1.msra.mxu0 0.0
    %402 = vmatprep.subr.mxu0 0.0
    %403 = vmatpush1.msra.mxu0 %v145
    %404 = vmatprep.subr.mxu0 0.0
    %405 = vmatpush1.msra.mxu0 %v144
    %406 = vmatprep.subr.mxu0 0.0
    %407 = vmatpush1.msra.mxu0 %v143
    %408 = vmatprep.subr.mxu0 0.0
    %409 = vmatpush1.msra.mxu0 %v142
    %410 = vmatprep.subr.mxu0 0.0
    %411 = vmatpush2.msra.mxu0 0.0
    %412 = vmatprep.subr.mxu0 0.0
    %413 = vmatpush2.msra.mxu0 0.0
    %414 = vmatprep.subr.mxu0 0.0
    %415 = vmatpush2.msra.mxu0 0.0
    %416 = vmatprep.subr.mxu0 0.0
    %417 = vmatpush2.msra.mxu0 0.0
    %418 = vmatprep.subr.mxu0 0.0
    %419 = vmatpush2.msra.mxu0 0.0
    %420 = vmatprep.subr.mxu0 0.0
    %421 = vmatpush2.msra.mxu0 0.0
    %422 = vmatprep.subr.mxu0 0.0
    %423 = vmatpush2.msra.mxu0 0.0
    %424 = vmatprep.subr.mxu0 0.0
    %425 = vmatpush2.msra.mxu0 0.0
    %426 = vmatprep.subr.mxu0 0.0
    %427 = vmatpush2.msra.mxu0 0.0
    %428 = vmatprep.subr.mxu0 0.0
    %429 = vmatpush2.msra.mxu0 0.0
    %430 = vmatprep.subr.mxu0 0.0
    %431 = vmatpush2.msra.mxu0 0.0
    %432 = vmatprep.subr.mxu0 0.0
    %433 = vmatpush2.msra.mxu0 0.0
    %434 = vmatprep.subr.mxu0 0.0
    %435 = vmatpush2.msra.mxu0 0.0
    %436 = vmatprep.subr.mxu0 0.0
    %437 = vmatpush2.msra.mxu0 0.0
    %438 = vmatprep.subr.mxu0 0.0
    %439 = vmatpush2.msra.mxu0 0.0
    %440 = vmatprep.subr.mxu0 0.0
    %441 = vmatpush2.msra.mxu0 0.0
    %442 = vmatprep.mubr.f32.mxu0 0.0
    %443 = vmatmul.mubr.f32.gmra.mxu0 %v376
    %v444 = vpop.f32.mrf.mxu0
    %v445 = vadd.f32 %v372, %v444
    %v446 = vpop.f32.mrf.mxu0
    %447 = vdwg.mxu0
    %vm448 = vcmp.gt.f32.partialorder %v445, 0.0
    %v449 = vsel %vm448, 1.0, 0.2
    %v450 = vmul.f32 %v445, %v449
    %v452 = vlaneseq
    %v453 = vshrl.u32 %v452, 7
    %v454 = vsub.s32 0, %v453
    %v455 = vrot.slane %v151, %v454
    %v458 = vsel %vm374, %v450, 0
    %460 = vmatprep.subr.mxu0 0.0
    %461 = vmatpush1.msra.mxu0 0.0
    %462 = vmatprep.subr.mxu0 0.0
    %463 = vmatpush1.msra.mxu0 0.0
    %464 = vmatprep.subr.mxu0 0.0
    %465 = vmatpush1.msra.mxu0 0.0
    %466 = vmatprep.subr.mxu0 0.0
    %467 = vmatpush1.msra.mxu0 0.0
    %468 = vmatprep.subr.mxu0 0.0
    %469 = vmatpush1.msra.mxu0 0.0
    %470 = vmatprep.subr.mxu0 0.0
    %471 = vmatpush1.msra.mxu0 0.0
    %472 = vmatprep.subr.mxu0 0.0
    %473 = vmatpush1.msra.mxu0 0.0
    %474 = vmatprep.subr.mxu0 0.0
    %475 = vmatpush1.msra.mxu0 0.0
    %476 = vmatprep.subr.mxu0 0.0
    %477 = vmatpush1.msra.mxu0 0.0
    %478 = vmatprep.subr.mxu0 0.0
    %479 = vmatpush1.msra.mxu0 0.0
    %480 = vmatprep.subr.mxu0 0.0
    %481 = vmatpush1.msra.mxu0 0.0
    %482 = vmatprep.subr.mxu0 0.0
    %483 = vmatpush1.msra.mxu0 0.0
    %484 = vmatprep.subr.mxu0 0.0
    %485 = vmatpush1.msra.mxu0 %v150
    %486 = vmatprep.subr.mxu0 0.0
    %487 = vmatpush1.msra.mxu0 %v149
    %488 = vmatprep.subr.mxu0 0.0
    %489 = vmatpush1.msra.mxu0 %v148
    %490 = vmatprep.subr.mxu0 0.0
    %491 = vmatpush1.msra.mxu0 %v147
    %492 = vmatprep.subr.mxu0 0.0
    %493 = vmatpush2.msra.mxu0 0.0
    %494 = vmatprep.subr.mxu0 0.0
    %495 = vmatpush2.msra.mxu0 0.0
    %496 = vmatprep.subr.mxu0 0.0
    %497 = vmatpush2.msra.mxu0 0.0
    %498 = vmatprep.subr.mxu0 0.0
    %499 = vmatpush2.msra.mxu0 0.0
    %500 = vmatprep.subr.mxu0 0.0
    %501 = vmatpush2.msra.mxu0 0.0
    %502 = vmatprep.subr.mxu0 0.0
    %503 = vmatpush2.msra.mxu0 0.0
    %504 = vmatprep.subr.mxu0 0.0
    %505 = vmatpush2.msra.mxu0 0.0
    %506 = vmatprep.subr.mxu0 0.0
    %507 = vmatpush2.msra.mxu0 0.0
    %508 = vmatprep.subr.mxu0 0.0
    %509 = vmatpush2.msra.mxu0 0.0
    %510 = vmatprep.subr.mxu0 0.0
    %511 = vmatpush2.msra.mxu0 0.0
    %512 = vmatprep.subr.mxu0 0.0
    %513 = vmatpush2.msra.mxu0 0.0
    %514 = vmatprep.subr.mxu0 0.0
    %515 = vmatpush2.msra.mxu0 0.0
    %516 = vmatprep.subr.mxu0 0.0
    %517 = vmatpush2.msra.mxu0 0.0
    %518 = vmatprep.subr.mxu0 0.0
    %519 = vmatpush2.msra.mxu0 0.0
    %520 = vmatprep.subr.mxu0 0.0
    %521 = vmatpush2.msra.mxu0 0.0
    %522 = vmatprep.subr.mxu0 0.0
    %523 = vmatpush2.msra.mxu0 0.0
    %524 = vmatprep.mubr.f32.mxu0 0.0
    %525 = vmatmul.mubr.f32.gmra.mxu0 %v458
    %v526 = vpop.f32.mrf.mxu0
    %v527 = vadd.f32 %v455, %v526
    %v528 = vpop.f32.mrf.mxu0
    %529 = vdwg.mxu0
    %v530 = vmul.f32 %v527, %v261
    %v531 = vsel %vm179, %v530, 0.0
    %532 = vadd.xlane.f32.xlu0 %v531
    %v533 = vpop.xlane.xlu0 %532
    %v535 = vlaneseq
    %v536 = vshrl.u32 %v535, 7
    %v537 = vsub.s32 0, %v536
    %v538 = vrot.slane %v163, %v537
    %v540 = vadd.f32 %v533, %v538
    %v541 = vxor.u32 %v540, 2147483648
    %v542 = vmul.f32 %v541, 1.442695
    %v543 = vpow.pop %v542
    %v544 = vadd.f32 %v543, 1.0
    %v545 = vrcp.pop %v544
    %v546 = vmul.f32 1.0, %v545
    %v547 = vsub.f32 %v546, %v171
    %v548 = vmul.f32 %v547, 0.125
    %550 = vset.pattern.permute.xlu0 0
    %551 = vperm.xlu0 %550, %v548
    %v552 = vpop.permute.xlu0 %551
    %v554 = vmul.f32 %v552, %v261
    %v556 = vsel %vm179, %v554, 0
    %v559 = vsel %vm183, %v160, 0
    %561 = vmatprep.subr.mxu0 0.0
    %562 = vmatpush1.msra.mxu0 0.0
    %563 = vmatprep.subr.mxu0 0.0
    %564 = vmatpush1.msra.mxu0 0.0
    %565 = vmatprep.subr.mxu0 0.0
    %566 = vmatpush1.msra.mxu0 0.0
    %567 = vmatprep.subr.mxu0 0.0
    %568 = vmatpush1.msra.mxu0 0.0
    %569 = vmatprep.subr.mxu0 0.0
    %570 = vmatpush1.msra.mxu0 0.0
    %571 = vmatprep.subr.mxu0 0.0
    %572 = vmatpush1.msra.mxu0 0.0
    %573 = vmatprep.subr.mxu0 0.0
    %574 = vmatpush1.msra.mxu0 0.0
    %575 = vmatprep.subr.mxu0 0.0
    %576 = vmatpush1.msra.mxu0 0.0
    %577 = vmatprep.subr.mxu0 0.0
    %578 = vmatpush1.msra.mxu0 0.0
    %579 = vmatprep.subr.mxu0 0.0
    %580 = vmatpush1.msra.mxu0 0.0
    %581 = vmatprep.subr.mxu0 0.0
    %582 = vmatpush1.msra.mxu0 0.0
    %583 = vmatprep.subr.mxu0 0.0
    %584 = vmatpush1.msra.mxu0 0.0
    %585 = vmatprep.subr.mxu0 0.0
    %586 = vmatpush1.msra.mxu0 0.0
    %587 = vmatprep.subr.mxu0 0.0
    %588 = vmatpush1.msra.mxu0 0.0
    %589 = vmatprep.subr.mxu0 0.0
    %590 = vmatpush1.msra.mxu0 0.0
    %591 = vmatprep.subr.mxu0 0.0
    %592 = vmatpush1.msra.mxu0 %v559
    %593 = vmatprep.subr.mxu0 0.0
    %594 = vmatpush2.msra.mxu0 0.0
    %595 = vmatprep.subr.mxu0 0.0
    %596 = vmatpush2.msra.mxu0 0.0
    %597 = vmatprep.subr.mxu0 0.0
    %598 = vmatpush2.msra.mxu0 0.0
    %599 = vmatprep.subr.mxu0 0.0
    %600 = vmatpush2.msra.mxu0 0.0
    %601 = vmatprep.subr.mxu0 0.0
    %602 = vmatpush2.msra.mxu0 0.0
    %603 = vmatprep.subr.mxu0 0.0
    %604 = vmatpush2.msra.mxu0 0.0
    %605 = vmatprep.subr.mxu0 0.0
    %606 = vmatpush2.msra.mxu0 0.0
    %607 = vmatprep.subr.mxu0 0.0
    %608 = vmatpush2.msra.mxu0 0.0
    %609 = vmatprep.subr.mxu0 0.0
    %610 = vmatpush2.msra.mxu0 0.0
    %611 = vmatprep.subr.mxu0 0.0
    %612 = vmatpush2.msra.mxu0 0.0
    %613 = vmatprep.subr.mxu0 0.0
    %614 = vmatpush2.msra.mxu0 0.0
    %615 = vmatprep.subr.mxu0 0.0
    %616 = vmatpush2.msra.mxu0 0.0
    %617 = vmatprep.subr.mxu0 0.0
    %618 = vmatpush2.msra.mxu0 0.0
    %619 = vmatprep.subr.mxu0 0.0
    %620 = vmatpush2.msra.mxu0 0.0
    %621 = vmatprep.subr.mxu0 0.0
    %622 = vmatpush2.msra.mxu0 0.0
    %623 = vmatprep.subr.mxu0 0.0
    %624 = vmatpush2.msra.mxu0 0.0
    %625 = vmatprep.mubr.f32.mxu0 0.0
    %626 = vmatmul.mubr.f32.gmra.mxu0 %v556
    %v627 = vpop.f32.mrf.mxu0
    %v628 = vadd.f32 0.0, %v627
    %v629 = vpop.f32.mrf.mxu0
    %630 = vdwg.mxu0
    %v631 = vmul.f32 %v449, %v628
    %v633 = vsel %vm374, %v631, 0
    %635 = vmatprep.subr.mxu0 0.0
    %636 = vmatpush1.msra.mxu0 0.0
    %637 = vmatprep.subr.mxu0 0.0
    %638 = vmatpush1.msra.mxu0 0.0
    %639 = vmatprep.subr.mxu0 0.0
    %640 = vmatpush1.msra.mxu0 0.0
    %641 = vmatprep.subr.mxu0 0.0
    %642 = vmatpush1.msra.mxu0 0.0
    %643 = vmatprep.subr.mxu0 0.0
    %644 = vmatpush1.msra.mxu0 0.0
    %645 = vmatprep.subr.mxu0 0.0
    %646 = vmatpush1.msra.mxu0 0.0
    %647 = vmatprep.subr.mxu0 0.0
    %648 = vmatpush1.msra.mxu0 0.0
    %649 = vmatprep.subr.mxu0 0.0
    %650 = vmatpush1.msra.mxu0 0.0
    %651 = vmatprep.subr.mxu0 0.0
    %652 = vmatpush1.msra.mxu0 0.0
    %653 = vmatprep.subr.mxu0 0.0
    %654 = vmatpush1.msra.mxu0 0.0
    %655 = vmatprep.subr.mxu0 0.0
    %656 = vmatpush1.msra.mxu0 0.0
    %657 = vmatprep.subr.mxu0 0.0
    %658 = vmatpush1.msra.mxu0 0.0
    %659 = vmatprep.subr.mxu0 0.0
    %660 = vmatpush1.msra.mxu0 %v159
    %661 = vmatprep.subr.mxu0 0.0
    %662 = vmatpush1.msra.mxu0 %v158
    %663 = vmatprep.subr.mxu0 0.0
    %664 = vmatpush1.msra.mxu0 %v157
    %665 = vmatprep.subr.mxu0 0.0
    %666 = vmatpush1.msra.mxu0 %v156
    %667 = vmatprep.subr.mxu0 0.0
    %668 = vmatpush2.msra.mxu0 0.0
    %669 = vmatprep.subr.mxu0 0.0
    %670 = vmatpush2.msra.mxu0 0.0
    %671 = vmatprep.subr.mxu0 0.0
    %672 = vmatpush2.msra.mxu0 0.0
    %673 = vmatprep.subr.mxu0 0.0
    %674 = vmatpush2.msra.mxu0 0.0
    %675 = vmatprep.subr.mxu0 0.0
    %676 = vmatpush2.msra.mxu0 0.0
    %677 = vmatprep.subr.mxu0 0.0
    %678 = vmatpush2.msra.mxu0 0.0
    %679 = vmatprep.subr.mxu0 0.0
    %680 = vmatpush2.msra.mxu0 0.0
    %681 = vmatprep.subr.mxu0 0.0
    %682 = vmatpush2.msra.mxu0 0.0
    %683 = vmatprep.subr.mxu0 0.0
    %684 = vmatpush2.msra.mxu0 0.0
    %685 = vmatprep.subr.mxu0 0.0
    %686 = vmatpush2.msra.mxu0 0.0
    %687 = vmatprep.subr.mxu0 0.0
    %688 = vmatpush2.msra.mxu0 0.0
    %689 = vmatprep.subr.mxu0 0.0
    %690 = vmatpush2.msra.mxu0 0.0
    %691 = vmatprep.subr.mxu0 0.0
    %692 = vmatpush2.msra.mxu0 0.0
    %693 = vmatprep.subr.mxu0 0.0
    %694 = vmatpush2.msra.mxu0 0.0
    %695 = vmatprep.subr.mxu0 0.0
    %696 = vmatpush2.msra.mxu0 0.0
    %697 = vmatprep.subr.mxu0 0.0
    %698 = vmatpush2.msra.mxu0 0.0
    %699 = vmatprep.mubr.f32.mxu0 0.0
    %700 = vmatmul.mubr.f32.gmra.mxu0 %v633
    %v701 = vpop.f32.mrf.mxu0
    %v702 = vadd.f32 0.0, %v701
    %v703 = vpop.f32.mrf.mxu0
    %704 = vdwg.mxu0
    %v705 = vmul.f32 %v366, %v702
    %v707 = vsel %vm374, %v705, 0
    %709 = vmatprep.subr.mxu0 0.0
    %710 = vmatpush1.msra.mxu0 0.0
    %711 = vmatprep.subr.mxu0 0.0
    %712 = vmatpush1.msra.mxu0 0.0
    %713 = vmatprep.subr.mxu0 0.0
    %714 = vmatpush1.msra.mxu0 0.0
    %715 = vmatprep.subr.mxu0 0.0
    %716 = vmatpush1.msra.mxu0 0.0
    %717 = vmatprep.subr.mxu0 0.0
    %718 = vmatpush1.msra.mxu0 0.0
    %719 = vmatprep.subr.mxu0 0.0
    %720 = vmatpush1.msra.mxu0 0.0
    %721 = vmatprep.subr.mxu0 0.0
    %722 = vmatpush1.msra.mxu0 0.0
    %723 = vmatprep.subr.mxu0 0.0
    %724 = vmatpush1.msra.mxu0 0.0
    %725 = vmatprep.subr.mxu0 0.0
    %726 = vmatpush1.msra.mxu0 0.0
    %727 = vmatprep.subr.mxu0 0.0
    %728 = vmatpush1.msra.mxu0 0.0
    %729 = vmatprep.subr.mxu0 0.0
    %730 = vmatpush1.msra.mxu0 0.0
    %731 = vmatprep.subr.mxu0 0.0
    %732 = vmatpush1.msra.mxu0 0.0
    %733 = vmatprep.subr.mxu0 0.0
    %734 = vmatpush1.msra.mxu0 %v155
    %735 = vmatprep.subr.mxu0 0.0
    %736 = vmatpush1.msra.mxu0 %v154
    %737 = vmatprep.subr.mxu0 0.0
    %738 = vmatpush1.msra.mxu0 %v153
    %739 = vmatprep.subr.mxu0 0.0
    %740 = vmatpush1.msra.mxu0 %v152
    %741 = vmatprep.subr.mxu0 0.0
    %742 = vmatpush2.msra.mxu0 0.0
    %743 = vmatprep.subr.mxu0 0.0
    %744 = vmatpush2.msra.mxu0 0.0
    %745 = vmatprep.subr.mxu0 0.0
    %746 = vmatpush2.msra.mxu0 0.0
    %747 = vmatprep.subr.mxu0 0.0
    %748 = vmatpush2.msra.mxu0 0.0
    %749 = vmatprep.subr.mxu0 0.0
    %750 = vmatpush2.msra.mxu0 0.0
    %751 = vmatprep.subr.mxu0 0.0
    %752 = vmatpush2.msra.mxu0 0.0
    %753 = vmatprep.subr.mxu0 0.0
    %754 = vmatpush2.msra.mxu0 0.0
    %755 = vmatprep.subr.mxu0 0.0
    %756 = vmatpush2.msra.mxu0 0.0
    %757 = vmatprep.subr.mxu0 0.0
    %758 = vmatpush2.msra.mxu0 0.0
    %759 = vmatprep.subr.mxu0 0.0
    %760 = vmatpush2.msra.mxu0 0.0
    %761 = vmatprep.subr.mxu0 0.0
    %762 = vmatpush2.msra.mxu0 0.0
    %763 = vmatprep.subr.mxu0 0.0
    %764 = vmatpush2.msra.mxu0 0.0
    %765 = vmatprep.subr.mxu0 0.0
    %766 = vmatpush2.msra.mxu0 0.0
    %767 = vmatprep.subr.mxu0 0.0
    %768 = vmatpush2.msra.mxu0 0.0
    %769 = vmatprep.subr.mxu0 0.0
    %770 = vmatpush2.msra.mxu0 0.0
    %771 = vmatprep.subr.mxu0 0.0
    %772 = vmatpush2.msra.mxu0 0.0
    %773 = vmatprep.mubr.f32.mxu0 0.0
    %774 = vmatmul.mubr.f32.gmra.mxu0 %v707
    %v775 = vpop.f32.mrf.mxu0
    %v776 = vadd.f32 0.0, %v775
    %v777 = vpop.f32.mrf.mxu0
    %778 = vdwg.mxu0
    %v779 = vmul.f32 %v552, %v527
    %v780 = vsel %vm179, %v779, 0.0
    %v781 = vrot.slane %v780, 4
    %v782 = vadd.f32 %v780, %v781
    %v783 = vrot.slane %v782, 2
    %v784 = vadd.f32 %v782, %v783
    %v785 = vrot.slane %v784, 1
    %v786 = vadd.f32 %v784, %v785
    %788 = vrot.lane.b32.xlu0 %v776, 126
    %v789 = vpop.permute.xlu0 %788
    %v791 = vadd.f32 %v776, %v789
    %v792 = vsel %vm179, %v791, 0.0
    %v793 = vrot.slane %v792, 4
    %v794 = vadd.f32 %v792, %v793
    %v795 = vrot.slane %v794, 2
    %v796 = vadd.f32 %v794, %v795
    %v797 = vrot.slane %v796, 1
    %v798 = vadd.f32 %v796, %v797
    %v799 = vadd.f32 %v786, %v798
    %v801 = vlaneseq
    %v802 = vshrl.u32 %v801, 7
    %v803 = vsub.s32 0, %v802
    %v804 = vrot.slane %v162, %v803
    %v806 = vmul.f32 %v527, %v804
    %v807 = vsel %vm179, %v806, 0.0
    %808 = vadd.xlane.f32.xlu0 %v807
    %v809 = vpop.xlane.xlu0 %808
    %v811 = vlaneseq
    %v812 = vshrl.u32 %v811, 7
    %v813 = vsub.s32 0, %v812
    %v814 = vrot.slane %v164, %v813
    %v816 = vadd.f32 %v809, %v814
    %v817 = vxor.u32 %v816, 2147483648
    %v818 = vmul.f32 %v817, 1.442695
    %v819 = vpow.pop %v818
    %v820 = vadd.f32 %v819, 1.0
    %v821 = vrcp.pop %v820
    %v822 = vmul.f32 1.0, %v821
    %v823 = vsub.f32 0.0, %v816
    %v824 = vmax.f32 %v823, 0.0
    %v825 = vand.u32 2147483647, %v823
    %v826 = vsub.f32 0.0, %v825
    %v827 = vmul.f32 %v826, 1.442695
    %v828 = vpow.pop %v827
    %v829 = vadd.f32 %v828, 1.0
    %v830 = vlog2.pop %v829
    %v831 = vmul.f32 %v830, 0.6931472
    %v832 = vadd.f32 %v824, %v831
    %v833 = vmul.f32 %v171, %v832
    %v834 = vmax.f32 %v816, 0.0
    %v835 = vand.u32 2147483647, %v816
    %v836 = vsub.f32 0.0, %v835
    %v837 = vmul.f32 %v836, 1.442695
    %v838 = vpow.pop %v837
    %v839 = vadd.f32 %v838, 1.0
    %v840 = vlog2.pop %v839
    %v841 = vmul.f32 %v840, 0.6931472
    %v842 = vadd.f32 %v834, %v841
    %v843 = vmul.f32 %v172, %v842
    %v844 = vadd.f32 %v833, %v843
    %v845 = vsel %vm177, %v844, 0.0
    %v846 = vrot.slane %v845, 4
    %v847 = vadd.f32 %v845, %v846
    %v848 = vrot.slane %v847, 2
    %v849 = vadd.f32 %v847, %v848
    %v850 = vrot.slane %v849, 1
    %v851 = vadd.f32 %v849, %v850
    %v852 = vmul.f32 %v851, 0.125
    %v853 = vadd.f32 %v852, 0.0
    %v854 = vsub.f32 %v822, %v171
    %v855 = vmul.f32 %v854, 0.125
    %857 = vset.pattern.permute.xlu0 0
    %858 = vperm.xlu0 %857, %v855
    %v859 = vpop.permute.xlu0 %858
    %v861 = vmul.f32 %v859, %v804
    %v863 = vsel %vm179, %v861, 0
    %865 = vmatprep.subr.mxu0 0.0
    %866 = vmatpush1.msra.mxu0 0.0
    %867 = vmatprep.subr.mxu0 0.0
    %868 = vmatpush1.msra.mxu0 0.0
    %869 = vmatprep.subr.mxu0 0.0
    %870 = vmatpush1.msra.mxu0 0.0
    %871 = vmatprep.subr.mxu0 0.0
    %872 = vmatpush1.msra.mxu0 0.0
    %873 = vmatprep.subr.mxu0 0.0
    %874 = vmatpush1.msra.mxu0 0.0
    %875 = vmatprep.subr.mxu0 0.0
    %876 = vmatpush1.msra.mxu0 0.0
    %877 = vmatprep.subr.mxu0 0.0
    %878 = vmatpush1.msra.mxu0 0.0
    %879 = vmatprep.subr.mxu0 0.0
    %880 = vmatpush1.msra.mxu0 0.0
    %881 = vmatprep.subr.mxu0 0.0
    %882 = vmatpush1.msra.mxu0 0.0
    %883 = vmatprep.subr.mxu0 0.0
    %884 = vmatpush1.msra.mxu0 0.0
    %885 = vmatprep.subr.mxu0 0.0
    %886 = vmatpush1.msra.mxu0 0.0
    %887 = vmatprep.subr.mxu0 0.0
    %888 = vmatpush1.msra.mxu0 0.0
    %889 = vmatprep.subr.mxu0 0.0
    %890 = vmatpush1.msra.mxu0 0.0
    %891 = vmatprep.subr.mxu0 0.0
    %892 = vmatpush1.msra.mxu0 0.0
    %893 = vmatprep.subr.mxu0 0.0
    %894 = vmatpush1.msra.mxu0 0.0
    %895 = vmatprep.subr.mxu0 0.0
    %896 = vmatpush1.msra.mxu0 %v559
    %897 = vmatprep.subr.mxu0 0.0
    %898 = vmatpush2.msra.mxu0 0.0
    %899 = vmatprep.subr.mxu0 0.0
    %900 = vmatpush2.msra.mxu0 0.0
    %901 = vmatprep.subr.mxu0 0.0
    %902 = vmatpush2.msra.mxu0 0.0
    %903 = vmatprep.subr.mxu0 0.0
    %904 = vmatpush2.msra.mxu0 0.0
    %905 = vmatprep.subr.mxu0 0.0
    %906 = vmatpush2.msra.mxu0 0.0
    %907 = vmatprep.subr.mxu0 0.0
    %908 = vmatpush2.msra.mxu0 0.0
    %909 = vmatprep.subr.mxu0 0.0
    %910 = vmatpush2.msra.mxu0 0.0
    %911 = vmatprep.subr.mxu0 0.0
    %912 = vmatpush2.msra.mxu0 0.0
    %913 = vmatprep.subr.mxu0 0.0
    %914 = vmatpush2.msra.mxu0 0.0
    %915 = vmatprep.subr.mxu0 0.0
    %916 = vmatpush2.msra.mxu0 0.0
    %917 = vmatprep.subr.mxu0 0.0
    %918 = vmatpush2.msra.mxu0 0.0
    %919 = vmatprep.subr.mxu0 0.0
    %920 = vmatpush2.msra.mxu0 0.0
    %921 = vmatprep.subr.mxu0 0.0
    %922 = vmatpush2.msra.mxu0 0.0
    %923 = vmatprep.subr.mxu0 0.0
    %924 = vmatpush2.msra.mxu0 0.0
    %925 = vmatprep.subr.mxu0 0.0
    %926 = vmatpush2.msra.mxu0 0.0
    %927 = vmatprep.subr.mxu0 0.0
    %928 = vmatpush2.msra.mxu0 0.0
    %929 = vmatprep.mubr.f32.mxu0 0.0
    %930 = vmatmul.mubr.f32.gmra.mxu0 %v863
    %v931 = vpop.f32.mrf.mxu0
    %v932 = vadd.f32 0.0, %v931
    %v933 = vpop.f32.mrf.mxu0
    %934 = vdwg.mxu0
    %v935 = vmul.f32 %v449, %v932
    %v937 = vsel %vm374, %v935, 0
    %939 = vmatprep.subr.mxu0 0.0
    %940 = vmatpush1.msra.mxu0 0.0
    %941 = vmatprep.subr.mxu0 0.0
    %942 = vmatpush1.msra.mxu0 0.0
    %943 = vmatprep.subr.mxu0 0.0
    %944 = vmatpush1.msra.mxu0 0.0
    %945 = vmatprep.subr.mxu0 0.0
    %946 = vmatpush1.msra.mxu0 0.0
    %947 = vmatprep.subr.mxu0 0.0
    %948 = vmatpush1.msra.mxu0 0.0
    %949 = vmatprep.subr.mxu0 0.0
    %950 = vmatpush1.msra.mxu0 0.0
    %951 = vmatprep.subr.mxu0 0.0
    %952 = vmatpush1.msra.mxu0 0.0
    %953 = vmatprep.subr.mxu0 0.0
    %954 = vmatpush1.msra.mxu0 0.0
    %955 = vmatprep.subr.mxu0 0.0
    %956 = vmatpush1.msra.mxu0 0.0
    %957 = vmatprep.subr.mxu0 0.0
    %958 = vmatpush1.msra.mxu0 0.0
    %959 = vmatprep.subr.mxu0 0.0
    %960 = vmatpush1.msra.mxu0 0.0
    %961 = vmatprep.subr.mxu0 0.0
    %962 = vmatpush1.msra.mxu0 0.0
    %963 = vmatprep.subr.mxu0 0.0
    %964 = vmatpush1.msra.mxu0 %v159
    %965 = vmatprep.subr.mxu0 0.0
    %966 = vmatpush1.msra.mxu0 %v158
    %967 = vmatprep.subr.mxu0 0.0
    %968 = vmatpush1.msra.mxu0 %v157
    %969 = vmatprep.subr.mxu0 0.0
    %970 = vmatpush1.msra.mxu0 %v156
    %971 = vmatprep.subr.mxu0 0.0
    %972 = vmatpush2.msra.mxu0 0.0
    %973 = vmatprep.subr.mxu0 0.0
    %974 = vmatpush2.msra.mxu0 0.0
    %975 = vmatprep.subr.mxu0 0.0
    %976 = vmatpush2.msra.mxu0 0.0
    %977 = vmatprep.subr.mxu0 0.0
    %978 = vmatpush2.msra.mxu0 0.0
    %979 = vmatprep.subr.mxu0 0.0
    %980 = vmatpush2.msra.mxu0 0.0
    %981 = vmatprep.subr.mxu0 0.0
    %982 = vmatpush2.msra.mxu0 0.0
    %983 = vmatprep.subr.mxu0 0.0
    %984 = vmatpush2.msra.mxu0 0.0
    %985 = vmatprep.subr.mxu0 0.0
    %986 = vmatpush2.msra.mxu0 0.0
    %987 = vmatprep.subr.mxu0 0.0
    %988 = vmatpush2.msra.mxu0 0.0
    %989 = vmatprep.subr.mxu0 0.0
    %990 = vmatpush2.msra.mxu0 0.0
    %991 = vmatprep.subr.mxu0 0.0
    %992 = vmatpush2.msra.mxu0 0.0
    %993 = vmatprep.subr.mxu0 0.0
    %994 = vmatpush2.msra.mxu0 0.0
    %995 = vmatprep.subr.mxu0 0.0
    %996 = vmatpush2.msra.mxu0 0.0
    %997 = vmatprep.subr.mxu0 0.0
    %998 = vmatpush2.msra.mxu0 0.0
    %999 = vmatprep.subr.mxu0 0.0
    %1000 = vmatpush2.msra.mxu0 0.0
    %1001 = vmatprep.subr.mxu0 0.0
    %1002 = vmatpush2.msra.mxu0 0.0
    %1003 = vmatprep.mubr.f32.mxu0 0.0
    %1004 = vmatmul.mubr.f32.gmra.mxu0 %v937
    %v1005 = vpop.f32.mrf.mxu0
    %v1006 = vadd.f32 0.0, %v1005
    %v1007 = vpop.f32.mrf.mxu0
    %1008 = vdwg.mxu0
    %v1009 = vmul.f32 %v366, %v1006
    %v1011 = vsel %vm374, %v1009, 0
    %1013 = vmatprep.subr.mxu0 0.0
    %1014 = vmatpush1.msra.mxu0 0.0
    %1015 = vmatprep.subr.mxu0 0.0
    %1016 = vmatpush1.msra.mxu0 0.0
    %1017 = vmatprep.subr.mxu0 0.0
    %1018 = vmatpush1.msra.mxu0 0.0
    %1019 = vmatprep.subr.mxu0 0.0
    %1020 = vmatpush1.msra.mxu0 0.0
    %1021 = vmatprep.subr.mxu0 0.0
    %1022 = vmatpush1.msra.mxu0 0.0
    %1023 = vmatprep.subr.mxu0 0.0
    %1024 = vmatpush1.msra.mxu0 0.0
    %1025 = vmatprep.subr.mxu0 0.0
    %1026 = vmatpush1.msra.mxu0 0.0
    %1027 = vmatprep.subr.mxu0 0.0
    %1028 = vmatpush1.msra.mxu0 0.0
    %1029 = vmatprep.subr.mxu0 0.0
    %1030 = vmatpush1.msra.mxu0 0.0
    %1031 = vmatprep.subr.mxu0 0.0
    %1032 = vmatpush1.msra.mxu0 0.0
    %1033 = vmatprep.subr.mxu0 0.0
    %1034 = vmatpush1.msra.mxu0 0.0
    %1035 = vmatprep.subr.mxu0 0.0
    %1036 = vmatpush1.msra.mxu0 0.0
    %1037 = vmatprep.subr.mxu0 0.0
    %1038 = vmatpush1.msra.mxu0 %v155
    %1039 = vmatprep.subr.mxu0 0.0
    %1040 = vmatpush1.msra.mxu0 %v154
    %1041 = vmatprep.subr.mxu0 0.0
    %1042 = vmatpush1.msra.mxu0 %v153
    %1043 = vmatprep.subr.mxu0 0.0
    %1044 = vmatpush1.msra.mxu0 %v152
    %1045 = vmatprep.subr.mxu0 0.0
    %1046 = vmatpush2.msra.mxu0 0.0
    %1047 = vmatprep.subr.mxu0 0.0
    %1048 = vmatpush2.msra.mxu0 0.0
    %1049 = vmatprep.subr.mxu0 0.0
    %1050 = vmatpush2.msra.mxu0 0.0
    %1051 = vmatprep.subr.mxu0 0.0
    %1052 = vmatpush2.msra.mxu0 0.0
    %1053 = vmatprep.subr.mxu0 0.0
    %1054 = vmatpush2.msra.mxu0 0.0
    %1055 = vmatprep.subr.mxu0 0.0
    %1056 = vmatpush2.msra.mxu0 0.0
    %1057 = vmatprep.subr.mxu0 0.0
    %1058 = vmatpush2.msra.mxu0 0.0
    %1059 = vmatprep.subr.mxu0 0.0
    %1060 = vmatpush2.msra.mxu0 0.0
    %1061 = vmatprep.subr.mxu0 0.0
    %1062 = vmatpush2.msra.mxu0 0.0
    %1063 = vmatprep.subr.mxu0 0.0
    %1064 = vmatpush2.msra.mxu0 0.0
    %1065 = vmatprep.subr.mxu0 0.0
    %1066 = vmatpush2.msra.mxu0 0.0
    %1067 = vmatprep.subr.mxu0 0.0
    %1068 = vmatpush2.msra.mxu0 0.0
    %1069 = vmatprep.subr.mxu0 0.0
    %1070 = vmatpush2.msra.mxu0 0.0
    %1071 = vmatprep.subr.mxu0 0.0
    %1072 = vmatpush2.msra.mxu0 0.0
    %1073 = vmatprep.subr.mxu0 0.0
    %1074 = vmatpush2.msra.mxu0 0.0
    %1075 = vmatprep.subr.mxu0 0.0
    %1076 = vmatpush2.msra.mxu0 0.0
    %1077 = vmatprep.mubr.f32.mxu0 0.0
    %1078 = vmatmul.mubr.f32.gmra.mxu0 %v1011
    %v1079 = vpop.f32.mrf.mxu0
    %v1080 = vadd.f32 0.0, %v1079
    %v1081 = vpop.f32.mrf.mxu0
    %1082 = vdwg.mxu0
    %v1083 = vsel %vm179, %v861, 0.0
    %v1084 = vrot.slane %v1083, 4
    %v1085 = vadd.f32 %v1083, %v1084
    %v1086 = vrot.slane %v1085, 2
    %v1087 = vadd.f32 %v1085, %v1086
    %v1088 = vrot.slane %v1087, 1
    %v1089 = vadd.f32 %v1087, %v1088
    %v1090 = vadd.f32 %v1089, 0.0
    %v1091 = vsel %vm374, %v935, 0.0
    %v1092 = vrot.slane %v1091, 4
    %v1093 = vadd.f32 %v1091, %v1092
    %v1094 = vrot.slane %v1093, 2
    %v1095 = vadd.f32 %v1093, %v1094
    %v1096 = vrot.slane %v1095, 1
    %v1097 = vadd.f32 %v1095, %v1096
    %v1098 = vadd.f32 %v1097, 0.0
    %v1099 = vsel %vm374, %v1009, 0.0
    %v1100 = vrot.slane %v1099, 4
    %v1101 = vadd.f32 %v1099, %v1100
    %v1102 = vrot.slane %v1101, 2
    %v1103 = vadd.f32 %v1101, %v1102
    %v1104 = vrot.slane %v1103, 1
    %v1105 = vadd.f32 %v1103, %v1104
    %v1106 = vadd.f32 %v1105, 0.0
    %v1107 = vmul.f32 %v799, 0.001
    %v1108 = vsub.f32 %v165, %v1107
    %s1109 = sld [smem:[#allocation5 + $0x1]]
    %s1110 = smul.u32 %s1109, 8
    %s1111 = scalar_lea.vmem %s3, %s1110
    %v1112 = vld [vmem:[%s1111] sm:$0xff]
    %s1113 = scalar_lea.vmem %s5, %s1110
    %v1114 = vld [vmem:[%s1113] sm:$0xff]
    %v1115 = vsub.f32 1.0, %v1114
    %1117 = vrot.lane.b32.xlu0 %v1114, 1
    %v1118 = vpop.permute.xlu0 %1117
    %v1120 = vsel %vm177, %v1115, %v1118
    %v1122 = vsel %vm179, %v1120, 0
    %1124 = vmatprep.subr.mxu0 0.0
    %1125 = vmatpush1.msra.mxu0 0.0
    %1126 = vmatprep.subr.mxu0 0.0
    %1127 = vmatpush1.msra.mxu0 0.0
    %1128 = vmatprep.subr.mxu0 0.0
    %1129 = vmatpush1.msra.mxu0 0.0
    %1130 = vmatprep.subr.mxu0 0.0
    %1131 = vmatpush1.msra.mxu0 0.0
    %1132 = vmatprep.subr.mxu0 0.0
    %1133 = vmatpush1.msra.mxu0 0.0
    %1134 = vmatprep.subr.mxu0 0.0
    %1135 = vmatpush1.msra.mxu0 0.0
    %1136 = vmatprep.subr.mxu0 0.0
    %1137 = vmatpush1.msra.mxu0 0.0
    %1138 = vmatprep.subr.mxu0 0.0
    %1139 = vmatpush1.msra.mxu0 0.0
    %1140 = vmatprep.subr.mxu0 0.0
    %1141 = vmatpush1.msra.mxu0 0.0
    %1142 = vmatprep.subr.mxu0 0.0
    %1143 = vmatpush1.msra.mxu0 0.0
    %1144 = vmatprep.subr.mxu0 0.0
    %1145 = vmatpush1.msra.mxu0 0.0
    %1146 = vmatprep.subr.mxu0 0.0
    %1147 = vmatpush1.msra.mxu0 0.0
    %1148 = vmatprep.subr.mxu0 0.0
    %1149 = vmatpush1.msra.mxu0 0.0
    %1150 = vmatprep.subr.mxu0 0.0
    %1151 = vmatpush1.msra.mxu0 0.0
    %1152 = vmatprep.subr.mxu0 0.0
    %1153 = vmatpush1.msra.mxu0 0.0
    %1154 = vmatprep.subr.mxu0 0.0
    %1155 = vmatpush1.msra.mxu0 %v185
    %1156 = vmatprep.subr.mxu0 0.0
    %1157 = vmatpush2.msra.mxu0 0.0
    %1158 = vmatprep.subr.mxu0 0.0
    %1159 = vmatpush2.msra.mxu0 0.0
    %1160 = vmatprep.subr.mxu0 0.0
    %1161 = vmatpush2.msra.mxu0 0.0
    %1162 = vmatprep.subr.mxu0 0.0
    %1163 = vmatpush2.msra.mxu0 0.0
    %1164 = vmatprep.subr.mxu0 0.0
    %1165 = vmatpush2.msra.mxu0 0.0
    %1166 = vmatprep.subr.mxu0 0.0
    %1167 = vmatpush2.msra.mxu0 0.0
    %1168 = vmatprep.subr.mxu0 0.0
    %1169 = vmatpush2.msra.mxu0 0.0
    %1170 = vmatprep.subr.mxu0 0.0
    %1171 = vmatpush2.msra.mxu0 0.0
    %1172 = vmatprep.subr.mxu0 0.0
    %1173 = vmatpush2.msra.mxu0 0.0
    %1174 = vmatprep.subr.mxu0 0.0
    %1175 = vmatpush2.msra.mxu0 0.0
    %1176 = vmatprep.subr.mxu0 0.0
    %1177 = vmatpush2.msra.mxu0 0.0
    %1178 = vmatprep.subr.mxu0 0.0
    %1179 = vmatpush2.msra.mxu0 0.0
    %1180 = vmatprep.subr.mxu0 0.0
    %1181 = vmatpush2.msra.mxu0 0.0
    %1182 = vmatprep.subr.mxu0 0.0
    %1183 = vmatpush2.msra.mxu0 0.0
    %1184 = vmatprep.subr.mxu0 0.0
    %1185 = vmatpush2.msra.mxu0 0.0
    %1186 = vmatprep.subr.mxu0 0.0
    %1187 = vmatpush2.msra.mxu0 0.0
    %1188 = vmatprep.mubr.f32.mxu0 0.0
    %1189 = vmatmul.mubr.f32.gmra.mxu0 %v1122
    %v1190 = vpop.f32.mrf.mxu0
    %v1191 = vadd.f32 0.0, %v1190
    %v1192 = vpop.f32.mrf.mxu0
    %1193 = vdwg.mxu0
    %v1195 = vlaneseq
    %v1196 = vshrl.u32 %v1195, 7
    %v1197 = vsub.s32 0, %v1196
    %v1198 = vrot.slane %v1108, %v1197
    %v1200 = vsub.f32 %v1108, %v162
    %v1202 = vlaneseq
    %v1203 = vshrl.u32 %v1202, 7
    %v1204 = vsub.s32 0, %v1203
    %v1205 = vrot.slane %v1200, %v1204
    %1206 = vrot.lane.b32.xlu0 %v1205, 2
    %v1207 = vpop.permute.xlu0 %1206
    %1210 = vrot.lane.b32.xlu0 %v1112, 4
    %v1211 = vpop.permute.xlu0 %1210
    %1214 = vrot.lane.b32.xlu0 %v1191, 6
    %v1215 = vpop.permute.xlu0 %1214
    %v1217 = vsel %vm179, %v1198, %v1207
    %v1218 = vsel %vm281, %v1217, %v1211
    %v1219 = vsel %vm283, %v1218, %v1215
    %v1221 = vsel %vm291, %v1219, 0
    %1223 = vmatprep.subr.mxu0 0.0
    %1224 = vmatpush1.msra.mxu0 0.0
    %1225 = vmatprep.subr.mxu0 0.0
    %1226 = vmatpush1.msra.mxu0 0.0
    %1227 = vmatprep.subr.mxu0 0.0
    %1228 = vmatpush1.msra.mxu0 0.0
    %1229 = vmatprep.subr.mxu0 0.0
    %1230 = vmatpush1.msra.mxu0 0.0
    %1231 = vmatprep.subr.mxu0 0.0
    %1232 = vmatpush1.msra.mxu0 0.0
    %1233 = vmatprep.subr.mxu0 0.0
    %1234 = vmatpush1.msra.mxu0 0.0
    %1235 = vmatprep.subr.mxu0 0.0
    %1236 = vmatpush1.msra.mxu0 0.0
    %1237 = vmatprep.subr.mxu0 0.0
    %1238 = vmatpush1.msra.mxu0 0.0
    %1239 = vmatprep.subr.mxu0 0.0
    %1240 = vmatpush1.msra.mxu0 0.0
    %1241 = vmatprep.subr.mxu0 0.0
    %1242 = vmatpush1.msra.mxu0 0.0
    %1243 = vmatprep.subr.mxu0 0.0
    %1244 = vmatpush1.msra.mxu0 0.0
    %1245 = vmatprep.subr.mxu0 0.0
    %1246 = vmatpush1.msra.mxu0 0.0
    %1247 = vmatprep.subr.mxu0 0.0
    %1248 = vmatpush1.msra.mxu0 0.0
    %1249 = vmatprep.subr.mxu0 0.0
    %1250 = vmatpush1.msra.mxu0 0.0
    %1251 = vmatprep.subr.mxu0 0.0
    %1252 = vmatpush1.msra.mxu0 0.0
    %1253 = vmatprep.subr.mxu0 0.0
    %1254 = vmatpush1.msra.mxu0 %v140
    %1255 = vmatprep.subr.mxu0 0.0
    %1256 = vmatpush2.msra.mxu0 0.0
    %1257 = vmatprep.subr.mxu0 0.0
    %1258 = vmatpush2.msra.mxu0 0.0
    %1259 = vmatprep.subr.mxu0 0.0
    %1260 = vmatpush2.msra.mxu0 0.0
    %1261 = vmatprep.subr.mxu0 0.0
    %1262 = vmatpush2.msra.mxu0 0.0
    %1263 = vmatprep.subr.mxu0 0.0
    %1264 = vmatpush2.msra.mxu0 0.0
    %1265 = vmatprep.subr.mxu0 0.0
    %1266 = vmatpush2.msra.mxu0 0.0
    %1267 = vmatprep.subr.mxu0 0.0
    %1268 = vmatpush2.msra.mxu0 0.0
    %1269 = vmatprep.subr.mxu0 0.0
    %1270 = vmatpush2.msra.mxu0 0.0
    %1271 = vmatprep.subr.mxu0 0.0
    %1272 = vmatpush2.msra.mxu0 0.0
    %1273 = vmatprep.subr.mxu0 0.0
    %1274 = vmatpush2.msra.mxu0 0.0
    %1275 = vmatprep.subr.mxu0 0.0
    %1276 = vmatpush2.msra.mxu0 0.0
    %1277 = vmatprep.subr.mxu0 0.0
    %1278 = vmatpush2.msra.mxu0 0.0
    %1279 = vmatprep.subr.mxu0 0.0
    %1280 = vmatpush2.msra.mxu0 0.0
    %1281 = vmatprep.subr.mxu0 0.0
    %1282 = vmatpush2.msra.mxu0 0.0
    %1283 = vmatprep.subr.mxu0 0.0
    %1284 = vmatpush2.msra.mxu0 0.0
    %1285 = vmatprep.subr.mxu0 0.0
    %1286 = vmatpush2.msra.mxu0 0.0
    %1287 = vmatprep.mubr.f32.mxu0 0.0
    %1288 = vmatmul.mubr.f32.gmra.mxu0 %v1221
    %v1289 = vpop.f32.mrf.mxu0
    %v1290 = vadd.f32 %v289, %v1289
    %v1291 = vpop.f32.mrf.mxu0
    %1292 = vdwg.mxu0
    %vm1293 = vcmp.gt.f32.partialorder %v1290, 0.0
    %v1294 = vsel %vm1293, 1.0, 0.2
    %v1295 = vmul.f32 %v1290, %v1294
    %v1297 = vsel %vm374, %v1295, 0
    %1299 = vmatprep.subr.mxu0 0.0
    %1300 = vmatpush1.msra.mxu0 0.0
    %1301 = vmatprep.subr.mxu0 0.0
    %1302 = vmatpush1.msra.mxu0 0.0
    %1303 = vmatprep.subr.mxu0 0.0
    %1304 = vmatpush1.msra.mxu0 0.0
    %1305 = vmatprep.subr.mxu0 0.0
    %1306 = vmatpush1.msra.mxu0 0.0
    %1307 = vmatprep.subr.mxu0 0.0
    %1308 = vmatpush1.msra.mxu0 0.0
    %1309 = vmatprep.subr.mxu0 0.0
    %1310 = vmatpush1.msra.mxu0 0.0
    %1311 = vmatprep.subr.mxu0 0.0
    %1312 = vmatpush1.msra.mxu0 0.0
    %1313 = vmatprep.subr.mxu0 0.0
    %1314 = vmatpush1.msra.mxu0 0.0
    %1315 = vmatprep.subr.mxu0 0.0
    %1316 = vmatpush1.msra.mxu0 0.0
    %1317 = vmatprep.subr.mxu0 0.0
    %1318 = vmatpush1.msra.mxu0 0.0
    %1319 = vmatprep.subr.mxu0 0.0
    %1320 = vmatpush1.msra.mxu0 0.0
    %1321 = vmatprep.subr.mxu0 0.0
    %1322 = vmatpush1.msra.mxu0 0.0
    %1323 = vmatprep.subr.mxu0 0.0
    %1324 = vmatpush1.msra.mxu0 %v145
    %1325 = vmatprep.subr.mxu0 0.0
    %1326 = vmatpush1.msra.mxu0 %v144
    %1327 = vmatprep.subr.mxu0 0.0
    %1328 = vmatpush1.msra.mxu0 %v143
    %1329 = vmatprep.subr.mxu0 0.0
    %1330 = vmatpush1.msra.mxu0 %v142
    %1331 = vmatprep.subr.mxu0 0.0
    %1332 = vmatpush2.msra.mxu0 0.0
    %1333 = vmatprep.subr.mxu0 0.0
    %1334 = vmatpush2.msra.mxu0 0.0
    %1335 = vmatprep.subr.mxu0 0.0
    %1336 = vmatpush2.msra.mxu0 0.0
    %1337 = vmatprep.subr.mxu0 0.0
    %1338 = vmatpush2.msra.mxu0 0.0
    %1339 = vmatprep.subr.mxu0 0.0
    %1340 = vmatpush2.msra.mxu0 0.0
    %1341 = vmatprep.subr.mxu0 0.0
    %1342 = vmatpush2.msra.mxu0 0.0
    %1343 = vmatprep.subr.mxu0 0.0
    %1344 = vmatpush2.msra.mxu0 0.0
    %1345 = vmatprep.subr.mxu0 0.0
    %1346 = vmatpush2.msra.mxu0 0.0
    %1347 = vmatprep.subr.mxu0 0.0
    %1348 = vmatpush2.msra.mxu0 0.0
    %1349 = vmatprep.subr.mxu0 0.0
    %1350 = vmatpush2.msra.mxu0 0.0
    %1351 = vmatprep.subr.mxu0 0.0
    %1352 = vmatpush2.msra.mxu0 0.0
    %1353 = vmatprep.subr.mxu0 0.0
    %1354 = vmatpush2.msra.mxu0 0.0
    %1355 = vmatprep.subr.mxu0 0.0
    %1356 = vmatpush2.msra.mxu0 0.0
    %1357 = vmatprep.subr.mxu0 0.0
    %1358 = vmatpush2.msra.mxu0 0.0
    %1359 = vmatprep.subr.mxu0 0.0
    %1360 = vmatpush2.msra.mxu0 0.0
    %1361 = vmatprep.subr.mxu0 0.0
    %1362 = vmatpush2.msra.mxu0 0.0
    %1363 = vmatprep.mubr.f32.mxu0 0.0
    %1364 = vmatmul.mubr.f32.gmra.mxu0 %v1297
    %v1365 = vpop.f32.mrf.mxu0
    %v1366 = vadd.f32 %v372, %v1365
    %v1367 = vpop.f32.mrf.mxu0
    %1368 = vdwg.mxu0
    %vm1369 = vcmp.gt.f32.partialorder %v1366, 0.0
    %v1370 = vsel %vm1369, 1.0, 0.2
    %v1371 = vmul.f32 %v1366, %v1370
    %v1373 = vsel %vm374, %v1371, 0
    %1375 = vmatprep.subr.mxu0 0.0
    %1376 = vmatpush1.msra.mxu0 0.0
    %1377 = vmatprep.subr.mxu0 0.0
    %1378 = vmatpush1.msra.mxu0 0.0
    %1379 = vmatprep.subr.mxu0 0.0
    %1380 = vmatpush1.msra.mxu0 0.0
    %1381 = vmatprep.subr.mxu0 0.0
    %1382 = vmatpush1.msra.mxu0 0.0
    %1383 = vmatprep.subr.mxu0 0.0
    %1384 = vmatpush1.msra.mxu0 0.0
    %1385 = vmatprep.subr.mxu0 0.0
    %1386 = vmatpush1.msra.mxu0 0.0
    %1387 = vmatprep.subr.mxu0 0.0
    %1388 = vmatpush1.msra.mxu0 0.0
    %1389 = vmatprep.subr.mxu0 0.0
    %1390 = vmatpush1.msra.mxu0 0.0
    %1391 = vmatprep.subr.mxu0 0.0
    %1392 = vmatpush1.msra.mxu0 0.0
    %1393 = vmatprep.subr.mxu0 0.0
    %1394 = vmatpush1.msra.mxu0 0.0
    %1395 = vmatprep.subr.mxu0 0.0
    %1396 = vmatpush1.msra.mxu0 0.0
    %1397 = vmatprep.subr.mxu0 0.0
    %1398 = vmatpush1.msra.mxu0 0.0
    %1399 = vmatprep.subr.mxu0 0.0
    %1400 = vmatpush1.msra.mxu0 %v150
    %1401 = vmatprep.subr.mxu0 0.0
    %1402 = vmatpush1.msra.mxu0 %v149
    %1403 = vmatprep.subr.mxu0 0.0
    %1404 = vmatpush1.msra.mxu0 %v148
    %1405 = vmatprep.subr.mxu0 0.0
    %1406 = vmatpush1.msra.mxu0 %v147
    %1407 = vmatprep.subr.mxu0 0.0
    %1408 = vmatpush2.msra.mxu0 0.0
    %1409 = vmatprep.subr.mxu0 0.0
    %1410 = vmatpush2.msra.mxu0 0.0
    %1411 = vmatprep.subr.mxu0 0.0
    %1412 = vmatpush2.msra.mxu0 0.0
    %1413 = vmatprep.subr.mxu0 0.0
    %1414 = vmatpush2.msra.mxu0 0.0
    %1415 = vmatprep.subr.mxu0 0.0
    %1416 = vmatpush2.msra.mxu0 0.0
    %1417 = vmatprep.subr.mxu0 0.0
    %1418 = vmatpush2.msra.mxu0 0.0
    %1419 = vmatprep.subr.mxu0 0.0
    %1420 = vmatpush2.msra.mxu0 0.0
    %1421 = vmatprep.subr.mxu0 0.0
    %1422 = vmatpush2.msra.mxu0 0.0
    %1423 = vmatprep.subr.mxu0 0.0
    %1424 = vmatpush2.msra.mxu0 0.0
    %1425 = vmatprep.subr.mxu0 0.0
    %1426 = vmatpush2.msra.mxu0 0.0
    %1427 = vmatprep.subr.mxu0 0.0
    %1428 = vmatpush2.msra.mxu0 0.0
    %1429 = vmatprep.subr.mxu0 0.0
    %1430 = vmatpush2.msra.mxu0 0.0
    %1431 = vmatprep.subr.mxu0 0.0
    %1432 = vmatpush2.msra.mxu0 0.0
    %1433 = vmatprep.subr.mxu0 0.0
    %1434 = vmatpush2.msra.mxu0 0.0
    %1435 = vmatprep.subr.mxu0 0.0
    %1436 = vmatpush2.msra.mxu0 0.0
    %1437 = vmatprep.subr.mxu0 0.0
    %1438 = vmatpush2.msra.mxu0 0.0
    %1439 = vmatprep.mubr.f32.mxu0 0.0
    %1440 = vmatmul.mubr.f32.gmra.mxu0 %v1373
    %v1441 = vpop.f32.mrf.mxu0
    %v1442 = vadd.f32 %v455, %v1441
    %v1443 = vpop.f32.mrf.mxu0
    %1444 = vdwg.mxu0
    %v1445 = vmul.f32 %v1442, %v1198
    %v1446 = vsel %vm179, %v1445, 0.0
    %1447 = vadd.xlane.f32.xlu0 %v1446
    %v1448 = vpop.xlane.xlu0 %1447
    %v1449 = vadd.f32 %v1448, %v538
    %v1450 = vxor.u32 %v1449, 2147483648
    %v1451 = vmul.f32 %v1450, 1.442695
    %v1452 = vpow.pop %v1451
    %v1453 = vadd.f32 %v1452, 1.0
    %v1454 = vrcp.pop %v1453
    %v1455 = vmul.f32 1.0, %v1454
    %v1456 = vsub.f32 %v1455, %v1114
    %v1457 = vmul.f32 %v1456, 0.125
    %1459 = vset.pattern.permute.xlu0 0
    %1460 = vperm.xlu0 %1459, %v1457
    %v1461 = vpop.permute.xlu0 %1460
    %v1463 = vmul.f32 %v1461, %v1198
    %v1465 = vsel %vm179, %v1463, 0
    %1467 = vmatprep.subr.mxu0 0.0
    %1468 = vmatpush1.msra.mxu0 0.0
    %1469 = vmatprep.subr.mxu0 0.0
    %1470 = vmatpush1.msra.mxu0 0.0
    %1471 = vmatprep.subr.mxu0 0.0
    %1472 = vmatpush1.msra.mxu0 0.0
    %1473 = vmatprep.subr.mxu0 0.0
    %1474 = vmatpush1.msra.mxu0 0.0
    %1475 = vmatprep.subr.mxu0 0.0
    %1476 = vmatpush1.msra.mxu0 0.0
    %1477 = vmatprep.subr.mxu0 0.0
    %1478 = vmatpush1.msra.mxu0 0.0
    %1479 = vmatprep.subr.mxu0 0.0
    %1480 = vmatpush1.msra.mxu0 0.0
    %1481 = vmatprep.subr.mxu0 0.0
    %1482 = vmatpush1.msra.mxu0 0.0
    %1483 = vmatprep.subr.mxu0 0.0
    %1484 = vmatpush1.msra.mxu0 0.0
    %1485 = vmatprep.subr.mxu0 0.0
    %1486 = vmatpush1.msra.mxu0 0.0
    %1487 = vmatprep.subr.mxu0 0.0
    %1488 = vmatpush1.msra.mxu0 0.0
    %1489 = vmatprep.subr.mxu0 0.0
    %1490 = vmatpush1.msra.mxu0 0.0
    %1491 = vmatprep.subr.mxu0 0.0
    %1492 = vmatpush1.msra.mxu0 0.0
    %1493 = vmatprep.subr.mxu0 0.0
    %1494 = vmatpush1.msra.mxu0 0.0
    %1495 = vmatprep.subr.mxu0 0.0
    %1496 = vmatpush1.msra.mxu0 0.0
    %1497 = vmatprep.subr.mxu0 0.0
    %1498 = vmatpush1.msra.mxu0 %v559
    %1499 = vmatprep.subr.mxu0 0.0
    %1500 = vmatpush2.msra.mxu0 0.0
    %1501 = vmatprep.subr.mxu0 0.0
    %1502 = vmatpush2.msra.mxu0 0.0
    %1503 = vmatprep.subr.mxu0 0.0
    %1504 = vmatpush2.msra.mxu0 0.0
    %1505 = vmatprep.subr.mxu0 0.0
    %1506 = vmatpush2.msra.mxu0 0.0
    %1507 = vmatprep.subr.mxu0 0.0
    %1508 = vmatpush2.msra.mxu0 0.0
    %1509 = vmatprep.subr.mxu0 0.0
    %1510 = vmatpush2.msra.mxu0 0.0
    %1511 = vmatprep.subr.mxu0 0.0
    %1512 = vmatpush2.msra.mxu0 0.0
    %1513 = vmatprep.subr.mxu0 0.0
    %1514 = vmatpush2.msra.mxu0 0.0
    %1515 = vmatprep.subr.mxu0 0.0
    %1516 = vmatpush2.msra.mxu0 0.0
    %1517 = vmatprep.subr.mxu0 0.0
    %1518 = vmatpush2.msra.mxu0 0.0
    %1519 = vmatprep.subr.mxu0 0.0
    %1520 = vmatpush2.msra.mxu0 0.0
    %1521 = vmatprep.subr.mxu0 0.0
    %1522 = vmatpush2.msra.mxu0 0.0
    %1523 = vmatprep.subr.mxu0 0.0
    %1524 = vmatpush2.msra.mxu0 0.0
    %1525 = vmatprep.subr.mxu0 0.0
    %1526 = vmatpush2.msra.mxu0 0.0
    %1527 = vmatprep.subr.mxu0 0.0
    %1528 = vmatpush2.msra.mxu0 0.0
    %1529 = vmatprep.subr.mxu0 0.0
    %1530 = vmatpush2.msra.mxu0 0.0
    %1531 = vmatprep.mubr.f32.mxu0 0.0
    %1532 = vmatmul.mubr.f32.gmra.mxu0 %v1465
    %v1533 = vpop.f32.mrf.mxu0
    %v1534 = vadd.f32 0.0, %v1533
    %v1535 = vpop.f32.mrf.mxu0
    %1536 = vdwg.mxu0
    %v1537 = vmul.f32 %v1370, %v1534
    %v1539 = vsel %vm374, %v1537, 0
    %1541 = vmatprep.subr.mxu0 0.0
    %1542 = vmatpush1.msra.mxu0 0.0
    %1543 = vmatprep.subr.mxu0 0.0
    %1544 = vmatpush1.msra.mxu0 0.0
    %1545 = vmatprep.subr.mxu0 0.0
    %1546 = vmatpush1.msra.mxu0 0.0
    %1547 = vmatprep.subr.mxu0 0.0
    %1548 = vmatpush1.msra.mxu0 0.0
    %1549 = vmatprep.subr.mxu0 0.0
    %1550 = vmatpush1.msra.mxu0 0.0
    %1551 = vmatprep.subr.mxu0 0.0
    %1552 = vmatpush1.msra.mxu0 0.0
    %1553 = vmatprep.subr.mxu0 0.0
    %1554 = vmatpush1.msra.mxu0 0.0
    %1555 = vmatprep.subr.mxu0 0.0
    %1556 = vmatpush1.msra.mxu0 0.0
    %1557 = vmatprep.subr.mxu0 0.0
    %1558 = vmatpush1.msra.mxu0 0.0
    %1559 = vmatprep.subr.mxu0 0.0
    %1560 = vmatpush1.msra.mxu0 0.0
    %1561 = vmatprep.subr.mxu0 0.0
    %1562 = vmatpush1.msra.mxu0 0.0
    %1563 = vmatprep.subr.mxu0 0.0
    %1564 = vmatpush1.msra.mxu0 0.0
    %1565 = vmatprep.subr.mxu0 0.0
    %1566 = vmatpush1.msra.mxu0 %v159
    %1567 = vmatprep.subr.mxu0 0.0
    %1568 = vmatpush1.msra.mxu0 %v158
    %1569 = vmatprep.subr.mxu0 0.0
    %1570 = vmatpush1.msra.mxu0 %v157
    %1571 = vmatprep.subr.mxu0 0.0
    %1572 = vmatpush1.msra.mxu0 %v156
    %1573 = vmatprep.subr.mxu0 0.0
    %1574 = vmatpush2.msra.mxu0 0.0
    %1575 = vmatprep.subr.mxu0 0.0
    %1576 = vmatpush2.msra.mxu0 0.0
    %1577 = vmatprep.subr.mxu0 0.0
    %1578 = vmatpush2.msra.mxu0 0.0
    %1579 = vmatprep.subr.mxu0 0.0
    %1580 = vmatpush2.msra.mxu0 0.0
    %1581 = vmatprep.subr.mxu0 0.0
    %1582 = vmatpush2.msra.mxu0 0.0
    %1583 = vmatprep.subr.mxu0 0.0
    %1584 = vmatpush2.msra.mxu0 0.0
    %1585 = vmatprep.subr.mxu0 0.0
    %1586 = vmatpush2.msra.mxu0 0.0
    %1587 = vmatprep.subr.mxu0 0.0
    %1588 = vmatpush2.msra.mxu0 0.0
    %1589 = vmatprep.subr.mxu0 0.0
    %1590 = vmatpush2.msra.mxu0 0.0
    %1591 = vmatprep.subr.mxu0 0.0
    %1592 = vmatpush2.msra.mxu0 0.0
    %1593 = vmatprep.subr.mxu0 0.0
    %1594 = vmatpush2.msra.mxu0 0.0
    %1595 = vmatprep.subr.mxu0 0.0
    %1596 = vmatpush2.msra.mxu0 0.0
    %1597 = vmatprep.subr.mxu0 0.0
    %1598 = vmatpush2.msra.mxu0 0.0
    %1599 = vmatprep.subr.mxu0 0.0
    %1600 = vmatpush2.msra.mxu0 0.0
    %1601 = vmatprep.subr.mxu0 0.0
    %1602 = vmatpush2.msra.mxu0 0.0
    %1603 = vmatprep.subr.mxu0 0.0
    %1604 = vmatpush2.msra.mxu0 0.0
    %1605 = vmatprep.mubr.f32.mxu0 0.0
    %1606 = vmatmul.mubr.f32.gmra.mxu0 %v1539
    %v1607 = vpop.f32.mrf.mxu0
    %v1608 = vadd.f32 0.0, %v1607
    %v1609 = vpop.f32.mrf.mxu0
    %1610 = vdwg.mxu0
    %v1611 = vmul.f32 %v1294, %v1608
    %v1613 = vsel %vm374, %v1611, 0
    %1615 = vmatprep.subr.mxu0 0.0
    %1616 = vmatpush1.msra.mxu0 0.0
    %1617 = vmatprep.subr.mxu0 0.0
    %1618 = vmatpush1.msra.mxu0 0.0
    %1619 = vmatprep.subr.mxu0 0.0
    %1620 = vmatpush1.msra.mxu0 0.0
    %1621 = vmatprep.subr.mxu0 0.0
    %1622 = vmatpush1.msra.mxu0 0.0
    %1623 = vmatprep.subr.mxu0 0.0
    %1624 = vmatpush1.msra.mxu0 0.0
    %1625 = vmatprep.subr.mxu0 0.0
    %1626 = vmatpush1.msra.mxu0 0.0
    %1627 = vmatprep.subr.mxu0 0.0
    %1628 = vmatpush1.msra.mxu0 0.0
    %1629 = vmatprep.subr.mxu0 0.0
    %1630 = vmatpush1.msra.mxu0 0.0
    %1631 = vmatprep.subr.mxu0 0.0
    %1632 = vmatpush1.msra.mxu0 0.0
    %1633 = vmatprep.subr.mxu0 0.0
    %1634 = vmatpush1.msra.mxu0 0.0
    %1635 = vmatprep.subr.mxu0 0.0
    %1636 = vmatpush1.msra.mxu0 0.0
    %1637 = vmatprep.subr.mxu0 0.0
    %1638 = vmatpush1.msra.mxu0 0.0
    %1639 = vmatprep.subr.mxu0 0.0
    %1640 = vmatpush1.msra.mxu0 %v155
    %1641 = vmatprep.subr.mxu0 0.0
    %1642 = vmatpush1.msra.mxu0 %v154
    %1643 = vmatprep.subr.mxu0 0.0
    %1644 = vmatpush1.msra.mxu0 %v153
    %1645 = vmatprep.subr.mxu0 0.0
    %1646 = vmatpush1.msra.mxu0 %v152
    %1647 = vmatprep.subr.mxu0 0.0
    %1648 = vmatpush2.msra.mxu0 0.0
    %1649 = vmatprep.subr.mxu0 0.0
    %1650 = vmatpush2.msra.mxu0 0.0
    %1651 = vmatprep.subr.mxu0 0.0
    %1652 = vmatpush2.msra.mxu0 0.0
    %1653 = vmatprep.subr.mxu0 0.0
    %1654 = vmatpush2.msra.mxu0 0.0
    %1655 = vmatprep.subr.mxu0 0.0
    %1656 = vmatpush2.msra.mxu0 0.0
    %1657 = vmatprep.subr.mxu0 0.0
    %1658 = vmatpush2.msra.mxu0 0.0
    %1659 = vmatprep.subr.mxu0 0.0
    %1660 = vmatpush2.msra.mxu0 0.0
    %1661 = vmatprep.subr.mxu0 0.0
    %1662 = vmatpush2.msra.mxu0 0.0
    %1663 = vmatprep.subr.mxu0 0.0
    %1664 = vmatpush2.msra.mxu0 0.0
    %1665 = vmatprep.subr.mxu0 0.0
    %1666 = vmatpush2.msra.mxu0 0.0
    %1667 = vmatprep.subr.mxu0 0.0
    %1668 = vmatpush2.msra.mxu0 0.0
    %1669 = vmatprep.subr.mxu0 0.0
    %1670 = vmatpush2.msra.mxu0 0.0
    %1671 = vmatprep.subr.mxu0 0.0
    %1672 = vmatpush2.msra.mxu0 0.0
    %1673 = vmatprep.subr.mxu0 0.0
    %1674 = vmatpush2.msra.mxu0 0.0
    %1675 = vmatprep.subr.mxu0 0.0
    %1676 = vmatpush2.msra.mxu0 0.0
    %1677 = vmatprep.subr.mxu0 0.0
    %1678 = vmatpush2.msra.mxu0 0.0
    %1679 = vmatprep.mubr.f32.mxu0 0.0
    %1680 = vmatmul.mubr.f32.gmra.mxu0 %v1613
    %v1681 = vpop.f32.mrf.mxu0
    %v1682 = vadd.f32 0.0, %v1681
    %v1683 = vpop.f32.mrf.mxu0
    %1684 = vdwg.mxu0
    %v1685 = vmul.f32 %v1461, %v1442
    %v1686 = vsel %vm179, %v1685, 0.0
    %v1687 = vrot.slane %v1686, 4
    %v1688 = vadd.f32 %v1686, %v1687
    %v1689 = vrot.slane %v1688, 2
    %v1690 = vadd.f32 %v1688, %v1689
    %v1691 = vrot.slane %v1690, 1
    %v1692 = vadd.f32 %v1690, %v1691
    %1694 = vrot.lane.b32.xlu0 %v1682, 126
    %v1695 = vpop.permute.xlu0 %1694
    %v1697 = vadd.f32 %v1682, %v1695
    %v1698 = vsel %vm179, %v1697, 0.0
    %v1699 = vrot.slane %v1698, 4
    %v1700 = vadd.f32 %v1698, %v1699
    %v1701 = vrot.slane %v1700, 2
    %v1702 = vadd.f32 %v1700, %v1701
    %v1703 = vrot.slane %v1702, 1
    %v1704 = vadd.f32 %v1702, %v1703
    %v1705 = vadd.f32 %v1692, %v1704
    %v1706 = vmul.f32 %v1442, %v804
    %v1707 = vsel %vm179, %v1706, 0.0
    %1708 = vadd.xlane.f32.xlu0 %v1707
    %v1709 = vpop.xlane.xlu0 %1708
    %v1710 = vadd.f32 %v1709, %v814
    %v1711 = vxor.u32 %v1710, 2147483648
    %v1712 = vmul.f32 %v1711, 1.442695
    %v1713 = vpow.pop %v1712
    %v1714 = vadd.f32 %v1713, 1.0
    %v1715 = vrcp.pop %v1714
    %v1716 = vmul.f32 1.0, %v1715
    %v1717 = vsub.f32 0.0, %v1710
    %v1718 = vmax.f32 %v1717, 0.0
    %v1719 = vand.u32 2147483647, %v1717
    %v1720 = vsub.f32 0.0, %v1719
    %v1721 = vmul.f32 %v1720, 1.442695
    %v1722 = vpow.pop %v1721
    %v1723 = vadd.f32 %v1722, 1.0
    %v1724 = vlog2.pop %v1723
    %v1725 = vmul.f32 %v1724, 0.6931472
    %v1726 = vadd.f32 %v1718, %v1725
    %v1727 = vmul.f32 %v1114, %v1726
    %v1728 = vmax.f32 %v1710, 0.0
    %v1729 = vand.u32 2147483647, %v1710
    %v1730 = vsub.f32 0.0, %v1729
    %v1731 = vmul.f32 %v1730, 1.442695
    %v1732 = vpow.pop %v1731
    %v1733 = vadd.f32 %v1732, 1.0
    %v1734 = vlog2.pop %v1733
    %v1735 = vmul.f32 %v1734, 0.6931472
    %v1736 = vadd.f32 %v1728, %v1735
    %v1737 = vmul.f32 %v1115, %v1736
    %v1738 = vadd.f32 %v1727, %v1737
    %v1739 = vsel %vm177, %v1738, 0.0
    %v1740 = vrot.slane %v1739, 4
    %v1741 = vadd.f32 %v1739, %v1740
    %v1742 = vrot.slane %v1741, 2
    %v1743 = vadd.f32 %v1741, %v1742
    %v1744 = vrot.slane %v1743, 1
    %v1745 = vadd.f32 %v1743, %v1744
    %v1746 = vmul.f32 %v1745, 0.125
    %v1747 = vadd.f32 %v853, %v1746
    %v1748 = vsub.f32 %v1716, %v1114
    %v1749 = vmul.f32 %v1748, 0.125
    %1751 = vset.pattern.permute.xlu0 0
    %1752 = vperm.xlu0 %1751, %v1749
    %v1753 = vpop.permute.xlu0 %1752
    %v1755 = vmul.f32 %v1753, %v804
    %v1757 = vsel %vm179, %v1755, 0
    %1759 = vmatprep.subr.mxu0 0.0
    %1760 = vmatpush1.msra.mxu0 0.0
    %1761 = vmatprep.subr.mxu0 0.0
    %1762 = vmatpush1.msra.mxu0 0.0
    %1763 = vmatprep.subr.mxu0 0.0
    %1764 = vmatpush1.msra.mxu0 0.0
    %1765 = vmatprep.subr.mxu0 0.0
    %1766 = vmatpush1.msra.mxu0 0.0
    %1767 = vmatprep.subr.mxu0 0.0
    %1768 = vmatpush1.msra.mxu0 0.0
    %1769 = vmatprep.subr.mxu0 0.0
    %1770 = vmatpush1.msra.mxu0 0.0
    %1771 = vmatprep.subr.mxu0 0.0
    %1772 = vmatpush1.msra.mxu0 0.0
    %1773 = vmatprep.subr.mxu0 0.0
    %1774 = vmatpush1.msra.mxu0 0.0
    %1775 = vmatprep.subr.mxu0 0.0
    %1776 = vmatpush1.msra.mxu0 0.0
    %1777 = vmatprep.subr.mxu0 0.0
    %1778 = vmatpush1.msra.mxu0 0.0
    %1779 = vmatprep.subr.mxu0 0.0
    %1780 = vmatpush1.msra.mxu0 0.0
    %1781 = vmatprep.subr.mxu0 0.0
    %1782 = vmatpush1.msra.mxu0 0.0
    %1783 = vmatprep.subr.mxu0 0.0
    %1784 = vmatpush1.msra.mxu0 0.0
    %1785 = vmatprep.subr.mxu0 0.0
    %1786 = vmatpush1.msra.mxu0 0.0
    %1787 = vmatprep.subr.mxu0 0.0
    %1788 = vmatpush1.msra.mxu0 0.0
    %1789 = vmatprep.subr.mxu0 0.0
    %1790 = vmatpush1.msra.mxu0 %v559
    %1791 = vmatprep.subr.mxu0 0.0
    %1792 = vmatpush2.msra.mxu0 0.0
    %1793 = vmatprep.subr.mxu0 0.0
    %1794 = vmatpush2.msra.mxu0 0.0
    %1795 = vmatprep.subr.mxu0 0.0
    %1796 = vmatpush2.msra.mxu0 0.0
    %1797 = vmatprep.subr.mxu0 0.0
    %1798 = vmatpush2.msra.mxu0 0.0
    %1799 = vmatprep.subr.mxu0 0.0
    %1800 = vmatpush2.msra.mxu0 0.0
    %1801 = vmatprep.subr.mxu0 0.0
    %1802 = vmatpush2.msra.mxu0 0.0
    %1803 = vmatprep.subr.mxu0 0.0
    %1804 = vmatpush2.msra.mxu0 0.0
    %1805 = vmatprep.subr.mxu0 0.0
    %1806 = vmatpush2.msra.mxu0 0.0
    %1807 = vmatprep.subr.mxu0 0.0
    %1808 = vmatpush2.msra.mxu0 0.0
    %1809 = vmatprep.subr.mxu0 0.0
    %1810 = vmatpush2.msra.mxu0 0.0
    %1811 = vmatprep.subr.mxu0 0.0
    %1812 = vmatpush2.msra.mxu0 0.0
    %1813 = vmatprep.subr.mxu0 0.0
    %1814 = vmatpush2.msra.mxu0 0.0
    %1815 = vmatprep.subr.mxu0 0.0
    %1816 = vmatpush2.msra.mxu0 0.0
    %1817 = vmatprep.subr.mxu0 0.0
    %1818 = vmatpush2.msra.mxu0 0.0
    %1819 = vmatprep.subr.mxu0 0.0
    %1820 = vmatpush2.msra.mxu0 0.0
    %1821 = vmatprep.subr.mxu0 0.0
    %1822 = vmatpush2.msra.mxu0 0.0
    %1823 = vmatprep.mubr.f32.mxu0 0.0
    %1824 = vmatmul.mubr.f32.gmra.mxu0 %v1757
    %v1825 = vpop.f32.mrf.mxu0
    %v1826 = vadd.f32 0.0, %v1825
    %v1827 = vpop.f32.mrf.mxu0
    %1828 = vdwg.mxu0
    %v1829 = vmul.f32 %v1370, %v1826
    %v1831 = vsel %vm374, %v1829, 0
    %1833 = vmatprep.subr.mxu0 0.0
    %1834 = vmatpush1.msra.mxu0 0.0
    %1835 = vmatprep.subr.mxu0 0.0
    %1836 = vmatpush1.msra.mxu0 0.0
    %1837 = vmatprep.subr.mxu0 0.0
    %1838 = vmatpush1.msra.mxu0 0.0
    %1839 = vmatprep.subr.mxu0 0.0
    %1840 = vmatpush1.msra.mxu0 0.0
    %1841 = vmatprep.subr.mxu0 0.0
    %1842 = vmatpush1.msra.mxu0 0.0
    %1843 = vmatprep.subr.mxu0 0.0
    %1844 = vmatpush1.msra.mxu0 0.0
    %1845 = vmatprep.subr.mxu0 0.0
    %1846 = vmatpush1.msra.mxu0 0.0
    %1847 = vmatprep.subr.mxu0 0.0
    %1848 = vmatpush1.msra.mxu0 0.0
    %1849 = vmatprep.subr.mxu0 0.0
    %1850 = vmatpush1.msra.mxu0 0.0
    %1851 = vmatprep.subr.mxu0 0.0
    %1852 = vmatpush1.msra.mxu0 0.0
    %1853 = vmatprep.subr.mxu0 0.0
    %1854 = vmatpush1.msra.mxu0 0.0
    %1855 = vmatprep.subr.mxu0 0.0
    %1856 = vmatpush1.msra.mxu0 0.0
    %1857 = vmatprep.subr.mxu0 0.0
    %1858 = vmatpush1.msra.mxu0 %v159
    %1859 = vmatprep.subr.mxu0 0.0
    %1860 = vmatpush1.msra.mxu0 %v158
    %1861 = vmatprep.subr.mxu0 0.0
    %1862 = vmatpush1.msra.mxu0 %v157
    %1863 = vmatprep.subr.mxu0 0.0
    %1864 = vmatpush1.msra.mxu0 %v156
    %1865 = vmatprep.subr.mxu0 0.0
    %1866 = vmatpush2.msra.mxu0 0.0
    %1867 = vmatprep.subr.mxu0 0.0
    %1868 = vmatpush2.msra.mxu0 0.0
    %1869 = vmatprep.subr.mxu0 0.0
    %1870 = vmatpush2.msra.mxu0 0.0
    %1871 = vmatprep.subr.mxu0 0.0
    %1872 = vmatpush2.msra.mxu0 0.0
    %1873 = vmatprep.subr.mxu0 0.0
    %1874 = vmatpush2.msra.mxu0 0.0
    %1875 = vmatprep.subr.mxu0 0.0
    %1876 = vmatpush2.msra.mxu0 0.0
    %1877 = vmatprep.subr.mxu0 0.0
    %1878 = vmatpush2.msra.mxu0 0.0
    %1879 = vmatprep.subr.mxu0 0.0
    %1880 = vmatpush2.msra.mxu0 0.0
    %1881 = vmatprep.subr.mxu0 0.0
    %1882 = vmatpush2.msra.mxu0 0.0
    %1883 = vmatprep.subr.mxu0 0.0
    %1884 = vmatpush2.msra.mxu0 0.0
    %1885 = vmatprep.subr.mxu0 0.0
    %1886 = vmatpush2.msra.mxu0 0.0
    %1887 = vmatprep.subr.mxu0 0.0
    %1888 = vmatpush2.msra.mxu0 0.0
    %1889 = vmatprep.subr.mxu0 0.0
    %1890 = vmatpush2.msra.mxu0 0.0
    %1891 = vmatprep.subr.mxu0 0.0
    %1892 = vmatpush2.msra.mxu0 0.0
    %1893 = vmatprep.subr.mxu0 0.0
    %1894 = vmatpush2.msra.mxu0 0.0
    %1895 = vmatprep.subr.mxu0 0.0
    %1896 = vmatpush2.msra.mxu0 0.0
    %1897 = vmatprep.mubr.f32.mxu0 0.0
    %1898 = vmatmul.mubr.f32.gmra.mxu0 %v1831
    %v1899 = vpop.f32.mrf.mxu0
    %v1900 = vadd.f32 0.0, %v1899
    %v1901 = vpop.f32.mrf.mxu0
    %1902 = vdwg.mxu0
    %v1903 = vmul.f32 %v1294, %v1900
    %v1905 = vsel %vm374, %v1903, 0
    %1907 = vmatprep.subr.mxu0 0.0
    %1908 = vmatpush1.msra.mxu0 0.0
    %1909 = vmatprep.subr.mxu0 0.0
    %1910 = vmatpush1.msra.mxu0 0.0
    %1911 = vmatprep.subr.mxu0 0.0
    %1912 = vmatpush1.msra.mxu0 0.0
    %1913 = vmatprep.subr.mxu0 0.0
    %1914 = vmatpush1.msra.mxu0 0.0
    %1915 = vmatprep.subr.mxu0 0.0
    %1916 = vmatpush1.msra.mxu0 0.0
    %1917 = vmatprep.subr.mxu0 0.0
    %1918 = vmatpush1.msra.mxu0 0.0
    %1919 = vmatprep.subr.mxu0 0.0
    %1920 = vmatpush1.msra.mxu0 0.0
    %1921 = vmatprep.subr.mxu0 0.0
    %1922 = vmatpush1.msra.mxu0 0.0
    %1923 = vmatprep.subr.mxu0 0.0
    %1924 = vmatpush1.msra.mxu0 0.0
    %1925 = vmatprep.subr.mxu0 0.0
    %1926 = vmatpush1.msra.mxu0 0.0
    %1927 = vmatprep.subr.mxu0 0.0
    %1928 = vmatpush1.msra.mxu0 0.0
    %1929 = vmatprep.subr.mxu0 0.0
    %1930 = vmatpush1.msra.mxu0 0.0
    %1931 = vmatprep.subr.mxu0 0.0
    %1932 = vmatpush1.msra.mxu0 %v155
    %1933 = vmatprep.subr.mxu0 0.0
    %1934 = vmatpush1.msra.mxu0 %v154
    %1935 = vmatprep.subr.mxu0 0.0
    %1936 = vmatpush1.msra.mxu0 %v153
    %1937 = vmatprep.subr.mxu0 0.0
    %1938 = vmatpush1.msra.mxu0 %v152
    %1939 = vmatprep.subr.mxu0 0.0
    %1940 = vmatpush2.msra.mxu0 0.0
    %1941 = vmatprep.subr.mxu0 0.0
    %1942 = vmatpush2.msra.mxu0 0.0
    %1943 = vmatprep.subr.mxu0 0.0
    %1944 = vmatpush2.msra.mxu0 0.0
    %1945 = vmatprep.subr.mxu0 0.0
    %1946 = vmatpush2.msra.mxu0 0.0
    %1947 = vmatprep.subr.mxu0 0.0
    %1948 = vmatpush2.msra.mxu0 0.0
    %1949 = vmatprep.subr.mxu0 0.0
    %1950 = vmatpush2.msra.mxu0 0.0
    %1951 = vmatprep.subr.mxu0 0.0
    %1952 = vmatpush2.msra.mxu0 0.0
    %1953 = vmatprep.subr.mxu0 0.0
    %1954 = vmatpush2.msra.mxu0 0.0
    %1955 = vmatprep.subr.mxu0 0.0
    %1956 = vmatpush2.msra.mxu0 0.0
    %1957 = vmatprep.subr.mxu0 0.0
    %1958 = vmatpush2.msra.mxu0 0.0
    %1959 = vmatprep.subr.mxu0 0.0
    %1960 = vmatpush2.msra.mxu0 0.0
    %1961 = vmatprep.subr.mxu0 0.0
    %1962 = vmatpush2.msra.mxu0 0.0
    %1963 = vmatprep.subr.mxu0 0.0
    %1964 = vmatpush2.msra.mxu0 0.0
    %1965 = vmatprep.subr.mxu0 0.0
    %1966 = vmatpush2.msra.mxu0 0.0
    %1967 = vmatprep.subr.mxu0 0.0
    %1968 = vmatpush2.msra.mxu0 0.0
    %1969 = vmatprep.subr.mxu0 0.0
    %1970 = vmatpush2.msra.mxu0 0.0
    %1971 = vmatprep.mubr.f32.mxu0 0.0
    %1972 = vmatmul.mubr.f32.gmra.mxu0 %v1905
    %v1973 = vpop.f32.mrf.mxu0
    %v1974 = vadd.f32 0.0, %v1973
    %v1975 = vpop.f32.mrf.mxu0
    %1976 = vdwg.mxu0
    %1977 = vxpose.xlu0.b32.start [1/16] %v1371, 128
    %1978 = vxpose.xlu0.b32.cont [2/16] 0.0, 128
    %1979 = vxpose.xlu0.b32.cont [3/16] 0.0, 128
    %1980 = vxpose.xlu0.b32.cont [4/16] 0.0, 128
    %1981 = vxpose.xlu0.b32.cont [5/16] 0.0, 128
    %1982 = vxpose.xlu0.b32.cont [6/16] 0.0, 128
    %1983 = vxpose.xlu0.b32.cont [7/16] 0.0, 128
    %1984 = vxpose.xlu0.b32.cont [8/16] 0.0, 128
    %1985 = vxpose.xlu0.b32.cont [9/16] 0.0, 128
    %1986 = vxpose.xlu0.b32.cont [10/16] 0.0, 128
    %1987 = vxpose.xlu0.b32.cont [11/16] 0.0, 128
    %1988 = vxpose.xlu0.b32.cont [12/16] 0.0, 128
    %1989 = vxpose.xlu0.b32.cont [13/16] 0.0, 128
    %1990 = vxpose.xlu0.b32.cont [14/16] 0.0, 128
    %1991 = vxpose.xlu0.b32.cont [15/16] 0.0, 128
    %1992 = vxpose.xlu0.b32.end [16/16] 0.0, 128
    %v1993 = vpop.trf.xlu0
    %v1994 = vpop.trf.xlu0
    %v1995 = vpop.trf.xlu0
    %v1996 = vpop.trf.xlu0
    %v1997 = vpop.trf.xlu0
    %v1998 = vpop.trf.xlu0
    %v1999 = vpop.trf.xlu0
    %v2000 = vpop.trf.xlu0
    %v2001 = vpop.trf.xlu0
    %v2002 = vpop.trf.xlu0
    %v2003 = vpop.trf.xlu0
    %v2004 = vpop.trf.xlu0
    %v2005 = vpop.trf.xlu0
    %v2006 = vpop.trf.xlu0
    %v2007 = vpop.trf.xlu0
    %v2008 = vpop.trf.xlu0
    %v2010 = vsel %vm291, %v1993, 0
    %v2013 = vsel %vm291, %v1994, 0
    %v2016 = vsel %vm291, %v1995, 0
    %v2019 = vsel %vm291, %v1996, 0
    %2021 = vmatprep.subr.mxu0 0.0
    %2022 = vmatpush1.msra.mxu0 0.0
    %2023 = vmatprep.subr.mxu0 0.0
    %2024 = vmatpush1.msra.mxu0 0.0
    %2025 = vmatprep.subr.mxu0 0.0
    %2026 = vmatpush1.msra.mxu0 0.0
    %2027 = vmatprep.subr.mxu0 0.0
    %2028 = vmatpush1.msra.mxu0 0.0
    %2029 = vmatprep.subr.mxu0 0.0
    %2030 = vmatpush1.msra.mxu0 0.0
    %2031 = vmatprep.subr.mxu0 0.0
    %2032 = vmatpush1.msra.mxu0 0.0
    %2033 = vmatprep.subr.mxu0 0.0
    %2034 = vmatpush1.msra.mxu0 0.0
    %2035 = vmatprep.subr.mxu0 0.0
    %2036 = vmatpush1.msra.mxu0 0.0
    %2037 = vmatprep.subr.mxu0 0.0
    %2038 = vmatpush1.msra.mxu0 0.0
    %2039 = vmatprep.subr.mxu0 0.0
    %2040 = vmatpush1.msra.mxu0 0.0
    %2041 = vmatprep.subr.mxu0 0.0
    %2042 = vmatpush1.msra.mxu0 0.0
    %2043 = vmatprep.subr.mxu0 0.0
    %2044 = vmatpush1.msra.mxu0 0.0
    %2045 = vmatprep.subr.mxu0 0.0
    %2046 = vmatpush1.msra.mxu0 0.0
    %2047 = vmatprep.subr.mxu0 0.0
    %2048 = vmatpush1.msra.mxu0 0.0
    %2049 = vmatprep.subr.mxu0 0.0
    %2050 = vmatpush1.msra.mxu0 0.0
    %2051 = vmatprep.subr.mxu0 0.0
    %2052 = vmatpush1.msra.mxu0 %v1755
    %2053 = vmatprep.subr.mxu0 0.0
    %2054 = vmatpush2.msra.mxu0 0.0
    %2055 = vmatprep.subr.mxu0 0.0
    %2056 = vmatpush2.msra.mxu0 0.0
    %2057 = vmatprep.subr.mxu0 0.0
    %2058 = vmatpush2.msra.mxu0 0.0
    %2059 = vmatprep.subr.mxu0 0.0
    %2060 = vmatpush2.msra.mxu0 0.0
    %2061 = vmatprep.subr.mxu0 0.0
    %2062 = vmatpush2.msra.mxu0 0.0
    %2063 = vmatprep.subr.mxu0 0.0
    %2064 = vmatpush2.msra.mxu0 0.0
    %2065 = vmatprep.subr.mxu0 0.0
    %2066 = vmatpush2.msra.mxu0 0.0
    %2067 = vmatprep.subr.mxu0 0.0
    %2068 = vmatpush2.msra.mxu0 0.0
    %2069 = vmatprep.subr.mxu0 0.0
    %2070 = vmatpush2.msra.mxu0 0.0
    %2071 = vmatprep.subr.mxu0 0.0
    %2072 = vmatpush2.msra.mxu0 0.0
    %2073 = vmatprep.subr.mxu0 0.0
    %2074 = vmatpush2.msra.mxu0 0.0
    %2075 = vmatprep.subr.mxu0 0.0
    %2076 = vmatpush2.msra.mxu0 0.0
    %2077 = vmatprep.subr.mxu0 0.0
    %2078 = vmatpush2.msra.mxu0 0.0
    %2079 = vmatprep.subr.mxu0 0.0
    %2080 = vmatpush2.msra.mxu0 0.0
    %2081 = vmatprep.subr.mxu0 0.0
    %2082 = vmatpush2.msra.mxu0 0.0
    %2083 = vmatprep.subr.mxu0 0.0
    %2084 = vmatpush2.msra.mxu0 0.0
    %2085 = vmatprep.mubr.f32.mxu0 0.0
    %2086 = vmatmul.mubr.f32.gmra.mxu0 %v2010
    %v2087 = vpop.f32.mrf.mxu0
    %v2088 = vadd.f32 0.0, %v2087
    %v2089 = vpop.f32.mrf.mxu0
    %2090 = vmatprep.mubr.f32.mxu0 0.0
    %2091 = vmatmul.mubr.f32.gmra.mxu0 %v2013
    %v2092 = vpop.f32.mrf.mxu0
    %v2093 = vadd.f32 0.0, %v2092
    %v2094 = vpop.f32.mrf.mxu0
    %2095 = vmatprep.mubr.f32.mxu0 0.0
    %2096 = vmatmul.mubr.f32.gmra.mxu0 %v2016
    %v2097 = vpop.f32.mrf.mxu0
    %v2098 = vadd.f32 0.0, %v2097
    %v2099 = vpop.f32.mrf.mxu0
    %2100 = vmatprep.mubr.f32.mxu0 0.0
    %2101 = vmatmul.mubr.f32.gmra.mxu0 %v2019
    %v2102 = vpop.f32.mrf.mxu0
    %v2103 = vadd.f32 0.0, %v2102
    %v2104 = vpop.f32.mrf.mxu0
    %2105 = vdwg.mxu0
    %2106 = vxpose.xlu0.b32.start [1/16] %v450, 128
    %2107 = vxpose.xlu0.b32.cont [2/16] 0.0, 128
    %2108 = vxpose.xlu0.b32.cont [3/16] 0.0, 128
    %2109 = vxpose.xlu0.b32.cont [4/16] 0.0, 128
    %2110 = vxpose.xlu0.b32.cont [5/16] 0.0, 128
    %2111 = vxpose.xlu0.b32.cont [6/16] 0.0, 128
    %2112 = vxpose.xlu0.b32.cont [7/16] 0.0, 128
    %2113 = vxpose.xlu0.b32.cont [8/16] 0.0, 128
    %2114 = vxpose.xlu0.b32.cont [9/16] 0.0, 128
    %2115 = vxpose.xlu0.b32.cont [10/16] 0.0, 128
    %2116 = vxpose.xlu0.b32.cont [11/16] 0.0, 128
    %2117 = vxpose.xlu0.b32.cont [12/16] 0.0, 128
    %2118 = vxpose.xlu0.b32.cont [13/16] 0.0, 128
    %2119 = vxpose.xlu0.b32.cont [14/16] 0.0, 128
    %2120 = vxpose.xlu0.b32.cont [15/16] 0.0, 128
    %2121 = vxpose.xlu0.b32.end [16/16] 0.0, 128
    %v2122 = vpop.trf.xlu0
    %v2123 = vpop.trf.xlu0
    %v2124 = vpop.trf.xlu0
    %v2125 = vpop.trf.xlu0
    %v2126 = vpop.trf.xlu0
    %v2127 = vpop.trf.xlu0
    %v2128 = vpop.trf.xlu0
    %v2129 = vpop.trf.xlu0
    %v2130 = vpop.trf.xlu0
    %v2131 = vpop.trf.xlu0
    %v2132 = vpop.trf.xlu0
    %v2133 = vpop.trf.xlu0
    %v2134 = vpop.trf.xlu0
    %v2135 = vpop.trf.xlu0
    %v2136 = vpop.trf.xlu0
    %v2137 = vpop.trf.xlu0
    %v2139 = vsel %vm291, %v2122, 0
    %v2142 = vsel %vm291, %v2123, 0
    %v2145 = vsel %vm291, %v2124, 0
    %v2148 = vsel %vm291, %v2125, 0
    %2150 = vmatprep.subr.mxu0 0.0
    %2151 = vmatpush1.msra.mxu0 0.0
    %2152 = vmatprep.subr.mxu0 0.0
    %2153 = vmatpush1.msra.mxu0 0.0
    %2154 = vmatprep.subr.mxu0 0.0
    %2155 = vmatpush1.msra.mxu0 0.0
    %2156 = vmatprep.subr.mxu0 0.0
    %2157 = vmatpush1.msra.mxu0 0.0
    %2158 = vmatprep.subr.mxu0 0.0
    %2159 = vmatpush1.msra.mxu0 0.0
    %2160 = vmatprep.subr.mxu0 0.0
    %2161 = vmatpush1.msra.mxu0 0.0
    %2162 = vmatprep.subr.mxu0 0.0
    %2163 = vmatpush1.msra.mxu0 0.0
    %2164 = vmatprep.subr.mxu0 0.0
    %2165 = vmatpush1.msra.mxu0 0.0
    %2166 = vmatprep.subr.mxu0 0.0
    %2167 = vmatpush1.msra.mxu0 0.0
    %2168 = vmatprep.subr.mxu0 0.0
    %2169 = vmatpush1.msra.mxu0 0.0
    %2170 = vmatprep.subr.mxu0 0.0
    %2171 = vmatpush1.msra.mxu0 0.0
    %2172 = vmatprep.subr.mxu0 0.0
    %2173 = vmatpush1.msra.mxu0 0.0
    %2174 = vmatprep.subr.mxu0 0.0
    %2175 = vmatpush1.msra.mxu0 0.0
    %2176 = vmatprep.subr.mxu0 0.0
    %2177 = vmatpush1.msra.mxu0 0.0
    %2178 = vmatprep.subr.mxu0 0.0
    %2179 = vmatpush1.msra.mxu0 0.0
    %2180 = vmatprep.subr.mxu0 0.0
    %2181 = vmatpush1.msra.mxu0 %v861
    %2182 = vmatprep.subr.mxu0 0.0
    %2183 = vmatpush2.msra.mxu0 0.0
    %2184 = vmatprep.subr.mxu0 0.0
    %2185 = vmatpush2.msra.mxu0 0.0
    %2186 = vmatprep.subr.mxu0 0.0
    %2187 = vmatpush2.msra.mxu0 0.0
    %2188 = vmatprep.subr.mxu0 0.0
    %2189 = vmatpush2.msra.mxu0 0.0
    %2190 = vmatprep.subr.mxu0 0.0
    %2191 = vmatpush2.msra.mxu0 0.0
    %2192 = vmatprep.subr.mxu0 0.0
    %2193 = vmatpush2.msra.mxu0 0.0
    %2194 = vmatprep.subr.mxu0 0.0
    %2195 = vmatpush2.msra.mxu0 0.0
    %2196 = vmatprep.subr.mxu0 0.0
    %2197 = vmatpush2.msra.mxu0 0.0
    %2198 = vmatprep.subr.mxu0 0.0
    %2199 = vmatpush2.msra.mxu0 0.0
    %2200 = vmatprep.subr.mxu0 0.0
    %2201 = vmatpush2.msra.mxu0 0.0
    %2202 = vmatprep.subr.mxu0 0.0
    %2203 = vmatpush2.msra.mxu0 0.0
    %2204 = vmatprep.subr.mxu0 0.0
    %2205 = vmatpush2.msra.mxu0 0.0
    %2206 = vmatprep.subr.mxu0 0.0
    %2207 = vmatpush2.msra.mxu0 0.0
    %2208 = vmatprep.subr.mxu0 0.0
    %2209 = vmatpush2.msra.mxu0 0.0
    %2210 = vmatprep.subr.mxu0 0.0
    %2211 = vmatpush2.msra.mxu0 0.0
    %2212 = vmatprep.subr.mxu0 0.0
    %2213 = vmatpush2.msra.mxu0 0.0
    %2214 = vmatprep.mubr.f32.mxu0 0.0
    %2215 = vmatmul.mubr.f32.gmra.mxu0 %v2139
    %v2216 = vpop.f32.mrf.mxu0
    %v2217 = vadd.f32 %v2088, %v2216
    %v2218 = vpop.f32.mrf.mxu0
    %2219 = vmatprep.mubr.f32.mxu0 0.0
    %2220 = vmatmul.mubr.f32.gmra.mxu0 %v2142
    %v2221 = vpop.f32.mrf.mxu0
    %v2222 = vadd.f32 %v2093, %v2221
    %v2223 = vpop.f32.mrf.mxu0
    %2224 = vmatprep.mubr.f32.mxu0 0.0
    %2225 = vmatmul.mubr.f32.gmra.mxu0 %v2145
    %v2226 = vpop.f32.mrf.mxu0
    %v2227 = vadd.f32 %v2098, %v2226
    %v2228 = vpop.f32.mrf.mxu0
    %2229 = vmatprep.mubr.f32.mxu0 0.0
    %2230 = vmatmul.mubr.f32.gmra.mxu0 %v2148
    %v2231 = vpop.f32.mrf.mxu0
    %v2232 = vadd.f32 %v2103, %v2231
    %v2233 = vpop.f32.mrf.mxu0
    %2234 = vdwg.mxu0
    %v2235 = vsel %vm179, %v1755, 0.0
    %v2236 = vrot.slane %v2235, 4
    %v2237 = vadd.f32 %v2235, %v2236
    %v2238 = vrot.slane %v2237, 2
    %v2239 = vadd.f32 %v2237, %v2238
    %v2240 = vrot.slane %v2239, 1
    %v2241 = vadd.f32 %v2239, %v2240
    %v2242 = vadd.f32 %v1090, %v2241
    %2243 = vxpose.xlu0.b32.start [1/16] %v1295, 128
    %2244 = vxpose.xlu0.b32.cont [2/16] 0.0, 128
    %2245 = vxpose.xlu0.b32.cont [3/16] 0.0, 128
    %2246 = vxpose.xlu0.b32.cont [4/16] 0.0, 128
    %2247 = vxpose.xlu0.b32.cont [5/16] 0.0, 128
    %2248 = vxpose.xlu0.b32.cont [6/16] 0.0, 128
    %2249 = vxpose.xlu0.b32.cont [7/16] 0.0, 128
    %2250 = vxpose.xlu0.b32.cont [8/16] 0.0, 128
    %2251 = vxpose.xlu0.b32.cont [9/16] 0.0, 128
    %2252 = vxpose.xlu0.b32.cont [10/16] 0.0, 128
    %2253 = vxpose.xlu0.b32.cont [11/16] 0.0, 128
    %2254 = vxpose.xlu0.b32.cont [12/16] 0.0, 128
    %2255 = vxpose.xlu0.b32.cont [13/16] 0.0, 128
    %2256 = vxpose.xlu0.b32.cont [14/16] 0.0, 128
    %2257 = vxpose.xlu0.b32.cont [15/16] 0.0, 128
    %2258 = vxpose.xlu0.b32.end [16/16] 0.0, 128
    %v2259 = vpop.trf.xlu0
    %v2260 = vpop.trf.xlu0
    %v2261 = vpop.trf.xlu0
    %v2262 = vpop.trf.xlu0
    %v2263 = vpop.trf.xlu0
    %v2264 = vpop.trf.xlu0
    %v2265 = vpop.trf.xlu0
    %v2266 = vpop.trf.xlu0
    %v2267 = vpop.trf.xlu0
    %v2268 = vpop.trf.xlu0
    %v2269 = vpop.trf.xlu0
    %v2270 = vpop.trf.xlu0
    %v2271 = vpop.trf.xlu0
    %v2272 = vpop.trf.xlu0
    %v2273 = vpop.trf.xlu0
    %v2274 = vpop.trf.xlu0
    %v2276 = vsel %vm291, %v2259, 0
    %v2279 = vsel %vm291, %v2260, 0
    %v2282 = vsel %vm291, %v2261, 0
    %v2285 = vsel %vm291, %v2262, 0
    %2287 = vmatprep.subr.mxu0 0.0
    %2288 = vmatpush1.msra.mxu0 0.0
    %2289 = vmatprep.subr.mxu0 0.0
    %2290 = vmatpush1.msra.mxu0 0.0
    %2291 = vmatprep.subr.mxu0 0.0
    %2292 = vmatpush1.msra.mxu0 0.0
    %2293 = vmatprep.subr.mxu0 0.0
    %2294 = vmatpush1.msra.mxu0 0.0
    %2295 = vmatprep.subr.mxu0 0.0
    %2296 = vmatpush1.msra.mxu0 0.0
    %2297 = vmatprep.subr.mxu0 0.0
    %2298 = vmatpush1.msra.mxu0 0.0
    %2299 = vmatprep.subr.mxu0 0.0
    %2300 = vmatpush1.msra.mxu0 0.0
    %2301 = vmatprep.subr.mxu0 0.0
    %2302 = vmatpush1.msra.mxu0 0.0
    %2303 = vmatprep.subr.mxu0 0.0
    %2304 = vmatpush1.msra.mxu0 0.0
    %2305 = vmatprep.subr.mxu0 0.0
    %2306 = vmatpush1.msra.mxu0 0.0
    %2307 = vmatprep.subr.mxu0 0.0
    %2308 = vmatpush1.msra.mxu0 0.0
    %2309 = vmatprep.subr.mxu0 0.0
    %2310 = vmatpush1.msra.mxu0 0.0
    %2311 = vmatprep.subr.mxu0 0.0
    %2312 = vmatpush1.msra.mxu0 0.0
    %2313 = vmatprep.subr.mxu0 0.0
    %2314 = vmatpush1.msra.mxu0 0.0
    %2315 = vmatprep.subr.mxu0 0.0
    %2316 = vmatpush1.msra.mxu0 0.0
    %2317 = vmatprep.subr.mxu0 0.0
    %2318 = vmatpush1.msra.mxu0 %v1829
    %2319 = vmatprep.subr.mxu0 0.0
    %2320 = vmatpush2.msra.mxu0 0.0
    %2321 = vmatprep.subr.mxu0 0.0
    %2322 = vmatpush2.msra.mxu0 0.0
    %2323 = vmatprep.subr.mxu0 0.0
    %2324 = vmatpush2.msra.mxu0 0.0
    %2325 = vmatprep.subr.mxu0 0.0
    %2326 = vmatpush2.msra.mxu0 0.0
    %2327 = vmatprep.subr.mxu0 0.0
    %2328 = vmatpush2.msra.mxu0 0.0
    %2329 = vmatprep.subr.mxu0 0.0
    %2330 = vmatpush2.msra.mxu0 0.0
    %2331 = vmatprep.subr.mxu0 0.0
    %2332 = vmatpush2.msra.mxu0 0.0
    %2333 = vmatprep.subr.mxu0 0.0
    %2334 = vmatpush2.msra.mxu0 0.0
    %2335 = vmatprep.subr.mxu0 0.0
    %2336 = vmatpush2.msra.mxu0 0.0
    %2337 = vmatprep.subr.mxu0 0.0
    %2338 = vmatpush2.msra.mxu0 0.0
    %2339 = vmatprep.subr.mxu0 0.0
    %2340 = vmatpush2.msra.mxu0 0.0
    %2341 = vmatprep.subr.mxu0 0.0
    %2342 = vmatpush2.msra.mxu0 0.0
    %2343 = vmatprep.subr.mxu0 0.0
    %2344 = vmatpush2.msra.mxu0 0.0
    %2345 = vmatprep.subr.mxu0 0.0
    %2346 = vmatpush2.msra.mxu0 0.0
    %2347 = vmatprep.subr.mxu0 0.0
    %2348 = vmatpush2.msra.mxu0 0.0
    %2349 = vmatprep.subr.mxu0 0.0
    %2350 = vmatpush2.msra.mxu0 0.0
    %2351 = vmatprep.mubr.f32.mxu0 0.0
    %2352 = vmatmul.mubr.f32.gmra.mxu0 %v2276
    %v2353 = vpop.f32.mrf.mxu0
    %v2354 = vadd.f32 0.0, %v2353
    %v2355 = vpop.f32.mrf.mxu0
    %2356 = vmatprep.mubr.f32.mxu0 0.0
    %2357 = vmatmul.mubr.f32.gmra.mxu0 %v2279
    %v2358 = vpop.f32.mrf.mxu0
    %v2359 = vadd.f32 0.0, %v2358
    %v2360 = vpop.f32.mrf.mxu0
    %2361 = vmatprep.mubr.f32.mxu0 0.0
    %2362 = vmatmul.mubr.f32.gmra.mxu0 %v2282
    %v2363 = vpop.f32.mrf.mxu0
    %v2364 = vadd.f32 0.0, %v2363
    %v2365 = vpop.f32.mrf.mxu0
    %2366 = vmatprep.mubr.f32.mxu0 0.0
    %2367 = vmatmul.mubr.f32.gmra.mxu0 %v2285
    %v2368 = vpop.f32.mrf.mxu0
    %v2369 = vadd.f32 0.0, %v2368
    %v2370 = vpop.f32.mrf.mxu0
    %2371 = vdwg.mxu0
    %2372 = vxpose.xlu0.b32.start [1/16] %v367, 128
    %2373 = vxpose.xlu0.b32.cont [2/16] 0.0, 128
    %2374 = vxpose.xlu0.b32.cont [3/16] 0.0, 128
    %2375 = vxpose.xlu0.b32.cont [4/16] 0.0, 128
    %2376 = vxpose.xlu0.b32.cont [5/16] 0.0, 128
    %2377 = vxpose.xlu0.b32.cont [6/16] 0.0, 128
    %2378 = vxpose.xlu0.b32.cont [7/16] 0.0, 128
    %2379 = vxpose.xlu0.b32.cont [8/16] 0.0, 128
    %2380 = vxpose.xlu0.b32.cont [9/16] 0.0, 128
    %2381 = vxpose.xlu0.b32.cont [10/16] 0.0, 128
    %2382 = vxpose.xlu0.b32.cont [11/16] 0.0, 128
    %2383 = vxpose.xlu0.b32.cont [12/16] 0.0, 128
    %2384 = vxpose.xlu0.b32.cont [13/16] 0.0, 128
    %2385 = vxpose.xlu0.b32.cont [14/16] 0.0, 128
    %2386 = vxpose.xlu0.b32.cont [15/16] 0.0, 128
    %2387 = vxpose.xlu0.b32.end [16/16] 0.0, 128
    %v2388 = vpop.trf.xlu0
    %v2389 = vpop.trf.xlu0
    %v2390 = vpop.trf.xlu0
    %v2391 = vpop.trf.xlu0
    %v2392 = vpop.trf.xlu0
    %v2393 = vpop.trf.xlu0
    %v2394 = vpop.trf.xlu0
    %v2395 = vpop.trf.xlu0
    %v2396 = vpop.trf.xlu0
    %v2397 = vpop.trf.xlu0
    %v2398 = vpop.trf.xlu0
    %v2399 = vpop.trf.xlu0
    %v2400 = vpop.trf.xlu0
    %v2401 = vpop.trf.xlu0
    %v2402 = vpop.trf.xlu0
    %v2403 = vpop.trf.xlu0
    %v2405 = vsel %vm291, %v2388, 0
    %v2408 = vsel %vm291, %v2389, 0
    %v2411 = vsel %vm291, %v2390, 0
    %v2414 = vsel %vm291, %v2391, 0
    %2416 = vmatprep.subr.mxu0 0.0
    %2417 = vmatpush1.msra.mxu0 0.0
    %2418 = vmatprep.subr.mxu0 0.0
    %2419 = vmatpush1.msra.mxu0 0.0
    %2420 = vmatprep.subr.mxu0 0.0
    %2421 = vmatpush1.msra.mxu0 0.0
    %2422 = vmatprep.subr.mxu0 0.0
    %2423 = vmatpush1.msra.mxu0 0.0
    %2424 = vmatprep.subr.mxu0 0.0
    %2425 = vmatpush1.msra.mxu0 0.0
    %2426 = vmatprep.subr.mxu0 0.0
    %2427 = vmatpush1.msra.mxu0 0.0
    %2428 = vmatprep.subr.mxu0 0.0
    %2429 = vmatpush1.msra.mxu0 0.0
    %2430 = vmatprep.subr.mxu0 0.0
    %2431 = vmatpush1.msra.mxu0 0.0
    %2432 = vmatprep.subr.mxu0 0.0
    %2433 = vmatpush1.msra.mxu0 0.0
    %2434 = vmatprep.subr.mxu0 0.0
    %2435 = vmatpush1.msra.mxu0 0.0
    %2436 = vmatprep.subr.mxu0 0.0
    %2437 = vmatpush1.msra.mxu0 0.0
    %2438 = vmatprep.subr.mxu0 0.0
    %2439 = vmatpush1.msra.mxu0 0.0
    %2440 = vmatprep.subr.mxu0 0.0
    %2441 = vmatpush1.msra.mxu0 0.0
    %2442 = vmatprep.subr.mxu0 0.0
    %2443 = vmatpush1.msra.mxu0 0.0
    %2444 = vmatprep.subr.mxu0 0.0
    %2445 = vmatpush1.msra.mxu0 0.0
    %2446 = vmatprep.subr.mxu0 0.0
    %2447 = vmatpush1.msra.mxu0 %v935
    %2448 = vmatprep.subr.mxu0 0.0
    %2449 = vmatpush2.msra.mxu0 0.0
    %2450 = vmatprep.subr.mxu0 0.0
    %2451 = vmatpush2.msra.mxu0 0.0
    %2452 = vmatprep.subr.mxu0 0.0
    %2453 = vmatpush2.msra.mxu0 0.0
    %2454 = vmatprep.subr.mxu0 0.0
    %2455 = vmatpush2.msra.mxu0 0.0
    %2456 = vmatprep.subr.mxu0 0.0
    %2457 = vmatpush2.msra.mxu0 0.0
    %2458 = vmatprep.subr.mxu0 0.0
    %2459 = vmatpush2.msra.mxu0 0.0
    %2460 = vmatprep.subr.mxu0 0.0
    %2461 = vmatpush2.msra.mxu0 0.0
    %2462 = vmatprep.subr.mxu0 0.0
    %2463 = vmatpush2.msra.mxu0 0.0
    %2464 = vmatprep.subr.mxu0 0.0
    %2465 = vmatpush2.msra.mxu0 0.0
    %2466 = vmatprep.subr.mxu0 0.0
    %2467 = vmatpush2.msra.mxu0 0.0
    %2468 = vmatprep.subr.mxu0 0.0
    %2469 = vmatpush2.msra.mxu0 0.0
    %2470 = vmatprep.subr.mxu0 0.0
    %2471 = vmatpush2.msra.mxu0 0.0
    %2472 = vmatprep.subr.mxu0 0.0
    %2473 = vmatpush2.msra.mxu0 0.0
    %2474 = vmatprep.subr.mxu0 0.0
    %2475 = vmatpush2.msra.mxu0 0.0
    %2476 = vmatprep.subr.mxu0 0.0
    %2477 = vmatpush2.msra.mxu0 0.0
    %2478 = vmatprep.subr.mxu0 0.0
    %2479 = vmatpush2.msra.mxu0 0.0
    %2480 = vmatprep.mubr.f32.mxu0 0.0
    %2481 = vmatmul.mubr.f32.gmra.mxu0 %v2405
    %v2482 = vpop.f32.mrf.mxu0
    %v2483 = vadd.f32 %v2354, %v2482
    %v2484 = vpop.f32.mrf.mxu0
    %2485 = vmatprep.mubr.f32.mxu0 0.0
    %2486 = vmatmul.mubr.f32.gmra.mxu0 %v2408
    %v2487 = vpop.f32.mrf.mxu0
    %v2488 = vadd.f32 %v2359, %v2487
    %v2489 = vpop.f32.mrf.mxu0
    %2490 = vmatprep.mubr.f32.mxu0 0.0
    %2491 = vmatmul.mubr.f32.gmra.mxu0 %v2411
    %v2492 = vpop.f32.mrf.mxu0
    %v2493 = vadd.f32 %v2364, %v2492
    %v2494 = vpop.f32.mrf.mxu0
    %2495 = vmatprep.mubr.f32.mxu0 0.0
    %2496 = vmatmul.mubr.f32.gmra.mxu0 %v2414
    %v2497 = vpop.f32.mrf.mxu0
    %v2498 = vadd.f32 %v2369, %v2497
    %v2499 = vpop.f32.mrf.mxu0
    %2500 = vdwg.mxu0
    %v2501 = vsel %vm374, %v1829, 0.0
    %v2502 = vrot.slane %v2501, 4
    %v2503 = vadd.f32 %v2501, %v2502
    %v2504 = vrot.slane %v2503, 2
    %v2505 = vadd.f32 %v2503, %v2504
    %v2506 = vrot.slane %v2505, 1
    %v2507 = vadd.f32 %v2505, %v2506
    %v2508 = vadd.f32 %v1098, %v2507
    %2509 = vxpose.xlu0.b32.start [1/16] %v1219, 128
    %2510 = vxpose.xlu0.b32.cont [2/16] 0.0, 128
    %2511 = vxpose.xlu0.b32.cont [3/16] 0.0, 128
    %2512 = vxpose.xlu0.b32.cont [4/16] 0.0, 128
    %2513 = vxpose.xlu0.b32.cont [5/16] 0.0, 128
    %2514 = vxpose.xlu0.b32.cont [6/16] 0.0, 128
    %2515 = vxpose.xlu0.b32.cont [7/16] 0.0, 128
    %2516 = vxpose.xlu0.b32.cont [8/16] 0.0, 128
    %2517 = vxpose.xlu0.b32.cont [9/16] 0.0, 128
    %2518 = vxpose.xlu0.b32.cont [10/16] 0.0, 128
    %2519 = vxpose.xlu0.b32.cont [11/16] 0.0, 128
    %2520 = vxpose.xlu0.b32.cont [12/16] 0.0, 128
    %2521 = vxpose.xlu0.b32.cont [13/16] 0.0, 128
    %2522 = vxpose.xlu0.b32.cont [14/16] 0.0, 128
    %2523 = vxpose.xlu0.b32.cont [15/16] 0.0, 128
    %2524 = vxpose.xlu0.b32.end [16/16] 0.0, 128
    %v2525 = vpop.trf.xlu0
    %v2526 = vpop.trf.xlu0
    %v2527 = vpop.trf.xlu0
    %v2528 = vpop.trf.xlu0
    %v2529 = vpop.trf.xlu0
    %v2530 = vpop.trf.xlu0
    %v2531 = vpop.trf.xlu0
    %v2532 = vpop.trf.xlu0
    %v2533 = vpop.trf.xlu0
    %v2534 = vpop.trf.xlu0
    %v2535 = vpop.trf.xlu0
    %v2536 = vpop.trf.xlu0
    %v2537 = vpop.trf.xlu0
    %v2538 = vpop.trf.xlu0
    %v2539 = vpop.trf.xlu0
    %v2540 = vpop.trf.xlu0
    %v2542 = vsel %vm291, %v2525, 0
    %2544 = vmatprep.subr.mxu0 0.0
    %2545 = vmatpush1.msra.mxu0 0.0
    %2546 = vmatprep.subr.mxu0 0.0
    %2547 = vmatpush1.msra.mxu0 0.0
    %2548 = vmatprep.subr.mxu0 0.0
    %2549 = vmatpush1.msra.mxu0 0.0
    %2550 = vmatprep.subr.mxu0 0.0
    %2551 = vmatpush1.msra.mxu0 0.0
    %2552 = vmatprep.subr.mxu0 0.0
    %2553 = vmatpush1.msra.mxu0 0.0
    %2554 = vmatprep.subr.mxu0 0.0
    %2555 = vmatpush1.msra.mxu0 0.0
    %2556 = vmatprep.subr.mxu0 0.0
    %2557 = vmatpush1.msra.mxu0 0.0
    %2558 = vmatprep.subr.mxu0 0.0
    %2559 = vmatpush1.msra.mxu0 0.0
    %2560 = vmatprep.subr.mxu0 0.0
    %2561 = vmatpush1.msra.mxu0 0.0
    %2562 = vmatprep.subr.mxu0 0.0
    %2563 = vmatpush1.msra.mxu0 0.0
    %2564 = vmatprep.subr.mxu0 0.0
    %2565 = vmatpush1.msra.mxu0 0.0
    %2566 = vmatprep.subr.mxu0 0.0
    %2567 = vmatpush1.msra.mxu0 0.0
    %2568 = vmatprep.subr.mxu0 0.0
    %2569 = vmatpush1.msra.mxu0 0.0
    %2570 = vmatprep.subr.mxu0 0.0
    %2571 = vmatpush1.msra.mxu0 0.0
    %2572 = vmatprep.subr.mxu0 0.0
    %2573 = vmatpush1.msra.mxu0 0.0
    %2574 = vmatprep.subr.mxu0 0.0
    %2575 = vmatpush1.msra.mxu0 %v1903
    %2576 = vmatprep.subr.mxu0 0.0
    %2577 = vmatpush2.msra.mxu0 0.0
    %2578 = vmatprep.subr.mxu0 0.0
    %2579 = vmatpush2.msra.mxu0 0.0
    %2580 = vmatprep.subr.mxu0 0.0
    %2581 = vmatpush2.msra.mxu0 0.0
    %2582 = vmatprep.subr.mxu0 0.0
    %2583 = vmatpush2.msra.mxu0 0.0
    %2584 = vmatprep.subr.mxu0 0.0
    %2585 = vmatpush2.msra.mxu0 0.0
    %2586 = vmatprep.subr.mxu0 0.0
    %2587 = vmatpush2.msra.mxu0 0.0
    %2588 = vmatprep.subr.mxu0 0.0
    %2589 = vmatpush2.msra.mxu0 0.0
    %2590 = vmatprep.subr.mxu0 0.0
    %2591 = vmatpush2.msra.mxu0 0.0
    %2592 = vmatprep.subr.mxu0 0.0
    %2593 = vmatpush2.msra.mxu0 0.0
    %2594 = vmatprep.subr.mxu0 0.0
    %2595 = vmatpush2.msra.mxu0 0.0
    %2596 = vmatprep.subr.mxu0 0.0
    %2597 = vmatpush2.msra.mxu0 0.0
    %2598 = vmatprep.subr.mxu0 0.0
    %2599 = vmatpush2.msra.mxu0 0.0
    %2600 = vmatprep.subr.mxu0 0.0
    %2601 = vmatpush2.msra.mxu0 0.0
    %2602 = vmatprep.subr.mxu0 0.0
    %2603 = vmatpush2.msra.mxu0 0.0
    %2604 = vmatprep.subr.mxu0 0.0
    %2605 = vmatpush2.msra.mxu0 0.0
    %2606 = vmatprep.subr.mxu0 0.0
    %2607 = vmatpush2.msra.mxu0 0.0
    %2608 = vmatprep.mubr.f32.mxu0 0.0
    %2609 = vmatmul.mubr.f32.gmra.mxu0 %v2542
    %v2610 = vpop.f32.mrf.mxu0
    %v2611 = vadd.f32 0.0, %v2610
    %v2612 = vpop.f32.mrf.mxu0
    %2613 = vdwg.mxu0
    %2614 = vxpose.xlu0.b32.start [1/16] %v284, 128
    %2615 = vxpose.xlu0.b32.cont [2/16] 0.0, 128
    %2616 = vxpose.xlu0.b32.cont [3/16] 0.0, 128
    %2617 = vxpose.xlu0.b32.cont [4/16] 0.0, 128
    %2618 = vxpose.xlu0.b32.cont [5/16] 0.0, 128
    %2619 = vxpose.xlu0.b32.cont [6/16] 0.0, 128
    %2620 = vxpose.xlu0.b32.cont [7/16] 0.0, 128
    %2621 = vxpose.xlu0.b32.cont [8/16] 0.0, 128
    %2622 = vxpose.xlu0.b32.cont [9/16] 0.0, 128
    %2623 = vxpose.xlu0.b32.cont [10/16] 0.0, 128
    %2624 = vxpose.xlu0.b32.cont [11/16] 0.0, 128
    %2625 = vxpose.xlu0.b32.cont [12/16] 0.0, 128
    %2626 = vxpose.xlu0.b32.cont [13/16] 0.0, 128
    %2627 = vxpose.xlu0.b32.cont [14/16] 0.0, 128
    %2628 = vxpose.xlu0.b32.cont [15/16] 0.0, 128
    %2629 = vxpose.xlu0.b32.end [16/16] 0.0, 128
    %v2630 = vpop.trf.xlu0
    %v2631 = vpop.trf.xlu0
    %v2632 = vpop.trf.xlu0
    %v2633 = vpop.trf.xlu0
    %v2634 = vpop.trf.xlu0
    %v2635 = vpop.trf.xlu0
    %v2636 = vpop.trf.xlu0
    %v2637 = vpop.trf.xlu0
    %v2638 = vpop.trf.xlu0
    %v2639 = vpop.trf.xlu0
    %v2640 = vpop.trf.xlu0
    %v2641 = vpop.trf.xlu0
    %v2642 = vpop.trf.xlu0
    %v2643 = vpop.trf.xlu0
    %v2644 = vpop.trf.xlu0
    %v2645 = vpop.trf.xlu0
    %v2647 = vsel %vm291, %v2630, 0
    %2649 = vmatprep.subr.mxu0 0.0
    %2650 = vmatpush1.msra.mxu0 0.0
    %2651 = vmatprep.subr.mxu0 0.0
    %2652 = vmatpush1.msra.mxu0 0.0
    %2653 = vmatprep.subr.mxu0 0.0
    %2654 = vmatpush1.msra.mxu0 0.0
    %2655 = vmatprep.subr.mxu0 0.0
    %2656 = vmatpush1.msra.mxu0 0.0
    %2657 = vmatprep.subr.mxu0 0.0
    %2658 = vmatpush1.msra.mxu0 0.0
    %2659 = vmatprep.subr.mxu0 0.0
    %2660 = vmatpush1.msra.mxu0 0.0
    %2661 = vmatprep.subr.mxu0 0.0
    %2662 = vmatpush1.msra.mxu0 0.0
    %2663 = vmatprep.subr.mxu0 0.0
    %2664 = vmatpush1.msra.mxu0 0.0
    %2665 = vmatprep.subr.mxu0 0.0
    %2666 = vmatpush1.msra.mxu0 0.0
    %2667 = vmatprep.subr.mxu0 0.0
    %2668 = vmatpush1.msra.mxu0 0.0
    %2669 = vmatprep.subr.mxu0 0.0
    %2670 = vmatpush1.msra.mxu0 0.0
    %2671 = vmatprep.subr.mxu0 0.0
    %2672 = vmatpush1.msra.mxu0 0.0
    %2673 = vmatprep.subr.mxu0 0.0
    %2674 = vmatpush1.msra.mxu0 0.0
    %2675 = vmatprep.subr.mxu0 0.0
    %2676 = vmatpush1.msra.mxu0 0.0
    %2677 = vmatprep.subr.mxu0 0.0
    %2678 = vmatpush1.msra.mxu0 0.0
    %2679 = vmatprep.subr.mxu0 0.0
    %2680 = vmatpush1.msra.mxu0 %v1009
    %2681 = vmatprep.subr.mxu0 0.0
    %2682 = vmatpush2.msra.mxu0 0.0
    %2683 = vmatprep.subr.mxu0 0.0
    %2684 = vmatpush2.msra.mxu0 0.0
    %2685 = vmatprep.subr.mxu0 0.0
    %2686 = vmatpush2.msra.mxu0 0.0
    %2687 = vmatprep.subr.mxu0 0.0
    %2688 = vmatpush2.msra.mxu0 0.0
    %2689 = vmatprep.subr.mxu0 0.0
    %2690 = vmatpush2.msra.mxu0 0.0
    %2691 = vmatprep.subr.mxu0 0.0
    %2692 = vmatpush2.msra.mxu0 0.0
    %2693 = vmatprep.subr.mxu0 0.0
    %2694 = vmatpush2.msra.mxu0 0.0
    %2695 = vmatprep.subr.mxu0 0.0
    %2696 = vmatpush2.msra.mxu0 0.0
    %2697 = vmatprep.subr.mxu0 0.0
    %2698 = vmatpush2.msra.mxu0 0.0
    %2699 = vmatprep.subr.mxu0 0.0
    %2700 = vmatpush2.msra.mxu0 0.0
    %2701 = vmatprep.subr.mxu0 0.0
    %2702 = vmatpush2.msra.mxu0 0.0
    %2703 = vmatprep.subr.mxu0 0.0
    %2704 = vmatpush2.msra.mxu0 0.0
    %2705 = vmatprep.subr.mxu0 0.0
    %2706 = vmatpush2.msra.mxu0 0.0
    %2707 = vmatprep.subr.mxu0 0.0
    %2708 = vmatpush2.msra.mxu0 0.0
    %2709 = vmatprep.subr.mxu0 0.0
    %2710 = vmatpush2.msra.mxu0 0.0
    %2711 = vmatprep.subr.mxu0 0.0
    %2712 = vmatpush2.msra.mxu0 0.0
    %2713 = vmatprep.mubr.f32.mxu0 0.0
    %2714 = vmatmul.mubr.f32.gmra.mxu0 %v2647
    %v2715 = vpop.f32.mrf.mxu0
    %v2716 = vadd.f32 %v2611, %v2715
    %v2717 = vpop.f32.mrf.mxu0
    %2718 = vdwg.mxu0
    %v2719 = vsel %vm374, %v1903, 0.0
    %v2720 = vrot.slane %v2719, 4
    %v2721 = vadd.f32 %v2719, %v2720
    %v2722 = vrot.slane %v2721, 2
    %v2723 = vadd.f32 %v2721, %v2722
    %v2724 = vrot.slane %v2723, 1
    %v2725 = vadd.f32 %v2723, %v2724
    %v2726 = vadd.f32 %v1106, %v2725
    %2727 = vxpose.xlu0.b32.start [1/16] %v1120, 128
    %2728 = vxpose.xlu0.b32.cont [2/16] 0.0, 128
    %2729 = vxpose.xlu0.b32.cont [3/16] 0.0, 128
    %2730 = vxpose.xlu0.b32.cont [4/16] 0.0, 128
    %2731 = vxpose.xlu0.b32.cont [5/16] 0.0, 128
    %2732 = vxpose.xlu0.b32.cont [6/16] 0.0, 128
    %2733 = vxpose.xlu0.b32.cont [7/16] 0.0, 128
    %2734 = vxpose.xlu0.b32.cont [8/16] 0.0, 128
    %2735 = vxpose.xlu0.b32.cont [9/16] 0.0, 128
    %2736 = vxpose.xlu0.b32.cont [10/16] 0.0, 128
    %2737 = vxpose.xlu0.b32.cont [11/16] 0.0, 128
    %2738 = vxpose.xlu0.b32.cont [12/16] 0.0, 128
    %2739 = vxpose.xlu0.b32.cont [13/16] 0.0, 128
    %2740 = vxpose.xlu0.b32.cont [14/16] 0.0, 128
    %2741 = vxpose.xlu0.b32.cont [15/16] 0.0, 128
    %2742 = vxpose.xlu0.b32.end [16/16] 0.0, 128
    %v2743 = vpop.trf.xlu0
    %v2744 = vpop.trf.xlu0
    %v2745 = vpop.trf.xlu0
    %v2746 = vpop.trf.xlu0
    %v2747 = vpop.trf.xlu0
    %v2748 = vpop.trf.xlu0
    %v2749 = vpop.trf.xlu0
    %v2750 = vpop.trf.xlu0
    %v2751 = vpop.trf.xlu0
    %v2752 = vpop.trf.xlu0
    %v2753 = vpop.trf.xlu0
    %v2754 = vpop.trf.xlu0
    %v2755 = vpop.trf.xlu0
    %v2756 = vpop.trf.xlu0
    %v2757 = vpop.trf.xlu0
    %v2758 = vpop.trf.xlu0
    %2760 = vrot.lane.b32.xlu0 %v1974, 122
    %v2761 = vpop.permute.xlu0 %2760
    %v2764 = vsel %vm291, %v2743, 0
    %2766 = vmatprep.subr.mxu0 0.0
    %2767 = vmatpush1.msra.mxu0 0.0
    %2768 = vmatprep.subr.mxu0 0.0
    %2769 = vmatpush1.msra.mxu0 0.0
    %2770 = vmatprep.subr.mxu0 0.0
    %2771 = vmatpush1.msra.mxu0 0.0
    %2772 = vmatprep.subr.mxu0 0.0
    %2773 = vmatpush1.msra.mxu0 0.0
    %2774 = vmatprep.subr.mxu0 0.0
    %2775 = vmatpush1.msra.mxu0 0.0
    %2776 = vmatprep.subr.mxu0 0.0
    %2777 = vmatpush1.msra.mxu0 0.0
    %2778 = vmatprep.subr.mxu0 0.0
    %2779 = vmatpush1.msra.mxu0 0.0
    %2780 = vmatprep.subr.mxu0 0.0
    %2781 = vmatpush1.msra.mxu0 0.0
    %2782 = vmatprep.subr.mxu0 0.0
    %2783 = vmatpush1.msra.mxu0 0.0
    %2784 = vmatprep.subr.mxu0 0.0
    %2785 = vmatpush1.msra.mxu0 0.0
    %2786 = vmatprep.subr.mxu0 0.0
    %2787 = vmatpush1.msra.mxu0 0.0
    %2788 = vmatprep.subr.mxu0 0.0
    %2789 = vmatpush1.msra.mxu0 0.0
    %2790 = vmatprep.subr.mxu0 0.0
    %2791 = vmatpush1.msra.mxu0 0.0
    %2792 = vmatprep.subr.mxu0 0.0
    %2793 = vmatpush1.msra.mxu0 0.0
    %2794 = vmatprep.subr.mxu0 0.0
    %2795 = vmatpush1.msra.mxu0 0.0
    %2796 = vmatprep.subr.mxu0 0.0
    %2797 = vmatpush1.msra.mxu0 %v2761
    %2798 = vmatprep.subr.mxu0 0.0
    %2799 = vmatpush2.msra.mxu0 0.0
    %2800 = vmatprep.subr.mxu0 0.0
    %2801 = vmatpush2.msra.mxu0 0.0
    %2802 = vmatprep.subr.mxu0 0.0
    %2803 = vmatpush2.msra.mxu0 0.0
    %2804 = vmatprep.subr.mxu0 0.0
    %2805 = vmatpush2.msra.mxu0 0.0
    %2806 = vmatprep.subr.mxu0 0.0
    %2807 = vmatpush2.msra.mxu0 0.0
    %2808 = vmatprep.subr.mxu0 0.0
    %2809 = vmatpush2.msra.mxu0 0.0
    %2810 = vmatprep.subr.mxu0 0.0
    %2811 = vmatpush2.msra.mxu0 0.0
    %2812 = vmatprep.subr.mxu0 0.0
    %2813 = vmatpush2.msra.mxu0 0.0
    %2814 = vmatprep.subr.mxu0 0.0
    %2815 = vmatpush2.msra.mxu0 0.0
    %2816 = vmatprep.subr.mxu0 0.0
    %2817 = vmatpush2.msra.mxu0 0.0
    %2818 = vmatprep.subr.mxu0 0.0
    %2819 = vmatpush2.msra.mxu0 0.0
    %2820 = vmatprep.subr.mxu0 0.0
    %2821 = vmatpush2.msra.mxu0 0.0
    %2822 = vmatprep.subr.mxu0 0.0
    %2823 = vmatpush2.msra.mxu0 0.0
    %2824 = vmatprep.subr.mxu0 0.0
    %2825 = vmatpush2.msra.mxu0 0.0
    %2826 = vmatprep.subr.mxu0 0.0
    %2827 = vmatpush2.msra.mxu0 0.0
    %2828 = vmatprep.subr.mxu0 0.0
    %2829 = vmatpush2.msra.mxu0 0.0
    %2830 = vmatprep.mubr.f32.mxu0 0.0
    %2831 = vmatmul.mubr.f32.gmra.mxu0 %v2764
    %v2832 = vpop.f32.mrf.mxu0
    %v2833 = vadd.f32 0.0, %v2832
    %v2834 = vpop.f32.mrf.mxu0
    %2835 = vdwg.mxu0
    %2836 = vxpose.xlu0.b32.start [1/16] %v178, 128
    %2837 = vxpose.xlu0.b32.cont [2/16] 0.0, 128
    %2838 = vxpose.xlu0.b32.cont [3/16] 0.0, 128
    %2839 = vxpose.xlu0.b32.cont [4/16] 0.0, 128
    %2840 = vxpose.xlu0.b32.cont [5/16] 0.0, 128
    %2841 = vxpose.xlu0.b32.cont [6/16] 0.0, 128
    %2842 = vxpose.xlu0.b32.cont [7/16] 0.0, 128
    %2843 = vxpose.xlu0.b32.cont [8/16] 0.0, 128
    %2844 = vxpose.xlu0.b32.cont [9/16] 0.0, 128
    %2845 = vxpose.xlu0.b32.cont [10/16] 0.0, 128
    %2846 = vxpose.xlu0.b32.cont [11/16] 0.0, 128
    %2847 = vxpose.xlu0.b32.cont [12/16] 0.0, 128
    %2848 = vxpose.xlu0.b32.cont [13/16] 0.0, 128
    %2849 = vxpose.xlu0.b32.cont [14/16] 0.0, 128
    %2850 = vxpose.xlu0.b32.cont [15/16] 0.0, 128
    %2851 = vxpose.xlu0.b32.end [16/16] 0.0, 128
    %v2852 = vpop.trf.xlu0
    %v2853 = vpop.trf.xlu0
    %v2854 = vpop.trf.xlu0
    %v2855 = vpop.trf.xlu0
    %v2856 = vpop.trf.xlu0
    %v2857 = vpop.trf.xlu0
    %v2858 = vpop.trf.xlu0
    %v2859 = vpop.trf.xlu0
    %v2860 = vpop.trf.xlu0
    %v2861 = vpop.trf.xlu0
    %v2862 = vpop.trf.xlu0
    %v2863 = vpop.trf.xlu0
    %v2864 = vpop.trf.xlu0
    %v2865 = vpop.trf.xlu0
    %v2866 = vpop.trf.xlu0
    %v2867 = vpop.trf.xlu0
    %2869 = vrot.lane.b32.xlu0 %v1080, 122
    %v2870 = vpop.permute.xlu0 %2869
    %v2873 = vsel %vm291, %v2852, 0
    %2875 = vmatprep.subr.mxu0 0.0
    %2876 = vmatpush1.msra.mxu0 0.0
    %2877 = vmatprep.subr.mxu0 0.0
    %2878 = vmatpush1.msra.mxu0 0.0
    %2879 = vmatprep.subr.mxu0 0.0
    %2880 = vmatpush1.msra.mxu0 0.0
    %2881 = vmatprep.subr.mxu0 0.0
    %2882 = vmatpush1.msra.mxu0 0.0
    %2883 = vmatprep.subr.mxu0 0.0
    %2884 = vmatpush1.msra.mxu0 0.0
    %2885 = vmatprep.subr.mxu0 0.0
    %2886 = vmatpush1.msra.mxu0 0.0
    %2887 = vmatprep.subr.mxu0 0.0
    %2888 = vmatpush1.msra.mxu0 0.0
    %2889 = vmatprep.subr.mxu0 0.0
    %2890 = vmatpush1.msra.mxu0 0.0
    %2891 = vmatprep.subr.mxu0 0.0
    %2892 = vmatpush1.msra.mxu0 0.0
    %2893 = vmatprep.subr.mxu0 0.0
    %2894 = vmatpush1.msra.mxu0 0.0
    %2895 = vmatprep.subr.mxu0 0.0
    %2896 = vmatpush1.msra.mxu0 0.0
    %2897 = vmatprep.subr.mxu0 0.0
    %2898 = vmatpush1.msra.mxu0 0.0
    %2899 = vmatprep.subr.mxu0 0.0
    %2900 = vmatpush1.msra.mxu0 0.0
    %2901 = vmatprep.subr.mxu0 0.0
    %2902 = vmatpush1.msra.mxu0 0.0
    %2903 = vmatprep.subr.mxu0 0.0
    %2904 = vmatpush1.msra.mxu0 0.0
    %2905 = vmatprep.subr.mxu0 0.0
    %2906 = vmatpush1.msra.mxu0 %v2870
    %2907 = vmatprep.subr.mxu0 0.0
    %2908 = vmatpush2.msra.mxu0 0.0
    %2909 = vmatprep.subr.mxu0 0.0
    %2910 = vmatpush2.msra.mxu0 0.0
    %2911 = vmatprep.subr.mxu0 0.0
    %2912 = vmatpush2.msra.mxu0 0.0
    %2913 = vmatprep.subr.mxu0 0.0
    %2914 = vmatpush2.msra.mxu0 0.0
    %2915 = vmatprep.subr.mxu0 0.0
    %2916 = vmatpush2.msra.mxu0 0.0
    %2917 = vmatprep.subr.mxu0 0.0
    %2918 = vmatpush2.msra.mxu0 0.0
    %2919 = vmatprep.subr.mxu0 0.0
    %2920 = vmatpush2.msra.mxu0 0.0
    %2921 = vmatprep.subr.mxu0 0.0
    %2922 = vmatpush2.msra.mxu0 0.0
    %2923 = vmatprep.subr.mxu0 0.0
    %2924 = vmatpush2.msra.mxu0 0.0
    %2925 = vmatprep.subr.mxu0 0.0
    %2926 = vmatpush2.msra.mxu0 0.0
    %2927 = vmatprep.subr.mxu0 0.0
    %2928 = vmatpush2.msra.mxu0 0.0
    %2929 = vmatprep.subr.mxu0 0.0
    %2930 = vmatpush2.msra.mxu0 0.0
    %2931 = vmatprep.subr.mxu0 0.0
    %2932 = vmatpush2.msra.mxu0 0.0
    %2933 = vmatprep.subr.mxu0 0.0
    %2934 = vmatpush2.msra.mxu0 0.0
    %2935 = vmatprep.subr.mxu0 0.0
    %2936 = vmatpush2.msra.mxu0 0.0
    %2937 = vmatprep.subr.mxu0 0.0
    %2938 = vmatpush2.msra.mxu0 0.0
    %2939 = vmatprep.mubr.f32.mxu0 0.0
    %2940 = vmatmul.mubr.f32.gmra.mxu0 %v2873
    %v2941 = vpop.f32.mrf.mxu0
    %v2942 = vadd.f32 %v2833, %v2941
    %v2943 = vpop.f32.mrf.mxu0
    %2944 = vdwg.mxu0
    %v2945 = vmul.f32 %v1705, 0.001
    %v2946 = vsub.f32 %v1108, %v2945
    %s2947 = sld [smem:[#allocation5 + $0x2]]
    %s2948 = smul.u32 %s2947, 8
    %s2949 = scalar_lea.vmem %s3, %s2948
    %v2950 = vld [vmem:[%s2949] sm:$0xff]
    %s2951 = scalar_lea.vmem %s5, %s2948
    %v2952 = vld [vmem:[%s2951] sm:$0xff]
    %v2953 = vsub.f32 1.0, %v2952
    %2955 = vrot.lane.b32.xlu0 %v2952, 1
    %v2956 = vpop.permute.xlu0 %2955
    %v2958 = vsel %vm177, %v2953, %v2956
    %v2960 = vsel %vm179, %v2958, 0
    %2962 = vmatprep.subr.mxu0 0.0
    %2963 = vmatpush1.msra.mxu0 0.0
    %2964 = vmatprep.subr.mxu0 0.0
    %2965 = vmatpush1.msra.mxu0 0.0
    %2966 = vmatprep.subr.mxu0 0.0
    %2967 = vmatpush1.msra.mxu0 0.0
    %2968 = vmatprep.subr.mxu0 0.0
    %2969 = vmatpush1.msra.mxu0 0.0
    %2970 = vmatprep.subr.mxu0 0.0
    %2971 = vmatpush1.msra.mxu0 0.0
    %2972 = vmatprep.subr.mxu0 0.0
    %2973 = vmatpush1.msra.mxu0 0.0
    %2974 = vmatprep.subr.mxu0 0.0
    %2975 = vmatpush1.msra.mxu0 0.0
    %2976 = vmatprep.subr.mxu0 0.0
    %2977 = vmatpush1.msra.mxu0 0.0
    %2978 = vmatprep.subr.mxu0 0.0
    %2979 = vmatpush1.msra.mxu0 0.0
    %2980 = vmatprep.subr.mxu0 0.0
    %2981 = vmatpush1.msra.mxu0 0.0
    %2982 = vmatprep.subr.mxu0 0.0
    %2983 = vmatpush1.msra.mxu0 0.0
    %2984 = vmatprep.subr.mxu0 0.0
    %2985 = vmatpush1.msra.mxu0 0.0
    %2986 = vmatprep.subr.mxu0 0.0
    %2987 = vmatpush1.msra.mxu0 0.0
    %2988 = vmatprep.subr.mxu0 0.0
    %2989 = vmatpush1.msra.mxu0 0.0
    %2990 = vmatprep.subr.mxu0 0.0
    %2991 = vmatpush1.msra.mxu0 0.0
    %2992 = vmatprep.subr.mxu0 0.0
    %2993 = vmatpush1.msra.mxu0 %v185
    %2994 = vmatprep.subr.mxu0 0.0
    %2995 = vmatpush2.msra.mxu0 0.0
    %2996 = vmatprep.subr.mxu0 0.0
    %2997 = vmatpush2.msra.mxu0 0.0
    %2998 = vmatprep.subr.mxu0 0.0
    %2999 = vmatpush2.msra.mxu0 0.0
    %3000 = vmatprep.subr.mxu0 0.0
    %3001 = vmatpush2.msra.mxu0 0.0
    %3002 = vmatprep.subr.mxu0 0.0
    %3003 = vmatpush2.msra.mxu0 0.0
    %3004 = vmatprep.subr.mxu0 0.0
    %3005 = vmatpush2.msra.mxu0 0.0
    %3006 = vmatprep.subr.mxu0 0.0
    %3007 = vmatpush2.msra.mxu0 0.0
    %3008 = vmatprep.subr.mxu0 0.0
    %3009 = vmatpush2.msra.mxu0 0.0
    %3010 = vmatprep.subr.mxu0 0.0
    %3011 = vmatpush2.msra.mxu0 0.0
    %3012 = vmatprep.subr.mxu0 0.0
    %3013 = vmatpush2.msra.mxu0 0.0
    %3014 = vmatprep.subr.mxu0 0.0
    %3015 = vmatpush2.msra.mxu0 0.0
    %3016 = vmatprep.subr.mxu0 0.0
    %3017 = vmatpush2.msra.mxu0 0.0
    %3018 = vmatprep.subr.mxu0 0.0
    %3019 = vmatpush2.msra.mxu0 0.0
    %3020 = vmatprep.subr.mxu0 0.0
    %3021 = vmatpush2.msra.mxu0 0.0
    %3022 = vmatprep.subr.mxu0 0.0
    %3023 = vmatpush2.msra.mxu0 0.0
    %3024 = vmatprep.subr.mxu0 0.0
    %3025 = vmatpush2.msra.mxu0 0.0
    %3026 = vmatprep.mubr.f32.mxu0 0.0
    %3027 = vmatmul.mubr.f32.gmra.mxu0 %v2960
    %v3028 = vpop.f32.mrf.mxu0
    %v3029 = vadd.f32 0.0, %v3028
    %v3030 = vpop.f32.mrf.mxu0
    %3031 = vdwg.mxu0
    %v3033 = vlaneseq
    %v3034 = vshrl.u32 %v3033, 7
    %v3035 = vsub.s32 0, %v3034
    %v3036 = vrot.slane %v2946, %v3035
    %v3038 = vsub.f32 %v2946, %v162
    %v3040 = vlaneseq
    %v3041 = vshrl.u32 %v3040, 7
    %v3042 = vsub.s32 0, %v3041
    %v3043 = vrot.slane %v3038, %v3042
    %3044 = vrot.lane.b32.xlu0 %v3043, 2
    %v3045 = vpop.permute.xlu0 %3044
    %3048 = vrot.lane.b32.xlu0 %v2950, 4
    %v3049 = vpop.permute.xlu0 %3048
    %3052 = vrot.lane.b32.xlu0 %v3029, 6
    %v3053 = vpop.permute.xlu0 %3052
    %v3055 = vsel %vm179, %v3036, %v3045
    %v3056 = vsel %vm281, %v3055, %v3049
    %v3057 = vsel %vm283, %v3056, %v3053
    %v3059 = vsel %vm291, %v3057, 0
    %3061 = vmatprep.subr.mxu0 0.0
    %3062 = vmatpush1.msra.mxu0 0.0
    %3063 = vmatprep.subr.mxu0 0.0
    %3064 = vmatpush1.msra.mxu0 0.0
    %3065 = vmatprep.subr.mxu0 0.0
    %3066 = vmatpush1.msra.mxu0 0.0
    %3067 = vmatprep.subr.mxu0 0.0
    %3068 = vmatpush1.msra.mxu0 0.0
    %3069 = vmatprep.subr.mxu0 0.0
    %3070 = vmatpush1.msra.mxu0 0.0
    %3071 = vmatprep.subr.mxu0 0.0
    %3072 = vmatpush1.msra.mxu0 0.0
    %3073 = vmatprep.subr.mxu0 0.0
    %3074 = vmatpush1.msra.mxu0 0.0
    %3075 = vmatprep.subr.mxu0 0.0
    %3076 = vmatpush1.msra.mxu0 0.0
    %3077 = vmatprep.subr.mxu0 0.0
    %3078 = vmatpush1.msra.mxu0 0.0
    %3079 = vmatprep.subr.mxu0 0.0
    %3080 = vmatpush1.msra.mxu0 0.0
    %3081 = vmatprep.subr.mxu0 0.0
    %3082 = vmatpush1.msra.mxu0 0.0
    %3083 = vmatprep.subr.mxu0 0.0
    %3084 = vmatpush1.msra.mxu0 0.0
    %3085 = vmatprep.subr.mxu0 0.0
    %3086 = vmatpush1.msra.mxu0 0.0
    %3087 = vmatprep.subr.mxu0 0.0
    %3088 = vmatpush1.msra.mxu0 0.0
    %3089 = vmatprep.subr.mxu0 0.0
    %3090 = vmatpush1.msra.mxu0 0.0
    %3091 = vmatprep.subr.mxu0 0.0
    %3092 = vmatpush1.msra.mxu0 %v140
    %3093 = vmatprep.subr.mxu0 0.0
    %3094 = vmatpush2.msra.mxu0 0.0
    %3095 = vmatprep.subr.mxu0 0.0
    %3096 = vmatpush2.msra.mxu0 0.0
    %3097 = vmatprep.subr.mxu0 0.0
    %3098 = vmatpush2.msra.mxu0 0.0
    %3099 = vmatprep.subr.mxu0 0.0
    %3100 = vmatpush2.msra.mxu0 0.0
    %3101 = vmatprep.subr.mxu0 0.0
    %3102 = vmatpush2.msra.mxu0 0.0
    %3103 = vmatprep.subr.mxu0 0.0
    %3104 = vmatpush2.msra.mxu0 0.0
    %3105 = vmatprep.subr.mxu0 0.0
    %3106 = vmatpush2.msra.mxu0 0.0
    %3107 = vmatprep.subr.mxu0 0.0
    %3108 = vmatpush2.msra.mxu0 0.0
    %3109 = vmatprep.subr.mxu0 0.0
    %3110 = vmatpush2.msra.mxu0 0.0
    %3111 = vmatprep.subr.mxu0 0.0
    %3112 = vmatpush2.msra.mxu0 0.0
    %3113 = vmatprep.subr.mxu0 0.0
    %3114 = vmatpush2.msra.mxu0 0.0
    %3115 = vmatprep.subr.mxu0 0.0
    %3116 = vmatpush2.msra.mxu0 0.0
    %3117 = vmatprep.subr.mxu0 0.0
    %3118 = vmatpush2.msra.mxu0 0.0
    %3119 = vmatprep.subr.mxu0 0.0
    %3120 = vmatpush2.msra.mxu0 0.0
    %3121 = vmatprep.subr.mxu0 0.0
    %3122 = vmatpush2.msra.mxu0 0.0
    %3123 = vmatprep.subr.mxu0 0.0
    %3124 = vmatpush2.msra.mxu0 0.0
    %3125 = vmatprep.mubr.f32.mxu0 0.0
    %3126 = vmatmul.mubr.f32.gmra.mxu0 %v3059
    %v3127 = vpop.f32.mrf.mxu0
    %v3128 = vadd.f32 %v289, %v3127
    %v3129 = vpop.f32.mrf.mxu0
    %3130 = vdwg.mxu0
    %vm3131 = vcmp.gt.f32.partialorder %v3128, 0.0
    %v3132 = vsel %vm3131, 1.0, 0.2
    %v3133 = vmul.f32 %v3128, %v3132
    %v3135 = vsel %vm374, %v3133, 0
    %3137 = vmatprep.subr.mxu0 0.0
    %3138 = vmatpush1.msra.mxu0 0.0
    %3139 = vmatprep.subr.mxu0 0.0
    %3140 = vmatpush1.msra.mxu0 0.0
    %3141 = vmatprep.subr.mxu0 0.0
    %3142 = vmatpush1.msra.mxu0 0.0
    %3143 = vmatprep.subr.mxu0 0.0
    %3144 = vmatpush1.msra.mxu0 0.0
    %3145 = vmatprep.subr.mxu0 0.0
    %3146 = vmatpush1.msra.mxu0 0.0
    %3147 = vmatprep.subr.mxu0 0.0
    %3148 = vmatpush1.msra.mxu0 0.0
    %3149 = vmatprep.subr.mxu0 0.0
    %3150 = vmatpush1.msra.mxu0 0.0
    %3151 = vmatprep.subr.mxu0 0.0
    %3152 = vmatpush1.msra.mxu0 0.0
    %3153 = vmatprep.subr.mxu0 0.0
    %3154 = vmatpush1.msra.mxu0 0.0
    %3155 = vmatprep.subr.mxu0 0.0
    %3156 = vmatpush1.msra.mxu0 0.0
    %3157 = vmatprep.subr.mxu0 0.0
    %3158 = vmatpush1.msra.mxu0 0.0
    %3159 = vmatprep.subr.mxu0 0.0
    %3160 = vmatpush1.msra.mxu0 0.0
    %3161 = vmatprep.subr.mxu0 0.0
    %3162 = vmatpush1.msra.mxu0 %v145
    %3163 = vmatprep.subr.mxu0 0.0
    %3164 = vmatpush1.msra.mxu0 %v144
    %3165 = vmatprep.subr.mxu0 0.0
    %3166 = vmatpush1.msra.mxu0 %v143
    %3167 = vmatprep.subr.mxu0 0.0
    %3168 = vmatpush1.msra.mxu0 %v142
    %3169 = vmatprep.subr.mxu0 0.0
    %3170 = vmatpush2.msra.mxu0 0.0
    %3171 = vmatprep.subr.mxu0 0.0
    %3172 = vmatpush2.msra.mxu0 0.0
    %3173 = vmatprep.subr.mxu0 0.0
    %3174 = vmatpush2.msra.mxu0 0.0
    %3175 = vmatprep.subr.mxu0 0.0
    %3176 = vmatpush2.msra.mxu0 0.0
    %3177 = vmatprep.subr.mxu0 0.0
    %3178 = vmatpush2.msra.mxu0 0.0
    %3179 = vmatprep.subr.mxu0 0.0
    %3180 = vmatpush2.msra.mxu0 0.0
    %3181 = vmatprep.subr.mxu0 0.0
    %3182 = vmatpush2.msra.mxu0 0.0
    %3183 = vmatprep.subr.mxu0 0.0
    %3184 = vmatpush2.msra.mxu0 0.0
    %3185 = vmatprep.subr.mxu0 0.0
    %3186 = vmatpush2.msra.mxu0 0.0
    %3187 = vmatprep.subr.mxu0 0.0
    %3188 = vmatpush2.msra.mxu0 0.0
    %3189 = vmatprep.subr.mxu0 0.0
    %3190 = vmatpush2.msra.mxu0 0.0
    %3191 = vmatprep.subr.mxu0 0.0
    %3192 = vmatpush2.msra.mxu0 0.0
    %3193 = vmatprep.subr.mxu0 0.0
    %3194 = vmatpush2.msra.mxu0 0.0
    %3195 = vmatprep.subr.mxu0 0.0
    %3196 = vmatpush2.msra.mxu0 0.0
    %3197 = vmatprep.subr.mxu0 0.0
    %3198 = vmatpush2.msra.mxu0 0.0
    %3199 = vmatprep.subr.mxu0 0.0
    %3200 = vmatpush2.msra.mxu0 0.0
    %3201 = vmatprep.mubr.f32.mxu0 0.0
    %3202 = vmatmul.mubr.f32.gmra.mxu0 %v3135
    %v3203 = vpop.f32.mrf.mxu0
    %v3204 = vadd.f32 %v372, %v3203
    %v3205 = vpop.f32.mrf.mxu0
    %3206 = vdwg.mxu0
    %vm3207 = vcmp.gt.f32.partialorder %v3204, 0.0
    %v3208 = vsel %vm3207, 1.0, 0.2
    %v3209 = vmul.f32 %v3204, %v3208
    %v3211 = vsel %vm374, %v3209, 0
    %3213 = vmatprep.subr.mxu0 0.0
    %3214 = vmatpush1.msra.mxu0 0.0
    %3215 = vmatprep.subr.mxu0 0.0
    %3216 = vmatpush1.msra.mxu0 0.0
    %3217 = vmatprep.subr.mxu0 0.0
    %3218 = vmatpush1.msra.mxu0 0.0
    %3219 = vmatprep.subr.mxu0 0.0
    %3220 = vmatpush1.msra.mxu0 0.0
    %3221 = vmatprep.subr.mxu0 0.0
    %3222 = vmatpush1.msra.mxu0 0.0
    %3223 = vmatprep.subr.mxu0 0.0
    %3224 = vmatpush1.msra.mxu0 0.0
    %3225 = vmatprep.subr.mxu0 0.0
    %3226 = vmatpush1.msra.mxu0 0.0
    %3227 = vmatprep.subr.mxu0 0.0
    %3228 = vmatpush1.msra.mxu0 0.0
    %3229 = vmatprep.subr.mxu0 0.0
    %3230 = vmatpush1.msra.mxu0 0.0
    %3231 = vmatprep.subr.mxu0 0.0
    %3232 = vmatpush1.msra.mxu0 0.0
    %3233 = vmatprep.subr.mxu0 0.0
    %3234 = vmatpush1.msra.mxu0 0.0
    %3235 = vmatprep.subr.mxu0 0.0
    %3236 = vmatpush1.msra.mxu0 0.0
    %3237 = vmatprep.subr.mxu0 0.0
    %3238 = vmatpush1.msra.mxu0 %v150
    %3239 = vmatprep.subr.mxu0 0.0
    %3240 = vmatpush1.msra.mxu0 %v149
    %3241 = vmatprep.subr.mxu0 0.0
    %3242 = vmatpush1.msra.mxu0 %v148
    %3243 = vmatprep.subr.mxu0 0.0
    %3244 = vmatpush1.msra.mxu0 %v147
    %3245 = vmatprep.subr.mxu0 0.0
    %3246 = vmatpush2.msra.mxu0 0.0
    %3247 = vmatprep.subr.mxu0 0.0
    %3248 = vmatpush2.msra.mxu0 0.0
    %3249 = vmatprep.subr.mxu0 0.0
    %3250 = vmatpush2.msra.mxu0 0.0
    %3251 = vmatprep.subr.mxu0 0.0
    %3252 = vmatpush2.msra.mxu0 0.0
    %3253 = vmatprep.subr.mxu0 0.0
    %3254 = vmatpush2.msra.mxu0 0.0
    %3255 = vmatprep.subr.mxu0 0.0
    %3256 = vmatpush2.msra.mxu0 0.0
    %3257 = vmatprep.subr.mxu0 0.0
    %3258 = vmatpush2.msra.mxu0 0.0
    %3259 = vmatprep.subr.mxu0 0.0
    %3260 = vmatpush2.msra.mxu0 0.0
    %3261 = vmatprep.subr.mxu0 0.0
    %3262 = vmatpush2.msra.mxu0 0.0
    %3263 = vmatprep.subr.mxu0 0.0
    %3264 = vmatpush2.msra.mxu0 0.0
    %3265 = vmatprep.subr.mxu0 0.0
    %3266 = vmatpush2.msra.mxu0 0.0
    %3267 = vmatprep.subr.mxu0 0.0
    %3268 = vmatpush2.msra.mxu0 0.0
    %3269 = vmatprep.subr.mxu0 0.0
    %3270 = vmatpush2.msra.mxu0 0.0
    %3271 = vmatprep.subr.mxu0 0.0
    %3272 = vmatpush2.msra.mxu0 0.0
    %3273 = vmatprep.subr.mxu0 0.0
    %3274 = vmatpush2.msra.mxu0 0.0
    %3275 = vmatprep.subr.mxu0 0.0
    %3276 = vmatpush2.msra.mxu0 0.0
    %3277 = vmatprep.mubr.f32.mxu0 0.0
    %3278 = vmatmul.mubr.f32.gmra.mxu0 %v3211
    %v3279 = vpop.f32.mrf.mxu0
    %v3280 = vadd.f32 %v455, %v3279
    %v3281 = vpop.f32.mrf.mxu0
    %3282 = vdwg.mxu0
    %v3283 = vmul.f32 %v3280, %v3036
    %v3284 = vsel %vm179, %v3283, 0.0
    %3285 = vadd.xlane.f32.xlu0 %v3284
    %v3286 = vpop.xlane.xlu0 %3285
    %v3287 = vadd.f32 %v3286, %v538
    %v3288 = vxor.u32 %v3287, 2147483648
    %v3289 = vmul.f32 %v3288, 1.442695
    %v3290 = vpow.pop %v3289
    %v3291 = vadd.f32 %v3290, 1.0
    %v3292 = vrcp.pop %v3291
    %v3293 = vmul.f32 1.0, %v3292
    %v3294 = vsub.f32 %v3293, %v2952
    %v3295 = vmul.f32 %v3294, 0.125
    %3297 = vset.pattern.permute.xlu0 0
    %3298 = vperm.xlu0 %3297, %v3295
    %v3299 = vpop.permute.xlu0 %3298
    %v3301 = vmul.f32 %v3299, %v3036
    %v3303 = vsel %vm179, %v3301, 0
    %3305 = vmatprep.subr.mxu0 0.0
    %3306 = vmatpush1.msra.mxu0 0.0
    %3307 = vmatprep.subr.mxu0 0.0
    %3308 = vmatpush1.msra.mxu0 0.0
    %3309 = vmatprep.subr.mxu0 0.0
    %3310 = vmatpush1.msra.mxu0 0.0
    %3311 = vmatprep.subr.mxu0 0.0
    %3312 = vmatpush1.msra.mxu0 0.0
    %3313 = vmatprep.subr.mxu0 0.0
    %3314 = vmatpush1.msra.mxu0 0.0
    %3315 = vmatprep.subr.mxu0 0.0
    %3316 = vmatpush1.msra.mxu0 0.0
    %3317 = vmatprep.subr.mxu0 0.0
    %3318 = vmatpush1.msra.mxu0 0.0
    %3319 = vmatprep.subr.mxu0 0.0
    %3320 = vmatpush1.msra.mxu0 0.0
    %3321 = vmatprep.subr.mxu0 0.0
    %3322 = vmatpush1.msra.mxu0 0.0
    %3323 = vmatprep.subr.mxu0 0.0
    %3324 = vmatpush1.msra.mxu0 0.0
    %3325 = vmatprep.subr.mxu0 0.0
    %3326 = vmatpush1.msra.mxu0 0.0
    %3327 = vmatprep.subr.mxu0 0.0
    %3328 = vmatpush1.msra.mxu0 0.0
    %3329 = vmatprep.subr.mxu0 0.0
    %3330 = vmatpush1.msra.mxu0 0.0
    %3331 = vmatprep.subr.mxu0 0.0
    %3332 = vmatpush1.msra.mxu0 0.0
    %3333 = vmatprep.subr.mxu0 0.0
    %3334 = vmatpush1.msra.mxu0 0.0
    %3335 = vmatprep.subr.mxu0 0.0
    %3336 = vmatpush1.msra.mxu0 %v559
    %3337 = vmatprep.subr.mxu0 0.0
    %3338 = vmatpush2.msra.mxu0 0.0
    %3339 = vmatprep.subr.mxu0 0.0
    %3340 = vmatpush2.msra.mxu0 0.0
    %3341 = vmatprep.subr.mxu0 0.0
    %3342 = vmatpush2.msra.mxu0 0.0
    %3343 = vmatprep.subr.mxu0 0.0
    %3344 = vmatpush2.msra.mxu0 0.0
    %3345 = vmatprep.subr.mxu0 0.0
    %3346 = vmatpush2.msra.mxu0 0.0
    %3347 = vmatprep.subr.mxu0 0.0
    %3348 = vmatpush2.msra.mxu0 0.0
    %3349 = vmatprep.subr.mxu0 0.0
    %3350 = vmatpush2.msra.mxu0 0.0
    %3351 = vmatprep.subr.mxu0 0.0
    %3352 = vmatpush2.msra.mxu0 0.0
    %3353 = vmatprep.subr.mxu0 0.0
    %3354 = vmatpush2.msra.mxu0 0.0
    %3355 = vmatprep.subr.mxu0 0.0
    %3356 = vmatpush2.msra.mxu0 0.0
    %3357 = vmatprep.subr.mxu0 0.0
    %3358 = vmatpush2.msra.mxu0 0.0
    %3359 = vmatprep.subr.mxu0 0.0
    %3360 = vmatpush2.msra.mxu0 0.0
    %3361 = vmatprep.subr.mxu0 0.0
    %3362 = vmatpush2.msra.mxu0 0.0
    %3363 = vmatprep.subr.mxu0 0.0
    %3364 = vmatpush2.msra.mxu0 0.0
    %3365 = vmatprep.subr.mxu0 0.0
    %3366 = vmatpush2.msra.mxu0 0.0
    %3367 = vmatprep.subr.mxu0 0.0
    %3368 = vmatpush2.msra.mxu0 0.0
    %3369 = vmatprep.mubr.f32.mxu0 0.0
    %3370 = vmatmul.mubr.f32.gmra.mxu0 %v3303
    %v3371 = vpop.f32.mrf.mxu0
    %v3372 = vadd.f32 0.0, %v3371
    %v3373 = vpop.f32.mrf.mxu0
    %3374 = vdwg.mxu0
    %v3375 = vmul.f32 %v3208, %v3372
    %v3377 = vsel %vm374, %v3375, 0
    %3379 = vmatprep.subr.mxu0 0.0
    %3380 = vmatpush1.msra.mxu0 0.0
    %3381 = vmatprep.subr.mxu0 0.0
    %3382 = vmatpush1.msra.mxu0 0.0
    %3383 = vmatprep.subr.mxu0 0.0
    %3384 = vmatpush1.msra.mxu0 0.0
    %3385 = vmatprep.subr.mxu0 0.0
    %3386 = vmatpush1.msra.mxu0 0.0
    %3387 = vmatprep.subr.mxu0 0.0
    %3388 = vmatpush1.msra.mxu0 0.0
    %3389 = vmatprep.subr.mxu0 0.0
    %3390 = vmatpush1.msra.mxu0 0.0
    %3391 = vmatprep.subr.mxu0 0.0
    %3392 = vmatpush1.msra.mxu0 0.0
    %3393 = vmatprep.subr.mxu0 0.0
    %3394 = vmatpush1.msra.mxu0 0.0
    %3395 = vmatprep.subr.mxu0 0.0
    %3396 = vmatpush1.msra.mxu0 0.0
    %3397 = vmatprep.subr.mxu0 0.0
    %3398 = vmatpush1.msra.mxu0 0.0
    %3399 = vmatprep.subr.mxu0 0.0
    %3400 = vmatpush1.msra.mxu0 0.0
    %3401 = vmatprep.subr.mxu0 0.0
    %3402 = vmatpush1.msra.mxu0 0.0
    %3403 = vmatprep.subr.mxu0 0.0
    %3404 = vmatpush1.msra.mxu0 %v159
    %3405 = vmatprep.subr.mxu0 0.0
    %3406 = vmatpush1.msra.mxu0 %v158
    %3407 = vmatprep.subr.mxu0 0.0
    %3408 = vmatpush1.msra.mxu0 %v157
    %3409 = vmatprep.subr.mxu0 0.0
    %3410 = vmatpush1.msra.mxu0 %v156
    %3411 = vmatprep.subr.mxu0 0.0
    %3412 = vmatpush2.msra.mxu0 0.0
    %3413 = vmatprep.subr.mxu0 0.0
    %3414 = vmatpush2.msra.mxu0 0.0
    %3415 = vmatprep.subr.mxu0 0.0
    %3416 = vmatpush2.msra.mxu0 0.0
    %3417 = vmatprep.subr.mxu0 0.0
    %3418 = vmatpush2.msra.mxu0 0.0
    %3419 = vmatprep.subr.mxu0 0.0
    %3420 = vmatpush2.msra.mxu0 0.0
    %3421 = vmatprep.subr.mxu0 0.0
    %3422 = vmatpush2.msra.mxu0 0.0
    %3423 = vmatprep.subr.mxu0 0.0
    %3424 = vmatpush2.msra.mxu0 0.0
    %3425 = vmatprep.subr.mxu0 0.0
    %3426 = vmatpush2.msra.mxu0 0.0
    %3427 = vmatprep.subr.mxu0 0.0
    %3428 = vmatpush2.msra.mxu0 0.0
    %3429 = vmatprep.subr.mxu0 0.0
    %3430 = vmatpush2.msra.mxu0 0.0
    %3431 = vmatprep.subr.mxu0 0.0
    %3432 = vmatpush2.msra.mxu0 0.0
    %3433 = vmatprep.subr.mxu0 0.0
    %3434 = vmatpush2.msra.mxu0 0.0
    %3435 = vmatprep.subr.mxu0 0.0
    %3436 = vmatpush2.msra.mxu0 0.0
    %3437 = vmatprep.subr.mxu0 0.0
    %3438 = vmatpush2.msra.mxu0 0.0
    %3439 = vmatprep.subr.mxu0 0.0
    %3440 = vmatpush2.msra.mxu0 0.0
    %3441 = vmatprep.subr.mxu0 0.0
    %3442 = vmatpush2.msra.mxu0 0.0
    %3443 = vmatprep.mubr.f32.mxu0 0.0
    %3444 = vmatmul.mubr.f32.gmra.mxu0 %v3377
    %v3445 = vpop.f32.mrf.mxu0
    %v3446 = vadd.f32 0.0, %v3445
    %v3447 = vpop.f32.mrf.mxu0
    %3448 = vdwg.mxu0
    %v3449 = vmul.f32 %v3132, %v3446
    %v3451 = vsel %vm374, %v3449, 0
    %3453 = vmatprep.subr.mxu0 0.0
    %3454 = vmatpush1.msra.mxu0 0.0
    %3455 = vmatprep.subr.mxu0 0.0
    %3456 = vmatpush1.msra.mxu0 0.0
    %3457 = vmatprep.subr.mxu0 0.0
    %3458 = vmatpush1.msra.mxu0 0.0
    %3459 = vmatprep.subr.mxu0 0.0
    %3460 = vmatpush1.msra.mxu0 0.0
    %3461 = vmatprep.subr.mxu0 0.0
    %3462 = vmatpush1.msra.mxu0 0.0
    %3463 = vmatprep.subr.mxu0 0.0
    %3464 = vmatpush1.msra.mxu0 0.0
    %3465 = vmatprep.subr.mxu0 0.0
    %3466 = vmatpush1.msra.mxu0 0.0
    %3467 = vmatprep.subr.mxu0 0.0
    %3468 = vmatpush1.msra.mxu0 0.0
    %3469 = vmatprep.subr.mxu0 0.0
    %3470 = vmatpush1.msra.mxu0 0.0
    %3471 = vmatprep.subr.mxu0 0.0
    %3472 = vmatpush1.msra.mxu0 0.0
    %3473 = vmatprep.subr.mxu0 0.0
    %3474 = vmatpush1.msra.mxu0 0.0
    %3475 = vmatprep.subr.mxu0 0.0
    %3476 = vmatpush1.msra.mxu0 0.0
    %3477 = vmatprep.subr.mxu0 0.0
    %3478 = vmatpush1.msra.mxu0 %v155
    %3479 = vmatprep.subr.mxu0 0.0
    %3480 = vmatpush1.msra.mxu0 %v154
    %3481 = vmatprep.subr.mxu0 0.0
    %3482 = vmatpush1.msra.mxu0 %v153
    %3483 = vmatprep.subr.mxu0 0.0
    %3484 = vmatpush1.msra.mxu0 %v152
    %3485 = vmatprep.subr.mxu0 0.0
    %3486 = vmatpush2.msra.mxu0 0.0
    %3487 = vmatprep.subr.mxu0 0.0
    %3488 = vmatpush2.msra.mxu0 0.0
    %3489 = vmatprep.subr.mxu0 0.0
    %3490 = vmatpush2.msra.mxu0 0.0
    %3491 = vmatprep.subr.mxu0 0.0
    %3492 = vmatpush2.msra.mxu0 0.0
    %3493 = vmatprep.subr.mxu0 0.0
    %3494 = vmatpush2.msra.mxu0 0.0
    %3495 = vmatprep.subr.mxu0 0.0
    %3496 = vmatpush2.msra.mxu0 0.0
    %3497 = vmatprep.subr.mxu0 0.0
    %3498 = vmatpush2.msra.mxu0 0.0
    %3499 = vmatprep.subr.mxu0 0.0
    %3500 = vmatpush2.msra.mxu0 0.0
    %3501 = vmatprep.subr.mxu0 0.0
    %3502 = vmatpush2.msra.mxu0 0.0
    %3503 = vmatprep.subr.mxu0 0.0
    %3504 = vmatpush2.msra.mxu0 0.0
    %3505 = vmatprep.subr.mxu0 0.0
    %3506 = vmatpush2.msra.mxu0 0.0
    %3507 = vmatprep.subr.mxu0 0.0
    %3508 = vmatpush2.msra.mxu0 0.0
    %3509 = vmatprep.subr.mxu0 0.0
    %3510 = vmatpush2.msra.mxu0 0.0
    %3511 = vmatprep.subr.mxu0 0.0
    %3512 = vmatpush2.msra.mxu0 0.0
    %3513 = vmatprep.subr.mxu0 0.0
    %3514 = vmatpush2.msra.mxu0 0.0
    %3515 = vmatprep.subr.mxu0 0.0
    %3516 = vmatpush2.msra.mxu0 0.0
    %3517 = vmatprep.mubr.f32.mxu0 0.0
    %3518 = vmatmul.mubr.f32.gmra.mxu0 %v3451
    %v3519 = vpop.f32.mrf.mxu0
    %v3520 = vadd.f32 0.0, %v3519
    %v3521 = vpop.f32.mrf.mxu0
    %3522 = vdwg.mxu0
    %v3523 = vmul.f32 %v3299, %v3280
    %v3524 = vsel %vm179, %v3523, 0.0
    %v3525 = vrot.slane %v3524, 4
    %v3526 = vadd.f32 %v3524, %v3525
    %v3527 = vrot.slane %v3526, 2
    %v3528 = vadd.f32 %v3526, %v3527
    %v3529 = vrot.slane %v3528, 1
    %v3530 = vadd.f32 %v3528, %v3529
    %3532 = vrot.lane.b32.xlu0 %v3520, 126
    %v3533 = vpop.permute.xlu0 %3532
    %v3535 = vadd.f32 %v3520, %v3533
    %v3536 = vsel %vm179, %v3535, 0.0
    %v3537 = vrot.slane %v3536, 4
    %v3538 = vadd.f32 %v3536, %v3537
    %v3539 = vrot.slane %v3538, 2
    %v3540 = vadd.f32 %v3538, %v3539
    %v3541 = vrot.slane %v3540, 1
    %v3542 = vadd.f32 %v3540, %v3541
    %v3543 = vadd.f32 %v3530, %v3542
    %v3544 = vmul.f32 %v3280, %v804
    %v3545 = vsel %vm179, %v3544, 0.0
    %3546 = vadd.xlane.f32.xlu0 %v3545
    %v3547 = vpop.xlane.xlu0 %3546
    %v3548 = vadd.f32 %v3547, %v814
    %v3549 = vxor.u32 %v3548, 2147483648
    %v3550 = vmul.f32 %v3549, 1.442695
    %v3551 = vpow.pop %v3550
    %v3552 = vadd.f32 %v3551, 1.0
    %v3553 = vrcp.pop %v3552
    %v3554 = vmul.f32 1.0, %v3553
    %v3555 = vsub.f32 0.0, %v3548
    %v3556 = vmax.f32 %v3555, 0.0
    %v3557 = vand.u32 2147483647, %v3555
    %v3558 = vsub.f32 0.0, %v3557
    %v3559 = vmul.f32 %v3558, 1.442695
    %v3560 = vpow.pop %v3559
    %v3561 = vadd.f32 %v3560, 1.0
    %v3562 = vlog2.pop %v3561
    %v3563 = vmul.f32 %v3562, 0.6931472
    %v3564 = vadd.f32 %v3556, %v3563
    %v3565 = vmul.f32 %v2952, %v3564
    %v3566 = vmax.f32 %v3548, 0.0
    %v3567 = vand.u32 2147483647, %v3548
    %v3568 = vsub.f32 0.0, %v3567
    %v3569 = vmul.f32 %v3568, 1.442695
    %v3570 = vpow.pop %v3569
    %v3571 = vadd.f32 %v3570, 1.0
    %v3572 = vlog2.pop %v3571
    %v3573 = vmul.f32 %v3572, 0.6931472
    %v3574 = vadd.f32 %v3566, %v3573
    %v3575 = vmul.f32 %v2953, %v3574
    %v3576 = vadd.f32 %v3565, %v3575
    %v3577 = vsel %vm177, %v3576, 0.0
    %v3578 = vrot.slane %v3577, 4
    %v3579 = vadd.f32 %v3577, %v3578
    %v3580 = vrot.slane %v3579, 2
    %v3581 = vadd.f32 %v3579, %v3580
    %v3582 = vrot.slane %v3581, 1
    %v3583 = vadd.f32 %v3581, %v3582
    %v3584 = vmul.f32 %v3583, 0.125
    %v3585 = vadd.f32 %v1747, %v3584
    %v3586 = vsub.f32 %v3554, %v2952
    %v3587 = vmul.f32 %v3586, 0.125
    %3589 = vset.pattern.permute.xlu0 0
    %3590 = vperm.xlu0 %3589, %v3587
    %v3591 = vpop.permute.xlu0 %3590
    %v3593 = vmul.f32 %v3591, %v804
    %v3595 = vsel %vm179, %v3593, 0
    %3597 = vmatprep.subr.mxu0 0.0
    %3598 = vmatpush1.msra.mxu0 0.0
    %3599 = vmatprep.subr.mxu0 0.0
    %3600 = vmatpush1.msra.mxu0 0.0
    %3601 = vmatprep.subr.mxu0 0.0
    %3602 = vmatpush1.msra.mxu0 0.0
    %3603 = vmatprep.subr.mxu0 0.0
    %3604 = vmatpush1.msra.mxu0 0.0
    %3605 = vmatprep.subr.mxu0 0.0
    %3606 = vmatpush1.msra.mxu0 0.0
    %3607 = vmatprep.subr.mxu0 0.0
    %3608 = vmatpush1.msra.mxu0 0.0
    %3609 = vmatprep.subr.mxu0 0.0
    %3610 = vmatpush1.msra.mxu0 0.0
    %3611 = vmatprep.subr.mxu0 0.0
    %3612 = vmatpush1.msra.mxu0 0.0
    %3613 = vmatprep.subr.mxu0 0.0
    %3614 = vmatpush1.msra.mxu0 0.0
    %3615 = vmatprep.subr.mxu0 0.0
    %3616 = vmatpush1.msra.mxu0 0.0
    %3617 = vmatprep.subr.mxu0 0.0
    %3618 = vmatpush1.msra.mxu0 0.0
    %3619 = vmatprep.subr.mxu0 0.0
    %3620 = vmatpush1.msra.mxu0 0.0
    %3621 = vmatprep.subr.mxu0 0.0
    %3622 = vmatpush1.msra.mxu0 0.0
    %3623 = vmatprep.subr.mxu0 0.0
    %3624 = vmatpush1.msra.mxu0 0.0
    %3625 = vmatprep.subr.mxu0 0.0
    %3626 = vmatpush1.msra.mxu0 0.0
    %3627 = vmatprep.subr.mxu0 0.0
    %3628 = vmatpush1.msra.mxu0 %v559
    %3629 = vmatprep.subr.mxu0 0.0
    %3630 = vmatpush2.msra.mxu0 0.0
    %3631 = vmatprep.subr.mxu0 0.0
    %3632 = vmatpush2.msra.mxu0 0.0
    %3633 = vmatprep.subr.mxu0 0.0
    %3634 = vmatpush2.msra.mxu0 0.0
    %3635 = vmatprep.subr.mxu0 0.0
    %3636 = vmatpush2.msra.mxu0 0.0
    %3637 = vmatprep.subr.mxu0 0.0
    %3638 = vmatpush2.msra.mxu0 0.0
    %3639 = vmatprep.subr.mxu0 0.0
    %3640 = vmatpush2.msra.mxu0 0.0
    %3641 = vmatprep.subr.mxu0 0.0
    %3642 = vmatpush2.msra.mxu0 0.0
    %3643 = vmatprep.subr.mxu0 0.0
    %3644 = vmatpush2.msra.mxu0 0.0
    %3645 = vmatprep.subr.mxu0 0.0
    %3646 = vmatpush2.msra.mxu0 0.0
    %3647 = vmatprep.subr.mxu0 0.0
    %3648 = vmatpush2.msra.mxu0 0.0
    %3649 = vmatprep.subr.mxu0 0.0
    %3650 = vmatpush2.msra.mxu0 0.0
    %3651 = vmatprep.subr.mxu0 0.0
    %3652 = vmatpush2.msra.mxu0 0.0
    %3653 = vmatprep.subr.mxu0 0.0
    %3654 = vmatpush2.msra.mxu0 0.0
    %3655 = vmatprep.subr.mxu0 0.0
    %3656 = vmatpush2.msra.mxu0 0.0
    %3657 = vmatprep.subr.mxu0 0.0
    %3658 = vmatpush2.msra.mxu0 0.0
    %3659 = vmatprep.subr.mxu0 0.0
    %3660 = vmatpush2.msra.mxu0 0.0
    %3661 = vmatprep.mubr.f32.mxu0 0.0
    %3662 = vmatmul.mubr.f32.gmra.mxu0 %v3595
    %v3663 = vpop.f32.mrf.mxu0
    %v3664 = vadd.f32 0.0, %v3663
    %v3665 = vpop.f32.mrf.mxu0
    %3666 = vdwg.mxu0
    %v3667 = vmul.f32 %v3208, %v3664
    %v3669 = vsel %vm374, %v3667, 0
    %3671 = vmatprep.subr.mxu0 0.0
    %3672 = vmatpush1.msra.mxu0 0.0
    %3673 = vmatprep.subr.mxu0 0.0
    %3674 = vmatpush1.msra.mxu0 0.0
    %3675 = vmatprep.subr.mxu0 0.0
    %3676 = vmatpush1.msra.mxu0 0.0
    %3677 = vmatprep.subr.mxu0 0.0
    %3678 = vmatpush1.msra.mxu0 0.0
    %3679 = vmatprep.subr.mxu0 0.0
    %3680 = vmatpush1.msra.mxu0 0.0
    %3681 = vmatprep.subr.mxu0 0.0
    %3682 = vmatpush1.msra.mxu0 0.0
    %3683 = vmatprep.subr.mxu0 0.0
    %3684 = vmatpush1.msra.mxu0 0.0
    %3685 = vmatprep.subr.mxu0 0.0
    %3686 = vmatpush1.msra.mxu0 0.0
    %3687 = vmatprep.subr.mxu0 0.0
    %3688 = vmatpush1.msra.mxu0 0.0
    %3689 = vmatprep.subr.mxu0 0.0
    %3690 = vmatpush1.msra.mxu0 0.0
    %3691 = vmatprep.subr.mxu0 0.0
    %3692 = vmatpush1.msra.mxu0 0.0
    %3693 = vmatprep.subr.mxu0 0.0
    %3694 = vmatpush1.msra.mxu0 0.0
    %3695 = vmatprep.subr.mxu0 0.0
    %3696 = vmatpush1.msra.mxu0 %v159
    %3697 = vmatprep.subr.mxu0 0.0
    %3698 = vmatpush1.msra.mxu0 %v158
    %3699 = vmatprep.subr.mxu0 0.0
    %3700 = vmatpush1.msra.mxu0 %v157
    %3701 = vmatprep.subr.mxu0 0.0
    %3702 = vmatpush1.msra.mxu0 %v156
    %3703 = vmatprep.subr.mxu0 0.0
    %3704 = vmatpush2.msra.mxu0 0.0
    %3705 = vmatprep.subr.mxu0 0.0
    %3706 = vmatpush2.msra.mxu0 0.0
    %3707 = vmatprep.subr.mxu0 0.0
    %3708 = vmatpush2.msra.mxu0 0.0
    %3709 = vmatprep.subr.mxu0 0.0
    %3710 = vmatpush2.msra.mxu0 0.0
    %3711 = vmatprep.subr.mxu0 0.0
    %3712 = vmatpush2.msra.mxu0 0.0
    %3713 = vmatprep.subr.mxu0 0.0
    %3714 = vmatpush2.msra.mxu0 0.0
    %3715 = vmatprep.subr.mxu0 0.0
    %3716 = vmatpush2.msra.mxu0 0.0
    %3717 = vmatprep.subr.mxu0 0.0
    %3718 = vmatpush2.msra.mxu0 0.0
    %3719 = vmatprep.subr.mxu0 0.0
    %3720 = vmatpush2.msra.mxu0 0.0
    %3721 = vmatprep.subr.mxu0 0.0
    %3722 = vmatpush2.msra.mxu0 0.0
    %3723 = vmatprep.subr.mxu0 0.0
    %3724 = vmatpush2.msra.mxu0 0.0
    %3725 = vmatprep.subr.mxu0 0.0
    %3726 = vmatpush2.msra.mxu0 0.0
    %3727 = vmatprep.subr.mxu0 0.0
    %3728 = vmatpush2.msra.mxu0 0.0
    %3729 = vmatprep.subr.mxu0 0.0
    %3730 = vmatpush2.msra.mxu0 0.0
    %3731 = vmatprep.subr.mxu0 0.0
    %3732 = vmatpush2.msra.mxu0 0.0
    %3733 = vmatprep.subr.mxu0 0.0
    %3734 = vmatpush2.msra.mxu0 0.0
    %3735 = vmatprep.mubr.f32.mxu0 0.0
    %3736 = vmatmul.mubr.f32.gmra.mxu0 %v3669
    %v3737 = vpop.f32.mrf.mxu0
    %v3738 = vadd.f32 0.0, %v3737
    %v3739 = vpop.f32.mrf.mxu0
    %3740 = vdwg.mxu0
    %v3741 = vmul.f32 %v3132, %v3738
    %v3743 = vsel %vm374, %v3741, 0
    %3745 = vmatprep.subr.mxu0 0.0
    %3746 = vmatpush1.msra.mxu0 0.0
    %3747 = vmatprep.subr.mxu0 0.0
    %3748 = vmatpush1.msra.mxu0 0.0
    %3749 = vmatprep.subr.mxu0 0.0
    %3750 = vmatpush1.msra.mxu0 0.0
    %3751 = vmatprep.subr.mxu0 0.0
    %3752 = vmatpush1.msra.mxu0 0.0
    %3753 = vmatprep.subr.mxu0 0.0
    %3754 = vmatpush1.msra.mxu0 0.0
    %3755 = vmatprep.subr.mxu0 0.0
    %3756 = vmatpush1.msra.mxu0 0.0
    %3757 = vmatprep.subr.mxu0 0.0
    %3758 = vmatpush1.msra.mxu0 0.0
    %3759 = vmatprep.subr.mxu0 0.0
    %3760 = vmatpush1.msra.mxu0 0.0
    %3761 = vmatprep.subr.mxu0 0.0
    %3762 = vmatpush1.msra.mxu0 0.0
    %3763 = vmatprep.subr.mxu0 0.0
    %3764 = vmatpush1.msra.mxu0 0.0
    %3765 = vmatprep.subr.mxu0 0.0
    %3766 = vmatpush1.msra.mxu0 0.0
    %3767 = vmatprep.subr.mxu0 0.0
    %3768 = vmatpush1.msra.mxu0 0.0
    %3769 = vmatprep.subr.mxu0 0.0
    %3770 = vmatpush1.msra.mxu0 %v155
    %3771 = vmatprep.subr.mxu0 0.0
    %3772 = vmatpush1.msra.mxu0 %v154
    %3773 = vmatprep.subr.mxu0 0.0
    %3774 = vmatpush1.msra.mxu0 %v153
    %3775 = vmatprep.subr.mxu0 0.0
    %3776 = vmatpush1.msra.mxu0 %v152
    %3777 = vmatprep.subr.mxu0 0.0
    %3778 = vmatpush2.msra.mxu0 0.0
    %3779 = vmatprep.subr.mxu0 0.0
    %3780 = vmatpush2.msra.mxu0 0.0
    %3781 = vmatprep.subr.mxu0 0.0
    %3782 = vmatpush2.msra.mxu0 0.0
    %3783 = vmatprep.subr.mxu0 0.0
    %3784 = vmatpush2.msra.mxu0 0.0
    %3785 = vmatprep.subr.mxu0 0.0
    %3786 = vmatpush2.msra.mxu0 0.0
    %3787 = vmatprep.subr.mxu0 0.0
    %3788 = vmatpush2.msra.mxu0 0.0
    %3789 = vmatprep.subr.mxu0 0.0
    %3790 = vmatpush2.msra.mxu0 0.0
    %3791 = vmatprep.subr.mxu0 0.0
    %3792 = vmatpush2.msra.mxu0 0.0
    %3793 = vmatprep.subr.mxu0 0.0
    %3794 = vmatpush2.msra.mxu0 0.0
    %3795 = vmatprep.subr.mxu0 0.0
    %3796 = vmatpush2.msra.mxu0 0.0
    %3797 = vmatprep.subr.mxu0 0.0
    %3798 = vmatpush2.msra.mxu0 0.0
    %3799 = vmatprep.subr.mxu0 0.0
    %3800 = vmatpush2.msra.mxu0 0.0
    %3801 = vmatprep.subr.mxu0 0.0
    %3802 = vmatpush2.msra.mxu0 0.0
    %3803 = vmatprep.subr.mxu0 0.0
    %3804 = vmatpush2.msra.mxu0 0.0
    %3805 = vmatprep.subr.mxu0 0.0
    %3806 = vmatpush2.msra.mxu0 0.0
    %3807 = vmatprep.subr.mxu0 0.0
    %3808 = vmatpush2.msra.mxu0 0.0
    %3809 = vmatprep.mubr.f32.mxu0 0.0
    %3810 = vmatmul.mubr.f32.gmra.mxu0 %v3743
    %v3811 = vpop.f32.mrf.mxu0
    %v3812 = vadd.f32 0.0, %v3811
    %v3813 = vpop.f32.mrf.mxu0
    %3814 = vdwg.mxu0
    %3815 = vxpose.xlu0.b32.start [1/16] %v3209, 128
    %3816 = vxpose.xlu0.b32.cont [2/16] 0.0, 128
    %3817 = vxpose.xlu0.b32.cont [3/16] 0.0, 128
    %3818 = vxpose.xlu0.b32.cont [4/16] 0.0, 128
    %3819 = vxpose.xlu0.b32.cont [5/16] 0.0, 128
    %3820 = vxpose.xlu0.b32.cont [6/16] 0.0, 128
    %3821 = vxpose.xlu0.b32.cont [7/16] 0.0, 128
    %3822 = vxpose.xlu0.b32.cont [8/16] 0.0, 128
    %3823 = vxpose.xlu0.b32.cont [9/16] 0.0, 128
    %3824 = vxpose.xlu0.b32.cont [10/16] 0.0, 128
    %3825 = vxpose.xlu0.b32.cont [11/16] 0.0, 128
    %3826 = vxpose.xlu0.b32.cont [12/16] 0.0, 128
    %3827 = vxpose.xlu0.b32.cont [13/16] 0.0, 128
    %3828 = vxpose.xlu0.b32.cont [14/16] 0.0, 128
    %3829 = vxpose.xlu0.b32.cont [15/16] 0.0, 128
    %3830 = vxpose.xlu0.b32.end [16/16] 0.0, 128
    %v3831 = vpop.trf.xlu0
    %v3832 = vpop.trf.xlu0
    %v3833 = vpop.trf.xlu0
    %v3834 = vpop.trf.xlu0
    %v3835 = vpop.trf.xlu0
    %v3836 = vpop.trf.xlu0
    %v3837 = vpop.trf.xlu0
    %v3838 = vpop.trf.xlu0
    %v3839 = vpop.trf.xlu0
    %v3840 = vpop.trf.xlu0
    %v3841 = vpop.trf.xlu0
    %v3842 = vpop.trf.xlu0
    %v3843 = vpop.trf.xlu0
    %v3844 = vpop.trf.xlu0
    %v3845 = vpop.trf.xlu0
    %v3846 = vpop.trf.xlu0
    %v3848 = vsel %vm291, %v3831, 0
    %v3851 = vsel %vm291, %v3832, 0
    %v3854 = vsel %vm291, %v3833, 0
    %v3857 = vsel %vm291, %v3834, 0
    %3859 = vmatprep.subr.mxu0 0.0
    %3860 = vmatpush1.msra.mxu0 0.0
    %3861 = vmatprep.subr.mxu0 0.0
    %3862 = vmatpush1.msra.mxu0 0.0
    %3863 = vmatprep.subr.mxu0 0.0
    %3864 = vmatpush1.msra.mxu0 0.0
    %3865 = vmatprep.subr.mxu0 0.0
    %3866 = vmatpush1.msra.mxu0 0.0
    %3867 = vmatprep.subr.mxu0 0.0
    %3868 = vmatpush1.msra.mxu0 0.0
    %3869 = vmatprep.subr.mxu0 0.0
    %3870 = vmatpush1.msra.mxu0 0.0
    %3871 = vmatprep.subr.mxu0 0.0
    %3872 = vmatpush1.msra.mxu0 0.0
    %3873 = vmatprep.subr.mxu0 0.0
    %3874 = vmatpush1.msra.mxu0 0.0
    %3875 = vmatprep.subr.mxu0 0.0
    %3876 = vmatpush1.msra.mxu0 0.0
    %3877 = vmatprep.subr.mxu0 0.0
    %3878 = vmatpush1.msra.mxu0 0.0
    %3879 = vmatprep.subr.mxu0 0.0
    %3880 = vmatpush1.msra.mxu0 0.0
    %3881 = vmatprep.subr.mxu0 0.0
    %3882 = vmatpush1.msra.mxu0 0.0
    %3883 = vmatprep.subr.mxu0 0.0
    %3884 = vmatpush1.msra.mxu0 0.0
    %3885 = vmatprep.subr.mxu0 0.0
    %3886 = vmatpush1.msra.mxu0 0.0
    %3887 = vmatprep.subr.mxu0 0.0
    %3888 = vmatpush1.msra.mxu0 0.0
    %3889 = vmatprep.subr.mxu0 0.0
    %3890 = vmatpush1.msra.mxu0 %v3593
    %3891 = vmatprep.subr.mxu0 0.0
    %3892 = vmatpush2.msra.mxu0 0.0
    %3893 = vmatprep.subr.mxu0 0.0
    %3894 = vmatpush2.msra.mxu0 0.0
    %3895 = vmatprep.subr.mxu0 0.0
    %3896 = vmatpush2.msra.mxu0 0.0
    %3897 = vmatprep.subr.mxu0 0.0
    %3898 = vmatpush2.msra.mxu0 0.0
    %3899 = vmatprep.subr.mxu0 0.0
    %3900 = vmatpush2.msra.mxu0 0.0
    %3901 = vmatprep.subr.mxu0 0.0
    %3902 = vmatpush2.msra.mxu0 0.0
    %3903 = vmatprep.subr.mxu0 0.0
    %3904 = vmatpush2.msra.mxu0 0.0
    %3905 = vmatprep.subr.mxu0 0.0
    %3906 = vmatpush2.msra.mxu0 0.0
    %3907 = vmatprep.subr.mxu0 0.0
    %3908 = vmatpush2.msra.mxu0 0.0
    %3909 = vmatprep.subr.mxu0 0.0
    %3910 = vmatpush2.msra.mxu0 0.0
    %3911 = vmatprep.subr.mxu0 0.0
    %3912 = vmatpush2.msra.mxu0 0.0
    %3913 = vmatprep.subr.mxu0 0.0
    %3914 = vmatpush2.msra.mxu0 0.0
    %3915 = vmatprep.subr.mxu0 0.0
    %3916 = vmatpush2.msra.mxu0 0.0
    %3917 = vmatprep.subr.mxu0 0.0
    %3918 = vmatpush2.msra.mxu0 0.0
    %3919 = vmatprep.subr.mxu0 0.0
    %3920 = vmatpush2.msra.mxu0 0.0
    %3921 = vmatprep.subr.mxu0 0.0
    %3922 = vmatpush2.msra.mxu0 0.0
    %3923 = vmatprep.mubr.f32.mxu0 0.0
    %3924 = vmatmul.mubr.f32.gmra.mxu0 %v3848
    %v3925 = vpop.f32.mrf.mxu0
    %v3926 = vadd.f32 0.0, %v3925
    %v3927 = vpop.f32.mrf.mxu0
    %3928 = vmatprep.mubr.f32.mxu0 0.0
    %3929 = vmatmul.mubr.f32.gmra.mxu0 %v3851
    %v3930 = vpop.f32.mrf.mxu0
    %v3931 = vadd.f32 0.0, %v3930
    %v3932 = vpop.f32.mrf.mxu0
    %3933 = vmatprep.mubr.f32.mxu0 0.0
    %3934 = vmatmul.mubr.f32.gmra.mxu0 %v3854
    %v3935 = vpop.f32.mrf.mxu0
    %v3936 = vadd.f32 0.0, %v3935
    %v3937 = vpop.f32.mrf.mxu0
    %3938 = vmatprep.mubr.f32.mxu0 0.0
    %3939 = vmatmul.mubr.f32.gmra.mxu0 %v3857
    %v3940 = vpop.f32.mrf.mxu0
    %v3941 = vadd.f32 0.0, %v3940
    %v3942 = vpop.f32.mrf.mxu0
    %3943 = vdwg.mxu0
    %v3944 = vadd.f32 %v2217, %v3926
    %v3945 = vadd.f32 %v2222, %v3931
    %v3946 = vadd.f32 %v2227, %v3936
    %v3947 = vadd.f32 %v2232, %v3941
    %v3948 = vsel %vm179, %v3593, 0.0
    %v3949 = vrot.slane %v3948, 4
    %v3950 = vadd.f32 %v3948, %v3949
    %v3951 = vrot.slane %v3950, 2
    %v3952 = vadd.f32 %v3950, %v3951
    %v3953 = vrot.slane %v3952, 1
    %v3954 = vadd.f32 %v3952, %v3953
    %v3955 = vadd.f32 %v2242, %v3954
    %3956 = vxpose.xlu0.b32.start [1/16] %v3133, 128
    %3957 = vxpose.xlu0.b32.cont [2/16] 0.0, 128
    %3958 = vxpose.xlu0.b32.cont [3/16] 0.0, 128
    %3959 = vxpose.xlu0.b32.cont [4/16] 0.0, 128
    %3960 = vxpose.xlu0.b32.cont [5/16] 0.0, 128
    %3961 = vxpose.xlu0.b32.cont [6/16] 0.0, 128
    %3962 = vxpose.xlu0.b32.cont [7/16] 0.0, 128
    %3963 = vxpose.xlu0.b32.cont [8/16] 0.0, 128
    %3964 = vxpose.xlu0.b32.cont [9/16] 0.0, 128
    %3965 = vxpose.xlu0.b32.cont [10/16] 0.0, 128
    %3966 = vxpose.xlu0.b32.cont [11/16] 0.0, 128
    %3967 = vxpose.xlu0.b32.cont [12/16] 0.0, 128
    %3968 = vxpose.xlu0.b32.cont [13/16] 0.0, 128
    %3969 = vxpose.xlu0.b32.cont [14/16] 0.0, 128
    %3970 = vxpose.xlu0.b32.cont [15/16] 0.0, 128
    %3971 = vxpose.xlu0.b32.end [16/16] 0.0, 128
    %v3972 = vpop.trf.xlu0
    %v3973 = vpop.trf.xlu0
    %v3974 = vpop.trf.xlu0
    %v3975 = vpop.trf.xlu0
    %v3976 = vpop.trf.xlu0
    %v3977 = vpop.trf.xlu0
    %v3978 = vpop.trf.xlu0
    %v3979 = vpop.trf.xlu0
    %v3980 = vpop.trf.xlu0
    %v3981 = vpop.trf.xlu0
    %v3982 = vpop.trf.xlu0
    %v3983 = vpop.trf.xlu0
    %v3984 = vpop.trf.xlu0
    %v3985 = vpop.trf.xlu0
    %v3986 = vpop.trf.xlu0
    %v3987 = vpop.trf.xlu0
    %v3989 = vsel %vm291, %v3972, 0
    %v3992 = vsel %vm291, %v3973, 0
    %v3995 = vsel %vm291, %v3974, 0
    %v3998 = vsel %vm291, %v3975, 0
    %4000 = vmatprep.subr.mxu0 0.0
    %4001 = vmatpush1.msra.mxu0 0.0
    %4002 = vmatprep.subr.mxu0 0.0
    %4003 = vmatpush1.msra.mxu0 0.0
    %4004 = vmatprep.subr.mxu0 0.0
    %4005 = vmatpush1.msra.mxu0 0.0
    %4006 = vmatprep.subr.mxu0 0.0
    %4007 = vmatpush1.msra.mxu0 0.0
    %4008 = vmatprep.subr.mxu0 0.0
    %4009 = vmatpush1.msra.mxu0 0.0
    %4010 = vmatprep.subr.mxu0 0.0
    %4011 = vmatpush1.msra.mxu0 0.0
    %4012 = vmatprep.subr.mxu0 0.0
    %4013 = vmatpush1.msra.mxu0 0.0
    %4014 = vmatprep.subr.mxu0 0.0
    %4015 = vmatpush1.msra.mxu0 0.0
    %4016 = vmatprep.subr.mxu0 0.0
    %4017 = vmatpush1.msra.mxu0 0.0
    %4018 = vmatprep.subr.mxu0 0.0
    %4019 = vmatpush1.msra.mxu0 0.0
    %4020 = vmatprep.subr.mxu0 0.0
    %4021 = vmatpush1.msra.mxu0 0.0
    %4022 = vmatprep.subr.mxu0 0.0
    %4023 = vmatpush1.msra.mxu0 0.0
    %4024 = vmatprep.subr.mxu0 0.0
    %4025 = vmatpush1.msra.mxu0 0.0
    %4026 = vmatprep.subr.mxu0 0.0
    %4027 = vmatpush1.msra.mxu0 0.0
    %4028 = vmatprep.subr.mxu0 0.0
    %4029 = vmatpush1.msra.mxu0 0.0
    %4030 = vmatprep.subr.mxu0 0.0
    %4031 = vmatpush1.msra.mxu0 %v3667
    %4032 = vmatprep.subr.mxu0 0.0
    %4033 = vmatpush2.msra.mxu0 0.0
    %4034 = vmatprep.subr.mxu0 0.0
    %4035 = vmatpush2.msra.mxu0 0.0
    %4036 = vmatprep.subr.mxu0 0.0
    %4037 = vmatpush2.msra.mxu0 0.0
    %4038 = vmatprep.subr.mxu0 0.0
    %4039 = vmatpush2.msra.mxu0 0.0
    %4040 = vmatprep.subr.mxu0 0.0
    %4041 = vmatpush2.msra.mxu0 0.0
    %4042 = vmatprep.subr.mxu0 0.0
    %4043 = vmatpush2.msra.mxu0 0.0
    %4044 = vmatprep.subr.mxu0 0.0
    %4045 = vmatpush2.msra.mxu0 0.0
    %4046 = vmatprep.subr.mxu0 0.0
    %4047 = vmatpush2.msra.mxu0 0.0
    %4048 = vmatprep.subr.mxu0 0.0
    %4049 = vmatpush2.msra.mxu0 0.0
    %4050 = vmatprep.subr.mxu0 0.0
    %4051 = vmatpush2.msra.mxu0 0.0
    %4052 = vmatprep.subr.mxu0 0.0
    %4053 = vmatpush2.msra.mxu0 0.0
    %4054 = vmatprep.subr.mxu0 0.0
    %4055 = vmatpush2.msra.mxu0 0.0
    %4056 = vmatprep.subr.mxu0 0.0
    %4057 = vmatpush2.msra.mxu0 0.0
    %4058 = vmatprep.subr.mxu0 0.0
    %4059 = vmatpush2.msra.mxu0 0.0
    %4060 = vmatprep.subr.mxu0 0.0
    %4061 = vmatpush2.msra.mxu0 0.0
    %4062 = vmatprep.subr.mxu0 0.0
    %4063 = vmatpush2.msra.mxu0 0.0
    %4064 = vmatprep.mubr.f32.mxu0 0.0
    %4065 = vmatmul.mubr.f32.gmra.mxu0 %v3989
    %v4066 = vpop.f32.mrf.mxu0
    %v4067 = vadd.f32 0.0, %v4066
    %v4068 = vpop.f32.mrf.mxu0
    %4069 = vmatprep.mubr.f32.mxu0 0.0
    %4070 = vmatmul.mubr.f32.gmra.mxu0 %v3992
    %v4071 = vpop.f32.mrf.mxu0
    %v4072 = vadd.f32 0.0, %v4071
    %v4073 = vpop.f32.mrf.mxu0
    %4074 = vmatprep.mubr.f32.mxu0 0.0
    %4075 = vmatmul.mubr.f32.gmra.mxu0 %v3995
    %v4076 = vpop.f32.mrf.mxu0
    %v4077 = vadd.f32 0.0, %v4076
    %v4078 = vpop.f32.mrf.mxu0
    %4079 = vmatprep.mubr.f32.mxu0 0.0
    %4080 = vmatmul.mubr.f32.gmra.mxu0 %v3998
    %v4081 = vpop.f32.mrf.mxu0
    %v4082 = vadd.f32 0.0, %v4081
    %v4083 = vpop.f32.mrf.mxu0
    %4084 = vdwg.mxu0
    %v4085 = vadd.f32 %v2483, %v4067
    %v4086 = vadd.f32 %v2488, %v4072
    %v4087 = vadd.f32 %v2493, %v4077
    %v4088 = vadd.f32 %v2498, %v4082
    %v4089 = vsel %vm374, %v3667, 0.0
    %v4090 = vrot.slane %v4089, 4
    %v4091 = vadd.f32 %v4089, %v4090
    %v4092 = vrot.slane %v4091, 2
    %v4093 = vadd.f32 %v4091, %v4092
    %v4094 = vrot.slane %v4093, 1
    %v4095 = vadd.f32 %v4093, %v4094
    %v4096 = vadd.f32 %v2508, %v4095
    %4097 = vxpose.xlu0.b32.start [1/16] %v3057, 128
    %4098 = vxpose.xlu0.b32.cont [2/16] 0.0, 128
    %4099 = vxpose.xlu0.b32.cont [3/16] 0.0, 128
    %4100 = vxpose.xlu0.b32.cont [4/16] 0.0, 128
    %4101 = vxpose.xlu0.b32.cont [5/16] 0.0, 128
    %4102 = vxpose.xlu0.b32.cont [6/16] 0.0, 128
    %4103 = vxpose.xlu0.b32.cont [7/16] 0.0, 128
    %4104 = vxpose.xlu0.b32.cont [8/16] 0.0, 128
    %4105 = vxpose.xlu0.b32.cont [9/16] 0.0, 128
    %4106 = vxpose.xlu0.b32.cont [10/16] 0.0, 128
    %4107 = vxpose.xlu0.b32.cont [11/16] 0.0, 128
    %4108 = vxpose.xlu0.b32.cont [12/16] 0.0, 128
    %4109 = vxpose.xlu0.b32.cont [13/16] 0.0, 128
    %4110 = vxpose.xlu0.b32.cont [14/16] 0.0, 128
    %4111 = vxpose.xlu0.b32.cont [15/16] 0.0, 128
    %4112 = vxpose.xlu0.b32.end [16/16] 0.0, 128
    %v4113 = vpop.trf.xlu0
    %v4114 = vpop.trf.xlu0
    %v4115 = vpop.trf.xlu0
    %v4116 = vpop.trf.xlu0
    %v4117 = vpop.trf.xlu0
    %v4118 = vpop.trf.xlu0
    %v4119 = vpop.trf.xlu0
    %v4120 = vpop.trf.xlu0
    %v4121 = vpop.trf.xlu0
    %v4122 = vpop.trf.xlu0
    %v4123 = vpop.trf.xlu0
    %v4124 = vpop.trf.xlu0
    %v4125 = vpop.trf.xlu0
    %v4126 = vpop.trf.xlu0
    %v4127 = vpop.trf.xlu0
    %v4128 = vpop.trf.xlu0
    %v4130 = vsel %vm291, %v4113, 0
    %4132 = vmatprep.subr.mxu0 0.0
    %4133 = vmatpush1.msra.mxu0 0.0
    %4134 = vmatprep.subr.mxu0 0.0
    %4135 = vmatpush1.msra.mxu0 0.0
    %4136 = vmatprep.subr.mxu0 0.0
    %4137 = vmatpush1.msra.mxu0 0.0
    %4138 = vmatprep.subr.mxu0 0.0
    %4139 = vmatpush1.msra.mxu0 0.0
    %4140 = vmatprep.subr.mxu0 0.0
    %4141 = vmatpush1.msra.mxu0 0.0
    %4142 = vmatprep.subr.mxu0 0.0
    %4143 = vmatpush1.msra.mxu0 0.0
    %4144 = vmatprep.subr.mxu0 0.0
    %4145 = vmatpush1.msra.mxu0 0.0
    %4146 = vmatprep.subr.mxu0 0.0
    %4147 = vmatpush1.msra.mxu0 0.0
    %4148 = vmatprep.subr.mxu0 0.0
    %4149 = vmatpush1.msra.mxu0 0.0
    %4150 = vmatprep.subr.mxu0 0.0
    %4151 = vmatpush1.msra.mxu0 0.0
    %4152 = vmatprep.subr.mxu0 0.0
    %4153 = vmatpush1.msra.mxu0 0.0
    %4154 = vmatprep.subr.mxu0 0.0
    %4155 = vmatpush1.msra.mxu0 0.0
    %4156 = vmatprep.subr.mxu0 0.0
    %4157 = vmatpush1.msra.mxu0 0.0
    %4158 = vmatprep.subr.mxu0 0.0
    %4159 = vmatpush1.msra.mxu0 0.0
    %4160 = vmatprep.subr.mxu0 0.0
    %4161 = vmatpush1.msra.mxu0 0.0
    %4162 = vmatprep.subr.mxu0 0.0
    %4163 = vmatpush1.msra.mxu0 %v3741
    %4164 = vmatprep.subr.mxu0 0.0
    %4165 = vmatpush2.msra.mxu0 0.0
    %4166 = vmatprep.subr.mxu0 0.0
    %4167 = vmatpush2.msra.mxu0 0.0
    %4168 = vmatprep.subr.mxu0 0.0
    %4169 = vmatpush2.msra.mxu0 0.0
    %4170 = vmatprep.subr.mxu0 0.0
    %4171 = vmatpush2.msra.mxu0 0.0
    %4172 = vmatprep.subr.mxu0 0.0
    %4173 = vmatpush2.msra.mxu0 0.0
    %4174 = vmatprep.subr.mxu0 0.0
    %4175 = vmatpush2.msra.mxu0 0.0
    %4176 = vmatprep.subr.mxu0 0.0
    %4177 = vmatpush2.msra.mxu0 0.0
    %4178 = vmatprep.subr.mxu0 0.0
    %4179 = vmatpush2.msra.mxu0 0.0
    %4180 = vmatprep.subr.mxu0 0.0
    %4181 = vmatpush2.msra.mxu0 0.0
    %4182 = vmatprep.subr.mxu0 0.0
    %4183 = vmatpush2.msra.mxu0 0.0
    %4184 = vmatprep.subr.mxu0 0.0
    %4185 = vmatpush2.msra.mxu0 0.0
    %4186 = vmatprep.subr.mxu0 0.0
    %4187 = vmatpush2.msra.mxu0 0.0
    %4188 = vmatprep.subr.mxu0 0.0
    %4189 = vmatpush2.msra.mxu0 0.0
    %4190 = vmatprep.subr.mxu0 0.0
    %4191 = vmatpush2.msra.mxu0 0.0
    %4192 = vmatprep.subr.mxu0 0.0
    %4193 = vmatpush2.msra.mxu0 0.0
    %4194 = vmatprep.subr.mxu0 0.0
    %4195 = vmatpush2.msra.mxu0 0.0
    %4196 = vmatprep.mubr.f32.mxu0 0.0
    %4197 = vmatmul.mubr.f32.gmra.mxu0 %v4130
    %v4198 = vpop.f32.mrf.mxu0
    %v4199 = vadd.f32 0.0, %v4198
    %v4200 = vpop.f32.mrf.mxu0
    %4201 = vdwg.mxu0
    %v4202 = vadd.f32 %v2716, %v4199
    %v4203 = vsel %vm374, %v3741, 0.0
    %v4204 = vrot.slane %v4203, 4
    %v4205 = vadd.f32 %v4203, %v4204
    %v4206 = vrot.slane %v4205, 2
    %v4207 = vadd.f32 %v4205, %v4206
    %v4208 = vrot.slane %v4207, 1
    %v4209 = vadd.f32 %v4207, %v4208
    %v4210 = vadd.f32 %v2726, %v4209
    %4211 = vxpose.xlu0.b32.start [1/16] %v2958, 128
    %4212 = vxpose.xlu0.b32.cont [2/16] 0.0, 128
    %4213 = vxpose.xlu0.b32.cont [3/16] 0.0, 128
    %4214 = vxpose.xlu0.b32.cont [4/16] 0.0, 128
    %4215 = vxpose.xlu0.b32.cont [5/16] 0.0, 128
    %4216 = vxpose.xlu0.b32.cont [6/16] 0.0, 128
    %4217 = vxpose.xlu0.b32.cont [7/16] 0.0, 128
    %4218 = vxpose.xlu0.b32.cont [8/16] 0.0, 128
    %4219 = vxpose.xlu0.b32.cont [9/16] 0.0, 128
    %4220 = vxpose.xlu0.b32.cont [10/16] 0.0, 128
    %4221 = vxpose.xlu0.b32.cont [11/16] 0.0, 128
    %4222 = vxpose.xlu0.b32.cont [12/16] 0.0, 128
    %4223 = vxpose.xlu0.b32.cont [13/16] 0.0, 128
    %4224 = vxpose.xlu0.b32.cont [14/16] 0.0, 128
    %4225 = vxpose.xlu0.b32.cont [15/16] 0.0, 128
    %4226 = vxpose.xlu0.b32.end [16/16] 0.0, 128
    %v4227 = vpop.trf.xlu0
    %v4228 = vpop.trf.xlu0
    %v4229 = vpop.trf.xlu0
    %v4230 = vpop.trf.xlu0
    %v4231 = vpop.trf.xlu0
    %v4232 = vpop.trf.xlu0
    %v4233 = vpop.trf.xlu0
    %v4234 = vpop.trf.xlu0
    %v4235 = vpop.trf.xlu0
    %v4236 = vpop.trf.xlu0
    %v4237 = vpop.trf.xlu0
    %v4238 = vpop.trf.xlu0
    %v4239 = vpop.trf.xlu0
    %v4240 = vpop.trf.xlu0
    %v4241 = vpop.trf.xlu0
    %v4242 = vpop.trf.xlu0
    %4244 = vrot.lane.b32.xlu0 %v3812, 122
    %v4245 = vpop.permute.xlu0 %4244
    %v4248 = vsel %vm291, %v4227, 0
    %4250 = vmatprep.subr.mxu0 0.0
    %4251 = vmatpush1.msra.mxu0 0.0
    %4252 = vmatprep.subr.mxu0 0.0
    %4253 = vmatpush1.msra.mxu0 0.0
    %4254 = vmatprep.subr.mxu0 0.0
    %4255 = vmatpush1.msra.mxu0 0.0
    %4256 = vmatprep.subr.mxu0 0.0
    %4257 = vmatpush1.msra.mxu0 0.0
    %4258 = vmatprep.subr.mxu0 0.0
    %4259 = vmatpush1.msra.mxu0 0.0
    %4260 = vmatprep.subr.mxu0 0.0
    %4261 = vmatpush1.msra.mxu0 0.0
    %4262 = vmatprep.subr.mxu0 0.0
    %4263 = vmatpush1.msra.mxu0 0.0
    %4264 = vmatprep.subr.mxu0 0.0
    %4265 = vmatpush1.msra.mxu0 0.0
    %4266 = vmatprep.subr.mxu0 0.0
    %4267 = vmatpush1.msra.mxu0 0.0
    %4268 = vmatprep.subr.mxu0 0.0
    %4269 = vmatpush1.msra.mxu0 0.0
    %4270 = vmatprep.subr.mxu0 0.0
    %4271 = vmatpush1.msra.mxu0 0.0
    %4272 = vmatprep.subr.mxu0 0.0
    %4273 = vmatpush1.msra.mxu0 0.0
    %4274 = vmatprep.subr.mxu0 0.0
    %4275 = vmatpush1.msra.mxu0 0.0
    %4276 = vmatprep.subr.mxu0 0.0
    %4277 = vmatpush1.msra.mxu0 0.0
    %4278 = vmatprep.subr.mxu0 0.0
    %4279 = vmatpush1.msra.mxu0 0.0
    %4280 = vmatprep.subr.mxu0 0.0
    %4281 = vmatpush1.msra.mxu0 %v4245
    %4282 = vmatprep.subr.mxu0 0.0
    %4283 = vmatpush2.msra.mxu0 0.0
    %4284 = vmatprep.subr.mxu0 0.0
    %4285 = vmatpush2.msra.mxu0 0.0
    %4286 = vmatprep.subr.mxu0 0.0
    %4287 = vmatpush2.msra.mxu0 0.0
    %4288 = vmatprep.subr.mxu0 0.0
    %4289 = vmatpush2.msra.mxu0 0.0
    %4290 = vmatprep.subr.mxu0 0.0
    %4291 = vmatpush2.msra.mxu0 0.0
    %4292 = vmatprep.subr.mxu0 0.0
    %4293 = vmatpush2.msra.mxu0 0.0
    %4294 = vmatprep.subr.mxu0 0.0
    %4295 = vmatpush2.msra.mxu0 0.0
    %4296 = vmatprep.subr.mxu0 0.0
    %4297 = vmatpush2.msra.mxu0 0.0
    %4298 = vmatprep.subr.mxu0 0.0
    %4299 = vmatpush2.msra.mxu0 0.0
    %4300 = vmatprep.subr.mxu0 0.0
    %4301 = vmatpush2.msra.mxu0 0.0
    %4302 = vmatprep.subr.mxu0 0.0
    %4303 = vmatpush2.msra.mxu0 0.0
    %4304 = vmatprep.subr.mxu0 0.0
    %4305 = vmatpush2.msra.mxu0 0.0
    %4306 = vmatprep.subr.mxu0 0.0
    %4307 = vmatpush2.msra.mxu0 0.0
    %4308 = vmatprep.subr.mxu0 0.0
    %4309 = vmatpush2.msra.mxu0 0.0
    %4310 = vmatprep.subr.mxu0 0.0
    %4311 = vmatpush2.msra.mxu0 0.0
    %4312 = vmatprep.subr.mxu0 0.0
    %4313 = vmatpush2.msra.mxu0 0.0
    %4314 = vmatprep.mubr.f32.mxu0 0.0
    %4315 = vmatmul.mubr.f32.gmra.mxu0 %v4248
    %v4316 = vpop.f32.mrf.mxu0
    %v4317 = vadd.f32 0.0, %v4316
    %v4318 = vpop.f32.mrf.mxu0
    %4319 = vdwg.mxu0
    %v4320 = vadd.f32 %v2942, %v4317
    %v4321 = vmul.f32 %v3543, 0.001
    %v4322 = vsub.f32 %v2946, %v4321
    %v4323 = vsub.f32 %v162, %v4322
    %v4324 = vmul.f32 %v4323, %v4323
    %vm4325 = vcmask 8192
    %v4326 = vsel %vm4325, %v4324, 0.0
    %4327 = vadd.xlane.f32.xlu0 %v4326
    %v4328 = vpop.xlane.xlu0 %4327
    %v4329 = vmul.f32 %v4323, 0.002
    %v4331 = vlaneseq
    %v4332 = vshrl.u32 %v4331, 7
    %v4333 = vsub.s32 0, %v4332
    %v4334 = vrot.slane %v4329, %v4333
    %4336 = vrot.lane.b32.xlu0 %v4334, 2
    %v4337 = vpop.permute.xlu0 %4336
    %v4339 = vsel %vm179, %v4334, %v4337
    %v4340 = vsel %vm281, %v4339, 0.0
    %v4341 = vsel %vm283, %v4340, 0.0
    %v4343 = vsel %vm291, %v4341, 0
    %4345 = vmatprep.subr.mxu0 0.0
    %4346 = vmatpush1.msra.mxu0 0.0
    %4347 = vmatprep.subr.mxu0 0.0
    %4348 = vmatpush1.msra.mxu0 0.0
    %4349 = vmatprep.subr.mxu0 0.0
    %4350 = vmatpush1.msra.mxu0 0.0
    %4351 = vmatprep.subr.mxu0 0.0
    %4352 = vmatpush1.msra.mxu0 0.0
    %4353 = vmatprep.subr.mxu0 0.0
    %4354 = vmatpush1.msra.mxu0 0.0
    %4355 = vmatprep.subr.mxu0 0.0
    %4356 = vmatpush1.msra.mxu0 0.0
    %4357 = vmatprep.subr.mxu0 0.0
    %4358 = vmatpush1.msra.mxu0 0.0
    %4359 = vmatprep.subr.mxu0 0.0
    %4360 = vmatpush1.msra.mxu0 0.0
    %4361 = vmatprep.subr.mxu0 0.0
    %4362 = vmatpush1.msra.mxu0 0.0
    %4363 = vmatprep.subr.mxu0 0.0
    %4364 = vmatpush1.msra.mxu0 0.0
    %4365 = vmatprep.subr.mxu0 0.0
    %4366 = vmatpush1.msra.mxu0 0.0
    %4367 = vmatprep.subr.mxu0 0.0
    %4368 = vmatpush1.msra.mxu0 0.0
    %4369 = vmatprep.subr.mxu0 0.0
    %4370 = vmatpush1.msra.mxu0 0.0
    %4371 = vmatprep.subr.mxu0 0.0
    %4372 = vmatpush1.msra.mxu0 0.0
    %4373 = vmatprep.subr.mxu0 0.0
    %4374 = vmatpush1.msra.mxu0 0.0
    %4375 = vmatprep.subr.mxu0 0.0
    %4376 = vmatpush1.msra.mxu0 %v140
    %4377 = vmatprep.subr.mxu0 0.0
    %4378 = vmatpush2.msra.mxu0 0.0
    %4379 = vmatprep.subr.mxu0 0.0
    %4380 = vmatpush2.msra.mxu0 0.0
    %4381 = vmatprep.subr.mxu0 0.0
    %4382 = vmatpush2.msra.mxu0 0.0
    %4383 = vmatprep.subr.mxu0 0.0
    %4384 = vmatpush2.msra.mxu0 0.0
    %4385 = vmatprep.subr.mxu0 0.0
    %4386 = vmatpush2.msra.mxu0 0.0
    %4387 = vmatprep.subr.mxu0 0.0
    %4388 = vmatpush2.msra.mxu0 0.0
    %4389 = vmatprep.subr.mxu0 0.0
    %4390 = vmatpush2.msra.mxu0 0.0
    %4391 = vmatprep.subr.mxu0 0.0
    %4392 = vmatpush2.msra.mxu0 0.0
    %4393 = vmatprep.subr.mxu0 0.0
    %4394 = vmatpush2.msra.mxu0 0.0
    %4395 = vmatprep.subr.mxu0 0.0
    %4396 = vmatpush2.msra.mxu0 0.0
    %4397 = vmatprep.subr.mxu0 0.0
    %4398 = vmatpush2.msra.mxu0 0.0
    %4399 = vmatprep.subr.mxu0 0.0
    %4400 = vmatpush2.msra.mxu0 0.0
    %4401 = vmatprep.subr.mxu0 0.0
    %4402 = vmatpush2.msra.mxu0 0.0
    %4403 = vmatprep.subr.mxu0 0.0
    %4404 = vmatpush2.msra.mxu0 0.0
    %4405 = vmatprep.subr.mxu0 0.0
    %4406 = vmatpush2.msra.mxu0 0.0
    %4407 = vmatprep.subr.mxu0 0.0
    %4408 = vmatpush2.msra.mxu0 0.0
    %4409 = vmatprep.mubr.f32.mxu0 0.0
    %4410 = vmatmul.mubr.f32.gmra.mxu0 %v4343
    %v4411 = vpop.f32.mrf.mxu0
    %v4412 = vadd.f32 0.0, %v4411
    %v4413 = vpop.f32.mrf.mxu0
    %4414 = vdwg.mxu0
    %v4415 = vmul.f32 %v366, %v4412
    %v4417 = vsel %vm374, %v4415, 0
    %4419 = vmatprep.subr.mxu0 0.0
    %4420 = vmatpush1.msra.mxu0 0.0
    %4421 = vmatprep.subr.mxu0 0.0
    %4422 = vmatpush1.msra.mxu0 0.0
    %4423 = vmatprep.subr.mxu0 0.0
    %4424 = vmatpush1.msra.mxu0 0.0
    %4425 = vmatprep.subr.mxu0 0.0
    %4426 = vmatpush1.msra.mxu0 0.0
    %4427 = vmatprep.subr.mxu0 0.0
    %4428 = vmatpush1.msra.mxu0 0.0
    %4429 = vmatprep.subr.mxu0 0.0
    %4430 = vmatpush1.msra.mxu0 0.0
    %4431 = vmatprep.subr.mxu0 0.0
    %4432 = vmatpush1.msra.mxu0 0.0
    %4433 = vmatprep.subr.mxu0 0.0
    %4434 = vmatpush1.msra.mxu0 0.0
    %4435 = vmatprep.subr.mxu0 0.0
    %4436 = vmatpush1.msra.mxu0 0.0
    %4437 = vmatprep.subr.mxu0 0.0
    %4438 = vmatpush1.msra.mxu0 0.0
    %4439 = vmatprep.subr.mxu0 0.0
    %4440 = vmatpush1.msra.mxu0 0.0
    %4441 = vmatprep.subr.mxu0 0.0
    %4442 = vmatpush1.msra.mxu0 0.0
    %4443 = vmatprep.subr.mxu0 0.0
    %4444 = vmatpush1.msra.mxu0 %v145
    %4445 = vmatprep.subr.mxu0 0.0
    %4446 = vmatpush1.msra.mxu0 %v144
    %4447 = vmatprep.subr.mxu0 0.0
    %4448 = vmatpush1.msra.mxu0 %v143
    %4449 = vmatprep.subr.mxu0 0.0
    %4450 = vmatpush1.msra.mxu0 %v142
    %4451 = vmatprep.subr.mxu0 0.0
    %4452 = vmatpush2.msra.mxu0 0.0
    %4453 = vmatprep.subr.mxu0 0.0
    %4454 = vmatpush2.msra.mxu0 0.0
    %4455 = vmatprep.subr.mxu0 0.0
    %4456 = vmatpush2.msra.mxu0 0.0
    %4457 = vmatprep.subr.mxu0 0.0
    %4458 = vmatpush2.msra.mxu0 0.0
    %4459 = vmatprep.subr.mxu0 0.0
    %4460 = vmatpush2.msra.mxu0 0.0
    %4461 = vmatprep.subr.mxu0 0.0
    %4462 = vmatpush2.msra.mxu0 0.0
    %4463 = vmatprep.subr.mxu0 0.0
    %4464 = vmatpush2.msra.mxu0 0.0
    %4465 = vmatprep.subr.mxu0 0.0
    %4466 = vmatpush2.msra.mxu0 0.0
    %4467 = vmatprep.subr.mxu0 0.0
    %4468 = vmatpush2.msra.mxu0 0.0
    %4469 = vmatprep.subr.mxu0 0.0
    %4470 = vmatpush2.msra.mxu0 0.0
    %4471 = vmatprep.subr.mxu0 0.0
    %4472 = vmatpush2.msra.mxu0 0.0
    %4473 = vmatprep.subr.mxu0 0.0
    %4474 = vmatpush2.msra.mxu0 0.0
    %4475 = vmatprep.subr.mxu0 0.0
    %4476 = vmatpush2.msra.mxu0 0.0
    %4477 = vmatprep.subr.mxu0 0.0
    %4478 = vmatpush2.msra.mxu0 0.0
    %4479 = vmatprep.subr.mxu0 0.0
    %4480 = vmatpush2.msra.mxu0 0.0
    %4481 = vmatprep.subr.mxu0 0.0
    %4482 = vmatpush2.msra.mxu0 0.0
    %4483 = vmatprep.mubr.f32.mxu0 0.0
    %4484 = vmatmul.mubr.f32.gmra.mxu0 %v4417
    %v4485 = vpop.f32.mrf.mxu0
    %v4486 = vadd.f32 0.0, %v4485
    %v4487 = vpop.f32.mrf.mxu0
    %4488 = vdwg.mxu0
    %v4489 = vmul.f32 %v449, %v4486
    %v4491 = vsel %vm374, %v4489, 0
    %4493 = vmatprep.subr.mxu0 0.0
    %4494 = vmatpush1.msra.mxu0 0.0
    %4495 = vmatprep.subr.mxu0 0.0
    %4496 = vmatpush1.msra.mxu0 0.0
    %4497 = vmatprep.subr.mxu0 0.0
    %4498 = vmatpush1.msra.mxu0 0.0
    %4499 = vmatprep.subr.mxu0 0.0
    %4500 = vmatpush1.msra.mxu0 0.0
    %4501 = vmatprep.subr.mxu0 0.0
    %4502 = vmatpush1.msra.mxu0 0.0
    %4503 = vmatprep.subr.mxu0 0.0
    %4504 = vmatpush1.msra.mxu0 0.0
    %4505 = vmatprep.subr.mxu0 0.0
    %4506 = vmatpush1.msra.mxu0 0.0
    %4507 = vmatprep.subr.mxu0 0.0
    %4508 = vmatpush1.msra.mxu0 0.0
    %4509 = vmatprep.subr.mxu0 0.0
    %4510 = vmatpush1.msra.mxu0 0.0
    %4511 = vmatprep.subr.mxu0 0.0
    %4512 = vmatpush1.msra.mxu0 0.0
    %4513 = vmatprep.subr.mxu0 0.0
    %4514 = vmatpush1.msra.mxu0 0.0
    %4515 = vmatprep.subr.mxu0 0.0
    %4516 = vmatpush1.msra.mxu0 0.0
    %4517 = vmatprep.subr.mxu0 0.0
    %4518 = vmatpush1.msra.mxu0 %v150
    %4519 = vmatprep.subr.mxu0 0.0
    %4520 = vmatpush1.msra.mxu0 %v149
    %4521 = vmatprep.subr.mxu0 0.0
    %4522 = vmatpush1.msra.mxu0 %v148
    %4523 = vmatprep.subr.mxu0 0.0
    %4524 = vmatpush1.msra.mxu0 %v147
    %4525 = vmatprep.subr.mxu0 0.0
    %4526 = vmatpush2.msra.mxu0 0.0
    %4527 = vmatprep.subr.mxu0 0.0
    %4528 = vmatpush2.msra.mxu0 0.0
    %4529 = vmatprep.subr.mxu0 0.0
    %4530 = vmatpush2.msra.mxu0 0.0
    %4531 = vmatprep.subr.mxu0 0.0
    %4532 = vmatpush2.msra.mxu0 0.0
    %4533 = vmatprep.subr.mxu0 0.0
    %4534 = vmatpush2.msra.mxu0 0.0
    %4535 = vmatprep.subr.mxu0 0.0
    %4536 = vmatpush2.msra.mxu0 0.0
    %4537 = vmatprep.subr.mxu0 0.0
    %4538 = vmatpush2.msra.mxu0 0.0
    %4539 = vmatprep.subr.mxu0 0.0
    %4540 = vmatpush2.msra.mxu0 0.0
    %4541 = vmatprep.subr.mxu0 0.0
    %4542 = vmatpush2.msra.mxu0 0.0
    %4543 = vmatprep.subr.mxu0 0.0
    %4544 = vmatpush2.msra.mxu0 0.0
    %4545 = vmatprep.subr.mxu0 0.0
    %4546 = vmatpush2.msra.mxu0 0.0
    %4547 = vmatprep.subr.mxu0 0.0
    %4548 = vmatpush2.msra.mxu0 0.0
    %4549 = vmatprep.subr.mxu0 0.0
    %4550 = vmatpush2.msra.mxu0 0.0
    %4551 = vmatprep.subr.mxu0 0.0
    %4552 = vmatpush2.msra.mxu0 0.0
    %4553 = vmatprep.subr.mxu0 0.0
    %4554 = vmatpush2.msra.mxu0 0.0
    %4555 = vmatprep.subr.mxu0 0.0
    %4556 = vmatpush2.msra.mxu0 0.0
    %4557 = vmatprep.mubr.f32.mxu0 0.0
    %4558 = vmatmul.mubr.f32.gmra.mxu0 %v4491
    %v4559 = vpop.f32.mrf.mxu0
    %v4560 = vadd.f32 0.0, %v4559
    %v4561 = vpop.f32.mrf.mxu0
    %4562 = vdwg.mxu0
    %v4563 = vmul.f32 %v4560, %v261
    %v4564 = vsel %vm179, %v4563, 0.0
    %4565 = vadd.xlane.f32.xlu0 %v4564
    %v4566 = vpop.xlane.xlu0 %4565
    %v4567 = vmul.f32 %v527, %v4334
    %v4568 = vsel %vm179, %v4567, 0.0
    %4569 = vadd.xlane.f32.xlu0 %v4568
    %v4570 = vpop.xlane.xlu0 %4569
    %v4571 = vadd.f32 %v4566, %v4570
    %v4572 = vsub.f32 1.0, %v546
    %v4573 = vmul.f32 %v546, %v4572
    %v4574 = vmul.f32 %v4573, %v4571
    %v4575 = vmul.f32 %v4574, 0.125
    %4577 = vset.pattern.permute.xlu0 0
    %4578 = vperm.xlu0 %4577, %v4575
    %v4579 = vpop.permute.xlu0 %4578
    %v4581 = vmul.f32 %v4579, %v261
    %v4582 = vmul.f32 %v552, %v4334
    %v4583 = vadd.f32 %v4581, %v4582
    %v4585 = vsel %vm179, %v4583, 0
    %4587 = vmatprep.subr.mxu0 0.0
    %4588 = vmatpush1.msra.mxu0 0.0
    %4589 = vmatprep.subr.mxu0 0.0
    %4590 = vmatpush1.msra.mxu0 0.0
    %4591 = vmatprep.subr.mxu0 0.0
    %4592 = vmatpush1.msra.mxu0 0.0
    %4593 = vmatprep.subr.mxu0 0.0
    %4594 = vmatpush1.msra.mxu0 0.0
    %4595 = vmatprep.subr.mxu0 0.0
    %4596 = vmatpush1.msra.mxu0 0.0
    %4597 = vmatprep.subr.mxu0 0.0
    %4598 = vmatpush1.msra.mxu0 0.0
    %4599 = vmatprep.subr.mxu0 0.0
    %4600 = vmatpush1.msra.mxu0 0.0
    %4601 = vmatprep.subr.mxu0 0.0
    %4602 = vmatpush1.msra.mxu0 0.0
    %4603 = vmatprep.subr.mxu0 0.0
    %4604 = vmatpush1.msra.mxu0 0.0
    %4605 = vmatprep.subr.mxu0 0.0
    %4606 = vmatpush1.msra.mxu0 0.0
    %4607 = vmatprep.subr.mxu0 0.0
    %4608 = vmatpush1.msra.mxu0 0.0
    %4609 = vmatprep.subr.mxu0 0.0
    %4610 = vmatpush1.msra.mxu0 0.0
    %4611 = vmatprep.subr.mxu0 0.0
    %4612 = vmatpush1.msra.mxu0 0.0
    %4613 = vmatprep.subr.mxu0 0.0
    %4614 = vmatpush1.msra.mxu0 0.0
    %4615 = vmatprep.subr.mxu0 0.0
    %4616 = vmatpush1.msra.mxu0 0.0
    %4617 = vmatprep.subr.mxu0 0.0
    %4618 = vmatpush1.msra.mxu0 %v559
    %4619 = vmatprep.subr.mxu0 0.0
    %4620 = vmatpush2.msra.mxu0 0.0
    %4621 = vmatprep.subr.mxu0 0.0
    %4622 = vmatpush2.msra.mxu0 0.0
    %4623 = vmatprep.subr.mxu0 0.0
    %4624 = vmatpush2.msra.mxu0 0.0
    %4625 = vmatprep.subr.mxu0 0.0
    %4626 = vmatpush2.msra.mxu0 0.0
    %4627 = vmatprep.subr.mxu0 0.0
    %4628 = vmatpush2.msra.mxu0 0.0
    %4629 = vmatprep.subr.mxu0 0.0
    %4630 = vmatpush2.msra.mxu0 0.0
    %4631 = vmatprep.subr.mxu0 0.0
    %4632 = vmatpush2.msra.mxu0 0.0
    %4633 = vmatprep.subr.mxu0 0.0
    %4634 = vmatpush2.msra.mxu0 0.0
    %4635 = vmatprep.subr.mxu0 0.0
    %4636 = vmatpush2.msra.mxu0 0.0
    %4637 = vmatprep.subr.mxu0 0.0
    %4638 = vmatpush2.msra.mxu0 0.0
    %4639 = vmatprep.subr.mxu0 0.0
    %4640 = vmatpush2.msra.mxu0 0.0
    %4641 = vmatprep.subr.mxu0 0.0
    %4642 = vmatpush2.msra.mxu0 0.0
    %4643 = vmatprep.subr.mxu0 0.0
    %4644 = vmatpush2.msra.mxu0 0.0
    %4645 = vmatprep.subr.mxu0 0.0
    %4646 = vmatpush2.msra.mxu0 0.0
    %4647 = vmatprep.subr.mxu0 0.0
    %4648 = vmatpush2.msra.mxu0 0.0
    %4649 = vmatprep.subr.mxu0 0.0
    %4650 = vmatpush2.msra.mxu0 0.0
    %4651 = vmatprep.mubr.f32.mxu0 0.0
    %4652 = vmatmul.mubr.f32.gmra.mxu0 %v4585
    %v4653 = vpop.f32.mrf.mxu0
    %v4654 = vadd.f32 0.0, %v4653
    %v4655 = vpop.f32.mrf.mxu0
    %4656 = vdwg.mxu0
    %v4657 = vmul.f32 %v449, %v4654
    %v4659 = vsel %vm374, %v4657, 0
    %4661 = vmatprep.subr.mxu0 0.0
    %4662 = vmatpush1.msra.mxu0 0.0
    %4663 = vmatprep.subr.mxu0 0.0
    %4664 = vmatpush1.msra.mxu0 0.0
    %4665 = vmatprep.subr.mxu0 0.0
    %4666 = vmatpush1.msra.mxu0 0.0
    %4667 = vmatprep.subr.mxu0 0.0
    %4668 = vmatpush1.msra.mxu0 0.0
    %4669 = vmatprep.subr.mxu0 0.0
    %4670 = vmatpush1.msra.mxu0 0.0
    %4671 = vmatprep.subr.mxu0 0.0
    %4672 = vmatpush1.msra.mxu0 0.0
    %4673 = vmatprep.subr.mxu0 0.0
    %4674 = vmatpush1.msra.mxu0 0.0
    %4675 = vmatprep.subr.mxu0 0.0
    %4676 = vmatpush1.msra.mxu0 0.0
    %4677 = vmatprep.subr.mxu0 0.0
    %4678 = vmatpush1.msra.mxu0 0.0
    %4679 = vmatprep.subr.mxu0 0.0
    %4680 = vmatpush1.msra.mxu0 0.0
    %4681 = vmatprep.subr.mxu0 0.0
    %4682 = vmatpush1.msra.mxu0 0.0
    %4683 = vmatprep.subr.mxu0 0.0
    %4684 = vmatpush1.msra.mxu0 0.0
    %4685 = vmatprep.subr.mxu0 0.0
    %4686 = vmatpush1.msra.mxu0 %v159
    %4687 = vmatprep.subr.mxu0 0.0
    %4688 = vmatpush1.msra.mxu0 %v158
    %4689 = vmatprep.subr.mxu0 0.0
    %4690 = vmatpush1.msra.mxu0 %v157
    %4691 = vmatprep.subr.mxu0 0.0
    %4692 = vmatpush1.msra.mxu0 %v156
    %4693 = vmatprep.subr.mxu0 0.0
    %4694 = vmatpush2.msra.mxu0 0.0
    %4695 = vmatprep.subr.mxu0 0.0
    %4696 = vmatpush2.msra.mxu0 0.0
    %4697 = vmatprep.subr.mxu0 0.0
    %4698 = vmatpush2.msra.mxu0 0.0
    %4699 = vmatprep.subr.mxu0 0.0
    %4700 = vmatpush2.msra.mxu0 0.0
    %4701 = vmatprep.subr.mxu0 0.0
    %4702 = vmatpush2.msra.mxu0 0.0
    %4703 = vmatprep.subr.mxu0 0.0
    %4704 = vmatpush2.msra.mxu0 0.0
    %4705 = vmatprep.subr.mxu0 0.0
    %4706 = vmatpush2.msra.mxu0 0.0
    %4707 = vmatprep.subr.mxu0 0.0
    %4708 = vmatpush2.msra.mxu0 0.0
    %4709 = vmatprep.subr.mxu0 0.0
    %4710 = vmatpush2.msra.mxu0 0.0
    %4711 = vmatprep.subr.mxu0 0.0
    %4712 = vmatpush2.msra.mxu0 0.0
    %4713 = vmatprep.subr.mxu0 0.0
    %4714 = vmatpush2.msra.mxu0 0.0
    %4715 = vmatprep.subr.mxu0 0.0
    %4716 = vmatpush2.msra.mxu0 0.0
    %4717 = vmatprep.subr.mxu0 0.0
    %4718 = vmatpush2.msra.mxu0 0.0
    %4719 = vmatprep.subr.mxu0 0.0
    %4720 = vmatpush2.msra.mxu0 0.0
    %4721 = vmatprep.subr.mxu0 0.0
    %4722 = vmatpush2.msra.mxu0 0.0
    %4723 = vmatprep.subr.mxu0 0.0
    %4724 = vmatpush2.msra.mxu0 0.0
    %4725 = vmatprep.mubr.f32.mxu0 0.0
    %4726 = vmatmul.mubr.f32.gmra.mxu0 %v4659
    %v4727 = vpop.f32.mrf.mxu0
    %v4728 = vadd.f32 0.0, %v4727
    %v4729 = vpop.f32.mrf.mxu0
    %4730 = vdwg.mxu0
    %v4731 = vmul.f32 %v366, %v4728
    %v4733 = vsel %vm374, %v4731, 0
    %4735 = vmatprep.subr.mxu0 0.0
    %4736 = vmatpush1.msra.mxu0 0.0
    %4737 = vmatprep.subr.mxu0 0.0
    %4738 = vmatpush1.msra.mxu0 0.0
    %4739 = vmatprep.subr.mxu0 0.0
    %4740 = vmatpush1.msra.mxu0 0.0
    %4741 = vmatprep.subr.mxu0 0.0
    %4742 = vmatpush1.msra.mxu0 0.0
    %4743 = vmatprep.subr.mxu0 0.0
    %4744 = vmatpush1.msra.mxu0 0.0
    %4745 = vmatprep.subr.mxu0 0.0
    %4746 = vmatpush1.msra.mxu0 0.0
    %4747 = vmatprep.subr.mxu0 0.0
    %4748 = vmatpush1.msra.mxu0 0.0
    %4749 = vmatprep.subr.mxu0 0.0
    %4750 = vmatpush1.msra.mxu0 0.0
    %4751 = vmatprep.subr.mxu0 0.0
    %4752 = vmatpush1.msra.mxu0 0.0
    %4753 = vmatprep.subr.mxu0 0.0
    %4754 = vmatpush1.msra.mxu0 0.0
    %4755 = vmatprep.subr.mxu0 0.0
    %4756 = vmatpush1.msra.mxu0 0.0
    %4757 = vmatprep.subr.mxu0 0.0
    %4758 = vmatpush1.msra.mxu0 0.0
    %4759 = vmatprep.subr.mxu0 0.0
    %4760 = vmatpush1.msra.mxu0 %v155
    %4761 = vmatprep.subr.mxu0 0.0
    %4762 = vmatpush1.msra.mxu0 %v154
    %4763 = vmatprep.subr.mxu0 0.0
    %4764 = vmatpush1.msra.mxu0 %v153
    %4765 = vmatprep.subr.mxu0 0.0
    %4766 = vmatpush1.msra.mxu0 %v152
    %4767 = vmatprep.subr.mxu0 0.0
    %4768 = vmatpush2.msra.mxu0 0.0
    %4769 = vmatprep.subr.mxu0 0.0
    %4770 = vmatpush2.msra.mxu0 0.0
    %4771 = vmatprep.subr.mxu0 0.0
    %4772 = vmatpush2.msra.mxu0 0.0
    %4773 = vmatprep.subr.mxu0 0.0
    %4774 = vmatpush2.msra.mxu0 0.0
    %4775 = vmatprep.subr.mxu0 0.0
    %4776 = vmatpush2.msra.mxu0 0.0
    %4777 = vmatprep.subr.mxu0 0.0
    %4778 = vmatpush2.msra.mxu0 0.0
    %4779 = vmatprep.subr.mxu0 0.0
    %4780 = vmatpush2.msra.mxu0 0.0
    %4781 = vmatprep.subr.mxu0 0.0
    %4782 = vmatpush2.msra.mxu0 0.0
    %4783 = vmatprep.subr.mxu0 0.0
    %4784 = vmatpush2.msra.mxu0 0.0
    %4785 = vmatprep.subr.mxu0 0.0
    %4786 = vmatpush2.msra.mxu0 0.0
    %4787 = vmatprep.subr.mxu0 0.0
    %4788 = vmatpush2.msra.mxu0 0.0
    %4789 = vmatprep.subr.mxu0 0.0
    %4790 = vmatpush2.msra.mxu0 0.0
    %4791 = vmatprep.subr.mxu0 0.0
    %4792 = vmatpush2.msra.mxu0 0.0
    %4793 = vmatprep.subr.mxu0 0.0
    %4794 = vmatpush2.msra.mxu0 0.0
    %4795 = vmatprep.subr.mxu0 0.0
    %4796 = vmatpush2.msra.mxu0 0.0
    %4797 = vmatprep.subr.mxu0 0.0
    %4798 = vmatpush2.msra.mxu0 0.0
    %4799 = vmatprep.mubr.f32.mxu0 0.0
    %4800 = vmatmul.mubr.f32.gmra.mxu0 %v4733
    %v4801 = vpop.f32.mrf.mxu0
    %v4802 = vadd.f32 0.0, %v4801
    %v4803 = vpop.f32.mrf.mxu0
    %4804 = vdwg.mxu0
    %4805 = vxpose.xlu0.b32.start [1/16] %v4489, 128
    %4806 = vxpose.xlu0.b32.cont [2/16] 0.0, 128
    %4807 = vxpose.xlu0.b32.cont [3/16] 0.0, 128
    %4808 = vxpose.xlu0.b32.cont [4/16] 0.0, 128
    %4809 = vxpose.xlu0.b32.cont [5/16] 0.0, 128
    %4810 = vxpose.xlu0.b32.cont [6/16] 0.0, 128
    %4811 = vxpose.xlu0.b32.cont [7/16] 0.0, 128
    %4812 = vxpose.xlu0.b32.cont [8/16] 0.0, 128
    %4813 = vxpose.xlu0.b32.cont [9/16] 0.0, 128
    %4814 = vxpose.xlu0.b32.cont [10/16] 0.0, 128
    %4815 = vxpose.xlu0.b32.cont [11/16] 0.0, 128
    %4816 = vxpose.xlu0.b32.cont [12/16] 0.0, 128
    %4817 = vxpose.xlu0.b32.cont [13/16] 0.0, 128
    %4818 = vxpose.xlu0.b32.cont [14/16] 0.0, 128
    %4819 = vxpose.xlu0.b32.cont [15/16] 0.0, 128
    %4820 = vxpose.xlu0.b32.end [16/16] 0.0, 128
    %v4821 = vpop.trf.xlu0
    %v4822 = vpop.trf.xlu0
    %v4823 = vpop.trf.xlu0
    %v4824 = vpop.trf.xlu0
    %v4825 = vpop.trf.xlu0
    %v4826 = vpop.trf.xlu0
    %v4827 = vpop.trf.xlu0
    %v4828 = vpop.trf.xlu0
    %v4829 = vpop.trf.xlu0
    %v4830 = vpop.trf.xlu0
    %v4831 = vpop.trf.xlu0
    %v4832 = vpop.trf.xlu0
    %v4833 = vpop.trf.xlu0
    %v4834 = vpop.trf.xlu0
    %v4835 = vpop.trf.xlu0
    %v4836 = vpop.trf.xlu0
    %v4838 = vsel %vm291, %v4821, 0
    %v4841 = vsel %vm291, %v4822, 0
    %v4844 = vsel %vm291, %v4823, 0
    %v4847 = vsel %vm291, %v4824, 0
    %4849 = vmatprep.subr.mxu0 0.0
    %4850 = vmatpush1.msra.mxu0 0.0
    %4851 = vmatprep.subr.mxu0 0.0
    %4852 = vmatpush1.msra.mxu0 0.0
    %4853 = vmatprep.subr.mxu0 0.0
    %4854 = vmatpush1.msra.mxu0 0.0
    %4855 = vmatprep.subr.mxu0 0.0
    %4856 = vmatpush1.msra.mxu0 0.0
    %4857 = vmatprep.subr.mxu0 0.0
    %4858 = vmatpush1.msra.mxu0 0.0
    %4859 = vmatprep.subr.mxu0 0.0
    %4860 = vmatpush1.msra.mxu0 0.0
    %4861 = vmatprep.subr.mxu0 0.0
    %4862 = vmatpush1.msra.mxu0 0.0
    %4863 = vmatprep.subr.mxu0 0.0
    %4864 = vmatpush1.msra.mxu0 0.0
    %4865 = vmatprep.subr.mxu0 0.0
    %4866 = vmatpush1.msra.mxu0 0.0
    %4867 = vmatprep.subr.mxu0 0.0
    %4868 = vmatpush1.msra.mxu0 0.0
    %4869 = vmatprep.subr.mxu0 0.0
    %4870 = vmatpush1.msra.mxu0 0.0
    %4871 = vmatprep.subr.mxu0 0.0
    %4872 = vmatpush1.msra.mxu0 0.0
    %4873 = vmatprep.subr.mxu0 0.0
    %4874 = vmatpush1.msra.mxu0 0.0
    %4875 = vmatprep.subr.mxu0 0.0
    %4876 = vmatpush1.msra.mxu0 0.0
    %4877 = vmatprep.subr.mxu0 0.0
    %4878 = vmatpush1.msra.mxu0 0.0
    %4879 = vmatprep.subr.mxu0 0.0
    %4880 = vmatpush1.msra.mxu0 %v554
    %4881 = vmatprep.subr.mxu0 0.0
    %4882 = vmatpush2.msra.mxu0 0.0
    %4883 = vmatprep.subr.mxu0 0.0
    %4884 = vmatpush2.msra.mxu0 0.0
    %4885 = vmatprep.subr.mxu0 0.0
    %4886 = vmatpush2.msra.mxu0 0.0
    %4887 = vmatprep.subr.mxu0 0.0
    %4888 = vmatpush2.msra.mxu0 0.0
    %4889 = vmatprep.subr.mxu0 0.0
    %4890 = vmatpush2.msra.mxu0 0.0
    %4891 = vmatprep.subr.mxu0 0.0
    %4892 = vmatpush2.msra.mxu0 0.0
    %4893 = vmatprep.subr.mxu0 0.0
    %4894 = vmatpush2.msra.mxu0 0.0
    %4895 = vmatprep.subr.mxu0 0.0
    %4896 = vmatpush2.msra.mxu0 0.0
    %4897 = vmatprep.subr.mxu0 0.0
    %4898 = vmatpush2.msra.mxu0 0.0
    %4899 = vmatprep.subr.mxu0 0.0
    %4900 = vmatpush2.msra.mxu0 0.0
    %4901 = vmatprep.subr.mxu0 0.0
    %4902 = vmatpush2.msra.mxu0 0.0
    %4903 = vmatprep.subr.mxu0 0.0
    %4904 = vmatpush2.msra.mxu0 0.0
    %4905 = vmatprep.subr.mxu0 0.0
    %4906 = vmatpush2.msra.mxu0 0.0
    %4907 = vmatprep.subr.mxu0 0.0
    %4908 = vmatpush2.msra.mxu0 0.0
    %4909 = vmatprep.subr.mxu0 0.0
    %4910 = vmatpush2.msra.mxu0 0.0
    %4911 = vmatprep.subr.mxu0 0.0
    %4912 = vmatpush2.msra.mxu0 0.0
    %4913 = vmatprep.mubr.f32.mxu0 0.0
    %4914 = vmatmul.mubr.f32.gmra.mxu0 %v4838
    %v4915 = vpop.f32.mrf.mxu0
    %v4916 = vadd.f32 0.0, %v4915
    %v4917 = vpop.f32.mrf.mxu0
    %4918 = vmatprep.mubr.f32.mxu0 0.0
    %4919 = vmatmul.mubr.f32.gmra.mxu0 %v4841
    %v4920 = vpop.f32.mrf.mxu0
    %v4921 = vadd.f32 0.0, %v4920
    %v4922 = vpop.f32.mrf.mxu0
    %4923 = vmatprep.mubr.f32.mxu0 0.0
    %4924 = vmatmul.mubr.f32.gmra.mxu0 %v4844
    %v4925 = vpop.f32.mrf.mxu0
    %v4926 = vadd.f32 0.0, %v4925
    %v4927 = vpop.f32.mrf.mxu0
    %4928 = vmatprep.mubr.f32.mxu0 0.0
    %4929 = vmatmul.mubr.f32.gmra.mxu0 %v4847
    %v4930 = vpop.f32.mrf.mxu0
    %v4931 = vadd.f32 0.0, %v4930
    %v4932 = vpop.f32.mrf.mxu0
    %4933 = vdwg.mxu0
    %v4934 = vadd.f32 %v3944, %v4916
    %v4935 = vadd.f32 %v3945, %v4921
    %v4936 = vadd.f32 %v3946, %v4926
    %v4937 = vadd.f32 %v3947, %v4931
    %4938 = vmatprep.subr.mxu0 0.0
    %4939 = vmatpush1.msra.mxu0 0.0
    %4940 = vmatprep.subr.mxu0 0.0
    %4941 = vmatpush1.msra.mxu0 0.0
    %4942 = vmatprep.subr.mxu0 0.0
    %4943 = vmatpush1.msra.mxu0 0.0
    %4944 = vmatprep.subr.mxu0 0.0
    %4945 = vmatpush1.msra.mxu0 0.0
    %4946 = vmatprep.subr.mxu0 0.0
    %4947 = vmatpush1.msra.mxu0 0.0
    %4948 = vmatprep.subr.mxu0 0.0
    %4949 = vmatpush1.msra.mxu0 0.0
    %4950 = vmatprep.subr.mxu0 0.0
    %4951 = vmatpush1.msra.mxu0 0.0
    %4952 = vmatprep.subr.mxu0 0.0
    %4953 = vmatpush1.msra.mxu0 0.0
    %4954 = vmatprep.subr.mxu0 0.0
    %4955 = vmatpush1.msra.mxu0 0.0
    %4956 = vmatprep.subr.mxu0 0.0
    %4957 = vmatpush1.msra.mxu0 0.0
    %4958 = vmatprep.subr.mxu0 0.0
    %4959 = vmatpush1.msra.mxu0 0.0
    %4960 = vmatprep.subr.mxu0 0.0
    %4961 = vmatpush1.msra.mxu0 0.0
    %4962 = vmatprep.subr.mxu0 0.0
    %4963 = vmatpush1.msra.mxu0 0.0
    %4964 = vmatprep.subr.mxu0 0.0
    %4965 = vmatpush1.msra.mxu0 0.0
    %4966 = vmatprep.subr.mxu0 0.0
    %4967 = vmatpush1.msra.mxu0 0.0
    %4968 = vmatprep.subr.mxu0 0.0
    %4969 = vmatpush1.msra.mxu0 %v4583
    %4970 = vmatprep.subr.mxu0 0.0
    %4971 = vmatpush2.msra.mxu0 0.0
    %4972 = vmatprep.subr.mxu0 0.0
    %4973 = vmatpush2.msra.mxu0 0.0
    %4974 = vmatprep.subr.mxu0 0.0
    %4975 = vmatpush2.msra.mxu0 0.0
    %4976 = vmatprep.subr.mxu0 0.0
    %4977 = vmatpush2.msra.mxu0 0.0
    %4978 = vmatprep.subr.mxu0 0.0
    %4979 = vmatpush2.msra.mxu0 0.0
    %4980 = vmatprep.subr.mxu0 0.0
    %4981 = vmatpush2.msra.mxu0 0.0
    %4982 = vmatprep.subr.mxu0 0.0
    %4983 = vmatpush2.msra.mxu0 0.0
    %4984 = vmatprep.subr.mxu0 0.0
    %4985 = vmatpush2.msra.mxu0 0.0
    %4986 = vmatprep.subr.mxu0 0.0
    %4987 = vmatpush2.msra.mxu0 0.0
    %4988 = vmatprep.subr.mxu0 0.0
    %4989 = vmatpush2.msra.mxu0 0.0
    %4990 = vmatprep.subr.mxu0 0.0
    %4991 = vmatpush2.msra.mxu0 0.0
    %4992 = vmatprep.subr.mxu0 0.0
    %4993 = vmatpush2.msra.mxu0 0.0
    %4994 = vmatprep.subr.mxu0 0.0
    %4995 = vmatpush2.msra.mxu0 0.0
    %4996 = vmatprep.subr.mxu0 0.0
    %4997 = vmatpush2.msra.mxu0 0.0
    %4998 = vmatprep.subr.mxu0 0.0
    %4999 = vmatpush2.msra.mxu0 0.0
    %5000 = vmatprep.subr.mxu0 0.0
    %5001 = vmatpush2.msra.mxu0 0.0
    %5002 = vmatprep.mubr.f32.mxu0 0.0
    %5003 = vmatmul.mubr.f32.gmra.mxu0 %v2139
    %v5004 = vpop.f32.mrf.mxu0
    %v5005 = vadd.f32 0.0, %v5004
    %v5006 = vpop.f32.mrf.mxu0
    %5007 = vmatprep.mubr.f32.mxu0 0.0
    %5008 = vmatmul.mubr.f32.gmra.mxu0 %v2142
    %v5009 = vpop.f32.mrf.mxu0
    %v5010 = vadd.f32 0.0, %v5009
    %v5011 = vpop.f32.mrf.mxu0
    %5012 = vmatprep.mubr.f32.mxu0 0.0
    %5013 = vmatmul.mubr.f32.gmra.mxu0 %v2145
    %v5014 = vpop.f32.mrf.mxu0
    %v5015 = vadd.f32 0.0, %v5014
    %v5016 = vpop.f32.mrf.mxu0
    %5017 = vmatprep.mubr.f32.mxu0 0.0
    %5018 = vmatmul.mubr.f32.gmra.mxu0 %v2148
    %v5019 = vpop.f32.mrf.mxu0
    %v5020 = vadd.f32 0.0, %v5019
    %v5021 = vpop.f32.mrf.mxu0
    %5022 = vdwg.mxu0
    %v5023 = vadd.f32 %v4934, %v5005
    %v5024 = vadd.f32 %v4935, %v5010
    %v5025 = vadd.f32 %v4936, %v5015
    %v5026 = vadd.f32 %v4937, %v5020
    %v5027 = vsel %vm179, %v4583, 0.0
    %v5028 = vrot.slane %v5027, 4
    %v5029 = vadd.f32 %v5027, %v5028
    %v5030 = vrot.slane %v5029, 2
    %v5031 = vadd.f32 %v5029, %v5030
    %v5032 = vrot.slane %v5031, 1
    %v5033 = vadd.f32 %v5031, %v5032
    %v5034 = vadd.f32 %v3955, %v5033
    %5035 = vxpose.xlu0.b32.start [1/16] %v4415, 128
    %5036 = vxpose.xlu0.b32.cont [2/16] 0.0, 128
    %5037 = vxpose.xlu0.b32.cont [3/16] 0.0, 128
    %5038 = vxpose.xlu0.b32.cont [4/16] 0.0, 128
    %5039 = vxpose.xlu0.b32.cont [5/16] 0.0, 128
    %5040 = vxpose.xlu0.b32.cont [6/16] 0.0, 128
    %5041 = vxpose.xlu0.b32.cont [7/16] 0.0, 128
    %5042 = vxpose.xlu0.b32.cont [8/16] 0.0, 128
    %5043 = vxpose.xlu0.b32.cont [9/16] 0.0, 128
    %5044 = vxpose.xlu0.b32.cont [10/16] 0.0, 128
    %5045 = vxpose.xlu0.b32.cont [11/16] 0.0, 128
    %5046 = vxpose.xlu0.b32.cont [12/16] 0.0, 128
    %5047 = vxpose.xlu0.b32.cont [13/16] 0.0, 128
    %5048 = vxpose.xlu0.b32.cont [14/16] 0.0, 128
    %5049 = vxpose.xlu0.b32.cont [15/16] 0.0, 128
    %5050 = vxpose.xlu0.b32.end [16/16] 0.0, 128
    %v5051 = vpop.trf.xlu0
    %v5052 = vpop.trf.xlu0
    %v5053 = vpop.trf.xlu0
    %v5054 = vpop.trf.xlu0
    %v5055 = vpop.trf.xlu0
    %v5056 = vpop.trf.xlu0
    %v5057 = vpop.trf.xlu0
    %v5058 = vpop.trf.xlu0
    %v5059 = vpop.trf.xlu0
    %v5060 = vpop.trf.xlu0
    %v5061 = vpop.trf.xlu0
    %v5062 = vpop.trf.xlu0
    %v5063 = vpop.trf.xlu0
    %v5064 = vpop.trf.xlu0
    %v5065 = vpop.trf.xlu0
    %v5066 = vpop.trf.xlu0
    %v5068 = vsel %vm291, %v5051, 0
    %v5071 = vsel %vm291, %v5052, 0
    %v5074 = vsel %vm291, %v5053, 0
    %v5077 = vsel %vm291, %v5054, 0
    %5079 = vmatprep.subr.mxu0 0.0
    %5080 = vmatpush1.msra.mxu0 0.0
    %5081 = vmatprep.subr.mxu0 0.0
    %5082 = vmatpush1.msra.mxu0 0.0
    %5083 = vmatprep.subr.mxu0 0.0
    %5084 = vmatpush1.msra.mxu0 0.0
    %5085 = vmatprep.subr.mxu0 0.0
    %5086 = vmatpush1.msra.mxu0 0.0
    %5087 = vmatprep.subr.mxu0 0.0
    %5088 = vmatpush1.msra.mxu0 0.0
    %5089 = vmatprep.subr.mxu0 0.0
    %5090 = vmatpush1.msra.mxu0 0.0
    %5091 = vmatprep.subr.mxu0 0.0
    %5092 = vmatpush1.msra.mxu0 0.0
    %5093 = vmatprep.subr.mxu0 0.0
    %5094 = vmatpush1.msra.mxu0 0.0
    %5095 = vmatprep.subr.mxu0 0.0
    %5096 = vmatpush1.msra.mxu0 0.0
    %5097 = vmatprep.subr.mxu0 0.0
    %5098 = vmatpush1.msra.mxu0 0.0
    %5099 = vmatprep.subr.mxu0 0.0
    %5100 = vmatpush1.msra.mxu0 0.0
    %5101 = vmatprep.subr.mxu0 0.0
    %5102 = vmatpush1.msra.mxu0 0.0
    %5103 = vmatprep.subr.mxu0 0.0
    %5104 = vmatpush1.msra.mxu0 0.0
    %5105 = vmatprep.subr.mxu0 0.0
    %5106 = vmatpush1.msra.mxu0 0.0
    %5107 = vmatprep.subr.mxu0 0.0
    %5108 = vmatpush1.msra.mxu0 0.0
    %5109 = vmatprep.subr.mxu0 0.0
    %5110 = vmatpush1.msra.mxu0 %v631
    %5111 = vmatprep.subr.mxu0 0.0
    %5112 = vmatpush2.msra.mxu0 0.0
    %5113 = vmatprep.subr.mxu0 0.0
    %5114 = vmatpush2.msra.mxu0 0.0
    %5115 = vmatprep.subr.mxu0 0.0
    %5116 = vmatpush2.msra.mxu0 0.0
    %5117 = vmatprep.subr.mxu0 0.0
    %5118 = vmatpush2.msra.mxu0 0.0
    %5119 = vmatprep.subr.mxu0 0.0
    %5120 = vmatpush2.msra.mxu0 0.0
    %5121 = vmatprep.subr.mxu0 0.0
    %5122 = vmatpush2.msra.mxu0 0.0
    %5123 = vmatprep.subr.mxu0 0.0
    %5124 = vmatpush2.msra.mxu0 0.0
    %5125 = vmatprep.subr.mxu0 0.0
    %5126 = vmatpush2.msra.mxu0 0.0
    %5127 = vmatprep.subr.mxu0 0.0
    %5128 = vmatpush2.msra.mxu0 0.0
    %5129 = vmatprep.subr.mxu0 0.0
    %5130 = vmatpush2.msra.mxu0 0.0
    %5131 = vmatprep.subr.mxu0 0.0
    %5132 = vmatpush2.msra.mxu0 0.0
    %5133 = vmatprep.subr.mxu0 0.0
    %5134 = vmatpush2.msra.mxu0 0.0
    %5135 = vmatprep.subr.mxu0 0.0
    %5136 = vmatpush2.msra.mxu0 0.0
    %5137 = vmatprep.subr.mxu0 0.0
    %5138 = vmatpush2.msra.mxu0 0.0
    %5139 = vmatprep.subr.mxu0 0.0
    %5140 = vmatpush2.msra.mxu0 0.0
    %5141 = vmatprep.subr.mxu0 0.0
    %5142 = vmatpush2.msra.mxu0 0.0
    %5143 = vmatprep.mubr.f32.mxu0 0.0
    %5144 = vmatmul.mubr.f32.gmra.mxu0 %v5068
    %v5145 = vpop.f32.mrf.mxu0
    %v5146 = vadd.f32 0.0, %v5145
    %v5147 = vpop.f32.mrf.mxu0
    %5148 = vmatprep.mubr.f32.mxu0 0.0
    %5149 = vmatmul.mubr.f32.gmra.mxu0 %v5071
    %v5150 = vpop.f32.mrf.mxu0
    %v5151 = vadd.f32 0.0, %v5150
    %v5152 = vpop.f32.mrf.mxu0
    %5153 = vmatprep.mubr.f32.mxu0 0.0
    %5154 = vmatmul.mubr.f32.gmra.mxu0 %v5074
    %v5155 = vpop.f32.mrf.mxu0
    %v5156 = vadd.f32 0.0, %v5155
    %v5157 = vpop.f32.mrf.mxu0
    %5158 = vmatprep.mubr.f32.mxu0 0.0
    %5159 = vmatmul.mubr.f32.gmra.mxu0 %v5077
    %v5160 = vpop.f32.mrf.mxu0
    %v5161 = vadd.f32 0.0, %v5160
    %v5162 = vpop.f32.mrf.mxu0
    %5163 = vdwg.mxu0
    %v5164 = vadd.f32 %v4085, %v5146
    %v5165 = vadd.f32 %v4086, %v5151
    %v5166 = vadd.f32 %v4087, %v5156
    %v5167 = vadd.f32 %v4088, %v5161
    %5168 = vmatprep.subr.mxu0 0.0
    %5169 = vmatpush1.msra.mxu0 0.0
    %5170 = vmatprep.subr.mxu0 0.0
    %5171 = vmatpush1.msra.mxu0 0.0
    %5172 = vmatprep.subr.mxu0 0.0
    %5173 = vmatpush1.msra.mxu0 0.0
    %5174 = vmatprep.subr.mxu0 0.0
    %5175 = vmatpush1.msra.mxu0 0.0
    %5176 = vmatprep.subr.mxu0 0.0
    %5177 = vmatpush1.msra.mxu0 0.0
    %5178 = vmatprep.subr.mxu0 0.0
    %5179 = vmatpush1.msra.mxu0 0.0
    %5180 = vmatprep.subr.mxu0 0.0
    %5181 = vmatpush1.msra.mxu0 0.0
    %5182 = vmatprep.subr.mxu0 0.0
    %5183 = vmatpush1.msra.mxu0 0.0
    %5184 = vmatprep.subr.mxu0 0.0
    %5185 = vmatpush1.msra.mxu0 0.0
    %5186 = vmatprep.subr.mxu0 0.0
    %5187 = vmatpush1.msra.mxu0 0.0
    %5188 = vmatprep.subr.mxu0 0.0
    %5189 = vmatpush1.msra.mxu0 0.0
    %5190 = vmatprep.subr.mxu0 0.0
    %5191 = vmatpush1.msra.mxu0 0.0
    %5192 = vmatprep.subr.mxu0 0.0
    %5193 = vmatpush1.msra.mxu0 0.0
    %5194 = vmatprep.subr.mxu0 0.0
    %5195 = vmatpush1.msra.mxu0 0.0
    %5196 = vmatprep.subr.mxu0 0.0
    %5197 = vmatpush1.msra.mxu0 0.0
    %5198 = vmatprep.subr.mxu0 0.0
    %5199 = vmatpush1.msra.mxu0 %v4657
    %5200 = vmatprep.subr.mxu0 0.0
    %5201 = vmatpush2.msra.mxu0 0.0
    %5202 = vmatprep.subr.mxu0 0.0
    %5203 = vmatpush2.msra.mxu0 0.0
    %5204 = vmatprep.subr.mxu0 0.0
    %5205 = vmatpush2.msra.mxu0 0.0
    %5206 = vmatprep.subr.mxu0 0.0
    %5207 = vmatpush2.msra.mxu0 0.0
    %5208 = vmatprep.subr.mxu0 0.0
    %5209 = vmatpush2.msra.mxu0 0.0
    %5210 = vmatprep.subr.mxu0 0.0
    %5211 = vmatpush2.msra.mxu0 0.0
    %5212 = vmatprep.subr.mxu0 0.0
    %5213 = vmatpush2.msra.mxu0 0.0
    %5214 = vmatprep.subr.mxu0 0.0
    %5215 = vmatpush2.msra.mxu0 0.0
    %5216 = vmatprep.subr.mxu0 0.0
    %5217 = vmatpush2.msra.mxu0 0.0
    %5218 = vmatprep.subr.mxu0 0.0
    %5219 = vmatpush2.msra.mxu0 0.0
    %5220 = vmatprep.subr.mxu0 0.0
    %5221 = vmatpush2.msra.mxu0 0.0
    %5222 = vmatprep.subr.mxu0 0.0
    %5223 = vmatpush2.msra.mxu0 0.0
    %5224 = vmatprep.subr.mxu0 0.0
    %5225 = vmatpush2.msra.mxu0 0.0
    %5226 = vmatprep.subr.mxu0 0.0
    %5227 = vmatpush2.msra.mxu0 0.0
    %5228 = vmatprep.subr.mxu0 0.0
    %5229 = vmatpush2.msra.mxu0 0.0
    %5230 = vmatprep.subr.mxu0 0.0
    %5231 = vmatpush2.msra.mxu0 0.0
    %5232 = vmatprep.mubr.f32.mxu0 0.0
    %5233 = vmatmul.mubr.f32.gmra.mxu0 %v2405
    %v5234 = vpop.f32.mrf.mxu0
    %v5235 = vadd.f32 0.0, %v5234
    %v5236 = vpop.f32.mrf.mxu0
    %5237 = vmatprep.mubr.f32.mxu0 0.0
    %5238 = vmatmul.mubr.f32.gmra.mxu0 %v2408
    %v5239 = vpop.f32.mrf.mxu0
    %v5240 = vadd.f32 0.0, %v5239
    %v5241 = vpop.f32.mrf.mxu0
    %5242 = vmatprep.mubr.f32.mxu0 0.0
    %5243 = vmatmul.mubr.f32.gmra.mxu0 %v2411
    %v5244 = vpop.f32.mrf.mxu0
    %v5245 = vadd.f32 0.0, %v5244
    %v5246 = vpop.f32.mrf.mxu0
    %5247 = vmatprep.mubr.f32.mxu0 0.0
    %5248 = vmatmul.mubr.f32.gmra.mxu0 %v2414
    %v5249 = vpop.f32.mrf.mxu0
    %v5250 = vadd.f32 0.0, %v5249
    %v5251 = vpop.f32.mrf.mxu0
    %5252 = vdwg.mxu0
    %v5253 = vadd.f32 %v5164, %v5235
    %v5254 = vadd.f32 %v5165, %v5240
    %v5255 = vadd.f32 %v5166, %v5245
    %v5256 = vadd.f32 %v5167, %v5250
    %v5257 = vsel %vm374, %v4657, 0.0
    %v5258 = vrot.slane %v5257, 4
    %v5259 = vadd.f32 %v5257, %v5258
    %v5260 = vrot.slane %v5259, 2
    %v5261 = vadd.f32 %v5259, %v5260
    %v5262 = vrot.slane %v5261, 1
    %v5263 = vadd.f32 %v5261, %v5262
    %v5264 = vadd.f32 %v4096, %v5263
    %5265 = vxpose.xlu0.b32.start [1/16] %v4341, 128
    %5266 = vxpose.xlu0.b32.cont [2/16] 0.0, 128
    %5267 = vxpose.xlu0.b32.cont [3/16] 0.0, 128
    %5268 = vxpose.xlu0.b32.cont [4/16] 0.0, 128
    %5269 = vxpose.xlu0.b32.cont [5/16] 0.0, 128
    %5270 = vxpose.xlu0.b32.cont [6/16] 0.0, 128
    %5271 = vxpose.xlu0.b32.cont [7/16] 0.0, 128
    %5272 = vxpose.xlu0.b32.cont [8/16] 0.0, 128
    %5273 = vxpose.xlu0.b32.cont [9/16] 0.0, 128
    %5274 = vxpose.xlu0.b32.cont [10/16] 0.0, 128
    %5275 = vxpose.xlu0.b32.cont [11/16] 0.0, 128
    %5276 = vxpose.xlu0.b32.cont [12/16] 0.0, 128
    %5277 = vxpose.xlu0.b32.cont [13/16] 0.0, 128
    %5278 = vxpose.xlu0.b32.cont [14/16] 0.0, 128
    %5279 = vxpose.xlu0.b32.cont [15/16] 0.0, 128
    %5280 = vxpose.xlu0.b32.end [16/16] 0.0, 128
    %v5281 = vpop.trf.xlu0
    %v5282 = vpop.trf.xlu0
    %v5283 = vpop.trf.xlu0
    %v5284 = vpop.trf.xlu0
    %v5285 = vpop.trf.xlu0
    %v5286 = vpop.trf.xlu0
    %v5287 = vpop.trf.xlu0
    %v5288 = vpop.trf.xlu0
    %v5289 = vpop.trf.xlu0
    %v5290 = vpop.trf.xlu0
    %v5291 = vpop.trf.xlu0
    %v5292 = vpop.trf.xlu0
    %v5293 = vpop.trf.xlu0
    %v5294 = vpop.trf.xlu0
    %v5295 = vpop.trf.xlu0
    %v5296 = vpop.trf.xlu0
    %v5298 = vsel %vm291, %v5281, 0
    %5300 = vmatprep.subr.mxu0 0.0
    %5301 = vmatpush1.msra.mxu0 0.0
    %5302 = vmatprep.subr.mxu0 0.0
    %5303 = vmatpush1.msra.mxu0 0.0
    %5304 = vmatprep.subr.mxu0 0.0
    %5305 = vmatpush1.msra.mxu0 0.0
    %5306 = vmatprep.subr.mxu0 0.0
    %5307 = vmatpush1.msra.mxu0 0.0
    %5308 = vmatprep.subr.mxu0 0.0
    %5309 = vmatpush1.msra.mxu0 0.0
    %5310 = vmatprep.subr.mxu0 0.0
    %5311 = vmatpush1.msra.mxu0 0.0
    %5312 = vmatprep.subr.mxu0 0.0
    %5313 = vmatpush1.msra.mxu0 0.0
    %5314 = vmatprep.subr.mxu0 0.0
    %5315 = vmatpush1.msra.mxu0 0.0
    %5316 = vmatprep.subr.mxu0 0.0
    %5317 = vmatpush1.msra.mxu0 0.0
    %5318 = vmatprep.subr.mxu0 0.0
    %5319 = vmatpush1.msra.mxu0 0.0
    %5320 = vmatprep.subr.mxu0 0.0
    %5321 = vmatpush1.msra.mxu0 0.0
    %5322 = vmatprep.subr.mxu0 0.0
    %5323 = vmatpush1.msra.mxu0 0.0
    %5324 = vmatprep.subr.mxu0 0.0
    %5325 = vmatpush1.msra.mxu0 0.0
    %5326 = vmatprep.subr.mxu0 0.0
    %5327 = vmatpush1.msra.mxu0 0.0
    %5328 = vmatprep.subr.mxu0 0.0
    %5329 = vmatpush1.msra.mxu0 0.0
    %5330 = vmatprep.subr.mxu0 0.0
    %5331 = vmatpush1.msra.mxu0 %v705
    %5332 = vmatprep.subr.mxu0 0.0
    %5333 = vmatpush2.msra.mxu0 0.0
    %5334 = vmatprep.subr.mxu0 0.0
    %5335 = vmatpush2.msra.mxu0 0.0
    %5336 = vmatprep.subr.mxu0 0.0
    %5337 = vmatpush2.msra.mxu0 0.0
    %5338 = vmatprep.subr.mxu0 0.0
    %5339 = vmatpush2.msra.mxu0 0.0
    %5340 = vmatprep.subr.mxu0 0.0
    %5341 = vmatpush2.msra.mxu0 0.0
    %5342 = vmatprep.subr.mxu0 0.0
    %5343 = vmatpush2.msra.mxu0 0.0
    %5344 = vmatprep.subr.mxu0 0.0
    %5345 = vmatpush2.msra.mxu0 0.0
    %5346 = vmatprep.subr.mxu0 0.0
    %5347 = vmatpush2.msra.mxu0 0.0
    %5348 = vmatprep.subr.mxu0 0.0
    %5349 = vmatpush2.msra.mxu0 0.0
    %5350 = vmatprep.subr.mxu0 0.0
    %5351 = vmatpush2.msra.mxu0 0.0
    %5352 = vmatprep.subr.mxu0 0.0
    %5353 = vmatpush2.msra.mxu0 0.0
    %5354 = vmatprep.subr.mxu0 0.0
    %5355 = vmatpush2.msra.mxu0 0.0
    %5356 = vmatprep.subr.mxu0 0.0
    %5357 = vmatpush2.msra.mxu0 0.0
    %5358 = vmatprep.subr.mxu0 0.0
    %5359 = vmatpush2.msra.mxu0 0.0
    %5360 = vmatprep.subr.mxu0 0.0
    %5361 = vmatpush2.msra.mxu0 0.0
    %5362 = vmatprep.subr.mxu0 0.0
    %5363 = vmatpush2.msra.mxu0 0.0
    %5364 = vmatprep.mubr.f32.mxu0 0.0
    %5365 = vmatmul.mubr.f32.gmra.mxu0 %v5298
    %v5366 = vpop.f32.mrf.mxu0
    %v5367 = vadd.f32 0.0, %v5366
    %v5368 = vpop.f32.mrf.mxu0
    %5369 = vdwg.mxu0
    %v5370 = vadd.f32 %v4202, %v5367
    %5371 = vmatprep.subr.mxu0 0.0
    %5372 = vmatpush1.msra.mxu0 0.0
    %5373 = vmatprep.subr.mxu0 0.0
    %5374 = vmatpush1.msra.mxu0 0.0
    %5375 = vmatprep.subr.mxu0 0.0
    %5376 = vmatpush1.msra.mxu0 0.0
    %5377 = vmatprep.subr.mxu0 0.0
    %5378 = vmatpush1.msra.mxu0 0.0
    %5379 = vmatprep.subr.mxu0 0.0
    %5380 = vmatpush1.msra.mxu0 0.0
    %5381 = vmatprep.subr.mxu0 0.0
    %5382 = vmatpush1.msra.mxu0 0.0
    %5383 = vmatprep.subr.mxu0 0.0
    %5384 = vmatpush1.msra.mxu0 0.0
    %5385 = vmatprep.subr.mxu0 0.0
    %5386 = vmatpush1.msra.mxu0 0.0
    %5387 = vmatprep.subr.mxu0 0.0
    %5388 = vmatpush1.msra.mxu0 0.0
    %5389 = vmatprep.subr.mxu0 0.0
    %5390 = vmatpush1.msra.mxu0 0.0
    %5391 = vmatprep.subr.mxu0 0.0
    %5392 = vmatpush1.msra.mxu0 0.0
    %5393 = vmatprep.subr.mxu0 0.0
    %5394 = vmatpush1.msra.mxu0 0.0
    %5395 = vmatprep.subr.mxu0 0.0
    %5396 = vmatpush1.msra.mxu0 0.0
    %5397 = vmatprep.subr.mxu0 0.0
    %5398 = vmatpush1.msra.mxu0 0.0
    %5399 = vmatprep.subr.mxu0 0.0
    %5400 = vmatpush1.msra.mxu0 0.0
    %5401 = vmatprep.subr.mxu0 0.0
    %5402 = vmatpush1.msra.mxu0 %v4731
    %5403 = vmatprep.subr.mxu0 0.0
    %5404 = vmatpush2.msra.mxu0 0.0
    %5405 = vmatprep.subr.mxu0 0.0
    %5406 = vmatpush2.msra.mxu0 0.0
    %5407 = vmatprep.subr.mxu0 0.0
    %5408 = vmatpush2.msra.mxu0 0.0
    %5409 = vmatprep.subr.mxu0 0.0
    %5410 = vmatpush2.msra.mxu0 0.0
    %5411 = vmatprep.subr.mxu0 0.0
    %5412 = vmatpush2.msra.mxu0 0.0
    %5413 = vmatprep.subr.mxu0 0.0
    %5414 = vmatpush2.msra.mxu0 0.0
    %5415 = vmatprep.subr.mxu0 0.0
    %5416 = vmatpush2.msra.mxu0 0.0
    %5417 = vmatprep.subr.mxu0 0.0
    %5418 = vmatpush2.msra.mxu0 0.0
    %5419 = vmatprep.subr.mxu0 0.0
    %5420 = vmatpush2.msra.mxu0 0.0
    %5421 = vmatprep.subr.mxu0 0.0
    %5422 = vmatpush2.msra.mxu0 0.0
    %5423 = vmatprep.subr.mxu0 0.0
    %5424 = vmatpush2.msra.mxu0 0.0
    %5425 = vmatprep.subr.mxu0 0.0
    %5426 = vmatpush2.msra.mxu0 0.0
    %5427 = vmatprep.subr.mxu0 0.0
    %5428 = vmatpush2.msra.mxu0 0.0
    %5429 = vmatprep.subr.mxu0 0.0
    %5430 = vmatpush2.msra.mxu0 0.0
    %5431 = vmatprep.subr.mxu0 0.0
    %5432 = vmatpush2.msra.mxu0 0.0
    %5433 = vmatprep.subr.mxu0 0.0
    %5434 = vmatpush2.msra.mxu0 0.0
    %5435 = vmatprep.mubr.f32.mxu0 0.0
    %5436 = vmatmul.mubr.f32.gmra.mxu0 %v2647
    %v5437 = vpop.f32.mrf.mxu0
    %v5438 = vadd.f32 0.0, %v5437
    %v5439 = vpop.f32.mrf.mxu0
    %5440 = vdwg.mxu0
    %v5441 = vadd.f32 %v5370, %v5438
    %v5442 = vsel %vm374, %v4731, 0.0
    %v5443 = vrot.slane %v5442, 4
    %v5444 = vadd.f32 %v5442, %v5443
    %v5445 = vrot.slane %v5444, 2
    %v5446 = vadd.f32 %v5444, %v5445
    %v5447 = vrot.slane %v5446, 1
    %v5448 = vadd.f32 %v5446, %v5447
    %v5449 = vadd.f32 %v4210, %v5448
    %5451 = vrot.lane.b32.xlu0 %v4802, 122
    %v5452 = vpop.permute.xlu0 %5451
    %5454 = vmatprep.subr.mxu0 0.0
    %5455 = vmatpush1.msra.mxu0 0.0
    %5456 = vmatprep.subr.mxu0 0.0
    %5457 = vmatpush1.msra.mxu0 0.0
    %5458 = vmatprep.subr.mxu0 0.0
    %5459 = vmatpush1.msra.mxu0 0.0
    %5460 = vmatprep.subr.mxu0 0.0
    %5461 = vmatpush1.msra.mxu0 0.0
    %5462 = vmatprep.subr.mxu0 0.0
    %5463 = vmatpush1.msra.mxu0 0.0
    %5464 = vmatprep.subr.mxu0 0.0
    %5465 = vmatpush1.msra.mxu0 0.0
    %5466 = vmatprep.subr.mxu0 0.0
    %5467 = vmatpush1.msra.mxu0 0.0
    %5468 = vmatprep.subr.mxu0 0.0
    %5469 = vmatpush1.msra.mxu0 0.0
    %5470 = vmatprep.subr.mxu0 0.0
    %5471 = vmatpush1.msra.mxu0 0.0
    %5472 = vmatprep.subr.mxu0 0.0
    %5473 = vmatpush1.msra.mxu0 0.0
    %5474 = vmatprep.subr.mxu0 0.0
    %5475 = vmatpush1.msra.mxu0 0.0
    %5476 = vmatprep.subr.mxu0 0.0
    %5477 = vmatpush1.msra.mxu0 0.0
    %5478 = vmatprep.subr.mxu0 0.0
    %5479 = vmatpush1.msra.mxu0 0.0
    %5480 = vmatprep.subr.mxu0 0.0
    %5481 = vmatpush1.msra.mxu0 0.0
    %5482 = vmatprep.subr.mxu0 0.0
    %5483 = vmatpush1.msra.mxu0 0.0
    %5484 = vmatprep.subr.mxu0 0.0
    %5485 = vmatpush1.msra.mxu0 %v5452
    %5486 = vmatprep.subr.mxu0 0.0
    %5487 = vmatpush2.msra.mxu0 0.0
    %5488 = vmatprep.subr.mxu0 0.0
    %5489 = vmatpush2.msra.mxu0 0.0
    %5490 = vmatprep.subr.mxu0 0.0
    %5491 = vmatpush2.msra.mxu0 0.0
    %5492 = vmatprep.subr.mxu0 0.0
    %5493 = vmatpush2.msra.mxu0 0.0
    %5494 = vmatprep.subr.mxu0 0.0
    %5495 = vmatpush2.msra.mxu0 0.0
    %5496 = vmatprep.subr.mxu0 0.0
    %5497 = vmatpush2.msra.mxu0 0.0
    %5498 = vmatprep.subr.mxu0 0.0
    %5499 = vmatpush2.msra.mxu0 0.0
    %5500 = vmatprep.subr.mxu0 0.0
    %5501 = vmatpush2.msra.mxu0 0.0
    %5502 = vmatprep.subr.mxu0 0.0
    %5503 = vmatpush2.msra.mxu0 0.0
    %5504 = vmatprep.subr.mxu0 0.0
    %5505 = vmatpush2.msra.mxu0 0.0
    %5506 = vmatprep.subr.mxu0 0.0
    %5507 = vmatpush2.msra.mxu0 0.0
    %5508 = vmatprep.subr.mxu0 0.0
    %5509 = vmatpush2.msra.mxu0 0.0
    %5510 = vmatprep.subr.mxu0 0.0
    %5511 = vmatpush2.msra.mxu0 0.0
    %5512 = vmatprep.subr.mxu0 0.0
    %5513 = vmatpush2.msra.mxu0 0.0
    %5514 = vmatprep.subr.mxu0 0.0
    %5515 = vmatpush2.msra.mxu0 0.0
    %5516 = vmatprep.subr.mxu0 0.0
    %5517 = vmatpush2.msra.mxu0 0.0
    %5518 = vmatprep.mubr.f32.mxu0 0.0
    %5519 = vmatmul.mubr.f32.gmra.mxu0 %v2873
    %v5520 = vpop.f32.mrf.mxu0
    %v5521 = vadd.f32 0.0, %v5520
    %v5522 = vpop.f32.mrf.mxu0
    %5523 = vdwg.mxu0
    %v5524 = vadd.f32 %v4320, %v5521
    %v5525 = vmul.f32 %v1294, %v4412
    %v5527 = vsel %vm374, %v5525, 0
    %5529 = vmatprep.subr.mxu0 0.0
    %5530 = vmatpush1.msra.mxu0 0.0
    %5531 = vmatprep.subr.mxu0 0.0
    %5532 = vmatpush1.msra.mxu0 0.0
    %5533 = vmatprep.subr.mxu0 0.0
    %5534 = vmatpush1.msra.mxu0 0.0
    %5535 = vmatprep.subr.mxu0 0.0
    %5536 = vmatpush1.msra.mxu0 0.0
    %5537 = vmatprep.subr.mxu0 0.0
    %5538 = vmatpush1.msra.mxu0 0.0
    %5539 = vmatprep.subr.mxu0 0.0
    %5540 = vmatpush1.msra.mxu0 0.0
    %5541 = vmatprep.subr.mxu0 0.0
    %5542 = vmatpush1.msra.mxu0 0.0
    %5543 = vmatprep.subr.mxu0 0.0
    %5544 = vmatpush1.msra.mxu0 0.0
    %5545 = vmatprep.subr.mxu0 0.0
    %5546 = vmatpush1.msra.mxu0 0.0
    %5547 = vmatprep.subr.mxu0 0.0
    %5548 = vmatpush1.msra.mxu0 0.0
    %5549 = vmatprep.subr.mxu0 0.0
    %5550 = vmatpush1.msra.mxu0 0.0
    %5551 = vmatprep.subr.mxu0 0.0
    %5552 = vmatpush1.msra.mxu0 0.0
    %5553 = vmatprep.subr.mxu0 0.0
    %5554 = vmatpush1.msra.mxu0 %v145
    %5555 = vmatprep.subr.mxu0 0.0
    %5556 = vmatpush1.msra.mxu0 %v144
    %5557 = vmatprep.subr.mxu0 0.0
    %5558 = vmatpush1.msra.mxu0 %v143
    %5559 = vmatprep.subr.mxu0 0.0
    %5560 = vmatpush1.msra.mxu0 %v142
    %5561 = vmatprep.subr.mxu0 0.0
    %5562 = vmatpush2.msra.mxu0 0.0
    %5563 = vmatprep.subr.mxu0 0.0
    %5564 = vmatpush2.msra.mxu0 0.0
    %5565 = vmatprep.subr.mxu0 0.0
    %5566 = vmatpush2.msra.mxu0 0.0
    %5567 = vmatprep.subr.mxu0 0.0
    %5568 = vmatpush2.msra.mxu0 0.0
    %5569 = vmatprep.subr.mxu0 0.0
    %5570 = vmatpush2.msra.mxu0 0.0
    %5571 = vmatprep.subr.mxu0 0.0
    %5572 = vmatpush2.msra.mxu0 0.0
    %5573 = vmatprep.subr.mxu0 0.0
    %5574 = vmatpush2.msra.mxu0 0.0
    %5575 = vmatprep.subr.mxu0 0.0
    %5576 = vmatpush2.msra.mxu0 0.0
    %5577 = vmatprep.subr.mxu0 0.0
    %5578 = vmatpush2.msra.mxu0 0.0
    %5579 = vmatprep.subr.mxu0 0.0
    %5580 = vmatpush2.msra.mxu0 0.0
    %5581 = vmatprep.subr.mxu0 0.0
    %5582 = vmatpush2.msra.mxu0 0.0
    %5583 = vmatprep.subr.mxu0 0.0
    %5584 = vmatpush2.msra.mxu0 0.0
    %5585 = vmatprep.subr.mxu0 0.0
    %5586 = vmatpush2.msra.mxu0 0.0
    %5587 = vmatprep.subr.mxu0 0.0
    %5588 = vmatpush2.msra.mxu0 0.0
    %5589 = vmatprep.subr.mxu0 0.0
    %5590 = vmatpush2.msra.mxu0 0.0
    %5591 = vmatprep.subr.mxu0 0.0
    %5592 = vmatpush2.msra.mxu0 0.0
    %5593 = vmatprep.mubr.f32.mxu0 0.0
    %5594 = vmatmul.mubr.f32.gmra.mxu0 %v5527
    %v5595 = vpop.f32.mrf.mxu0
    %v5596 = vadd.f32 0.0, %v5595
    %v5597 = vpop.f32.mrf.mxu0
    %5598 = vdwg.mxu0
    %v5599 = vmul.f32 %v1370, %v5596
    %v5601 = vsel %vm374, %v5599, 0
    %5603 = vmatprep.subr.mxu0 0.0
    %5604 = vmatpush1.msra.mxu0 0.0
    %5605 = vmatprep.subr.mxu0 0.0
    %5606 = vmatpush1.msra.mxu0 0.0
    %5607 = vmatprep.subr.mxu0 0.0
    %5608 = vmatpush1.msra.mxu0 0.0
    %5609 = vmatprep.subr.mxu0 0.0
    %5610 = vmatpush1.msra.mxu0 0.0
    %5611 = vmatprep.subr.mxu0 0.0
    %5612 = vmatpush1.msra.mxu0 0.0
    %5613 = vmatprep.subr.mxu0 0.0
    %5614 = vmatpush1.msra.mxu0 0.0
    %5615 = vmatprep.subr.mxu0 0.0
    %5616 = vmatpush1.msra.mxu0 0.0
    %5617 = vmatprep.subr.mxu0 0.0
    %5618 = vmatpush1.msra.mxu0 0.0
    %5619 = vmatprep.subr.mxu0 0.0
    %5620 = vmatpush1.msra.mxu0 0.0
    %5621 = vmatprep.subr.mxu0 0.0
    %5622 = vmatpush1.msra.mxu0 0.0
    %5623 = vmatprep.subr.mxu0 0.0
    %5624 = vmatpush1.msra.mxu0 0.0
    %5625 = vmatprep.subr.mxu0 0.0
    %5626 = vmatpush1.msra.mxu0 0.0
    %5627 = vmatprep.subr.mxu0 0.0
    %5628 = vmatpush1.msra.mxu0 %v150
    %5629 = vmatprep.subr.mxu0 0.0
    %5630 = vmatpush1.msra.mxu0 %v149
    %5631 = vmatprep.subr.mxu0 0.0
    %5632 = vmatpush1.msra.mxu0 %v148
    %5633 = vmatprep.subr.mxu0 0.0
    %5634 = vmatpush1.msra.mxu0 %v147
    %5635 = vmatprep.subr.mxu0 0.0
    %5636 = vmatpush2.msra.mxu0 0.0
    %5637 = vmatprep.subr.mxu0 0.0
    %5638 = vmatpush2.msra.mxu0 0.0
    %5639 = vmatprep.subr.mxu0 0.0
    %5640 = vmatpush2.msra.mxu0 0.0
    %5641 = vmatprep.subr.mxu0 0.0
    %5642 = vmatpush2.msra.mxu0 0.0
    %5643 = vmatprep.subr.mxu0 0.0
    %5644 = vmatpush2.msra.mxu0 0.0
    %5645 = vmatprep.subr.mxu0 0.0
    %5646 = vmatpush2.msra.mxu0 0.0
    %5647 = vmatprep.subr.mxu0 0.0
    %5648 = vmatpush2.msra.mxu0 0.0
    %5649 = vmatprep.subr.mxu0 0.0
    %5650 = vmatpush2.msra.mxu0 0.0
    %5651 = vmatprep.subr.mxu0 0.0
    %5652 = vmatpush2.msra.mxu0 0.0
    %5653 = vmatprep.subr.mxu0 0.0
    %5654 = vmatpush2.msra.mxu0 0.0
    %5655 = vmatprep.subr.mxu0 0.0
    %5656 = vmatpush2.msra.mxu0 0.0
    %5657 = vmatprep.subr.mxu0 0.0
    %5658 = vmatpush2.msra.mxu0 0.0
    %5659 = vmatprep.subr.mxu0 0.0
    %5660 = vmatpush2.msra.mxu0 0.0
    %5661 = vmatprep.subr.mxu0 0.0
    %5662 = vmatpush2.msra.mxu0 0.0
    %5663 = vmatprep.subr.mxu0 0.0
    %5664 = vmatpush2.msra.mxu0 0.0
    %5665 = vmatprep.subr.mxu0 0.0
    %5666 = vmatpush2.msra.mxu0 0.0
    %5667 = vmatprep.mubr.f32.mxu0 0.0
    %5668 = vmatmul.mubr.f32.gmra.mxu0 %v5601
    %v5669 = vpop.f32.mrf.mxu0
    %v5670 = vadd.f32 0.0, %v5669
    %v5671 = vpop.f32.mrf.mxu0
    %5672 = vdwg.mxu0
    %v5673 = vmul.f32 %v5670, %v1198
    %v5674 = vsel %vm179, %v5673, 0.0
    %5675 = vadd.xlane.f32.xlu0 %v5674
    %v5676 = vpop.xlane.xlu0 %5675
    %v5677 = vmul.f32 %v1442, %v4334
    %v5678 = vsel %vm179, %v5677, 0.0
    %5679 = vadd.xlane.f32.xlu0 %v5678
    %v5680 = vpop.xlane.xlu0 %5679
    %v5681 = vadd.f32 %v5676, %v5680
    %v5682 = vsub.f32 1.0, %v1455
    %v5683 = vmul.f32 %v1455, %v5682
    %v5684 = vmul.f32 %v5683, %v5681
    %v5685 = vmul.f32 %v5684, 0.125
    %5687 = vset.pattern.permute.xlu0 0
    %5688 = vperm.xlu0 %5687, %v5685
    %v5689 = vpop.permute.xlu0 %5688
    %v5691 = vmul.f32 %v5689, %v1198
    %v5692 = vmul.f32 %v1461, %v4334
    %v5693 = vadd.f32 %v5691, %v5692
    %v5695 = vsel %vm179, %v5693, 0
    %5697 = vmatprep.subr.mxu0 0.0
    %5698 = vmatpush1.msra.mxu0 0.0
    %5699 = vmatprep.subr.mxu0 0.0
    %5700 = vmatpush1.msra.mxu0 0.0
    %5701 = vmatprep.subr.mxu0 0.0
    %5702 = vmatpush1.msra.mxu0 0.0
    %5703 = vmatprep.subr.mxu0 0.0
    %5704 = vmatpush1.msra.mxu0 0.0
    %5705 = vmatprep.subr.mxu0 0.0
    %5706 = vmatpush1.msra.mxu0 0.0
    %5707 = vmatprep.subr.mxu0 0.0
    %5708 = vmatpush1.msra.mxu0 0.0
    %5709 = vmatprep.subr.mxu0 0.0
    %5710 = vmatpush1.msra.mxu0 0.0
    %5711 = vmatprep.subr.mxu0 0.0
    %5712 = vmatpush1.msra.mxu0 0.0
    %5713 = vmatprep.subr.mxu0 0.0
    %5714 = vmatpush1.msra.mxu0 0.0
    %5715 = vmatprep.subr.mxu0 0.0
    %5716 = vmatpush1.msra.mxu0 0.0
    %5717 = vmatprep.subr.mxu0 0.0
    %5718 = vmatpush1.msra.mxu0 0.0
    %5719 = vmatprep.subr.mxu0 0.0
    %5720 = vmatpush1.msra.mxu0 0.0
    %5721 = vmatprep.subr.mxu0 0.0
    %5722 = vmatpush1.msra.mxu0 0.0
    %5723 = vmatprep.subr.mxu0 0.0
    %5724 = vmatpush1.msra.mxu0 0.0
    %5725 = vmatprep.subr.mxu0 0.0
    %5726 = vmatpush1.msra.mxu0 0.0
    %5727 = vmatprep.subr.mxu0 0.0
    %5728 = vmatpush1.msra.mxu0 %v559
    %5729 = vmatprep.subr.mxu0 0.0
    %5730 = vmatpush2.msra.mxu0 0.0
    %5731 = vmatprep.subr.mxu0 0.0
    %5732 = vmatpush2.msra.mxu0 0.0
    %5733 = vmatprep.subr.mxu0 0.0
    %5734 = vmatpush2.msra.mxu0 0.0
    %5735 = vmatprep.subr.mxu0 0.0
    %5736 = vmatpush2.msra.mxu0 0.0
    %5737 = vmatprep.subr.mxu0 0.0
    %5738 = vmatpush2.msra.mxu0 0.0
    %5739 = vmatprep.subr.mxu0 0.0
    %5740 = vmatpush2.msra.mxu0 0.0
    %5741 = vmatprep.subr.mxu0 0.0
    %5742 = vmatpush2.msra.mxu0 0.0
    %5743 = vmatprep.subr.mxu0 0.0
    %5744 = vmatpush2.msra.mxu0 0.0
    %5745 = vmatprep.subr.mxu0 0.0
    %5746 = vmatpush2.msra.mxu0 0.0
    %5747 = vmatprep.subr.mxu0 0.0
    %5748 = vmatpush2.msra.mxu0 0.0
    %5749 = vmatprep.subr.mxu0 0.0
    %5750 = vmatpush2.msra.mxu0 0.0
    %5751 = vmatprep.subr.mxu0 0.0
    %5752 = vmatpush2.msra.mxu0 0.0
    %5753 = vmatprep.subr.mxu0 0.0
    %5754 = vmatpush2.msra.mxu0 0.0
    %5755 = vmatprep.subr.mxu0 0.0
    %5756 = vmatpush2.msra.mxu0 0.0
    %5757 = vmatprep.subr.mxu0 0.0
    %5758 = vmatpush2.msra.mxu0 0.0
    %5759 = vmatprep.subr.mxu0 0.0
    %5760 = vmatpush2.msra.mxu0 0.0
    %5761 = vmatprep.mubr.f32.mxu0 0.0
    %5762 = vmatmul.mubr.f32.gmra.mxu0 %v5695
    %v5763 = vpop.f32.mrf.mxu0
    %v5764 = vadd.f32 0.0, %v5763
    %v5765 = vpop.f32.mrf.mxu0
    %5766 = vdwg.mxu0
    %v5767 = vmul.f32 %v1370, %v5764
    %v5769 = vsel %vm374, %v5767, 0
    %5771 = vmatprep.subr.mxu0 0.0
    %5772 = vmatpush1.msra.mxu0 0.0
    %5773 = vmatprep.subr.mxu0 0.0
    %5774 = vmatpush1.msra.mxu0 0.0
    %5775 = vmatprep.subr.mxu0 0.0
    %5776 = vmatpush1.msra.mxu0 0.0
    %5777 = vmatprep.subr.mxu0 0.0
    %5778 = vmatpush1.msra.mxu0 0.0
    %5779 = vmatprep.subr.mxu0 0.0
    %5780 = vmatpush1.msra.mxu0 0.0
    %5781 = vmatprep.subr.mxu0 0.0
    %5782 = vmatpush1.msra.mxu0 0.0
    %5783 = vmatprep.subr.mxu0 0.0
    %5784 = vmatpush1.msra.mxu0 0.0
    %5785 = vmatprep.subr.mxu0 0.0
    %5786 = vmatpush1.msra.mxu0 0.0
    %5787 = vmatprep.subr.mxu0 0.0
    %5788 = vmatpush1.msra.mxu0 0.0
    %5789 = vmatprep.subr.mxu0 0.0
    %5790 = vmatpush1.msra.mxu0 0.0
    %5791 = vmatprep.subr.mxu0 0.0
    %5792 = vmatpush1.msra.mxu0 0.0
    %5793 = vmatprep.subr.mxu0 0.0
    %5794 = vmatpush1.msra.mxu0 0.0
    %5795 = vmatprep.subr.mxu0 0.0
    %5796 = vmatpush1.msra.mxu0 %v159
    %5797 = vmatprep.subr.mxu0 0.0
    %5798 = vmatpush1.msra.mxu0 %v158
    %5799 = vmatprep.subr.mxu0 0.0
    %5800 = vmatpush1.msra.mxu0 %v157
    %5801 = vmatprep.subr.mxu0 0.0
    %5802 = vmatpush1.msra.mxu0 %v156
    %5803 = vmatprep.subr.mxu0 0.0
    %5804 = vmatpush2.msra.mxu0 0.0
    %5805 = vmatprep.subr.mxu0 0.0
    %5806 = vmatpush2.msra.mxu0 0.0
    %5807 = vmatprep.subr.mxu0 0.0
    %5808 = vmatpush2.msra.mxu0 0.0
    %5809 = vmatprep.subr.mxu0 0.0
    %5810 = vmatpush2.msra.mxu0 0.0
    %5811 = vmatprep.subr.mxu0 0.0
    %5812 = vmatpush2.msra.mxu0 0.0
    %5813 = vmatprep.subr.mxu0 0.0
    %5814 = vmatpush2.msra.mxu0 0.0
    %5815 = vmatprep.subr.mxu0 0.0
    %5816 = vmatpush2.msra.mxu0 0.0
    %5817 = vmatprep.subr.mxu0 0.0
    %5818 = vmatpush2.msra.mxu0 0.0
    %5819 = vmatprep.subr.mxu0 0.0
    %5820 = vmatpush2.msra.mxu0 0.0
    %5821 = vmatprep.subr.mxu0 0.0
    %5822 = vmatpush2.msra.mxu0 0.0
    %5823 = vmatprep.subr.mxu0 0.0
    %5824 = vmatpush2.msra.mxu0 0.0
    %5825 = vmatprep.subr.mxu0 0.0
    %5826 = vmatpush2.msra.mxu0 0.0
    %5827 = vmatprep.subr.mxu0 0.0
    %5828 = vmatpush2.msra.mxu0 0.0
    %5829 = vmatprep.subr.mxu0 0.0
    %5830 = vmatpush2.msra.mxu0 0.0
    %5831 = vmatprep.subr.mxu0 0.0
    %5832 = vmatpush2.msra.mxu0 0.0
    %5833 = vmatprep.subr.mxu0 0.0
    %5834 = vmatpush2.msra.mxu0 0.0
    %5835 = vmatprep.mubr.f32.mxu0 0.0
    %5836 = vmatmul.mubr.f32.gmra.mxu0 %v5769
    %v5837 = vpop.f32.mrf.mxu0
    %v5838 = vadd.f32 0.0, %v5837
    %v5839 = vpop.f32.mrf.mxu0
    %5840 = vdwg.mxu0
    %v5841 = vmul.f32 %v1294, %v5838
    %v5843 = vsel %vm374, %v5841, 0
    %5845 = vmatprep.subr.mxu0 0.0
    %5846 = vmatpush1.msra.mxu0 0.0
    %5847 = vmatprep.subr.mxu0 0.0
    %5848 = vmatpush1.msra.mxu0 0.0
    %5849 = vmatprep.subr.mxu0 0.0
    %5850 = vmatpush1.msra.mxu0 0.0
    %5851 = vmatprep.subr.mxu0 0.0
    %5852 = vmatpush1.msra.mxu0 0.0
    %5853 = vmatprep.subr.mxu0 0.0
    %5854 = vmatpush1.msra.mxu0 0.0
    %5855 = vmatprep.subr.mxu0 0.0
    %5856 = vmatpush1.msra.mxu0 0.0
    %5857 = vmatprep.subr.mxu0 0.0
    %5858 = vmatpush1.msra.mxu0 0.0
    %5859 = vmatprep.subr.mxu0 0.0
    %5860 = vmatpush1.msra.mxu0 0.0
    %5861 = vmatprep.subr.mxu0 0.0
    %5862 = vmatpush1.msra.mxu0 0.0
    %5863 = vmatprep.subr.mxu0 0.0
    %5864 = vmatpush1.msra.mxu0 0.0
    %5865 = vmatprep.subr.mxu0 0.0
    %5866 = vmatpush1.msra.mxu0 0.0
    %5867 = vmatprep.subr.mxu0 0.0
    %5868 = vmatpush1.msra.mxu0 0.0
    %5869 = vmatprep.subr.mxu0 0.0
    %5870 = vmatpush1.msra.mxu0 %v155
    %5871 = vmatprep.subr.mxu0 0.0
    %5872 = vmatpush1.msra.mxu0 %v154
    %5873 = vmatprep.subr.mxu0 0.0
    %5874 = vmatpush1.msra.mxu0 %v153
    %5875 = vmatprep.subr.mxu0 0.0
    %5876 = vmatpush1.msra.mxu0 %v152
    %5877 = vmatprep.subr.mxu0 0.0
    %5878 = vmatpush2.msra.mxu0 0.0
    %5879 = vmatprep.subr.mxu0 0.0
    %5880 = vmatpush2.msra.mxu0 0.0
    %5881 = vmatprep.subr.mxu0 0.0
    %5882 = vmatpush2.msra.mxu0 0.0
    %5883 = vmatprep.subr.mxu0 0.0
    %5884 = vmatpush2.msra.mxu0 0.0
    %5885 = vmatprep.subr.mxu0 0.0
    %5886 = vmatpush2.msra.mxu0 0.0
    %5887 = vmatprep.subr.mxu0 0.0
    %5888 = vmatpush2.msra.mxu0 0.0
    %5889 = vmatprep.subr.mxu0 0.0
    %5890 = vmatpush2.msra.mxu0 0.0
    %5891 = vmatprep.subr.mxu0 0.0
    %5892 = vmatpush2.msra.mxu0 0.0
    %5893 = vmatprep.subr.mxu0 0.0
    %5894 = vmatpush2.msra.mxu0 0.0
    %5895 = vmatprep.subr.mxu0 0.0
    %5896 = vmatpush2.msra.mxu0 0.0
    %5897 = vmatprep.subr.mxu0 0.0
    %5898 = vmatpush2.msra.mxu0 0.0
    %5899 = vmatprep.subr.mxu0 0.0
    %5900 = vmatpush2.msra.mxu0 0.0
    %5901 = vmatprep.subr.mxu0 0.0
    %5902 = vmatpush2.msra.mxu0 0.0
    %5903 = vmatprep.subr.mxu0 0.0
    %5904 = vmatpush2.msra.mxu0 0.0
    %5905 = vmatprep.subr.mxu0 0.0
    %5906 = vmatpush2.msra.mxu0 0.0
    %5907 = vmatprep.subr.mxu0 0.0
    %5908 = vmatpush2.msra.mxu0 0.0
    %5909 = vmatprep.mubr.f32.mxu0 0.0
    %5910 = vmatmul.mubr.f32.gmra.mxu0 %v5843
    %v5911 = vpop.f32.mrf.mxu0
    %v5912 = vadd.f32 0.0, %v5911
    %v5913 = vpop.f32.mrf.mxu0
    %5914 = vdwg.mxu0
    %5915 = vxpose.xlu0.b32.start [1/16] %v5599, 128
    %5916 = vxpose.xlu0.b32.cont [2/16] 0.0, 128
    %5917 = vxpose.xlu0.b32.cont [3/16] 0.0, 128
    %5918 = vxpose.xlu0.b32.cont [4/16] 0.0, 128
    %5919 = vxpose.xlu0.b32.cont [5/16] 0.0, 128
    %5920 = vxpose.xlu0.b32.cont [6/16] 0.0, 128
    %5921 = vxpose.xlu0.b32.cont [7/16] 0.0, 128
    %5922 = vxpose.xlu0.b32.cont [8/16] 0.0, 128
    %5923 = vxpose.xlu0.b32.cont [9/16] 0.0, 128
    %5924 = vxpose.xlu0.b32.cont [10/16] 0.0, 128
    %5925 = vxpose.xlu0.b32.cont [11/16] 0.0, 128
    %5926 = vxpose.xlu0.b32.cont [12/16] 0.0, 128
    %5927 = vxpose.xlu0.b32.cont [13/16] 0.0, 128
    %5928 = vxpose.xlu0.b32.cont [14/16] 0.0, 128
    %5929 = vxpose.xlu0.b32.cont [15/16] 0.0, 128
    %5930 = vxpose.xlu0.b32.end [16/16] 0.0, 128
    %v5931 = vpop.trf.xlu0
    %v5932 = vpop.trf.xlu0
    %v5933 = vpop.trf.xlu0
    %v5934 = vpop.trf.xlu0
    %v5935 = vpop.trf.xlu0
    %v5936 = vpop.trf.xlu0
    %v5937 = vpop.trf.xlu0
    %v5938 = vpop.trf.xlu0
    %v5939 = vpop.trf.xlu0
    %v5940 = vpop.trf.xlu0
    %v5941 = vpop.trf.xlu0
    %v5942 = vpop.trf.xlu0
    %v5943 = vpop.trf.xlu0
    %v5944 = vpop.trf.xlu0
    %v5945 = vpop.trf.xlu0
    %v5946 = vpop.trf.xlu0
    %v5948 = vsel %vm291, %v5931, 0
    %v5951 = vsel %vm291, %v5932, 0
    %v5954 = vsel %vm291, %v5933, 0
    %v5957 = vsel %vm291, %v5934, 0
    %5959 = vmatprep.subr.mxu0 0.0
    %5960 = vmatpush1.msra.mxu0 0.0
    %5961 = vmatprep.subr.mxu0 0.0
    %5962 = vmatpush1.msra.mxu0 0.0
    %5963 = vmatprep.subr.mxu0 0.0
    %5964 = vmatpush1.msra.mxu0 0.0
    %5965 = vmatprep.subr.mxu0 0.0
    %5966 = vmatpush1.msra.mxu0 0.0
    %5967 = vmatprep.subr.mxu0 0.0
    %5968 = vmatpush1.msra.mxu0 0.0
    %5969 = vmatprep.subr.mxu0 0.0
    %5970 = vmatpush1.msra.mxu0 0.0
    %5971 = vmatprep.subr.mxu0 0.0
    %5972 = vmatpush1.msra.mxu0 0.0
    %5973 = vmatprep.subr.mxu0 0.0
    %5974 = vmatpush1.msra.mxu0 0.0
    %5975 = vmatprep.subr.mxu0 0.0
    %5976 = vmatpush1.msra.mxu0 0.0
    %5977 = vmatprep.subr.mxu0 0.0
    %5978 = vmatpush1.msra.mxu0 0.0
    %5979 = vmatprep.subr.mxu0 0.0
    %5980 = vmatpush1.msra.mxu0 0.0
    %5981 = vmatprep.subr.mxu0 0.0
    %5982 = vmatpush1.msra.mxu0 0.0
    %5983 = vmatprep.subr.mxu0 0.0
    %5984 = vmatpush1.msra.mxu0 0.0
    %5985 = vmatprep.subr.mxu0 0.0
    %5986 = vmatpush1.msra.mxu0 0.0
    %5987 = vmatprep.subr.mxu0 0.0
    %5988 = vmatpush1.msra.mxu0 0.0
    %5989 = vmatprep.subr.mxu0 0.0
    %5990 = vmatpush1.msra.mxu0 %v1463
    %5991 = vmatprep.subr.mxu0 0.0
    %5992 = vmatpush2.msra.mxu0 0.0
    %5993 = vmatprep.subr.mxu0 0.0
    %5994 = vmatpush2.msra.mxu0 0.0
    %5995 = vmatprep.subr.mxu0 0.0
    %5996 = vmatpush2.msra.mxu0 0.0
    %5997 = vmatprep.subr.mxu0 0.0
    %5998 = vmatpush2.msra.mxu0 0.0
    %5999 = vmatprep.subr.mxu0 0.0
    %6000 = vmatpush2.msra.mxu0 0.0
    %6001 = vmatprep.subr.mxu0 0.0
    %6002 = vmatpush2.msra.mxu0 0.0
    %6003 = vmatprep.subr.mxu0 0.0
    %6004 = vmatpush2.msra.mxu0 0.0
    %6005 = vmatprep.subr.mxu0 0.0
    %6006 = vmatpush2.msra.mxu0 0.0
    %6007 = vmatprep.subr.mxu0 0.0
    %6008 = vmatpush2.msra.mxu0 0.0
    %6009 = vmatprep.subr.mxu0 0.0
    %6010 = vmatpush2.msra.mxu0 0.0
    %6011 = vmatprep.subr.mxu0 0.0
    %6012 = vmatpush2.msra.mxu0 0.0
    %6013 = vmatprep.subr.mxu0 0.0
    %6014 = vmatpush2.msra.mxu0 0.0
    %6015 = vmatprep.subr.mxu0 0.0
    %6016 = vmatpush2.msra.mxu0 0.0
    %6017 = vmatprep.subr.mxu0 0.0
    %6018 = vmatpush2.msra.mxu0 0.0
    %6019 = vmatprep.subr.mxu0 0.0
    %6020 = vmatpush2.msra.mxu0 0.0
    %6021 = vmatprep.subr.mxu0 0.0
    %6022 = vmatpush2.msra.mxu0 0.0
    %6023 = vmatprep.mubr.f32.mxu0 0.0
    %6024 = vmatmul.mubr.f32.gmra.mxu0 %v5948
    %v6025 = vpop.f32.mrf.mxu0
    %v6026 = vadd.f32 0.0, %v6025
    %v6027 = vpop.f32.mrf.mxu0
    %6028 = vmatprep.mubr.f32.mxu0 0.0
    %6029 = vmatmul.mubr.f32.gmra.mxu0 %v5951
    %v6030 = vpop.f32.mrf.mxu0
    %v6031 = vadd.f32 0.0, %v6030
    %v6032 = vpop.f32.mrf.mxu0
    %6033 = vmatprep.mubr.f32.mxu0 0.0
    %6034 = vmatmul.mubr.f32.gmra.mxu0 %v5954
    %v6035 = vpop.f32.mrf.mxu0
    %v6036 = vadd.f32 0.0, %v6035
    %v6037 = vpop.f32.mrf.mxu0
    %6038 = vmatprep.mubr.f32.mxu0 0.0
    %6039 = vmatmul.mubr.f32.gmra.mxu0 %v5957
    %v6040 = vpop.f32.mrf.mxu0
    %v6041 = vadd.f32 0.0, %v6040
    %v6042 = vpop.f32.mrf.mxu0
    %6043 = vdwg.mxu0
    %v6044 = vadd.f32 %v5023, %v6026
    %v6045 = vadd.f32 %v5024, %v6031
    %v6046 = vadd.f32 %v5025, %v6036
    %v6047 = vadd.f32 %v5026, %v6041
    %6048 = vmatprep.subr.mxu0 0.0
    %6049 = vmatpush1.msra.mxu0 0.0
    %6050 = vmatprep.subr.mxu0 0.0
    %6051 = vmatpush1.msra.mxu0 0.0
    %6052 = vmatprep.subr.mxu0 0.0
    %6053 = vmatpush1.msra.mxu0 0.0
    %6054 = vmatprep.subr.mxu0 0.0
    %6055 = vmatpush1.msra.mxu0 0.0
    %6056 = vmatprep.subr.mxu0 0.0
    %6057 = vmatpush1.msra.mxu0 0.0
    %6058 = vmatprep.subr.mxu0 0.0
    %6059 = vmatpush1.msra.mxu0 0.0
    %6060 = vmatprep.subr.mxu0 0.0
    %6061 = vmatpush1.msra.mxu0 0.0
    %6062 = vmatprep.subr.mxu0 0.0
    %6063 = vmatpush1.msra.mxu0 0.0
    %6064 = vmatprep.subr.mxu0 0.0
    %6065 = vmatpush1.msra.mxu0 0.0
    %6066 = vmatprep.subr.mxu0 0.0
    %6067 = vmatpush1.msra.mxu0 0.0
    %6068 = vmatprep.subr.mxu0 0.0
    %6069 = vmatpush1.msra.mxu0 0.0
    %6070 = vmatprep.subr.mxu0 0.0
    %6071 = vmatpush1.msra.mxu0 0.0
    %6072 = vmatprep.subr.mxu0 0.0
    %6073 = vmatpush1.msra.mxu0 0.0
    %6074 = vmatprep.subr.mxu0 0.0
    %6075 = vmatpush1.msra.mxu0 0.0
    %6076 = vmatprep.subr.mxu0 0.0
    %6077 = vmatpush1.msra.mxu0 0.0
    %6078 = vmatprep.subr.mxu0 0.0
    %6079 = vmatpush1.msra.mxu0 %v5693
    %6080 = vmatprep.subr.mxu0 0.0
    %6081 = vmatpush2.msra.mxu0 0.0
    %6082 = vmatprep.subr.mxu0 0.0
    %6083 = vmatpush2.msra.mxu0 0.0
    %6084 = vmatprep.subr.mxu0 0.0
    %6085 = vmatpush2.msra.mxu0 0.0
    %6086 = vmatprep.subr.mxu0 0.0
    %6087 = vmatpush2.msra.mxu0 0.0
    %6088 = vmatprep.subr.mxu0 0.0
    %6089 = vmatpush2.msra.mxu0 0.0
    %6090 = vmatprep.subr.mxu0 0.0
    %6091 = vmatpush2.msra.mxu0 0.0
    %6092 = vmatprep.subr.mxu0 0.0
    %6093 = vmatpush2.msra.mxu0 0.0
    %6094 = vmatprep.subr.mxu0 0.0
    %6095 = vmatpush2.msra.mxu0 0.0
    %6096 = vmatprep.subr.mxu0 0.0
    %6097 = vmatpush2.msra.mxu0 0.0
    %6098 = vmatprep.subr.mxu0 0.0
    %6099 = vmatpush2.msra.mxu0 0.0
    %6100 = vmatprep.subr.mxu0 0.0
    %6101 = vmatpush2.msra.mxu0 0.0
    %6102 = vmatprep.subr.mxu0 0.0
    %6103 = vmatpush2.msra.mxu0 0.0
    %6104 = vmatprep.subr.mxu0 0.0
    %6105 = vmatpush2.msra.mxu0 0.0
    %6106 = vmatprep.subr.mxu0 0.0
    %6107 = vmatpush2.msra.mxu0 0.0
    %6108 = vmatprep.subr.mxu0 0.0
    %6109 = vmatpush2.msra.mxu0 0.0
    %6110 = vmatprep.subr.mxu0 0.0
    %6111 = vmatpush2.msra.mxu0 0.0
    %6112 = vmatprep.mubr.f32.mxu0 0.0
    %6113 = vmatmul.mubr.f32.gmra.mxu0 %v2010
    %v6114 = vpop.f32.mrf.mxu0
    %v6115 = vadd.f32 0.0, %v6114
    %v6116 = vpop.f32.mrf.mxu0
    %6117 = vmatprep.mubr.f32.mxu0 0.0
    %6118 = vmatmul.mubr.f32.gmra.mxu0 %v2013
    %v6119 = vpop.f32.mrf.mxu0
    %v6120 = vadd.f32 0.0, %v6119
    %v6121 = vpop.f32.mrf.mxu0
    %6122 = vmatprep.mubr.f32.mxu0 0.0
    %6123 = vmatmul.mubr.f32.gmra.mxu0 %v2016
    %v6124 = vpop.f32.mrf.mxu0
    %v6125 = vadd.f32 0.0, %v6124
    %v6126 = vpop.f32.mrf.mxu0
    %6127 = vmatprep.mubr.f32.mxu0 0.0
    %6128 = vmatmul.mubr.f32.gmra.mxu0 %v2019
    %v6129 = vpop.f32.mrf.mxu0
    %v6130 = vadd.f32 0.0, %v6129
    %v6131 = vpop.f32.mrf.mxu0
    %6132 = vdwg.mxu0
    %v6133 = vadd.f32 %v6044, %v6115
    %v6134 = vadd.f32 %v6045, %v6120
    %v6135 = vadd.f32 %v6046, %v6125
    %v6136 = vadd.f32 %v6047, %v6130
    %v6137 = vsel %vm179, %v5693, 0.0
    %v6138 = vrot.slane %v6137, 4
    %v6139 = vadd.f32 %v6137, %v6138
    %v6140 = vrot.slane %v6139, 2
    %v6141 = vadd.f32 %v6139, %v6140
    %v6142 = vrot.slane %v6141, 1
    %v6143 = vadd.f32 %v6141, %v6142
    %v6144 = vadd.f32 %v5034, %v6143
    %6145 = vxpose.xlu0.b32.start [1/16] %v5525, 128
    %6146 = vxpose.xlu0.b32.cont [2/16] 0.0, 128
    %6147 = vxpose.xlu0.b32.cont [3/16] 0.0, 128
    %6148 = vxpose.xlu0.b32.cont [4/16] 0.0, 128
    %6149 = vxpose.xlu0.b32.cont [5/16] 0.0, 128
    %6150 = vxpose.xlu0.b32.cont [6/16] 0.0, 128
    %6151 = vxpose.xlu0.b32.cont [7/16] 0.0, 128
    %6152 = vxpose.xlu0.b32.cont [8/16] 0.0, 128
    %6153 = vxpose.xlu0.b32.cont [9/16] 0.0, 128
    %6154 = vxpose.xlu0.b32.cont [10/16] 0.0, 128
    %6155 = vxpose.xlu0.b32.cont [11/16] 0.0, 128
    %6156 = vxpose.xlu0.b32.cont [12/16] 0.0, 128
    %6157 = vxpose.xlu0.b32.cont [13/16] 0.0, 128
    %6158 = vxpose.xlu0.b32.cont [14/16] 0.0, 128
    %6159 = vxpose.xlu0.b32.cont [15/16] 0.0, 128
    %6160 = vxpose.xlu0.b32.end [16/16] 0.0, 128
    %v6161 = vpop.trf.xlu0
    %v6162 = vpop.trf.xlu0
    %v6163 = vpop.trf.xlu0
    %v6164 = vpop.trf.xlu0
    %v6165 = vpop.trf.xlu0
    %v6166 = vpop.trf.xlu0
    %v6167 = vpop.trf.xlu0
    %v6168 = vpop.trf.xlu0
    %v6169 = vpop.trf.xlu0
    %v6170 = vpop.trf.xlu0
    %v6171 = vpop.trf.xlu0
    %v6172 = vpop.trf.xlu0
    %v6173 = vpop.trf.xlu0
    %v6174 = vpop.trf.xlu0
    %v6175 = vpop.trf.xlu0
    %v6176 = vpop.trf.xlu0
    %v6178 = vsel %vm291, %v6161, 0
    %v6181 = vsel %vm291, %v6162, 0
    %v6184 = vsel %vm291, %v6163, 0
    %v6187 = vsel %vm291, %v6164, 0
    %6189 = vmatprep.subr.mxu0 0.0
    %6190 = vmatpush1.msra.mxu0 0.0
    %6191 = vmatprep.subr.mxu0 0.0
    %6192 = vmatpush1.msra.mxu0 0.0
    %6193 = vmatprep.subr.mxu0 0.0
    %6194 = vmatpush1.msra.mxu0 0.0
    %6195 = vmatprep.subr.mxu0 0.0
    %6196 = vmatpush1.msra.mxu0 0.0
    %6197 = vmatprep.subr.mxu0 0.0
    %6198 = vmatpush1.msra.mxu0 0.0
    %6199 = vmatprep.subr.mxu0 0.0
    %6200 = vmatpush1.msra.mxu0 0.0
    %6201 = vmatprep.subr.mxu0 0.0
    %6202 = vmatpush1.msra.mxu0 0.0
    %6203 = vmatprep.subr.mxu0 0.0
    %6204 = vmatpush1.msra.mxu0 0.0
    %6205 = vmatprep.subr.mxu0 0.0
    %6206 = vmatpush1.msra.mxu0 0.0
    %6207 = vmatprep.subr.mxu0 0.0
    %6208 = vmatpush1.msra.mxu0 0.0
    %6209 = vmatprep.subr.mxu0 0.0
    %6210 = vmatpush1.msra.mxu0 0.0
    %6211 = vmatprep.subr.mxu0 0.0
    %6212 = vmatpush1.msra.mxu0 0.0
    %6213 = vmatprep.subr.mxu0 0.0
    %6214 = vmatpush1.msra.mxu0 0.0
    %6215 = vmatprep.subr.mxu0 0.0
    %6216 = vmatpush1.msra.mxu0 0.0
    %6217 = vmatprep.subr.mxu0 0.0
    %6218 = vmatpush1.msra.mxu0 0.0
    %6219 = vmatprep.subr.mxu0 0.0
    %6220 = vmatpush1.msra.mxu0 %v1537
    %6221 = vmatprep.subr.mxu0 0.0
    %6222 = vmatpush2.msra.mxu0 0.0
    %6223 = vmatprep.subr.mxu0 0.0
    %6224 = vmatpush2.msra.mxu0 0.0
    %6225 = vmatprep.subr.mxu0 0.0
    %6226 = vmatpush2.msra.mxu0 0.0
    %6227 = vmatprep.subr.mxu0 0.0
    %6228 = vmatpush2.msra.mxu0 0.0
    %6229 = vmatprep.subr.mxu0 0.0
    %6230 = vmatpush2.msra.mxu0 0.0
    %6231 = vmatprep.subr.mxu0 0.0
    %6232 = vmatpush2.msra.mxu0 0.0
    %6233 = vmatprep.subr.mxu0 0.0
    %6234 = vmatpush2.msra.mxu0 0.0
    %6235 = vmatprep.subr.mxu0 0.0
    %6236 = vmatpush2.msra.mxu0 0.0
    %6237 = vmatprep.subr.mxu0 0.0
    %6238 = vmatpush2.msra.mxu0 0.0
    %6239 = vmatprep.subr.mxu0 0.0
    %6240 = vmatpush2.msra.mxu0 0.0
    %6241 = vmatprep.subr.mxu0 0.0
    %6242 = vmatpush2.msra.mxu0 0.0
    %6243 = vmatprep.subr.mxu0 0.0
    %6244 = vmatpush2.msra.mxu0 0.0
    %6245 = vmatprep.subr.mxu0 0.0
    %6246 = vmatpush2.msra.mxu0 0.0
    %6247 = vmatprep.subr.mxu0 0.0
    %6248 = vmatpush2.msra.mxu0 0.0
    %6249 = vmatprep.subr.mxu0 0.0
    %6250 = vmatpush2.msra.mxu0 0.0
    %6251 = vmatprep.subr.mxu0 0.0
    %6252 = vmatpush2.msra.mxu0 0.0
    %6253 = vmatprep.mubr.f32.mxu0 0.0
    %6254 = vmatmul.mubr.f32.gmra.mxu0 %v6178
    %v6255 = vpop.f32.mrf.mxu0
    %v6256 = vadd.f32 0.0, %v6255
    %v6257 = vpop.f32.mrf.mxu0
    %6258 = vmatprep.mubr.f32.mxu0 0.0
    %6259 = vmatmul.mubr.f32.gmra.mxu0 %v6181
    %v6260 = vpop.f32.mrf.mxu0
    %v6261 = vadd.f32 0.0, %v6260
    %v6262 = vpop.f32.mrf.mxu0
    %6263 = vmatprep.mubr.f32.mxu0 0.0
    %6264 = vmatmul.mubr.f32.gmra.mxu0 %v6184
    %v6265 = vpop.f32.mrf.mxu0
    %v6266 = vadd.f32 0.0, %v6265
    %v6267 = vpop.f32.mrf.mxu0
    %6268 = vmatprep.mubr.f32.mxu0 0.0
    %6269 = vmatmul.mubr.f32.gmra.mxu0 %v6187
    %v6270 = vpop.f32.mrf.mxu0
    %v6271 = vadd.f32 0.0, %v6270
    %v6272 = vpop.f32.mrf.mxu0
    %6273 = vdwg.mxu0
    %v6274 = vadd.f32 %v5253, %v6256
    %v6275 = vadd.f32 %v5254, %v6261
    %v6276 = vadd.f32 %v5255, %v6266
    %v6277 = vadd.f32 %v5256, %v6271
    %6278 = vmatprep.subr.mxu0 0.0
    %6279 = vmatpush1.msra.mxu0 0.0
    %6280 = vmatprep.subr.mxu0 0.0
    %6281 = vmatpush1.msra.mxu0 0.0
    %6282 = vmatprep.subr.mxu0 0.0
    %6283 = vmatpush1.msra.mxu0 0.0
    %6284 = vmatprep.subr.mxu0 0.0
    %6285 = vmatpush1.msra.mxu0 0.0
    %6286 = vmatprep.subr.mxu0 0.0
    %6287 = vmatpush1.msra.mxu0 0.0
    %6288 = vmatprep.subr.mxu0 0.0
    %6289 = vmatpush1.msra.mxu0 0.0
    %6290 = vmatprep.subr.mxu0 0.0
    %6291 = vmatpush1.msra.mxu0 0.0
    %6292 = vmatprep.subr.mxu0 0.0
    %6293 = vmatpush1.msra.mxu0 0.0
    %6294 = vmatprep.subr.mxu0 0.0
    %6295 = vmatpush1.msra.mxu0 0.0
    %6296 = vmatprep.subr.mxu0 0.0
    %6297 = vmatpush1.msra.mxu0 0.0
    %6298 = vmatprep.subr.mxu0 0.0
    %6299 = vmatpush1.msra.mxu0 0.0
    %6300 = vmatprep.subr.mxu0 0.0
    %6301 = vmatpush1.msra.mxu0 0.0
    %6302 = vmatprep.subr.mxu0 0.0
    %6303 = vmatpush1.msra.mxu0 0.0
    %6304 = vmatprep.subr.mxu0 0.0
    %6305 = vmatpush1.msra.mxu0 0.0
    %6306 = vmatprep.subr.mxu0 0.0
    %6307 = vmatpush1.msra.mxu0 0.0
    %6308 = vmatprep.subr.mxu0 0.0
    %6309 = vmatpush1.msra.mxu0 %v5767
    %6310 = vmatprep.subr.mxu0 0.0
    %6311 = vmatpush2.msra.mxu0 0.0
    %6312 = vmatprep.subr.mxu0 0.0
    %6313 = vmatpush2.msra.mxu0 0.0
    %6314 = vmatprep.subr.mxu0 0.0
    %6315 = vmatpush2.msra.mxu0 0.0
    %6316 = vmatprep.subr.mxu0 0.0
    %6317 = vmatpush2.msra.mxu0 0.0
    %6318 = vmatprep.subr.mxu0 0.0
    %6319 = vmatpush2.msra.mxu0 0.0
    %6320 = vmatprep.subr.mxu0 0.0
    %6321 = vmatpush2.msra.mxu0 0.0
    %6322 = vmatprep.subr.mxu0 0.0
    %6323 = vmatpush2.msra.mxu0 0.0
    %6324 = vmatprep.subr.mxu0 0.0
    %6325 = vmatpush2.msra.mxu0 0.0
    %6326 = vmatprep.subr.mxu0 0.0
    %6327 = vmatpush2.msra.mxu0 0.0
    %6328 = vmatprep.subr.mxu0 0.0
    %6329 = vmatpush2.msra.mxu0 0.0
    %6330 = vmatprep.subr.mxu0 0.0
    %6331 = vmatpush2.msra.mxu0 0.0
    %6332 = vmatprep.subr.mxu0 0.0
    %6333 = vmatpush2.msra.mxu0 0.0
    %6334 = vmatprep.subr.mxu0 0.0
    %6335 = vmatpush2.msra.mxu0 0.0
    %6336 = vmatprep.subr.mxu0 0.0
    %6337 = vmatpush2.msra.mxu0 0.0
    %6338 = vmatprep.subr.mxu0 0.0
    %6339 = vmatpush2.msra.mxu0 0.0
    %6340 = vmatprep.subr.mxu0 0.0
    %6341 = vmatpush2.msra.mxu0 0.0
    %6342 = vmatprep.mubr.f32.mxu0 0.0
    %6343 = vmatmul.mubr.f32.gmra.mxu0 %v2276
    %v6344 = vpop.f32.mrf.mxu0
    %v6345 = vadd.f32 0.0, %v6344
    %v6346 = vpop.f32.mrf.mxu0
    %6347 = vmatprep.mubr.f32.mxu0 0.0
    %6348 = vmatmul.mubr.f32.gmra.mxu0 %v2279
    %v6349 = vpop.f32.mrf.mxu0
    %v6350 = vadd.f32 0.0, %v6349
    %v6351 = vpop.f32.mrf.mxu0
    %6352 = vmatprep.mubr.f32.mxu0 0.0
    %6353 = vmatmul.mubr.f32.gmra.mxu0 %v2282
    %v6354 = vpop.f32.mrf.mxu0
    %v6355 = vadd.f32 0.0, %v6354
    %v6356 = vpop.f32.mrf.mxu0
    %6357 = vmatprep.mubr.f32.mxu0 0.0
    %6358 = vmatmul.mubr.f32.gmra.mxu0 %v2285
    %v6359 = vpop.f32.mrf.mxu0
    %v6360 = vadd.f32 0.0, %v6359
    %v6361 = vpop.f32.mrf.mxu0
    %6362 = vdwg.mxu0
    %v6363 = vadd.f32 %v6274, %v6345
    %v6364 = vadd.f32 %v6275, %v6350
    %v6365 = vadd.f32 %v6276, %v6355
    %v6366 = vadd.f32 %v6277, %v6360
    %v6367 = vsel %vm374, %v5767, 0.0
    %v6368 = vrot.slane %v6367, 4
    %v6369 = vadd.f32 %v6367, %v6368
    %v6370 = vrot.slane %v6369, 2
    %v6371 = vadd.f32 %v6369, %v6370
    %v6372 = vrot.slane %v6371, 1
    %v6373 = vadd.f32 %v6371, %v6372
    %v6374 = vadd.f32 %v5264, %v6373
    %6375 = vmatprep.subr.mxu0 0.0
    %6376 = vmatpush1.msra.mxu0 0.0
    %6377 = vmatprep.subr.mxu0 0.0
    %6378 = vmatpush1.msra.mxu0 0.0
    %6379 = vmatprep.subr.mxu0 0.0
    %6380 = vmatpush1.msra.mxu0 0.0
    %6381 = vmatprep.subr.mxu0 0.0
    %6382 = vmatpush1.msra.mxu0 0.0
    %6383 = vmatprep.subr.mxu0 0.0
    %6384 = vmatpush1.msra.mxu0 0.0
    %6385 = vmatprep.subr.mxu0 0.0
    %6386 = vmatpush1.msra.mxu0 0.0
    %6387 = vmatprep.subr.mxu0 0.0
    %6388 = vmatpush1.msra.mxu0 0.0
    %6389 = vmatprep.subr.mxu0 0.0
    %6390 = vmatpush1.msra.mxu0 0.0
    %6391 = vmatprep.subr.mxu0 0.0
    %6392 = vmatpush1.msra.mxu0 0.0
    %6393 = vmatprep.subr.mxu0 0.0
    %6394 = vmatpush1.msra.mxu0 0.0
    %6395 = vmatprep.subr.mxu0 0.0
    %6396 = vmatpush1.msra.mxu0 0.0
    %6397 = vmatprep.subr.mxu0 0.0
    %6398 = vmatpush1.msra.mxu0 0.0
    %6399 = vmatprep.subr.mxu0 0.0
    %6400 = vmatpush1.msra.mxu0 0.0
    %6401 = vmatprep.subr.mxu0 0.0
    %6402 = vmatpush1.msra.mxu0 0.0
    %6403 = vmatprep.subr.mxu0 0.0
    %6404 = vmatpush1.msra.mxu0 0.0
    %6405 = vmatprep.subr.mxu0 0.0
    %6406 = vmatpush1.msra.mxu0 %v1611
    %6407 = vmatprep.subr.mxu0 0.0
    %6408 = vmatpush2.msra.mxu0 0.0
    %6409 = vmatprep.subr.mxu0 0.0
    %6410 = vmatpush2.msra.mxu0 0.0
    %6411 = vmatprep.subr.mxu0 0.0
    %6412 = vmatpush2.msra.mxu0 0.0
    %6413 = vmatprep.subr.mxu0 0.0
    %6414 = vmatpush2.msra.mxu0 0.0
    %6415 = vmatprep.subr.mxu0 0.0
    %6416 = vmatpush2.msra.mxu0 0.0
    %6417 = vmatprep.subr.mxu0 0.0
    %6418 = vmatpush2.msra.mxu0 0.0
    %6419 = vmatprep.subr.mxu0 0.0
    %6420 = vmatpush2.msra.mxu0 0.0
    %6421 = vmatprep.subr.mxu0 0.0
    %6422 = vmatpush2.msra.mxu0 0.0
    %6423 = vmatprep.subr.mxu0 0.0
    %6424 = vmatpush2.msra.mxu0 0.0
    %6425 = vmatprep.subr.mxu0 0.0
    %6426 = vmatpush2.msra.mxu0 0.0
    %6427 = vmatprep.subr.mxu0 0.0
    %6428 = vmatpush2.msra.mxu0 0.0
    %6429 = vmatprep.subr.mxu0 0.0
    %6430 = vmatpush2.msra.mxu0 0.0
    %6431 = vmatprep.subr.mxu0 0.0
    %6432 = vmatpush2.msra.mxu0 0.0
    %6433 = vmatprep.subr.mxu0 0.0
    %6434 = vmatpush2.msra.mxu0 0.0
    %6435 = vmatprep.subr.mxu0 0.0
    %6436 = vmatpush2.msra.mxu0 0.0
    %6437 = vmatprep.subr.mxu0 0.0
    %6438 = vmatpush2.msra.mxu0 0.0
    %6439 = vmatprep.mubr.f32.mxu0 0.0
    %6440 = vmatmul.mubr.f32.gmra.mxu0 %v5298
    %v6441 = vpop.f32.mrf.mxu0
    %v6442 = vadd.f32 0.0, %v6441
    %v6443 = vpop.f32.mrf.mxu0
    %6444 = vdwg.mxu0
    %v6445 = vadd.f32 %v5441, %v6442
    %6446 = vmatprep.subr.mxu0 0.0
    %6447 = vmatpush1.msra.mxu0 0.0
    %6448 = vmatprep.subr.mxu0 0.0
    %6449 = vmatpush1.msra.mxu0 0.0
    %6450 = vmatprep.subr.mxu0 0.0
    %6451 = vmatpush1.msra.mxu0 0.0
    %6452 = vmatprep.subr.mxu0 0.0
    %6453 = vmatpush1.msra.mxu0 0.0
    %6454 = vmatprep.subr.mxu0 0.0
    %6455 = vmatpush1.msra.mxu0 0.0
    %6456 = vmatprep.subr.mxu0 0.0
    %6457 = vmatpush1.msra.mxu0 0.0
    %6458 = vmatprep.subr.mxu0 0.0
    %6459 = vmatpush1.msra.mxu0 0.0
    %6460 = vmatprep.subr.mxu0 0.0
    %6461 = vmatpush1.msra.mxu0 0.0
    %6462 = vmatprep.subr.mxu0 0.0
    %6463 = vmatpush1.msra.mxu0 0.0
    %6464 = vmatprep.subr.mxu0 0.0
    %6465 = vmatpush1.msra.mxu0 0.0
    %6466 = vmatprep.subr.mxu0 0.0
    %6467 = vmatpush1.msra.mxu0 0.0
    %6468 = vmatprep.subr.mxu0 0.0
    %6469 = vmatpush1.msra.mxu0 0.0
    %6470 = vmatprep.subr.mxu0 0.0
    %6471 = vmatpush1.msra.mxu0 0.0
    %6472 = vmatprep.subr.mxu0 0.0
    %6473 = vmatpush1.msra.mxu0 0.0
    %6474 = vmatprep.subr.mxu0 0.0
    %6475 = vmatpush1.msra.mxu0 0.0
    %6476 = vmatprep.subr.mxu0 0.0
    %6477 = vmatpush1.msra.mxu0 %v5841
    %6478 = vmatprep.subr.mxu0 0.0
    %6479 = vmatpush2.msra.mxu0 0.0
    %6480 = vmatprep.subr.mxu0 0.0
    %6481 = vmatpush2.msra.mxu0 0.0
    %6482 = vmatprep.subr.mxu0 0.0
    %6483 = vmatpush2.msra.mxu0 0.0
    %6484 = vmatprep.subr.mxu0 0.0
    %6485 = vmatpush2.msra.mxu0 0.0
    %6486 = vmatprep.subr.mxu0 0.0
    %6487 = vmatpush2.msra.mxu0 0.0
    %6488 = vmatprep.subr.mxu0 0.0
    %6489 = vmatpush2.msra.mxu0 0.0
    %6490 = vmatprep.subr.mxu0 0.0
    %6491 = vmatpush2.msra.mxu0 0.0
    %6492 = vmatprep.subr.mxu0 0.0
    %6493 = vmatpush2.msra.mxu0 0.0
    %6494 = vmatprep.subr.mxu0 0.0
    %6495 = vmatpush2.msra.mxu0 0.0
    %6496 = vmatprep.subr.mxu0 0.0
    %6497 = vmatpush2.msra.mxu0 0.0
    %6498 = vmatprep.subr.mxu0 0.0
    %6499 = vmatpush2.msra.mxu0 0.0
    %6500 = vmatprep.subr.mxu0 0.0
    %6501 = vmatpush2.msra.mxu0 0.0
    %6502 = vmatprep.subr.mxu0 0.0
    %6503 = vmatpush2.msra.mxu0 0.0
    %6504 = vmatprep.subr.mxu0 0.0
    %6505 = vmatpush2.msra.mxu0 0.0
    %6506 = vmatprep.subr.mxu0 0.0
    %6507 = vmatpush2.msra.mxu0 0.0
    %6508 = vmatprep.subr.mxu0 0.0
    %6509 = vmatpush2.msra.mxu0 0.0
    %6510 = vmatprep.mubr.f32.mxu0 0.0
    %6511 = vmatmul.mubr.f32.gmra.mxu0 %v2542
    %v6512 = vpop.f32.mrf.mxu0
    %v6513 = vadd.f32 0.0, %v6512
    %v6514 = vpop.f32.mrf.mxu0
    %6515 = vdwg.mxu0
    %v6516 = vadd.f32 %v6445, %v6513
    %v6517 = vsel %vm374, %v5841, 0.0
    %v6518 = vrot.slane %v6517, 4
    %v6519 = vadd.f32 %v6517, %v6518
    %v6520 = vrot.slane %v6519, 2
    %v6521 = vadd.f32 %v6519, %v6520
    %v6522 = vrot.slane %v6521, 1
    %v6523 = vadd.f32 %v6521, %v6522
    %v6524 = vadd.f32 %v5449, %v6523
    %6526 = vrot.lane.b32.xlu0 %v5912, 122
    %v6527 = vpop.permute.xlu0 %6526
    %6529 = vmatprep.subr.mxu0 0.0
    %6530 = vmatpush1.msra.mxu0 0.0
    %6531 = vmatprep.subr.mxu0 0.0
    %6532 = vmatpush1.msra.mxu0 0.0
    %6533 = vmatprep.subr.mxu0 0.0
    %6534 = vmatpush1.msra.mxu0 0.0
    %6535 = vmatprep.subr.mxu0 0.0
    %6536 = vmatpush1.msra.mxu0 0.0
    %6537 = vmatprep.subr.mxu0 0.0
    %6538 = vmatpush1.msra.mxu0 0.0
    %6539 = vmatprep.subr.mxu0 0.0
    %6540 = vmatpush1.msra.mxu0 0.0
    %6541 = vmatprep.subr.mxu0 0.0
    %6542 = vmatpush1.msra.mxu0 0.0
    %6543 = vmatprep.subr.mxu0 0.0
    %6544 = vmatpush1.msra.mxu0 0.0
    %6545 = vmatprep.subr.mxu0 0.0
    %6546 = vmatpush1.msra.mxu0 0.0
    %6547 = vmatprep.subr.mxu0 0.0
    %6548 = vmatpush1.msra.mxu0 0.0
    %6549 = vmatprep.subr.mxu0 0.0
    %6550 = vmatpush1.msra.mxu0 0.0
    %6551 = vmatprep.subr.mxu0 0.0
    %6552 = vmatpush1.msra.mxu0 0.0
    %6553 = vmatprep.subr.mxu0 0.0
    %6554 = vmatpush1.msra.mxu0 0.0
    %6555 = vmatprep.subr.mxu0 0.0
    %6556 = vmatpush1.msra.mxu0 0.0
    %6557 = vmatprep.subr.mxu0 0.0
    %6558 = vmatpush1.msra.mxu0 0.0
    %6559 = vmatprep.subr.mxu0 0.0
    %6560 = vmatpush1.msra.mxu0 %v6527
    %6561 = vmatprep.subr.mxu0 0.0
    %6562 = vmatpush2.msra.mxu0 0.0
    %6563 = vmatprep.subr.mxu0 0.0
    %6564 = vmatpush2.msra.mxu0 0.0
    %6565 = vmatprep.subr.mxu0 0.0
    %6566 = vmatpush2.msra.mxu0 0.0
    %6567 = vmatprep.subr.mxu0 0.0
    %6568 = vmatpush2.msra.mxu0 0.0
    %6569 = vmatprep.subr.mxu0 0.0
    %6570 = vmatpush2.msra.mxu0 0.0
    %6571 = vmatprep.subr.mxu0 0.0
    %6572 = vmatpush2.msra.mxu0 0.0
    %6573 = vmatprep.subr.mxu0 0.0
    %6574 = vmatpush2.msra.mxu0 0.0
    %6575 = vmatprep.subr.mxu0 0.0
    %6576 = vmatpush2.msra.mxu0 0.0
    %6577 = vmatprep.subr.mxu0 0.0
    %6578 = vmatpush2.msra.mxu0 0.0
    %6579 = vmatprep.subr.mxu0 0.0
    %6580 = vmatpush2.msra.mxu0 0.0
    %6581 = vmatprep.subr.mxu0 0.0
    %6582 = vmatpush2.msra.mxu0 0.0
    %6583 = vmatprep.subr.mxu0 0.0
    %6584 = vmatpush2.msra.mxu0 0.0
    %6585 = vmatprep.subr.mxu0 0.0
    %6586 = vmatpush2.msra.mxu0 0.0
    %6587 = vmatprep.subr.mxu0 0.0
    %6588 = vmatpush2.msra.mxu0 0.0
    %6589 = vmatprep.subr.mxu0 0.0
    %6590 = vmatpush2.msra.mxu0 0.0
    %6591 = vmatprep.subr.mxu0 0.0
    %6592 = vmatpush2.msra.mxu0 0.0
    %6593 = vmatprep.mubr.f32.mxu0 0.0
    %6594 = vmatmul.mubr.f32.gmra.mxu0 %v2764
    %v6595 = vpop.f32.mrf.mxu0
    %v6596 = vadd.f32 0.0, %v6595
    %v6597 = vpop.f32.mrf.mxu0
    %6598 = vdwg.mxu0
    %v6599 = vadd.f32 %v5524, %v6596
    %v6600 = vmul.f32 %v3132, %v4412
    %v6602 = vsel %vm374, %v6600, 0
    %6604 = vmatprep.subr.mxu0 0.0
    %6605 = vmatpush1.msra.mxu0 0.0
    %6606 = vmatprep.subr.mxu0 0.0
    %6607 = vmatpush1.msra.mxu0 0.0
    %6608 = vmatprep.subr.mxu0 0.0
    %6609 = vmatpush1.msra.mxu0 0.0
    %6610 = vmatprep.subr.mxu0 0.0
    %6611 = vmatpush1.msra.mxu0 0.0
    %6612 = vmatprep.subr.mxu0 0.0
    %6613 = vmatpush1.msra.mxu0 0.0
    %6614 = vmatprep.subr.mxu0 0.0
    %6615 = vmatpush1.msra.mxu0 0.0
    %6616 = vmatprep.subr.mxu0 0.0
    %6617 = vmatpush1.msra.mxu0 0.0
    %6618 = vmatprep.subr.mxu0 0.0
    %6619 = vmatpush1.msra.mxu0 0.0
    %6620 = vmatprep.subr.mxu0 0.0
    %6621 = vmatpush1.msra.mxu0 0.0
    %6622 = vmatprep.subr.mxu0 0.0
    %6623 = vmatpush1.msra.mxu0 0.0
    %6624 = vmatprep.subr.mxu0 0.0
    %6625 = vmatpush1.msra.mxu0 0.0
    %6626 = vmatprep.subr.mxu0 0.0
    %6627 = vmatpush1.msra.mxu0 0.0
    %6628 = vmatprep.subr.mxu0 0.0
    %6629 = vmatpush1.msra.mxu0 %v145
    %6630 = vmatprep.subr.mxu0 0.0
    %6631 = vmatpush1.msra.mxu0 %v144
    %6632 = vmatprep.subr.mxu0 0.0
    %6633 = vmatpush1.msra.mxu0 %v143
    %6634 = vmatprep.subr.mxu0 0.0
    %6635 = vmatpush1.msra.mxu0 %v142
    %6636 = vmatprep.subr.mxu0 0.0
    %6637 = vmatpush2.msra.mxu0 0.0
    %6638 = vmatprep.subr.mxu0 0.0
    %6639 = vmatpush2.msra.mxu0 0.0
    %6640 = vmatprep.subr.mxu0 0.0
    %6641 = vmatpush2.msra.mxu0 0.0
    %6642 = vmatprep.subr.mxu0 0.0
    %6643 = vmatpush2.msra.mxu0 0.0
    %6644 = vmatprep.subr.mxu0 0.0
    %6645 = vmatpush2.msra.mxu0 0.0
    %6646 = vmatprep.subr.mxu0 0.0
    %6647 = vmatpush2.msra.mxu0 0.0
    %6648 = vmatprep.subr.mxu0 0.0
    %6649 = vmatpush2.msra.mxu0 0.0
    %6650 = vmatprep.subr.mxu0 0.0
    %6651 = vmatpush2.msra.mxu0 0.0
    %6652 = vmatprep.subr.mxu0 0.0
    %6653 = vmatpush2.msra.mxu0 0.0
    %6654 = vmatprep.subr.mxu0 0.0
    %6655 = vmatpush2.msra.mxu0 0.0
    %6656 = vmatprep.subr.mxu0 0.0
    %6657 = vmatpush2.msra.mxu0 0.0
    %6658 = vmatprep.subr.mxu0 0.0
    %6659 = vmatpush2.msra.mxu0 0.0
    %6660 = vmatprep.subr.mxu0 0.0
    %6661 = vmatpush2.msra.mxu0 0.0
    %6662 = vmatprep.subr.mxu0 0.0
    %6663 = vmatpush2.msra.mxu0 0.0
    %6664 = vmatprep.subr.mxu0 0.0
    %6665 = vmatpush2.msra.mxu0 0.0
    %6666 = vmatprep.subr.mxu0 0.0
    %6667 = vmatpush2.msra.mxu0 0.0
    %6668 = vmatprep.mubr.f32.mxu0 0.0
    %6669 = vmatmul.mubr.f32.gmra.mxu0 %v6602
    %v6670 = vpop.f32.mrf.mxu0
    %v6671 = vadd.f32 0.0, %v6670
    %v6672 = vpop.f32.mrf.mxu0
    %6673 = vdwg.mxu0
    %v6674 = vmul.f32 %v3208, %v6671
    %v6676 = vsel %vm374, %v6674, 0
    %6678 = vmatprep.subr.mxu0 0.0
    %6679 = vmatpush1.msra.mxu0 0.0
    %6680 = vmatprep.subr.mxu0 0.0
    %6681 = vmatpush1.msra.mxu0 0.0
    %6682 = vmatprep.subr.mxu0 0.0
    %6683 = vmatpush1.msra.mxu0 0.0
    %6684 = vmatprep.subr.mxu0 0.0
    %6685 = vmatpush1.msra.mxu0 0.0
    %6686 = vmatprep.subr.mxu0 0.0
    %6687 = vmatpush1.msra.mxu0 0.0
    %6688 = vmatprep.subr.mxu0 0.0
    %6689 = vmatpush1.msra.mxu0 0.0
    %6690 = vmatprep.subr.mxu0 0.0
    %6691 = vmatpush1.msra.mxu0 0.0
    %6692 = vmatprep.subr.mxu0 0.0
    %6693 = vmatpush1.msra.mxu0 0.0
    %6694 = vmatprep.subr.mxu0 0.0
    %6695 = vmatpush1.msra.mxu0 0.0
    %6696 = vmatprep.subr.mxu0 0.0
    %6697 = vmatpush1.msra.mxu0 0.0
    %6698 = vmatprep.subr.mxu0 0.0
    %6699 = vmatpush1.msra.mxu0 0.0
    %6700 = vmatprep.subr.mxu0 0.0
    %6701 = vmatpush1.msra.mxu0 0.0
    %6702 = vmatprep.subr.mxu0 0.0
    %6703 = vmatpush1.msra.mxu0 %v150
    %6704 = vmatprep.subr.mxu0 0.0
    %6705 = vmatpush1.msra.mxu0 %v149
    %6706 = vmatprep.subr.mxu0 0.0
    %6707 = vmatpush1.msra.mxu0 %v148
    %6708 = vmatprep.subr.mxu0 0.0
    %6709 = vmatpush1.msra.mxu0 %v147
    %6710 = vmatprep.subr.mxu0 0.0
    %6711 = vmatpush2.msra.mxu0 0.0
    %6712 = vmatprep.subr.mxu0 0.0
    %6713 = vmatpush2.msra.mxu0 0.0
    %6714 = vmatprep.subr.mxu0 0.0
    %6715 = vmatpush2.msra.mxu0 0.0
    %6716 = vmatprep.subr.mxu0 0.0
    %6717 = vmatpush2.msra.mxu0 0.0
    %6718 = vmatprep.subr.mxu0 0.0
    %6719 = vmatpush2.msra.mxu0 0.0
    %6720 = vmatprep.subr.mxu0 0.0
    %6721 = vmatpush2.msra.mxu0 0.0
    %6722 = vmatprep.subr.mxu0 0.0
    %6723 = vmatpush2.msra.mxu0 0.0
    %6724 = vmatprep.subr.mxu0 0.0
    %6725 = vmatpush2.msra.mxu0 0.0
    %6726 = vmatprep.subr.mxu0 0.0
    %6727 = vmatpush2.msra.mxu0 0.0
    %6728 = vmatprep.subr.mxu0 0.0
    %6729 = vmatpush2.msra.mxu0 0.0
    %6730 = vmatprep.subr.mxu0 0.0
    %6731 = vmatpush2.msra.mxu0 0.0
    %6732 = vmatprep.subr.mxu0 0.0
    %6733 = vmatpush2.msra.mxu0 0.0
    %6734 = vmatprep.subr.mxu0 0.0
    %6735 = vmatpush2.msra.mxu0 0.0
    %6736 = vmatprep.subr.mxu0 0.0
    %6737 = vmatpush2.msra.mxu0 0.0
    %6738 = vmatprep.subr.mxu0 0.0
    %6739 = vmatpush2.msra.mxu0 0.0
    %6740 = vmatprep.subr.mxu0 0.0
    %6741 = vmatpush2.msra.mxu0 0.0
    %6742 = vmatprep.mubr.f32.mxu0 0.0
    %6743 = vmatmul.mubr.f32.gmra.mxu0 %v6676
    %v6744 = vpop.f32.mrf.mxu0
    %v6745 = vadd.f32 0.0, %v6744
    %v6746 = vpop.f32.mrf.mxu0
    %6747 = vdwg.mxu0
    %v6748 = vmul.f32 %v6745, %v3036
    %v6749 = vsel %vm179, %v6748, 0.0
    %6750 = vadd.xlane.f32.xlu0 %v6749
    %v6751 = vpop.xlane.xlu0 %6750
    %v6752 = vmul.f32 %v3280, %v4334
    %v6753 = vsel %vm179, %v6752, 0.0
    %6754 = vadd.xlane.f32.xlu0 %v6753
    %v6755 = vpop.xlane.xlu0 %6754
    %v6756 = vadd.f32 %v6751, %v6755
    %v6757 = vsub.f32 1.0, %v3293
    %v6758 = vmul.f32 %v3293, %v6757
    %v6759 = vmul.f32 %v6758, %v6756
    %v6760 = vmul.f32 %v6759, 0.125
    %6762 = vset.pattern.permute.xlu0 0
    %6763 = vperm.xlu0 %6762, %v6760
    %v6764 = vpop.permute.xlu0 %6763
    %v6766 = vmul.f32 %v6764, %v3036
    %v6767 = vmul.f32 %v3299, %v4334
    %v6768 = vadd.f32 %v6766, %v6767
    %v6770 = vsel %vm179, %v6768, 0
    %6772 = vmatprep.subr.mxu0 0.0
    %6773 = vmatpush1.msra.mxu0 0.0
    %6774 = vmatprep.subr.mxu0 0.0
    %6775 = vmatpush1.msra.mxu0 0.0
    %6776 = vmatprep.subr.mxu0 0.0
    %6777 = vmatpush1.msra.mxu0 0.0
    %6778 = vmatprep.subr.mxu0 0.0
    %6779 = vmatpush1.msra.mxu0 0.0
    %6780 = vmatprep.subr.mxu0 0.0
    %6781 = vmatpush1.msra.mxu0 0.0
    %6782 = vmatprep.subr.mxu0 0.0
    %6783 = vmatpush1.msra.mxu0 0.0
    %6784 = vmatprep.subr.mxu0 0.0
    %6785 = vmatpush1.msra.mxu0 0.0
    %6786 = vmatprep.subr.mxu0 0.0
    %6787 = vmatpush1.msra.mxu0 0.0
    %6788 = vmatprep.subr.mxu0 0.0
    %6789 = vmatpush1.msra.mxu0 0.0
    %6790 = vmatprep.subr.mxu0 0.0
    %6791 = vmatpush1.msra.mxu0 0.0
    %6792 = vmatprep.subr.mxu0 0.0
    %6793 = vmatpush1.msra.mxu0 0.0
    %6794 = vmatprep.subr.mxu0 0.0
    %6795 = vmatpush1.msra.mxu0 0.0
    %6796 = vmatprep.subr.mxu0 0.0
    %6797 = vmatpush1.msra.mxu0 0.0
    %6798 = vmatprep.subr.mxu0 0.0
    %6799 = vmatpush1.msra.mxu0 0.0
    %6800 = vmatprep.subr.mxu0 0.0
    %6801 = vmatpush1.msra.mxu0 0.0
    %6802 = vmatprep.subr.mxu0 0.0
    %6803 = vmatpush1.msra.mxu0 %v559
    %6804 = vmatprep.subr.mxu0 0.0
    %6805 = vmatpush2.msra.mxu0 0.0
    %6806 = vmatprep.subr.mxu0 0.0
    %6807 = vmatpush2.msra.mxu0 0.0
    %6808 = vmatprep.subr.mxu0 0.0
    %6809 = vmatpush2.msra.mxu0 0.0
    %6810 = vmatprep.subr.mxu0 0.0
    %6811 = vmatpush2.msra.mxu0 0.0
    %6812 = vmatprep.subr.mxu0 0.0
    %6813 = vmatpush2.msra.mxu0 0.0
    %6814 = vmatprep.subr.mxu0 0.0
    %6815 = vmatpush2.msra.mxu0 0.0
    %6816 = vmatprep.subr.mxu0 0.0
    %6817 = vmatpush2.msra.mxu0 0.0
    %6818 = vmatprep.subr.mxu0 0.0
    %6819 = vmatpush2.msra.mxu0 0.0
    %6820 = vmatprep.subr.mxu0 0.0
    %6821 = vmatpush2.msra.mxu0 0.0
    %6822 = vmatprep.subr.mxu0 0.0
    %6823 = vmatpush2.msra.mxu0 0.0
    %6824 = vmatprep.subr.mxu0 0.0
    %6825 = vmatpush2.msra.mxu0 0.0
    %6826 = vmatprep.subr.mxu0 0.0
    %6827 = vmatpush2.msra.mxu0 0.0
    %6828 = vmatprep.subr.mxu0 0.0
    %6829 = vmatpush2.msra.mxu0 0.0
    %6830 = vmatprep.subr.mxu0 0.0
    %6831 = vmatpush2.msra.mxu0 0.0
    %6832 = vmatprep.subr.mxu0 0.0
    %6833 = vmatpush2.msra.mxu0 0.0
    %6834 = vmatprep.subr.mxu0 0.0
    %6835 = vmatpush2.msra.mxu0 0.0
    %6836 = vmatprep.mubr.f32.mxu0 0.0
    %6837 = vmatmul.mubr.f32.gmra.mxu0 %v6770
    %v6838 = vpop.f32.mrf.mxu0
    %v6839 = vadd.f32 0.0, %v6838
    %v6840 = vpop.f32.mrf.mxu0
    %6841 = vdwg.mxu0
    %v6842 = vmul.f32 %v3208, %v6839
    %v6844 = vsel %vm374, %v6842, 0
    %6846 = vmatprep.subr.mxu0 0.0
    %6847 = vmatpush1.msra.mxu0 0.0
    %6848 = vmatprep.subr.mxu0 0.0
    %6849 = vmatpush1.msra.mxu0 0.0
    %6850 = vmatprep.subr.mxu0 0.0
    %6851 = vmatpush1.msra.mxu0 0.0
    %6852 = vmatprep.subr.mxu0 0.0
    %6853 = vmatpush1.msra.mxu0 0.0
    %6854 = vmatprep.subr.mxu0 0.0
    %6855 = vmatpush1.msra.mxu0 0.0
    %6856 = vmatprep.subr.mxu0 0.0
    %6857 = vmatpush1.msra.mxu0 0.0
    %6858 = vmatprep.subr.mxu0 0.0
    %6859 = vmatpush1.msra.mxu0 0.0
    %6860 = vmatprep.subr.mxu0 0.0
    %6861 = vmatpush1.msra.mxu0 0.0
    %6862 = vmatprep.subr.mxu0 0.0
    %6863 = vmatpush1.msra.mxu0 0.0
    %6864 = vmatprep.subr.mxu0 0.0
    %6865 = vmatpush1.msra.mxu0 0.0
    %6866 = vmatprep.subr.mxu0 0.0
    %6867 = vmatpush1.msra.mxu0 0.0
    %6868 = vmatprep.subr.mxu0 0.0
    %6869 = vmatpush1.msra.mxu0 0.0
    %6870 = vmatprep.subr.mxu0 0.0
    %6871 = vmatpush1.msra.mxu0 %v159
    %6872 = vmatprep.subr.mxu0 0.0
    %6873 = vmatpush1.msra.mxu0 %v158
    %6874 = vmatprep.subr.mxu0 0.0
    %6875 = vmatpush1.msra.mxu0 %v157
    %6876 = vmatprep.subr.mxu0 0.0
    %6877 = vmatpush1.msra.mxu0 %v156
    %6878 = vmatprep.subr.mxu0 0.0
    %6879 = vmatpush2.msra.mxu0 0.0
    %6880 = vmatprep.subr.mxu0 0.0
    %6881 = vmatpush2.msra.mxu0 0.0
    %6882 = vmatprep.subr.mxu0 0.0
    %6883 = vmatpush2.msra.mxu0 0.0
    %6884 = vmatprep.subr.mxu0 0.0
    %6885 = vmatpush2.msra.mxu0 0.0
    %6886 = vmatprep.subr.mxu0 0.0
    %6887 = vmatpush2.msra.mxu0 0.0
    %6888 = vmatprep.subr.mxu0 0.0
    %6889 = vmatpush2.msra.mxu0 0.0
    %6890 = vmatprep.subr.mxu0 0.0
    %6891 = vmatpush2.msra.mxu0 0.0
    %6892 = vmatprep.subr.mxu0 0.0
    %6893 = vmatpush2.msra.mxu0 0.0
    %6894 = vmatprep.subr.mxu0 0.0
    %6895 = vmatpush2.msra.mxu0 0.0
    %6896 = vmatprep.subr.mxu0 0.0
    %6897 = vmatpush2.msra.mxu0 0.0
    %6898 = vmatprep.subr.mxu0 0.0
    %6899 = vmatpush2.msra.mxu0 0.0
    %6900 = vmatprep.subr.mxu0 0.0
    %6901 = vmatpush2.msra.mxu0 0.0
    %6902 = vmatprep.subr.mxu0 0.0
    %6903 = vmatpush2.msra.mxu0 0.0
    %6904 = vmatprep.subr.mxu0 0.0
    %6905 = vmatpush2.msra.mxu0 0.0
    %6906 = vmatprep.subr.mxu0 0.0
    %6907 = vmatpush2.msra.mxu0 0.0
    %6908 = vmatprep.subr.mxu0 0.0
    %6909 = vmatpush2.msra.mxu0 0.0
    %6910 = vmatprep.mubr.f32.mxu0 0.0
    %6911 = vmatmul.mubr.f32.gmra.mxu0 %v6844
    %v6912 = vpop.f32.mrf.mxu0
    %v6913 = vadd.f32 0.0, %v6912
    %v6914 = vpop.f32.mrf.mxu0
    %6915 = vdwg.mxu0
    %v6916 = vmul.f32 %v3132, %v6913
    %v6918 = vsel %vm374, %v6916, 0
    %6920 = vmatprep.subr.mxu0 0.0
    %6921 = vmatpush1.msra.mxu0 0.0
    %6922 = vmatprep.subr.mxu0 0.0
    %6923 = vmatpush1.msra.mxu0 0.0
    %6924 = vmatprep.subr.mxu0 0.0
    %6925 = vmatpush1.msra.mxu0 0.0
    %6926 = vmatprep.subr.mxu0 0.0
    %6927 = vmatpush1.msra.mxu0 0.0
    %6928 = vmatprep.subr.mxu0 0.0
    %6929 = vmatpush1.msra.mxu0 0.0
    %6930 = vmatprep.subr.mxu0 0.0
    %6931 = vmatpush1.msra.mxu0 0.0
    %6932 = vmatprep.subr.mxu0 0.0
    %6933 = vmatpush1.msra.mxu0 0.0
    %6934 = vmatprep.subr.mxu0 0.0
    %6935 = vmatpush1.msra.mxu0 0.0
    %6936 = vmatprep.subr.mxu0 0.0
    %6937 = vmatpush1.msra.mxu0 0.0
    %6938 = vmatprep.subr.mxu0 0.0
    %6939 = vmatpush1.msra.mxu0 0.0
    %6940 = vmatprep.subr.mxu0 0.0
    %6941 = vmatpush1.msra.mxu0 0.0
    %6942 = vmatprep.subr.mxu0 0.0
    %6943 = vmatpush1.msra.mxu0 0.0
    %6944 = vmatprep.subr.mxu0 0.0
    %6945 = vmatpush1.msra.mxu0 %v155
    %6946 = vmatprep.subr.mxu0 0.0
    %6947 = vmatpush1.msra.mxu0 %v154
    %6948 = vmatprep.subr.mxu0 0.0
    %6949 = vmatpush1.msra.mxu0 %v153
    %6950 = vmatprep.subr.mxu0 0.0
    %6951 = vmatpush1.msra.mxu0 %v152
    %6952 = vmatprep.subr.mxu0 0.0
    %6953 = vmatpush2.msra.mxu0 0.0
    %6954 = vmatprep.subr.mxu0 0.0
    %6955 = vmatpush2.msra.mxu0 0.0
    %6956 = vmatprep.subr.mxu0 0.0
    %6957 = vmatpush2.msra.mxu0 0.0
    %6958 = vmatprep.subr.mxu0 0.0
    %6959 = vmatpush2.msra.mxu0 0.0
    %6960 = vmatprep.subr.mxu0 0.0
    %6961 = vmatpush2.msra.mxu0 0.0
    %6962 = vmatprep.subr.mxu0 0.0
    %6963 = vmatpush2.msra.mxu0 0.0
    %6964 = vmatprep.subr.mxu0 0.0
    %6965 = vmatpush2.msra.mxu0 0.0
    %6966 = vmatprep.subr.mxu0 0.0
    %6967 = vmatpush2.msra.mxu0 0.0
    %6968 = vmatprep.subr.mxu0 0.0
    %6969 = vmatpush2.msra.mxu0 0.0
    %6970 = vmatprep.subr.mxu0 0.0
    %6971 = vmatpush2.msra.mxu0 0.0
    %6972 = vmatprep.subr.mxu0 0.0
    %6973 = vmatpush2.msra.mxu0 0.0
    %6974 = vmatprep.subr.mxu0 0.0
    %6975 = vmatpush2.msra.mxu0 0.0
    %6976 = vmatprep.subr.mxu0 0.0
    %6977 = vmatpush2.msra.mxu0 0.0
    %6978 = vmatprep.subr.mxu0 0.0
    %6979 = vmatpush2.msra.mxu0 0.0
    %6980 = vmatprep.subr.mxu0 0.0
    %6981 = vmatpush2.msra.mxu0 0.0
    %6982 = vmatprep.subr.mxu0 0.0
    %6983 = vmatpush2.msra.mxu0 0.0
    %6984 = vmatprep.mubr.f32.mxu0 0.0
    %6985 = vmatmul.mubr.f32.gmra.mxu0 %v6918
    %v6986 = vpop.f32.mrf.mxu0
    %v6987 = vadd.f32 0.0, %v6986
    %v6988 = vpop.f32.mrf.mxu0
    %6989 = vdwg.mxu0
    %6990 = vxpose.xlu0.b32.start [1/16] %v6674, 128
    %6991 = vxpose.xlu0.b32.cont [2/16] 0.0, 128
    %6992 = vxpose.xlu0.b32.cont [3/16] 0.0, 128
    %6993 = vxpose.xlu0.b32.cont [4/16] 0.0, 128
    %6994 = vxpose.xlu0.b32.cont [5/16] 0.0, 128
    %6995 = vxpose.xlu0.b32.cont [6/16] 0.0, 128
    %6996 = vxpose.xlu0.b32.cont [7/16] 0.0, 128
    %6997 = vxpose.xlu0.b32.cont [8/16] 0.0, 128
    %6998 = vxpose.xlu0.b32.cont [9/16] 0.0, 128
    %6999 = vxpose.xlu0.b32.cont [10/16] 0.0, 128
    %7000 = vxpose.xlu0.b32.cont [11/16] 0.0, 128
    %7001 = vxpose.xlu0.b32.cont [12/16] 0.0, 128
    %7002 = vxpose.xlu0.b32.cont [13/16] 0.0, 128
    %7003 = vxpose.xlu0.b32.cont [14/16] 0.0, 128
    %7004 = vxpose.xlu0.b32.cont [15/16] 0.0, 128
    %7005 = vxpose.xlu0.b32.end [16/16] 0.0, 128
    %v7006 = vpop.trf.xlu0
    %v7007 = vpop.trf.xlu0
    %v7008 = vpop.trf.xlu0
    %v7009 = vpop.trf.xlu0
    %v7010 = vpop.trf.xlu0
    %v7011 = vpop.trf.xlu0
    %v7012 = vpop.trf.xlu0
    %v7013 = vpop.trf.xlu0
    %v7014 = vpop.trf.xlu0
    %v7015 = vpop.trf.xlu0
    %v7016 = vpop.trf.xlu0
    %v7017 = vpop.trf.xlu0
    %v7018 = vpop.trf.xlu0
    %v7019 = vpop.trf.xlu0
    %v7020 = vpop.trf.xlu0
    %v7021 = vpop.trf.xlu0
    %v7023 = vsel %vm291, %v7006, 0
    %v7026 = vsel %vm291, %v7007, 0
    %v7029 = vsel %vm291, %v7008, 0
    %v7032 = vsel %vm291, %v7009, 0
    %7034 = vmatprep.subr.mxu0 0.0
    %7035 = vmatpush1.msra.mxu0 0.0
    %7036 = vmatprep.subr.mxu0 0.0
    %7037 = vmatpush1.msra.mxu0 0.0
    %7038 = vmatprep.subr.mxu0 0.0
    %7039 = vmatpush1.msra.mxu0 0.0
    %7040 = vmatprep.subr.mxu0 0.0
    %7041 = vmatpush1.msra.mxu0 0.0
    %7042 = vmatprep.subr.mxu0 0.0
    %7043 = vmatpush1.msra.mxu0 0.0
    %7044 = vmatprep.subr.mxu0 0.0
    %7045 = vmatpush1.msra.mxu0 0.0
    %7046 = vmatprep.subr.mxu0 0.0
    %7047 = vmatpush1.msra.mxu0 0.0
    %7048 = vmatprep.subr.mxu0 0.0
    %7049 = vmatpush1.msra.mxu0 0.0
    %7050 = vmatprep.subr.mxu0 0.0
    %7051 = vmatpush1.msra.mxu0 0.0
    %7052 = vmatprep.subr.mxu0 0.0
    %7053 = vmatpush1.msra.mxu0 0.0
    %7054 = vmatprep.subr.mxu0 0.0
    %7055 = vmatpush1.msra.mxu0 0.0
    %7056 = vmatprep.subr.mxu0 0.0
    %7057 = vmatpush1.msra.mxu0 0.0
    %7058 = vmatprep.subr.mxu0 0.0
    %7059 = vmatpush1.msra.mxu0 0.0
    %7060 = vmatprep.subr.mxu0 0.0
    %7061 = vmatpush1.msra.mxu0 0.0
    %7062 = vmatprep.subr.mxu0 0.0
    %7063 = vmatpush1.msra.mxu0 0.0
    %7064 = vmatprep.subr.mxu0 0.0
    %7065 = vmatpush1.msra.mxu0 %v3301
    %7066 = vmatprep.subr.mxu0 0.0
    %7067 = vmatpush2.msra.mxu0 0.0
    %7068 = vmatprep.subr.mxu0 0.0
    %7069 = vmatpush2.msra.mxu0 0.0
    %7070 = vmatprep.subr.mxu0 0.0
    %7071 = vmatpush2.msra.mxu0 0.0
    %7072 = vmatprep.subr.mxu0 0.0
    %7073 = vmatpush2.msra.mxu0 0.0
    %7074 = vmatprep.subr.mxu0 0.0
    %7075 = vmatpush2.msra.mxu0 0.0
    %7076 = vmatprep.subr.mxu0 0.0
    %7077 = vmatpush2.msra.mxu0 0.0
    %7078 = vmatprep.subr.mxu0 0.0
    %7079 = vmatpush2.msra.mxu0 0.0
    %7080 = vmatprep.subr.mxu0 0.0
    %7081 = vmatpush2.msra.mxu0 0.0
    %7082 = vmatprep.subr.mxu0 0.0
    %7083 = vmatpush2.msra.mxu0 0.0
    %7084 = vmatprep.subr.mxu0 0.0
    %7085 = vmatpush2.msra.mxu0 0.0
    %7086 = vmatprep.subr.mxu0 0.0
    %7087 = vmatpush2.msra.mxu0 0.0
    %7088 = vmatprep.subr.mxu0 0.0
    %7089 = vmatpush2.msra.mxu0 0.0
    %7090 = vmatprep.subr.mxu0 0.0
    %7091 = vmatpush2.msra.mxu0 0.0
    %7092 = vmatprep.subr.mxu0 0.0
    %7093 = vmatpush2.msra.mxu0 0.0
    %7094 = vmatprep.subr.mxu0 0.0
    %7095 = vmatpush2.msra.mxu0 0.0
    %7096 = vmatprep.subr.mxu0 0.0
    %7097 = vmatpush2.msra.mxu0 0.0
    %7098 = vmatprep.mubr.f32.mxu0 0.0
    %7099 = vmatmul.mubr.f32.gmra.mxu0 %v7023
    %v7100 = vpop.f32.mrf.mxu0
    %v7101 = vadd.f32 0.0, %v7100
    %v7102 = vpop.f32.mrf.mxu0
    %7103 = vmatprep.mubr.f32.mxu0 0.0
    %7104 = vmatmul.mubr.f32.gmra.mxu0 %v7026
    %v7105 = vpop.f32.mrf.mxu0
    %v7106 = vadd.f32 0.0, %v7105
    %v7107 = vpop.f32.mrf.mxu0
    %7108 = vmatprep.mubr.f32.mxu0 0.0
    %7109 = vmatmul.mubr.f32.gmra.mxu0 %v7029
    %v7110 = vpop.f32.mrf.mxu0
    %v7111 = vadd.f32 0.0, %v7110
    %v7112 = vpop.f32.mrf.mxu0
    %7113 = vmatprep.mubr.f32.mxu0 0.0
    %7114 = vmatmul.mubr.f32.gmra.mxu0 %v7032
    %v7115 = vpop.f32.mrf.mxu0
    %v7116 = vadd.f32 0.0, %v7115
    %v7117 = vpop.f32.mrf.mxu0
    %7118 = vdwg.mxu0
    %v7119 = vadd.f32 %v6133, %v7101
    %v7120 = vadd.f32 %v6134, %v7106
    %v7121 = vadd.f32 %v6135, %v7111
    %v7122 = vadd.f32 %v6136, %v7116
    %7123 = vmatprep.subr.mxu0 0.0
    %7124 = vmatpush1.msra.mxu0 0.0
    %7125 = vmatprep.subr.mxu0 0.0
    %7126 = vmatpush1.msra.mxu0 0.0
    %7127 = vmatprep.subr.mxu0 0.0
    %7128 = vmatpush1.msra.mxu0 0.0
    %7129 = vmatprep.subr.mxu0 0.0
    %7130 = vmatpush1.msra.mxu0 0.0
    %7131 = vmatprep.subr.mxu0 0.0
    %7132 = vmatpush1.msra.mxu0 0.0
    %7133 = vmatprep.subr.mxu0 0.0
    %7134 = vmatpush1.msra.mxu0 0.0
    %7135 = vmatprep.subr.mxu0 0.0
    %7136 = vmatpush1.msra.mxu0 0.0
    %7137 = vmatprep.subr.mxu0 0.0
    %7138 = vmatpush1.msra.mxu0 0.0
    %7139 = vmatprep.subr.mxu0 0.0
    %7140 = vmatpush1.msra.mxu0 0.0
    %7141 = vmatprep.subr.mxu0 0.0
    %7142 = vmatpush1.msra.mxu0 0.0
    %7143 = vmatprep.subr.mxu0 0.0
    %7144 = vmatpush1.msra.mxu0 0.0
    %7145 = vmatprep.subr.mxu0 0.0
    %7146 = vmatpush1.msra.mxu0 0.0
    %7147 = vmatprep.subr.mxu0 0.0
    %7148 = vmatpush1.msra.mxu0 0.0
    %7149 = vmatprep.subr.mxu0 0.0
    %7150 = vmatpush1.msra.mxu0 0.0
    %7151 = vmatprep.subr.mxu0 0.0
    %7152 = vmatpush1.msra.mxu0 0.0
    %7153 = vmatprep.subr.mxu0 0.0
    %7154 = vmatpush1.msra.mxu0 %v6768
    %7155 = vmatprep.subr.mxu0 0.0
    %7156 = vmatpush2.msra.mxu0 0.0
    %7157 = vmatprep.subr.mxu0 0.0
    %7158 = vmatpush2.msra.mxu0 0.0
    %7159 = vmatprep.subr.mxu0 0.0
    %7160 = vmatpush2.msra.mxu0 0.0
    %7161 = vmatprep.subr.mxu0 0.0
    %7162 = vmatpush2.msra.mxu0 0.0
    %7163 = vmatprep.subr.mxu0 0.0
    %7164 = vmatpush2.msra.mxu0 0.0
    %7165 = vmatprep.subr.mxu0 0.0
    %7166 = vmatpush2.msra.mxu0 0.0
    %7167 = vmatprep.subr.mxu0 0.0
    %7168 = vmatpush2.msra.mxu0 0.0
    %7169 = vmatprep.subr.mxu0 0.0
    %7170 = vmatpush2.msra.mxu0 0.0
    %7171 = vmatprep.subr.mxu0 0.0
    %7172 = vmatpush2.msra.mxu0 0.0
    %7173 = vmatprep.subr.mxu0 0.0
    %7174 = vmatpush2.msra.mxu0 0.0
    %7175 = vmatprep.subr.mxu0 0.0
    %7176 = vmatpush2.msra.mxu0 0.0
    %7177 = vmatprep.subr.mxu0 0.0
    %7178 = vmatpush2.msra.mxu0 0.0
    %7179 = vmatprep.subr.mxu0 0.0
    %7180 = vmatpush2.msra.mxu0 0.0
    %7181 = vmatprep.subr.mxu0 0.0
    %7182 = vmatpush2.msra.mxu0 0.0
    %7183 = vmatprep.subr.mxu0 0.0
    %7184 = vmatpush2.msra.mxu0 0.0
    %7185 = vmatprep.subr.mxu0 0.0
    %7186 = vmatpush2.msra.mxu0 0.0
    %7187 = vmatprep.mubr.f32.mxu0 0.0
    %7188 = vmatmul.mubr.f32.gmra.mxu0 %v3848
    %v7189 = vpop.f32.mrf.mxu0
    %v7190 = vadd.f32 0.0, %v7189
    %v7191 = vpop.f32.mrf.mxu0
    %7192 = vmatprep.mubr.f32.mxu0 0.0
    %7193 = vmatmul.mubr.f32.gmra.mxu0 %v3851
    %v7194 = vpop.f32.mrf.mxu0
    %v7195 = vadd.f32 0.0, %v7194
    %v7196 = vpop.f32.mrf.mxu0
    %7197 = vmatprep.mubr.f32.mxu0 0.0
    %7198 = vmatmul.mubr.f32.gmra.mxu0 %v3854
    %v7199 = vpop.f32.mrf.mxu0
    %v7200 = vadd.f32 0.0, %v7199
    %v7201 = vpop.f32.mrf.mxu0
    %7202 = vmatprep.mubr.f32.mxu0 0.0
    %7203 = vmatmul.mubr.f32.gmra.mxu0 %v3857
    %v7204 = vpop.f32.mrf.mxu0
    %v7205 = vadd.f32 0.0, %v7204
    %v7206 = vpop.f32.mrf.mxu0
    %7207 = vdwg.mxu0
    %v7208 = vadd.f32 %v7119, %v7190
    %v7209 = vadd.f32 %v7120, %v7195
    %v7210 = vadd.f32 %v7121, %v7200
    %v7211 = vadd.f32 %v7122, %v7205
    %v7212 = vsel %vm179, %v6768, 0.0
    %v7213 = vrot.slane %v7212, 4
    %v7214 = vadd.f32 %v7212, %v7213
    %v7215 = vrot.slane %v7214, 2
    %v7216 = vadd.f32 %v7214, %v7215
    %v7217 = vrot.slane %v7216, 1
    %v7218 = vadd.f32 %v7216, %v7217
    %v7219 = vadd.f32 %v6144, %v7218
    %7220 = vxpose.xlu0.b32.start [1/16] %v6600, 128
    %7221 = vxpose.xlu0.b32.cont [2/16] 0.0, 128
    %7222 = vxpose.xlu0.b32.cont [3/16] 0.0, 128
    %7223 = vxpose.xlu0.b32.cont [4/16] 0.0, 128
    %7224 = vxpose.xlu0.b32.cont [5/16] 0.0, 128
    %7225 = vxpose.xlu0.b32.cont [6/16] 0.0, 128
    %7226 = vxpose.xlu0.b32.cont [7/16] 0.0, 128
    %7227 = vxpose.xlu0.b32.cont [8/16] 0.0, 128
    %7228 = vxpose.xlu0.b32.cont [9/16] 0.0, 128
    %7229 = vxpose.xlu0.b32.cont [10/16] 0.0, 128
    %7230 = vxpose.xlu0.b32.cont [11/16] 0.0, 128
    %7231 = vxpose.xlu0.b32.cont [12/16] 0.0, 128
    %7232 = vxpose.xlu0.b32.cont [13/16] 0.0, 128
    %7233 = vxpose.xlu0.b32.cont [14/16] 0.0, 128
    %7234 = vxpose.xlu0.b32.cont [15/16] 0.0, 128
    %7235 = vxpose.xlu0.b32.end [16/16] 0.0, 128
    %v7236 = vpop.trf.xlu0
    %v7237 = vpop.trf.xlu0
    %v7238 = vpop.trf.xlu0
    %v7239 = vpop.trf.xlu0
    %v7240 = vpop.trf.xlu0
    %v7241 = vpop.trf.xlu0
    %v7242 = vpop.trf.xlu0
    %v7243 = vpop.trf.xlu0
    %v7244 = vpop.trf.xlu0
    %v7245 = vpop.trf.xlu0
    %v7246 = vpop.trf.xlu0
    %v7247 = vpop.trf.xlu0
    %v7248 = vpop.trf.xlu0
    %v7249 = vpop.trf.xlu0
    %v7250 = vpop.trf.xlu0
    %v7251 = vpop.trf.xlu0
    %v7253 = vsel %vm291, %v7236, 0
    %v7256 = vsel %vm291, %v7237, 0
    %v7259 = vsel %vm291, %v7238, 0
    %v7262 = vsel %vm291, %v7239, 0
    %7264 = vmatprep.subr.mxu0 0.0
    %7265 = vmatpush1.msra.mxu0 0.0
    %7266 = vmatprep.subr.mxu0 0.0
    %7267 = vmatpush1.msra.mxu0 0.0
    %7268 = vmatprep.subr.mxu0 0.0
    %7269 = vmatpush1.msra.mxu0 0.0
    %7270 = vmatprep.subr.mxu0 0.0
    %7271 = vmatpush1.msra.mxu0 0.0
    %7272 = vmatprep.subr.mxu0 0.0
    %7273 = vmatpush1.msra.mxu0 0.0
    %7274 = vmatprep.subr.mxu0 0.0
    %7275 = vmatpush1.msra.mxu0 0.0
    %7276 = vmatprep.subr.mxu0 0.0
    %7277 = vmatpush1.msra.mxu0 0.0
    %7278 = vmatprep.subr.mxu0 0.0
    %7279 = vmatpush1.msra.mxu0 0.0
    %7280 = vmatprep.subr.mxu0 0.0
    %7281 = vmatpush1.msra.mxu0 0.0
    %7282 = vmatprep.subr.mxu0 0.0
    %7283 = vmatpush1.msra.mxu0 0.0
    %7284 = vmatprep.subr.mxu0 0.0
    %7285 = vmatpush1.msra.mxu0 0.0
    %7286 = vmatprep.subr.mxu0 0.0
    %7287 = vmatpush1.msra.mxu0 0.0
    %7288 = vmatprep.subr.mxu0 0.0
    %7289 = vmatpush1.msra.mxu0 0.0
    %7290 = vmatprep.subr.mxu0 0.0
    %7291 = vmatpush1.msra.mxu0 0.0
    %7292 = vmatprep.subr.mxu0 0.0
    %7293 = vmatpush1.msra.mxu0 0.0
    %7294 = vmatprep.subr.mxu0 0.0
    %7295 = vmatpush1.msra.mxu0 %v3375
    %7296 = vmatprep.subr.mxu0 0.0
    %7297 = vmatpush2.msra.mxu0 0.0
    %7298 = vmatprep.subr.mxu0 0.0
    %7299 = vmatpush2.msra.mxu0 0.0
    %7300 = vmatprep.subr.mxu0 0.0
    %7301 = vmatpush2.msra.mxu0 0.0
    %7302 = vmatprep.subr.mxu0 0.0
    %7303 = vmatpush2.msra.mxu0 0.0
    %7304 = vmatprep.subr.mxu0 0.0
    %7305 = vmatpush2.msra.mxu0 0.0
    %7306 = vmatprep.subr.mxu0 0.0
    %7307 = vmatpush2.msra.mxu0 0.0
    %7308 = vmatprep.subr.mxu0 0.0
    %7309 = vmatpush2.msra.mxu0 0.0
    %7310 = vmatprep.subr.mxu0 0.0
    %7311 = vmatpush2.msra.mxu0 0.0
    %7312 = vmatprep.subr.mxu0 0.0
    %7313 = vmatpush2.msra.mxu0 0.0
    %7314 = vmatprep.subr.mxu0 0.0
    %7315 = vmatpush2.msra.mxu0 0.0
    %7316 = vmatprep.subr.mxu0 0.0
    %7317 = vmatpush2.msra.mxu0 0.0
    %7318 = vmatprep.subr.mxu0 0.0
    %7319 = vmatpush2.msra.mxu0 0.0
    %7320 = vmatprep.subr.mxu0 0.0
    %7321 = vmatpush2.msra.mxu0 0.0
    %7322 = vmatprep.subr.mxu0 0.0
    %7323 = vmatpush2.msra.mxu0 0.0
    %7324 = vmatprep.subr.mxu0 0.0
    %7325 = vmatpush2.msra.mxu0 0.0
    %7326 = vmatprep.subr.mxu0 0.0
    %7327 = vmatpush2.msra.mxu0 0.0
    %7328 = vmatprep.mubr.f32.mxu0 0.0
    %7329 = vmatmul.mubr.f32.gmra.mxu0 %v7253
    %v7330 = vpop.f32.mrf.mxu0
    %v7331 = vadd.f32 0.0, %v7330
    %v7332 = vpop.f32.mrf.mxu0
    %7333 = vmatprep.mubr.f32.mxu0 0.0
    %7334 = vmatmul.mubr.f32.gmra.mxu0 %v7256
    %v7335 = vpop.f32.mrf.mxu0
    %v7336 = vadd.f32 0.0, %v7335
    %v7337 = vpop.f32.mrf.mxu0
    %7338 = vmatprep.mubr.f32.mxu0 0.0
    %7339 = vmatmul.mubr.f32.gmra.mxu0 %v7259
    %v7340 = vpop.f32.mrf.mxu0
    %v7341 = vadd.f32 0.0, %v7340
    %v7342 = vpop.f32.mrf.mxu0
    %7343 = vmatprep.mubr.f32.mxu0 0.0
    %7344 = vmatmul.mubr.f32.gmra.mxu0 %v7262
    %v7345 = vpop.f32.mrf.mxu0
    %v7346 = vadd.f32 0.0, %v7345
    %v7347 = vpop.f32.mrf.mxu0
    %7348 = vdwg.mxu0
    %v7349 = vadd.f32 %v6363, %v7331
    %v7350 = vadd.f32 %v6364, %v7336
    %v7351 = vadd.f32 %v6365, %v7341
    %v7352 = vadd.f32 %v6366, %v7346
    %7353 = vmatprep.subr.mxu0 0.0
    %7354 = vmatpush1.msra.mxu0 0.0
    %7355 = vmatprep.subr.mxu0 0.0
    %7356 = vmatpush1.msra.mxu0 0.0
    %7357 = vmatprep.subr.mxu0 0.0
    %7358 = vmatpush1.msra.mxu0 0.0
    %7359 = vmatprep.subr.mxu0 0.0
    %7360 = vmatpush1.msra.mxu0 0.0
    %7361 = vmatprep.subr.mxu0 0.0
    %7362 = vmatpush1.msra.mxu0 0.0
    %7363 = vmatprep.subr.mxu0 0.0
    %7364 = vmatpush1.msra.mxu0 0.0
    %7365 = vmatprep.subr.mxu0 0.0
    %7366 = vmatpush1.msra.mxu0 0.0
    %7367 = vmatprep.subr.mxu0 0.0
    %7368 = vmatpush1.msra.mxu0 0.0
    %7369 = vmatprep.subr.mxu0 0.0
    %7370 = vmatpush1.msra.mxu0 0.0
    %7371 = vmatprep.subr.mxu0 0.0
    %7372 = vmatpush1.msra.mxu0 0.0
    %7373 = vmatprep.subr.mxu0 0.0
    %7374 = vmatpush1.msra.mxu0 0.0
    %7375 = vmatprep.subr.mxu0 0.0
    %7376 = vmatpush1.msra.mxu0 0.0
    %7377 = vmatprep.subr.mxu0 0.0
    %7378 = vmatpush1.msra.mxu0 0.0
    %7379 = vmatprep.subr.mxu0 0.0
    %7380 = vmatpush1.msra.mxu0 0.0
    %7381 = vmatprep.subr.mxu0 0.0
    %7382 = vmatpush1.msra.mxu0 0.0
    %7383 = vmatprep.subr.mxu0 0.0
    %7384 = vmatpush1.msra.mxu0 %v6842
    %7385 = vmatprep.subr.mxu0 0.0
    %7386 = vmatpush2.msra.mxu0 0.0
    %7387 = vmatprep.subr.mxu0 0.0
    %7388 = vmatpush2.msra.mxu0 0.0
    %7389 = vmatprep.subr.mxu0 0.0
    %7390 = vmatpush2.msra.mxu0 0.0
    %7391 = vmatprep.subr.mxu0 0.0
    %7392 = vmatpush2.msra.mxu0 0.0
    %7393 = vmatprep.subr.mxu0 0.0
    %7394 = vmatpush2.msra.mxu0 0.0
    %7395 = vmatprep.subr.mxu0 0.0
    %7396 = vmatpush2.msra.mxu0 0.0
    %7397 = vmatprep.subr.mxu0 0.0
    %7398 = vmatpush2.msra.mxu0 0.0
    %7399 = vmatprep.subr.mxu0 0.0
    %7400 = vmatpush2.msra.mxu0 0.0
    %7401 = vmatprep.subr.mxu0 0.0
    %7402 = vmatpush2.msra.mxu0 0.0
    %7403 = vmatprep.subr.mxu0 0.0
    %7404 = vmatpush2.msra.mxu0 0.0
    %7405 = vmatprep.subr.mxu0 0.0
    %7406 = vmatpush2.msra.mxu0 0.0
    %7407 = vmatprep.subr.mxu0 0.0
    %7408 = vmatpush2.msra.mxu0 0.0
    %7409 = vmatprep.subr.mxu0 0.0
    %7410 = vmatpush2.msra.mxu0 0.0
    %7411 = vmatprep.subr.mxu0 0.0
    %7412 = vmatpush2.msra.mxu0 0.0
    %7413 = vmatprep.subr.mxu0 0.0
    %7414 = vmatpush2.msra.mxu0 0.0
    %7415 = vmatprep.subr.mxu0 0.0
    %7416 = vmatpush2.msra.mxu0 0.0
    %7417 = vmatprep.mubr.f32.mxu0 0.0
    %7418 = vmatmul.mubr.f32.gmra.mxu0 %v3989
    %v7419 = vpop.f32.mrf.mxu0
    %v7420 = vadd.f32 0.0, %v7419
    %v7421 = vpop.f32.mrf.mxu0
    %7422 = vmatprep.mubr.f32.mxu0 0.0
    %7423 = vmatmul.mubr.f32.gmra.mxu0 %v3992
    %v7424 = vpop.f32.mrf.mxu0
    %v7425 = vadd.f32 0.0, %v7424
    %v7426 = vpop.f32.mrf.mxu0
    %7427 = vmatprep.mubr.f32.mxu0 0.0
    %7428 = vmatmul.mubr.f32.gmra.mxu0 %v3995
    %v7429 = vpop.f32.mrf.mxu0
    %v7430 = vadd.f32 0.0, %v7429
    %v7431 = vpop.f32.mrf.mxu0
    %7432 = vmatprep.mubr.f32.mxu0 0.0
    %7433 = vmatmul.mubr.f32.gmra.mxu0 %v3998
    %v7434 = vpop.f32.mrf.mxu0
    %v7435 = vadd.f32 0.0, %v7434
    %v7436 = vpop.f32.mrf.mxu0
    %7437 = vdwg.mxu0
    %v7438 = vadd.f32 %v7349, %v7420
    %v7439 = vadd.f32 %v7350, %v7425
    %v7440 = vadd.f32 %v7351, %v7430
    %v7441 = vadd.f32 %v7352, %v7435
    %v7442 = vsel %vm374, %v6842, 0.0
    %v7443 = vrot.slane %v7442, 4
    %v7444 = vadd.f32 %v7442, %v7443
    %v7445 = vrot.slane %v7444, 2
    %v7446 = vadd.f32 %v7444, %v7445
    %v7447 = vrot.slane %v7446, 1
    %v7448 = vadd.f32 %v7446, %v7447
    %v7449 = vadd.f32 %v6374, %v7448
    %7450 = vmatprep.subr.mxu0 0.0
    %7451 = vmatpush1.msra.mxu0 0.0
    %7452 = vmatprep.subr.mxu0 0.0
    %7453 = vmatpush1.msra.mxu0 0.0
    %7454 = vmatprep.subr.mxu0 0.0
    %7455 = vmatpush1.msra.mxu0 0.0
    %7456 = vmatprep.subr.mxu0 0.0
    %7457 = vmatpush1.msra.mxu0 0.0
    %7458 = vmatprep.subr.mxu0 0.0
    %7459 = vmatpush1.msra.mxu0 0.0
    %7460 = vmatprep.subr.mxu0 0.0
    %7461 = vmatpush1.msra.mxu0 0.0
    %7462 = vmatprep.subr.mxu0 0.0
    %7463 = vmatpush1.msra.mxu0 0.0
    %7464 = vmatprep.subr.mxu0 0.0
    %7465 = vmatpush1.msra.mxu0 0.0
    %7466 = vmatprep.subr.mxu0 0.0
    %7467 = vmatpush1.msra.mxu0 0.0
    %7468 = vmatprep.subr.mxu0 0.0
    %7469 = vmatpush1.msra.mxu0 0.0
    %7470 = vmatprep.subr.mxu0 0.0
    %7471 = vmatpush1.msra.mxu0 0.0
    %7472 = vmatprep.subr.mxu0 0.0
    %7473 = vmatpush1.msra.mxu0 0.0
    %7474 = vmatprep.subr.mxu0 0.0
    %7475 = vmatpush1.msra.mxu0 0.0
    %7476 = vmatprep.subr.mxu0 0.0
    %7477 = vmatpush1.msra.mxu0 0.0
    %7478 = vmatprep.subr.mxu0 0.0
    %7479 = vmatpush1.msra.mxu0 0.0
    %7480 = vmatprep.subr.mxu0 0.0
    %7481 = vmatpush1.msra.mxu0 %v3449
    %7482 = vmatprep.subr.mxu0 0.0
    %7483 = vmatpush2.msra.mxu0 0.0
    %7484 = vmatprep.subr.mxu0 0.0
    %7485 = vmatpush2.msra.mxu0 0.0
    %7486 = vmatprep.subr.mxu0 0.0
    %7487 = vmatpush2.msra.mxu0 0.0
    %7488 = vmatprep.subr.mxu0 0.0
    %7489 = vmatpush2.msra.mxu0 0.0
    %7490 = vmatprep.subr.mxu0 0.0
    %7491 = vmatpush2.msra.mxu0 0.0
    %7492 = vmatprep.subr.mxu0 0.0
    %7493 = vmatpush2.msra.mxu0 0.0
    %7494 = vmatprep.subr.mxu0 0.0
    %7495 = vmatpush2.msra.mxu0 0.0
    %7496 = vmatprep.subr.mxu0 0.0
    %7497 = vmatpush2.msra.mxu0 0.0
    %7498 = vmatprep.subr.mxu0 0.0
    %7499 = vmatpush2.msra.mxu0 0.0
    %7500 = vmatprep.subr.mxu0 0.0
    %7501 = vmatpush2.msra.mxu0 0.0
    %7502 = vmatprep.subr.mxu0 0.0
    %7503 = vmatpush2.msra.mxu0 0.0
    %7504 = vmatprep.subr.mxu0 0.0
    %7505 = vmatpush2.msra.mxu0 0.0
    %7506 = vmatprep.subr.mxu0 0.0
    %7507 = vmatpush2.msra.mxu0 0.0
    %7508 = vmatprep.subr.mxu0 0.0
    %7509 = vmatpush2.msra.mxu0 0.0
    %7510 = vmatprep.subr.mxu0 0.0
    %7511 = vmatpush2.msra.mxu0 0.0
    %7512 = vmatprep.subr.mxu0 0.0
    %7513 = vmatpush2.msra.mxu0 0.0
    %7514 = vmatprep.mubr.f32.mxu0 0.0
    %7515 = vmatmul.mubr.f32.gmra.mxu0 %v5298
    %v7516 = vpop.f32.mrf.mxu0
    %v7517 = vadd.f32 0.0, %v7516
    %v7518 = vpop.f32.mrf.mxu0
    %7519 = vdwg.mxu0
    %v7520 = vadd.f32 %v6516, %v7517
    %7521 = vmatprep.subr.mxu0 0.0
    %7522 = vmatpush1.msra.mxu0 0.0
    %7523 = vmatprep.subr.mxu0 0.0
    %7524 = vmatpush1.msra.mxu0 0.0
    %7525 = vmatprep.subr.mxu0 0.0
    %7526 = vmatpush1.msra.mxu0 0.0
    %7527 = vmatprep.subr.mxu0 0.0
    %7528 = vmatpush1.msra.mxu0 0.0
    %7529 = vmatprep.subr.mxu0 0.0
    %7530 = vmatpush1.msra.mxu0 0.0
    %7531 = vmatprep.subr.mxu0 0.0
    %7532 = vmatpush1.msra.mxu0 0.0
    %7533 = vmatprep.subr.mxu0 0.0
    %7534 = vmatpush1.msra.mxu0 0.0
    %7535 = vmatprep.subr.mxu0 0.0
    %7536 = vmatpush1.msra.mxu0 0.0
    %7537 = vmatprep.subr.mxu0 0.0
    %7538 = vmatpush1.msra.mxu0 0.0
    %7539 = vmatprep.subr.mxu0 0.0
    %7540 = vmatpush1.msra.mxu0 0.0
    %7541 = vmatprep.subr.mxu0 0.0
    %7542 = vmatpush1.msra.mxu0 0.0
    %7543 = vmatprep.subr.mxu0 0.0
    %7544 = vmatpush1.msra.mxu0 0.0
    %7545 = vmatprep.subr.mxu0 0.0
    %7546 = vmatpush1.msra.mxu0 0.0
    %7547 = vmatprep.subr.mxu0 0.0
    %7548 = vmatpush1.msra.mxu0 0.0
    %7549 = vmatprep.subr.mxu0 0.0
    %7550 = vmatpush1.msra.mxu0 0.0
    %7551 = vmatprep.subr.mxu0 0.0
    %7552 = vmatpush1.msra.mxu0 %v6916
    %7553 = vmatprep.subr.mxu0 0.0
    %7554 = vmatpush2.msra.mxu0 0.0
    %7555 = vmatprep.subr.mxu0 0.0
    %7556 = vmatpush2.msra.mxu0 0.0
    %7557 = vmatprep.subr.mxu0 0.0
    %7558 = vmatpush2.msra.mxu0 0.0
    %7559 = vmatprep.subr.mxu0 0.0
    %7560 = vmatpush2.msra.mxu0 0.0
    %7561 = vmatprep.subr.mxu0 0.0
    %7562 = vmatpush2.msra.mxu0 0.0
    %7563 = vmatprep.subr.mxu0 0.0
    %7564 = vmatpush2.msra.mxu0 0.0
    %7565 = vmatprep.subr.mxu0 0.0
    %7566 = vmatpush2.msra.mxu0 0.0
    %7567 = vmatprep.subr.mxu0 0.0
    %7568 = vmatpush2.msra.mxu0 0.0
    %7569 = vmatprep.subr.mxu0 0.0
    %7570 = vmatpush2.msra.mxu0 0.0
    %7571 = vmatprep.subr.mxu0 0.0
    %7572 = vmatpush2.msra.mxu0 0.0
    %7573 = vmatprep.subr.mxu0 0.0
    %7574 = vmatpush2.msra.mxu0 0.0
    %7575 = vmatprep.subr.mxu0 0.0
    %7576 = vmatpush2.msra.mxu0 0.0
    %7577 = vmatprep.subr.mxu0 0.0
    %7578 = vmatpush2.msra.mxu0 0.0
    %7579 = vmatprep.subr.mxu0 0.0
    %7580 = vmatpush2.msra.mxu0 0.0
    %7581 = vmatprep.subr.mxu0 0.0
    %7582 = vmatpush2.msra.mxu0 0.0
    %7583 = vmatprep.subr.mxu0 0.0
    %7584 = vmatpush2.msra.mxu0 0.0
    %7585 = vmatprep.mubr.f32.mxu0 0.0
    %7586 = vmatmul.mubr.f32.gmra.mxu0 %v4130
    %v7587 = vpop.f32.mrf.mxu0
    %v7588 = vadd.f32 0.0, %v7587
    %v7589 = vpop.f32.mrf.mxu0
    %7590 = vdwg.mxu0
    %v7591 = vadd.f32 %v7520, %v7588
    %v7592 = vsel %vm374, %v6916, 0.0
    %v7593 = vrot.slane %v7592, 4
    %v7594 = vadd.f32 %v7592, %v7593
    %v7595 = vrot.slane %v7594, 2
    %v7596 = vadd.f32 %v7594, %v7595
    %v7597 = vrot.slane %v7596, 1
    %v7598 = vadd.f32 %v7596, %v7597
    %v7599 = vadd.f32 %v6524, %v7598
    %7601 = vrot.lane.b32.xlu0 %v6987, 122
    %v7602 = vpop.permute.xlu0 %7601
    %7604 = vmatprep.subr.mxu0 0.0
    %7605 = vmatpush1.msra.mxu0 0.0
    %7606 = vmatprep.subr.mxu0 0.0
    %7607 = vmatpush1.msra.mxu0 0.0
    %7608 = vmatprep.subr.mxu0 0.0
    %7609 = vmatpush1.msra.mxu0 0.0
    %7610 = vmatprep.subr.mxu0 0.0
    %7611 = vmatpush1.msra.mxu0 0.0
    %7612 = vmatprep.subr.mxu0 0.0
    %7613 = vmatpush1.msra.mxu0 0.0
    %7614 = vmatprep.subr.mxu0 0.0
    %7615 = vmatpush1.msra.mxu0 0.0
    %7616 = vmatprep.subr.mxu0 0.0
    %7617 = vmatpush1.msra.mxu0 0.0
    %7618 = vmatprep.subr.mxu0 0.0
    %7619 = vmatpush1.msra.mxu0 0.0
    %7620 = vmatprep.subr.mxu0 0.0
    %7621 = vmatpush1.msra.mxu0 0.0
    %7622 = vmatprep.subr.mxu0 0.0
    %7623 = vmatpush1.msra.mxu0 0.0
    %7624 = vmatprep.subr.mxu0 0.0
    %7625 = vmatpush1.msra.mxu0 0.0
    %7626 = vmatprep.subr.mxu0 0.0
    %7627 = vmatpush1.msra.mxu0 0.0
    %7628 = vmatprep.subr.mxu0 0.0
    %7629 = vmatpush1.msra.mxu0 0.0
    %7630 = vmatprep.subr.mxu0 0.0
    %7631 = vmatpush1.msra.mxu0 0.0
    %7632 = vmatprep.subr.mxu0 0.0
    %7633 = vmatpush1.msra.mxu0 0.0
    %7634 = vmatprep.subr.mxu0 0.0
    %7635 = vmatpush1.msra.mxu0 %v7602
    %7636 = vmatprep.subr.mxu0 0.0
    %7637 = vmatpush2.msra.mxu0 0.0
    %7638 = vmatprep.subr.mxu0 0.0
    %7639 = vmatpush2.msra.mxu0 0.0
    %7640 = vmatprep.subr.mxu0 0.0
    %7641 = vmatpush2.msra.mxu0 0.0
    %7642 = vmatprep.subr.mxu0 0.0
    %7643 = vmatpush2.msra.mxu0 0.0
    %7644 = vmatprep.subr.mxu0 0.0
    %7645 = vmatpush2.msra.mxu0 0.0
    %7646 = vmatprep.subr.mxu0 0.0
    %7647 = vmatpush2.msra.mxu0 0.0
    %7648 = vmatprep.subr.mxu0 0.0
    %7649 = vmatpush2.msra.mxu0 0.0
    %7650 = vmatprep.subr.mxu0 0.0
    %7651 = vmatpush2.msra.mxu0 0.0
    %7652 = vmatprep.subr.mxu0 0.0
    %7653 = vmatpush2.msra.mxu0 0.0
    %7654 = vmatprep.subr.mxu0 0.0
    %7655 = vmatpush2.msra.mxu0 0.0
    %7656 = vmatprep.subr.mxu0 0.0
    %7657 = vmatpush2.msra.mxu0 0.0
    %7658 = vmatprep.subr.mxu0 0.0
    %7659 = vmatpush2.msra.mxu0 0.0
    %7660 = vmatprep.subr.mxu0 0.0
    %7661 = vmatpush2.msra.mxu0 0.0
    %7662 = vmatprep.subr.mxu0 0.0
    %7663 = vmatpush2.msra.mxu0 0.0
    %7664 = vmatprep.subr.mxu0 0.0
    %7665 = vmatpush2.msra.mxu0 0.0
    %7666 = vmatprep.subr.mxu0 0.0
    %7667 = vmatpush2.msra.mxu0 0.0
    %7668 = vmatprep.mubr.f32.mxu0 0.0
    %7669 = vmatmul.mubr.f32.gmra.mxu0 %v4248
    %v7670 = vpop.f32.mrf.mxu0
    %v7671 = vadd.f32 0.0, %v7670
    %v7672 = vpop.f32.mrf.mxu0
    %7673 = vdwg.mxu0
    %v7674 = vadd.f32 %v6599, %v7671
    %s7675 = sld [smem:[#allocation5 + $0x3]]
    %s7676 = smul.u32 %s7675, 8
    %s7677 = scalar_lea.vmem %s3, %s7676
    %v7678 = vld [vmem:[%s7677] sm:$0xff]
    %s7679 = scalar_lea.vmem %s5, %s7676
    %v7680 = vld [vmem:[%s7679] sm:$0xff]
    %v7681 = vsub.f32 1.0, %v7680
    %7683 = vrot.lane.b32.xlu0 %v7680, 1
    %v7684 = vpop.permute.xlu0 %7683
    %v7686 = vsel %vm177, %v7681, %v7684
    %v7688 = vsel %vm179, %v7686, 0
    %7690 = vmatprep.subr.mxu0 0.0
    %7691 = vmatpush1.msra.mxu0 0.0
    %7692 = vmatprep.subr.mxu0 0.0
    %7693 = vmatpush1.msra.mxu0 0.0
    %7694 = vmatprep.subr.mxu0 0.0
    %7695 = vmatpush1.msra.mxu0 0.0
    %7696 = vmatprep.subr.mxu0 0.0
    %7697 = vmatpush1.msra.mxu0 0.0
    %7698 = vmatprep.subr.mxu0 0.0
    %7699 = vmatpush1.msra.mxu0 0.0
    %7700 = vmatprep.subr.mxu0 0.0
    %7701 = vmatpush1.msra.mxu0 0.0
    %7702 = vmatprep.subr.mxu0 0.0
    %7703 = vmatpush1.msra.mxu0 0.0
    %7704 = vmatprep.subr.mxu0 0.0
    %7705 = vmatpush1.msra.mxu0 0.0
    %7706 = vmatprep.subr.mxu0 0.0
    %7707 = vmatpush1.msra.mxu0 0.0
    %7708 = vmatprep.subr.mxu0 0.0
    %7709 = vmatpush1.msra.mxu0 0.0
    %7710 = vmatprep.subr.mxu0 0.0
    %7711 = vmatpush1.msra.mxu0 0.0
    %7712 = vmatprep.subr.mxu0 0.0
    %7713 = vmatpush1.msra.mxu0 0.0
    %7714 = vmatprep.subr.mxu0 0.0
    %7715 = vmatpush1.msra.mxu0 0.0
    %7716 = vmatprep.subr.mxu0 0.0
    %7717 = vmatpush1.msra.mxu0 0.0
    %7718 = vmatprep.subr.mxu0 0.0
    %7719 = vmatpush1.msra.mxu0 0.0
    %7720 = vmatprep.subr.mxu0 0.0
    %7721 = vmatpush1.msra.mxu0 %v185
    %7722 = vmatprep.subr.mxu0 0.0
    %7723 = vmatpush2.msra.mxu0 0.0
    %7724 = vmatprep.subr.mxu0 0.0
    %7725 = vmatpush2.msra.mxu0 0.0
    %7726 = vmatprep.subr.mxu0 0.0
    %7727 = vmatpush2.msra.mxu0 0.0
    %7728 = vmatprep.subr.mxu0 0.0
    %7729 = vmatpush2.msra.mxu0 0.0
    %7730 = vmatprep.subr.mxu0 0.0
    %7731 = vmatpush2.msra.mxu0 0.0
    %7732 = vmatprep.subr.mxu0 0.0
    %7733 = vmatpush2.msra.mxu0 0.0
    %7734 = vmatprep.subr.mxu0 0.0
    %7735 = vmatpush2.msra.mxu0 0.0
    %7736 = vmatprep.subr.mxu0 0.0
    %7737 = vmatpush2.msra.mxu0 0.0
    %7738 = vmatprep.subr.mxu0 0.0
    %7739 = vmatpush2.msra.mxu0 0.0
    %7740 = vmatprep.subr.mxu0 0.0
    %7741 = vmatpush2.msra.mxu0 0.0
    %7742 = vmatprep.subr.mxu0 0.0
    %7743 = vmatpush2.msra.mxu0 0.0
    %7744 = vmatprep.subr.mxu0 0.0
    %7745 = vmatpush2.msra.mxu0 0.0
    %7746 = vmatprep.subr.mxu0 0.0
    %7747 = vmatpush2.msra.mxu0 0.0
    %7748 = vmatprep.subr.mxu0 0.0
    %7749 = vmatpush2.msra.mxu0 0.0
    %7750 = vmatprep.subr.mxu0 0.0
    %7751 = vmatpush2.msra.mxu0 0.0
    %7752 = vmatprep.subr.mxu0 0.0
    %7753 = vmatpush2.msra.mxu0 0.0
    %7754 = vmatprep.mubr.f32.mxu0 0.0
    %7755 = vmatmul.mubr.f32.gmra.mxu0 %v7688
    %v7756 = vpop.f32.mrf.mxu0
    %v7757 = vadd.f32 0.0, %v7756
    %v7758 = vpop.f32.mrf.mxu0
    %7759 = vdwg.mxu0
    %v7761 = vlaneseq
    %v7762 = vshrl.u32 %v7761, 7
    %v7763 = vsub.s32 0, %v7762
    %v7764 = vrot.slane %v4322, %v7763
    %v7766 = vsub.f32 %v4322, %v162
    %v7768 = vlaneseq
    %v7769 = vshrl.u32 %v7768, 7
    %v7770 = vsub.s32 0, %v7769
    %v7771 = vrot.slane %v7766, %v7770
    %7772 = vrot.lane.b32.xlu0 %v7771, 2
    %v7773 = vpop.permute.xlu0 %7772
    %7776 = vrot.lane.b32.xlu0 %v7678, 4
    %v7777 = vpop.permute.xlu0 %7776
    %7780 = vrot.lane.b32.xlu0 %v7757, 6
    %v7781 = vpop.permute.xlu0 %7780
    %v7783 = vsel %vm179, %v7764, %v7773
    %v7784 = vsel %vm281, %v7783, %v7777
    %v7785 = vsel %vm283, %v7784, %v7781
    %v7787 = vsel %vm291, %v7785, 0
    %7789 = vmatprep.subr.mxu0 0.0
    %7790 = vmatpush1.msra.mxu0 0.0
    %7791 = vmatprep.subr.mxu0 0.0
    %7792 = vmatpush1.msra.mxu0 0.0
    %7793 = vmatprep.subr.mxu0 0.0
    %7794 = vmatpush1.msra.mxu0 0.0
    %7795 = vmatprep.subr.mxu0 0.0
    %7796 = vmatpush1.msra.mxu0 0.0
    %7797 = vmatprep.subr.mxu0 0.0
    %7798 = vmatpush1.msra.mxu0 0.0
    %7799 = vmatprep.subr.mxu0 0.0
    %7800 = vmatpush1.msra.mxu0 0.0
    %7801 = vmatprep.subr.mxu0 0.0
    %7802 = vmatpush1.msra.mxu0 0.0
    %7803 = vmatprep.subr.mxu0 0.0
    %7804 = vmatpush1.msra.mxu0 0.0
    %7805 = vmatprep.subr.mxu0 0.0
    %7806 = vmatpush1.msra.mxu0 0.0
    %7807 = vmatprep.subr.mxu0 0.0
    %7808 = vmatpush1.msra.mxu0 0.0
    %7809 = vmatprep.subr.mxu0 0.0
    %7810 = vmatpush1.msra.mxu0 0.0
    %7811 = vmatprep.subr.mxu0 0.0
    %7812 = vmatpush1.msra.mxu0 0.0
    %7813 = vmatprep.subr.mxu0 0.0
    %7814 = vmatpush1.msra.mxu0 0.0
    %7815 = vmatprep.subr.mxu0 0.0
    %7816 = vmatpush1.msra.mxu0 0.0
    %7817 = vmatprep.subr.mxu0 0.0
    %7818 = vmatpush1.msra.mxu0 0.0
    %7819 = vmatprep.subr.mxu0 0.0
    %7820 = vmatpush1.msra.mxu0 %v140
    %7821 = vmatprep.subr.mxu0 0.0
    %7822 = vmatpush2.msra.mxu0 0.0
    %7823 = vmatprep.subr.mxu0 0.0
    %7824 = vmatpush2.msra.mxu0 0.0
    %7825 = vmatprep.subr.mxu0 0.0
    %7826 = vmatpush2.msra.mxu0 0.0
    %7827 = vmatprep.subr.mxu0 0.0
    %7828 = vmatpush2.msra.mxu0 0.0
    %7829 = vmatprep.subr.mxu0 0.0
    %7830 = vmatpush2.msra.mxu0 0.0
    %7831 = vmatprep.subr.mxu0 0.0
    %7832 = vmatpush2.msra.mxu0 0.0
    %7833 = vmatprep.subr.mxu0 0.0
    %7834 = vmatpush2.msra.mxu0 0.0
    %7835 = vmatprep.subr.mxu0 0.0
    %7836 = vmatpush2.msra.mxu0 0.0
    %7837 = vmatprep.subr.mxu0 0.0
    %7838 = vmatpush2.msra.mxu0 0.0
    %7839 = vmatprep.subr.mxu0 0.0
    %7840 = vmatpush2.msra.mxu0 0.0
    %7841 = vmatprep.subr.mxu0 0.0
    %7842 = vmatpush2.msra.mxu0 0.0
    %7843 = vmatprep.subr.mxu0 0.0
    %7844 = vmatpush2.msra.mxu0 0.0
    %7845 = vmatprep.subr.mxu0 0.0
    %7846 = vmatpush2.msra.mxu0 0.0
    %7847 = vmatprep.subr.mxu0 0.0
    %7848 = vmatpush2.msra.mxu0 0.0
    %7849 = vmatprep.subr.mxu0 0.0
    %7850 = vmatpush2.msra.mxu0 0.0
    %7851 = vmatprep.subr.mxu0 0.0
    %7852 = vmatpush2.msra.mxu0 0.0
    %7853 = vmatprep.mubr.f32.mxu0 0.0
    %7854 = vmatmul.mubr.f32.gmra.mxu0 %v7787
    %v7855 = vpop.f32.mrf.mxu0
    %v7856 = vadd.f32 %v289, %v7855
    %v7857 = vpop.f32.mrf.mxu0
    %7858 = vdwg.mxu0
    %vm7859 = vcmp.gt.f32.partialorder %v7856, 0.0
    %v7860 = vsel %vm7859, 1.0, 0.2
    %v7861 = vmul.f32 %v7856, %v7860
    %v7863 = vsel %vm374, %v7861, 0
    %7865 = vmatprep.subr.mxu0 0.0
    %7866 = vmatpush1.msra.mxu0 0.0
    %7867 = vmatprep.subr.mxu0 0.0
    %7868 = vmatpush1.msra.mxu0 0.0
    %7869 = vmatprep.subr.mxu0 0.0
    %7870 = vmatpush1.msra.mxu0 0.0
    %7871 = vmatprep.subr.mxu0 0.0
    %7872 = vmatpush1.msra.mxu0 0.0
    %7873 = vmatprep.subr.mxu0 0.0
    %7874 = vmatpush1.msra.mxu0 0.0
    %7875 = vmatprep.subr.mxu0 0.0
    %7876 = vmatpush1.msra.mxu0 0.0
    %7877 = vmatprep.subr.mxu0 0.0
    %7878 = vmatpush1.msra.mxu0 0.0
    %7879 = vmatprep.subr.mxu0 0.0
    %7880 = vmatpush1.msra.mxu0 0.0
    %7881 = vmatprep.subr.mxu0 0.0
    %7882 = vmatpush1.msra.mxu0 0.0
    %7883 = vmatprep.subr.mxu0 0.0
    %7884 = vmatpush1.msra.mxu0 0.0
    %7885 = vmatprep.subr.mxu0 0.0
    %7886 = vmatpush1.msra.mxu0 0.0
    %7887 = vmatprep.subr.mxu0 0.0
    %7888 = vmatpush1.msra.mxu0 0.0
    %7889 = vmatprep.subr.mxu0 0.0
    %7890 = vmatpush1.msra.mxu0 %v145
    %7891 = vmatprep.subr.mxu0 0.0
    %7892 = vmatpush1.msra.mxu0 %v144
    %7893 = vmatprep.subr.mxu0 0.0
    %7894 = vmatpush1.msra.mxu0 %v143
    %7895 = vmatprep.subr.mxu0 0.0
    %7896 = vmatpush1.msra.mxu0 %v142
    %7897 = vmatprep.subr.mxu0 0.0
    %7898 = vmatpush2.msra.mxu0 0.0
    %7899 = vmatprep.subr.mxu0 0.0
    %7900 = vmatpush2.msra.mxu0 0.0
    %7901 = vmatprep.subr.mxu0 0.0
    %7902 = vmatpush2.msra.mxu0 0.0
    %7903 = vmatprep.subr.mxu0 0.0
    %7904 = vmatpush2.msra.mxu0 0.0
    %7905 = vmatprep.subr.mxu0 0.0
    %7906 = vmatpush2.msra.mxu0 0.0
    %7907 = vmatprep.subr.mxu0 0.0
    %7908 = vmatpush2.msra.mxu0 0.0
    %7909 = vmatprep.subr.mxu0 0.0
    %7910 = vmatpush2.msra.mxu0 0.0
    %7911 = vmatprep.subr.mxu0 0.0
    %7912 = vmatpush2.msra.mxu0 0.0
    %7913 = vmatprep.subr.mxu0 0.0
    %7914 = vmatpush2.msra.mxu0 0.0
    %7915 = vmatprep.subr.mxu0 0.0
    %7916 = vmatpush2.msra.mxu0 0.0
    %7917 = vmatprep.subr.mxu0 0.0
    %7918 = vmatpush2.msra.mxu0 0.0
    %7919 = vmatprep.subr.mxu0 0.0
    %7920 = vmatpush2.msra.mxu0 0.0
    %7921 = vmatprep.subr.mxu0 0.0
    %7922 = vmatpush2.msra.mxu0 0.0
    %7923 = vmatprep.subr.mxu0 0.0
    %7924 = vmatpush2.msra.mxu0 0.0
    %7925 = vmatprep.subr.mxu0 0.0
    %7926 = vmatpush2.msra.mxu0 0.0
    %7927 = vmatprep.subr.mxu0 0.0
    %7928 = vmatpush2.msra.mxu0 0.0
    %7929 = vmatprep.mubr.f32.mxu0 0.0
    %7930 = vmatmul.mubr.f32.gmra.mxu0 %v7863
    %v7931 = vpop.f32.mrf.mxu0
    %v7932 = vadd.f32 %v372, %v7931
    %v7933 = vpop.f32.mrf.mxu0
    %7934 = vdwg.mxu0
    %vm7935 = vcmp.gt.f32.partialorder %v7932, 0.0
    %v7936 = vsel %vm7935, 1.0, 0.2
    %v7937 = vmul.f32 %v7932, %v7936
    %v7939 = vsel %vm374, %v7937, 0
    %7941 = vmatprep.subr.mxu0 0.0
    %7942 = vmatpush1.msra.mxu0 0.0
    %7943 = vmatprep.subr.mxu0 0.0
    %7944 = vmatpush1.msra.mxu0 0.0
    %7945 = vmatprep.subr.mxu0 0.0
    %7946 = vmatpush1.msra.mxu0 0.0
    %7947 = vmatprep.subr.mxu0 0.0
    %7948 = vmatpush1.msra.mxu0 0.0
    %7949 = vmatprep.subr.mxu0 0.0
    %7950 = vmatpush1.msra.mxu0 0.0
    %7951 = vmatprep.subr.mxu0 0.0
    %7952 = vmatpush1.msra.mxu0 0.0
    %7953 = vmatprep.subr.mxu0 0.0
    %7954 = vmatpush1.msra.mxu0 0.0
    %7955 = vmatprep.subr.mxu0 0.0
    %7956 = vmatpush1.msra.mxu0 0.0
    %7957 = vmatprep.subr.mxu0 0.0
    %7958 = vmatpush1.msra.mxu0 0.0
    %7959 = vmatprep.subr.mxu0 0.0
    %7960 = vmatpush1.msra.mxu0 0.0
    %7961 = vmatprep.subr.mxu0 0.0
    %7962 = vmatpush1.msra.mxu0 0.0
    %7963 = vmatprep.subr.mxu0 0.0
    %7964 = vmatpush1.msra.mxu0 0.0
    %7965 = vmatprep.subr.mxu0 0.0
    %7966 = vmatpush1.msra.mxu0 %v150
    %7967 = vmatprep.subr.mxu0 0.0
    %7968 = vmatpush1.msra.mxu0 %v149
    %7969 = vmatprep.subr.mxu0 0.0
    %7970 = vmatpush1.msra.mxu0 %v148
    %7971 = vmatprep.subr.mxu0 0.0
    %7972 = vmatpush1.msra.mxu0 %v147
    %7973 = vmatprep.subr.mxu0 0.0
    %7974 = vmatpush2.msra.mxu0 0.0
    %7975 = vmatprep.subr.mxu0 0.0
    %7976 = vmatpush2.msra.mxu0 0.0
    %7977 = vmatprep.subr.mxu0 0.0
    %7978 = vmatpush2.msra.mxu0 0.0
    %7979 = vmatprep.subr.mxu0 0.0
    %7980 = vmatpush2.msra.mxu0 0.0
    %7981 = vmatprep.subr.mxu0 0.0
    %7982 = vmatpush2.msra.mxu0 0.0
    %7983 = vmatprep.subr.mxu0 0.0
    %7984 = vmatpush2.msra.mxu0 0.0
    %7985 = vmatprep.subr.mxu0 0.0
    %7986 = vmatpush2.msra.mxu0 0.0
    %7987 = vmatprep.subr.mxu0 0.0
    %7988 = vmatpush2.msra.mxu0 0.0
    %7989 = vmatprep.subr.mxu0 0.0
    %7990 = vmatpush2.msra.mxu0 0.0
    %7991 = vmatprep.subr.mxu0 0.0
    %7992 = vmatpush2.msra.mxu0 0.0
    %7993 = vmatprep.subr.mxu0 0.0
    %7994 = vmatpush2.msra.mxu0 0.0
    %7995 = vmatprep.subr.mxu0 0.0
    %7996 = vmatpush2.msra.mxu0 0.0
    %7997 = vmatprep.subr.mxu0 0.0
    %7998 = vmatpush2.msra.mxu0 0.0
    %7999 = vmatprep.subr.mxu0 0.0
    %8000 = vmatpush2.msra.mxu0 0.0
    %8001 = vmatprep.subr.mxu0 0.0
    %8002 = vmatpush2.msra.mxu0 0.0
    %8003 = vmatprep.subr.mxu0 0.0
    %8004 = vmatpush2.msra.mxu0 0.0
    %8005 = vmatprep.mubr.f32.mxu0 0.0
    %8006 = vmatmul.mubr.f32.gmra.mxu0 %v7939
    %v8007 = vpop.f32.mrf.mxu0
    %v8008 = vadd.f32 %v455, %v8007
    %v8009 = vpop.f32.mrf.mxu0
    %8010 = vdwg.mxu0
    %v8011 = vld [vmem:[%s35] sm:$0x3]
    %v8012 = vld [vmem:[%s37] sm:$0xf]
    %v8013 = vld [vmem:[%s39] sm:$0x1]
    %v8014 = vld [vmem:[%s41] sm:$0xff]
    %v8015 = vld [vmem:[%s41 + $0x8] sm:$0xff]
    %v8016 = vld [vmem:[%s41 + $0x10] sm:$0xff]
    %v8017 = vld [vmem:[%s41 + $0x18] sm:$0xff]
    %v8018 = vld [vmem:[%s43] sm:$0x1]
    %v8019 = vld [vmem:[#allocation4] sm:$0x1]
    %v8020 = vld [vmem:[%s47] sm:$0xff]
    %v8022 = vsel %vm183, %v8011, 0
    %8024 = vmatprep.subr.mxu0 0.0
    %8025 = vmatpush1.msra.mxu0 0.0
    %8026 = vmatprep.subr.mxu0 0.0
    %8027 = vmatpush1.msra.mxu0 0.0
    %8028 = vmatprep.subr.mxu0 0.0
    %8029 = vmatpush1.msra.mxu0 0.0
    %8030 = vmatprep.subr.mxu0 0.0
    %8031 = vmatpush1.msra.mxu0 0.0
    %8032 = vmatprep.subr.mxu0 0.0
    %8033 = vmatpush1.msra.mxu0 0.0
    %8034 = vmatprep.subr.mxu0 0.0
    %8035 = vmatpush1.msra.mxu0 0.0
    %8036 = vmatprep.subr.mxu0 0.0
    %8037 = vmatpush1.msra.mxu0 0.0
    %8038 = vmatprep.subr.mxu0 0.0
    %8039 = vmatpush1.msra.mxu0 0.0
    %8040 = vmatprep.subr.mxu0 0.0
    %8041 = vmatpush1.msra.mxu0 0.0
    %8042 = vmatprep.subr.mxu0 0.0
    %8043 = vmatpush1.msra.mxu0 0.0
    %8044 = vmatprep.subr.mxu0 0.0
    %8045 = vmatpush1.msra.mxu0 0.0
    %8046 = vmatprep.subr.mxu0 0.0
    %8047 = vmatpush1.msra.mxu0 0.0
    %8048 = vmatprep.subr.mxu0 0.0
    %8049 = vmatpush1.msra.mxu0 0.0
    %8050 = vmatprep.subr.mxu0 0.0
    %8051 = vmatpush1.msra.mxu0 0.0
    %8052 = vmatprep.subr.mxu0 0.0
    %8053 = vmatpush1.msra.mxu0 0.0
    %8054 = vmatprep.subr.mxu0 0.0
    %8055 = vmatpush1.msra.mxu0 %v8022
    %8056 = vmatprep.subr.mxu0 0.0
    %8057 = vmatpush2.msra.mxu0 0.0
    %8058 = vmatprep.subr.mxu0 0.0
    %8059 = vmatpush2.msra.mxu0 0.0
    %8060 = vmatprep.subr.mxu0 0.0
    %8061 = vmatpush2.msra.mxu0 0.0
    %8062 = vmatprep.subr.mxu0 0.0
    %8063 = vmatpush2.msra.mxu0 0.0
    %8064 = vmatprep.subr.mxu0 0.0
    %8065 = vmatpush2.msra.mxu0 0.0
    %8066 = vmatprep.subr.mxu0 0.0
    %8067 = vmatpush2.msra.mxu0 0.0
    %8068 = vmatprep.subr.mxu0 0.0
    %8069 = vmatpush2.msra.mxu0 0.0
    %8070 = vmatprep.subr.mxu0 0.0
    %8071 = vmatpush2.msra.mxu0 0.0
    %8072 = vmatprep.subr.mxu0 0.0
    %8073 = vmatpush2.msra.mxu0 0.0
    %8074 = vmatprep.subr.mxu0 0.0
    %8075 = vmatpush2.msra.mxu0 0.0
    %8076 = vmatprep.subr.mxu0 0.0
    %8077 = vmatpush2.msra.mxu0 0.0
    %8078 = vmatprep.subr.mxu0 0.0
    %8079 = vmatpush2.msra.mxu0 0.0
    %8080 = vmatprep.subr.mxu0 0.0
    %8081 = vmatpush2.msra.mxu0 0.0
    %8082 = vmatprep.subr.mxu0 0.0
    %8083 = vmatpush2.msra.mxu0 0.0
    %8084 = vmatprep.subr.mxu0 0.0
    %8085 = vmatpush2.msra.mxu0 0.0
    %8086 = vmatprep.subr.mxu0 0.0
    %8087 = vmatpush2.msra.mxu0 0.0
    %8088 = vmatprep.mubr.f32.mxu0 0.0
    %8089 = vmatmul.mubr.f32.gmra.mxu0 %v7688
    %v8090 = vpop.f32.mrf.mxu0
    %v8091 = vadd.f32 0.0, %v8090
    %v8092 = vpop.f32.mrf.mxu0
    %8093 = vdwg.mxu0
    %8095 = vrot.lane.b32.xlu0 %v8091, 2
    %v8096 = vpop.permute.xlu0 %8095
    %v8098 = vsel %vm179, %v8008, %v8096
    %v8100 = vlaneseq
    %v8101 = vshrl.u32 %v8100, 7
    %v8102 = vsub.s32 0, %v8101
    %v8103 = vrot.slane %v8013, %v8102
    %v8106 = vsel %vm281, %v8098, 0
    %vm8108 = vcmask 1043456
    %v8110 = vsel %vm8108, %v8012, 0
    %8112 = vmatprep.subr.mxu0 0.0
    %8113 = vmatpush1.msra.mxu0 0.0
    %8114 = vmatprep.subr.mxu0 0.0
    %8115 = vmatpush1.msra.mxu0 0.0
    %8116 = vmatprep.subr.mxu0 0.0
    %8117 = vmatpush1.msra.mxu0 0.0
    %8118 = vmatprep.subr.mxu0 0.0
    %8119 = vmatpush1.msra.mxu0 0.0
    %8120 = vmatprep.subr.mxu0 0.0
    %8121 = vmatpush1.msra.mxu0 0.0
    %8122 = vmatprep.subr.mxu0 0.0
    %8123 = vmatpush1.msra.mxu0 0.0
    %8124 = vmatprep.subr.mxu0 0.0
    %8125 = vmatpush1.msra.mxu0 0.0
    %8126 = vmatprep.subr.mxu0 0.0
    %8127 = vmatpush1.msra.mxu0 0.0
    %8128 = vmatprep.subr.mxu0 0.0
    %8129 = vmatpush1.msra.mxu0 0.0
    %8130 = vmatprep.subr.mxu0 0.0
    %8131 = vmatpush1.msra.mxu0 0.0
    %8132 = vmatprep.subr.mxu0 0.0
    %8133 = vmatpush1.msra.mxu0 0.0
    %8134 = vmatprep.subr.mxu0 0.0
    %8135 = vmatpush1.msra.mxu0 0.0
    %8136 = vmatprep.subr.mxu0 0.0
    %8137 = vmatpush1.msra.mxu0 0.0
    %8138 = vmatprep.subr.mxu0 0.0
    %8139 = vmatpush1.msra.mxu0 0.0
    %8140 = vmatprep.subr.mxu0 0.0
    %8141 = vmatpush1.msra.mxu0 0.0
    %8142 = vmatprep.subr.mxu0 0.0
    %8143 = vmatpush1.msra.mxu0 %v8110
    %8144 = vmatprep.subr.mxu0 0.0
    %8145 = vmatpush2.msra.mxu0 0.0
    %8146 = vmatprep.subr.mxu0 0.0
    %8147 = vmatpush2.msra.mxu0 0.0
    %8148 = vmatprep.subr.mxu0 0.0
    %8149 = vmatpush2.msra.mxu0 0.0
    %8150 = vmatprep.subr.mxu0 0.0
    %8151 = vmatpush2.msra.mxu0 0.0
    %8152 = vmatprep.subr.mxu0 0.0
    %8153 = vmatpush2.msra.mxu0 0.0
    %8154 = vmatprep.subr.mxu0 0.0
    %8155 = vmatpush2.msra.mxu0 0.0
    %8156 = vmatprep.subr.mxu0 0.0
    %8157 = vmatpush2.msra.mxu0 0.0
    %8158 = vmatprep.subr.mxu0 0.0
    %8159 = vmatpush2.msra.mxu0 0.0
    %8160 = vmatprep.subr.mxu0 0.0
    %8161 = vmatpush2.msra.mxu0 0.0
    %8162 = vmatprep.subr.mxu0 0.0
    %8163 = vmatpush2.msra.mxu0 0.0
    %8164 = vmatprep.subr.mxu0 0.0
    %8165 = vmatpush2.msra.mxu0 0.0
    %8166 = vmatprep.subr.mxu0 0.0
    %8167 = vmatpush2.msra.mxu0 0.0
    %8168 = vmatprep.subr.mxu0 0.0
    %8169 = vmatpush2.msra.mxu0 0.0
    %8170 = vmatprep.subr.mxu0 0.0
    %8171 = vmatpush2.msra.mxu0 0.0
    %8172 = vmatprep.subr.mxu0 0.0
    %8173 = vmatpush2.msra.mxu0 0.0
    %8174 = vmatprep.subr.mxu0 0.0
    %8175 = vmatpush2.msra.mxu0 0.0
    %8176 = vmatprep.mubr.f32.mxu0 0.0
    %8177 = vmatmul.mubr.f32.gmra.mxu0 %v8106
    %v8178 = vpop.f32.mrf.mxu0
    %v8179 = vadd.f32 %v8103, %v8178
    %v8180 = vpop.f32.mrf.mxu0
    %8181 = vdwg.mxu0
    %vm8182 = vcmp.gt.f32.partialorder %v8179, 0.0
    %v8183 = vsel %vm8182, 1.0, 0.2
    %v8184 = vmul.f32 %v8179, %v8183
    %v8186 = vlaneseq
    %v8187 = vshrl.u32 %v8186, 7
    %v8188 = vsub.s32 0, %v8187
    %v8189 = vrot.slane %v8018, %v8188
    %v8191 = vmul.f32 %v8184, %v8189
    %v8192 = vsel %vm374, %v8191, 0.0
    %8193 = vadd.xlane.f32.xlu0 %v8192
    %v8194 = vpop.xlane.xlu0 %8193
    %v8196 = vlaneseq
    %v8197 = vshrl.u32 %v8196, 7
    %v8198 = vsub.s32 0, %v8197
    %v8199 = vrot.slane %v8019, %v8198
    %v8201 = vadd.f32 %v8194, %v8199
    %v8202 = vxor.u32 %v8201, 2147483648
    %v8203 = vmul.f32 %v8202, 1.442695
    %v8204 = vpow.pop %v8203
    %v8205 = vadd.f32 %v8204, 1.0
    %v8206 = vrcp.pop %v8205
    %v8207 = vmul.f32 1.0, %v8206
    %v8208 = vsub.f32 0.0, %v8201
    %v8209 = vmax.f32 %v8208, 0.0
    %v8210 = vand.u32 2147483647, %v8208
    %v8211 = vsub.f32 0.0, %v8210
    %v8212 = vmul.f32 %v8211, 1.442695
    %v8213 = vpow.pop %v8212
    %v8214 = vadd.f32 %v8213, 1.0
    %v8215 = vlog2.pop %v8214
    %v8216 = vmul.f32 %v8215, 0.6931472
    %v8217 = vadd.f32 %v8209, %v8216
    %v8218 = vmul.f32 %v8020, %v8217
    %v8219 = vsub.f32 1.0, %v8020
    %v8220 = vmax.f32 %v8201, 0.0
    %v8221 = vand.u32 2147483647, %v8201
    %v8222 = vsub.f32 0.0, %v8221
    %v8223 = vmul.f32 %v8222, 1.442695
    %v8224 = vpow.pop %v8223
    %v8225 = vadd.f32 %v8224, 1.0
    %v8226 = vlog2.pop %v8225
    %v8227 = vmul.f32 %v8226, 0.6931472
    %v8228 = vadd.f32 %v8220, %v8227
    %v8229 = vmul.f32 %v8219, %v8228
    %v8230 = vadd.f32 %v8218, %v8229
    %v8231 = vsel %vm177, %v8230, 0.0
    %v8232 = vrot.slane %v8231, 4
    %v8233 = vadd.f32 %v8231, %v8232
    %v8234 = vrot.slane %v8233, 2
    %v8235 = vadd.f32 %v8233, %v8234
    %v8236 = vrot.slane %v8235, 1
    %v8237 = vadd.f32 %v8235, %v8236
    %v8238 = vmul.f32 %v8237, 0.125
    %v8239 = vsub.f32 %v8207, %v8020
    %v8240 = vmul.f32 %v8239, 0.125
    %8242 = vset.pattern.permute.xlu0 0
    %8243 = vperm.xlu0 %8242, %v8240
    %v8244 = vpop.permute.xlu0 %8243
    %v8246 = vmul.f32 %v8244, %v8189
    %v8247 = vmul.f32 %v8183, %v8246
    %v8249 = vsel %vm374, %v8247, 0
    %8251 = vmatprep.subr.mxu0 0.0
    %8252 = vmatpush1.msra.mxu0 0.0
    %8253 = vmatprep.subr.mxu0 0.0
    %8254 = vmatpush1.msra.mxu0 0.0
    %8255 = vmatprep.subr.mxu0 0.0
    %8256 = vmatpush1.msra.mxu0 0.0
    %8257 = vmatprep.subr.mxu0 0.0
    %8258 = vmatpush1.msra.mxu0 0.0
    %8259 = vmatprep.subr.mxu0 0.0
    %8260 = vmatpush1.msra.mxu0 0.0
    %8261 = vmatprep.subr.mxu0 0.0
    %8262 = vmatpush1.msra.mxu0 0.0
    %8263 = vmatprep.subr.mxu0 0.0
    %8264 = vmatpush1.msra.mxu0 0.0
    %8265 = vmatprep.subr.mxu0 0.0
    %8266 = vmatpush1.msra.mxu0 0.0
    %8267 = vmatprep.subr.mxu0 0.0
    %8268 = vmatpush1.msra.mxu0 0.0
    %8269 = vmatprep.subr.mxu0 0.0
    %8270 = vmatpush1.msra.mxu0 0.0
    %8271 = vmatprep.subr.mxu0 0.0
    %8272 = vmatpush1.msra.mxu0 0.0
    %8273 = vmatprep.subr.mxu0 0.0
    %8274 = vmatpush1.msra.mxu0 0.0
    %8275 = vmatprep.subr.mxu0 0.0
    %8276 = vmatpush1.msra.mxu0 %v8017
    %8277 = vmatprep.subr.mxu0 0.0
    %8278 = vmatpush1.msra.mxu0 %v8016
    %8279 = vmatprep.subr.mxu0 0.0
    %8280 = vmatpush1.msra.mxu0 %v8015
    %8281 = vmatprep.subr.mxu0 0.0
    %8282 = vmatpush1.msra.mxu0 %v8014
    %8283 = vmatprep.subr.mxu0 0.0
    %8284 = vmatpush2.msra.mxu0 0.0
    %8285 = vmatprep.subr.mxu0 0.0
    %8286 = vmatpush2.msra.mxu0 0.0
    %8287 = vmatprep.subr.mxu0 0.0
    %8288 = vmatpush2.msra.mxu0 0.0
    %8289 = vmatprep.subr.mxu0 0.0
    %8290 = vmatpush2.msra.mxu0 0.0
    %8291 = vmatprep.subr.mxu0 0.0
    %8292 = vmatpush2.msra.mxu0 0.0
    %8293 = vmatprep.subr.mxu0 0.0
    %8294 = vmatpush2.msra.mxu0 0.0
    %8295 = vmatprep.subr.mxu0 0.0
    %8296 = vmatpush2.msra.mxu0 0.0
    %8297 = vmatprep.subr.mxu0 0.0
    %8298 = vmatpush2.msra.mxu0 0.0
    %8299 = vmatprep.subr.mxu0 0.0
    %8300 = vmatpush2.msra.mxu0 0.0
    %8301 = vmatprep.subr.mxu0 0.0
    %8302 = vmatpush2.msra.mxu0 0.0
    %8303 = vmatprep.subr.mxu0 0.0
    %8304 = vmatpush2.msra.mxu0 0.0
    %8305 = vmatprep.subr.mxu0 0.0
    %8306 = vmatpush2.msra.mxu0 0.0
    %8307 = vmatprep.subr.mxu0 0.0
    %8308 = vmatpush2.msra.mxu0 0.0
    %8309 = vmatprep.subr.mxu0 0.0
    %8310 = vmatpush2.msra.mxu0 0.0
    %8311 = vmatprep.subr.mxu0 0.0
    %8312 = vmatpush2.msra.mxu0 0.0
    %8313 = vmatprep.subr.mxu0 0.0
    %8314 = vmatpush2.msra.mxu0 0.0
    %8315 = vmatprep.mubr.f32.mxu0 0.0
    %8316 = vmatmul.mubr.f32.gmra.mxu0 %v8249
    %v8317 = vpop.f32.mrf.mxu0
    %v8318 = vadd.f32 0.0, %v8317
    %v8319 = vpop.f32.mrf.mxu0
    %8320 = vdwg.mxu0
    %v8322 = vsel %vm179, %v8318, 0
    %8324 = vmatprep.subr.mxu0 0.0
    %8325 = vmatpush1.msra.mxu0 0.0
    %8326 = vmatprep.subr.mxu0 0.0
    %8327 = vmatpush1.msra.mxu0 0.0
    %8328 = vmatprep.subr.mxu0 0.0
    %8329 = vmatpush1.msra.mxu0 0.0
    %8330 = vmatprep.subr.mxu0 0.0
    %8331 = vmatpush1.msra.mxu0 0.0
    %8332 = vmatprep.subr.mxu0 0.0
    %8333 = vmatpush1.msra.mxu0 0.0
    %8334 = vmatprep.subr.mxu0 0.0
    %8335 = vmatpush1.msra.mxu0 0.0
    %8336 = vmatprep.subr.mxu0 0.0
    %8337 = vmatpush1.msra.mxu0 0.0
    %8338 = vmatprep.subr.mxu0 0.0
    %8339 = vmatpush1.msra.mxu0 0.0
    %8340 = vmatprep.subr.mxu0 0.0
    %8341 = vmatpush1.msra.mxu0 0.0
    %8342 = vmatprep.subr.mxu0 0.0
    %8343 = vmatpush1.msra.mxu0 0.0
    %8344 = vmatprep.subr.mxu0 0.0
    %8345 = vmatpush1.msra.mxu0 0.0
    %8346 = vmatprep.subr.mxu0 0.0
    %8347 = vmatpush1.msra.mxu0 0.0
    %8348 = vmatprep.subr.mxu0 0.0
    %8349 = vmatpush1.msra.mxu0 0.0
    %8350 = vmatprep.subr.mxu0 0.0
    %8351 = vmatpush1.msra.mxu0 0.0
    %8352 = vmatprep.subr.mxu0 0.0
    %8353 = vmatpush1.msra.mxu0 0.0
    %8354 = vmatprep.subr.mxu0 0.0
    %8355 = vmatpush1.msra.mxu0 %v559
    %8356 = vmatprep.subr.mxu0 0.0
    %8357 = vmatpush2.msra.mxu0 0.0
    %8358 = vmatprep.subr.mxu0 0.0
    %8359 = vmatpush2.msra.mxu0 0.0
    %8360 = vmatprep.subr.mxu0 0.0
    %8361 = vmatpush2.msra.mxu0 0.0
    %8362 = vmatprep.subr.mxu0 0.0
    %8363 = vmatpush2.msra.mxu0 0.0
    %8364 = vmatprep.subr.mxu0 0.0
    %8365 = vmatpush2.msra.mxu0 0.0
    %8366 = vmatprep.subr.mxu0 0.0
    %8367 = vmatpush2.msra.mxu0 0.0
    %8368 = vmatprep.subr.mxu0 0.0
    %8369 = vmatpush2.msra.mxu0 0.0
    %8370 = vmatprep.subr.mxu0 0.0
    %8371 = vmatpush2.msra.mxu0 0.0
    %8372 = vmatprep.subr.mxu0 0.0
    %8373 = vmatpush2.msra.mxu0 0.0
    %8374 = vmatprep.subr.mxu0 0.0
    %8375 = vmatpush2.msra.mxu0 0.0
    %8376 = vmatprep.subr.mxu0 0.0
    %8377 = vmatpush2.msra.mxu0 0.0
    %8378 = vmatprep.subr.mxu0 0.0
    %8379 = vmatpush2.msra.mxu0 0.0
    %8380 = vmatprep.subr.mxu0 0.0
    %8381 = vmatpush2.msra.mxu0 0.0
    %8382 = vmatprep.subr.mxu0 0.0
    %8383 = vmatpush2.msra.mxu0 0.0
    %8384 = vmatprep.subr.mxu0 0.0
    %8385 = vmatpush2.msra.mxu0 0.0
    %8386 = vmatprep.subr.mxu0 0.0
    %8387 = vmatpush2.msra.mxu0 0.0
    %8388 = vmatprep.mubr.f32.mxu0 0.0
    %8389 = vmatmul.mubr.f32.gmra.mxu0 %v8322
    %v8390 = vpop.f32.mrf.mxu0
    %v8391 = vadd.f32 0.0, %v8390
    %v8392 = vpop.f32.mrf.mxu0
    %8393 = vdwg.mxu0
    %v8394 = vmul.f32 %v7936, %v8391
    %v8396 = vsel %vm374, %v8394, 0
    %8398 = vmatprep.subr.mxu0 0.0
    %8399 = vmatpush1.msra.mxu0 0.0
    %8400 = vmatprep.subr.mxu0 0.0
    %8401 = vmatpush1.msra.mxu0 0.0
    %8402 = vmatprep.subr.mxu0 0.0
    %8403 = vmatpush1.msra.mxu0 0.0
    %8404 = vmatprep.subr.mxu0 0.0
    %8405 = vmatpush1.msra.mxu0 0.0
    %8406 = vmatprep.subr.mxu0 0.0
    %8407 = vmatpush1.msra.mxu0 0.0
    %8408 = vmatprep.subr.mxu0 0.0
    %8409 = vmatpush1.msra.mxu0 0.0
    %8410 = vmatprep.subr.mxu0 0.0
    %8411 = vmatpush1.msra.mxu0 0.0
    %8412 = vmatprep.subr.mxu0 0.0
    %8413 = vmatpush1.msra.mxu0 0.0
    %8414 = vmatprep.subr.mxu0 0.0
    %8415 = vmatpush1.msra.mxu0 0.0
    %8416 = vmatprep.subr.mxu0 0.0
    %8417 = vmatpush1.msra.mxu0 0.0
    %8418 = vmatprep.subr.mxu0 0.0
    %8419 = vmatpush1.msra.mxu0 0.0
    %8420 = vmatprep.subr.mxu0 0.0
    %8421 = vmatpush1.msra.mxu0 0.0
    %8422 = vmatprep.subr.mxu0 0.0
    %8423 = vmatpush1.msra.mxu0 %v159
    %8424 = vmatprep.subr.mxu0 0.0
    %8425 = vmatpush1.msra.mxu0 %v158
    %8426 = vmatprep.subr.mxu0 0.0
    %8427 = vmatpush1.msra.mxu0 %v157
    %8428 = vmatprep.subr.mxu0 0.0
    %8429 = vmatpush1.msra.mxu0 %v156
    %8430 = vmatprep.subr.mxu0 0.0
    %8431 = vmatpush2.msra.mxu0 0.0
    %8432 = vmatprep.subr.mxu0 0.0
    %8433 = vmatpush2.msra.mxu0 0.0
    %8434 = vmatprep.subr.mxu0 0.0
    %8435 = vmatpush2.msra.mxu0 0.0
    %8436 = vmatprep.subr.mxu0 0.0
    %8437 = vmatpush2.msra.mxu0 0.0
    %8438 = vmatprep.subr.mxu0 0.0
    %8439 = vmatpush2.msra.mxu0 0.0
    %8440 = vmatprep.subr.mxu0 0.0
    %8441 = vmatpush2.msra.mxu0 0.0
    %8442 = vmatprep.subr.mxu0 0.0
    %8443 = vmatpush2.msra.mxu0 0.0
    %8444 = vmatprep.subr.mxu0 0.0
    %8445 = vmatpush2.msra.mxu0 0.0
    %8446 = vmatprep.subr.mxu0 0.0
    %8447 = vmatpush2.msra.mxu0 0.0
    %8448 = vmatprep.subr.mxu0 0.0
    %8449 = vmatpush2.msra.mxu0 0.0
    %8450 = vmatprep.subr.mxu0 0.0
    %8451 = vmatpush2.msra.mxu0 0.0
    %8452 = vmatprep.subr.mxu0 0.0
    %8453 = vmatpush2.msra.mxu0 0.0
    %8454 = vmatprep.subr.mxu0 0.0
    %8455 = vmatpush2.msra.mxu0 0.0
    %8456 = vmatprep.subr.mxu0 0.0
    %8457 = vmatpush2.msra.mxu0 0.0
    %8458 = vmatprep.subr.mxu0 0.0
    %8459 = vmatpush2.msra.mxu0 0.0
    %8460 = vmatprep.subr.mxu0 0.0
    %8461 = vmatpush2.msra.mxu0 0.0
    %8462 = vmatprep.mubr.f32.mxu0 0.0
    %8463 = vmatmul.mubr.f32.gmra.mxu0 %v8396
    %v8464 = vpop.f32.mrf.mxu0
    %v8465 = vadd.f32 0.0, %v8464
    %v8466 = vpop.f32.mrf.mxu0
    %8467 = vdwg.mxu0
    %v8468 = vmul.f32 %v7860, %v8465
    %v8470 = vsel %vm374, %v8468, 0
    %8472 = vmatprep.subr.mxu0 0.0
    %8473 = vmatpush1.msra.mxu0 0.0
    %8474 = vmatprep.subr.mxu0 0.0
    %8475 = vmatpush1.msra.mxu0 0.0
    %8476 = vmatprep.subr.mxu0 0.0
    %8477 = vmatpush1.msra.mxu0 0.0
    %8478 = vmatprep.subr.mxu0 0.0
    %8479 = vmatpush1.msra.mxu0 0.0
    %8480 = vmatprep.subr.mxu0 0.0
    %8481 = vmatpush1.msra.mxu0 0.0
    %8482 = vmatprep.subr.mxu0 0.0
    %8483 = vmatpush1.msra.mxu0 0.0
    %8484 = vmatprep.subr.mxu0 0.0
    %8485 = vmatpush1.msra.mxu0 0.0
    %8486 = vmatprep.subr.mxu0 0.0
    %8487 = vmatpush1.msra.mxu0 0.0
    %8488 = vmatprep.subr.mxu0 0.0
    %8489 = vmatpush1.msra.mxu0 0.0
    %8490 = vmatprep.subr.mxu0 0.0
    %8491 = vmatpush1.msra.mxu0 0.0
    %8492 = vmatprep.subr.mxu0 0.0
    %8493 = vmatpush1.msra.mxu0 0.0
    %8494 = vmatprep.subr.mxu0 0.0
    %8495 = vmatpush1.msra.mxu0 0.0
    %8496 = vmatprep.subr.mxu0 0.0
    %8497 = vmatpush1.msra.mxu0 %v155
    %8498 = vmatprep.subr.mxu0 0.0
    %8499 = vmatpush1.msra.mxu0 %v154
    %8500 = vmatprep.subr.mxu0 0.0
    %8501 = vmatpush1.msra.mxu0 %v153
    %8502 = vmatprep.subr.mxu0 0.0
    %8503 = vmatpush1.msra.mxu0 %v152
    %8504 = vmatprep.subr.mxu0 0.0
    %8505 = vmatpush2.msra.mxu0 0.0
    %8506 = vmatprep.subr.mxu0 0.0
    %8507 = vmatpush2.msra.mxu0 0.0
    %8508 = vmatprep.subr.mxu0 0.0
    %8509 = vmatpush2.msra.mxu0 0.0
    %8510 = vmatprep.subr.mxu0 0.0
    %8511 = vmatpush2.msra.mxu0 0.0
    %8512 = vmatprep.subr.mxu0 0.0
    %8513 = vmatpush2.msra.mxu0 0.0
    %8514 = vmatprep.subr.mxu0 0.0
    %8515 = vmatpush2.msra.mxu0 0.0
    %8516 = vmatprep.subr.mxu0 0.0
    %8517 = vmatpush2.msra.mxu0 0.0
    %8518 = vmatprep.subr.mxu0 0.0
    %8519 = vmatpush2.msra.mxu0 0.0
    %8520 = vmatprep.subr.mxu0 0.0
    %8521 = vmatpush2.msra.mxu0 0.0
    %8522 = vmatprep.subr.mxu0 0.0
    %8523 = vmatpush2.msra.mxu0 0.0
    %8524 = vmatprep.subr.mxu0 0.0
    %8525 = vmatpush2.msra.mxu0 0.0
    %8526 = vmatprep.subr.mxu0 0.0
    %8527 = vmatpush2.msra.mxu0 0.0
    %8528 = vmatprep.subr.mxu0 0.0
    %8529 = vmatpush2.msra.mxu0 0.0
    %8530 = vmatprep.subr.mxu0 0.0
    %8531 = vmatpush2.msra.mxu0 0.0
    %8532 = vmatprep.subr.mxu0 0.0
    %8533 = vmatpush2.msra.mxu0 0.0
    %8534 = vmatprep.subr.mxu0 0.0
    %8535 = vmatpush2.msra.mxu0 0.0
    %8536 = vmatprep.mubr.f32.mxu0 0.0
    %8537 = vmatmul.mubr.f32.gmra.mxu0 %v8470
    %v8538 = vpop.f32.mrf.mxu0
    %v8539 = vadd.f32 0.0, %v8538
    %v8540 = vpop.f32.mrf.mxu0
    %8541 = vdwg.mxu0
    %8542 = vxpose.xlu0.b32.start [1/16] %v7937, 128
    %8543 = vxpose.xlu0.b32.cont [2/16] 0.0, 128
    %8544 = vxpose.xlu0.b32.cont [3/16] 0.0, 128
    %8545 = vxpose.xlu0.b32.cont [4/16] 0.0, 128
    %8546 = vxpose.xlu0.b32.cont [5/16] 0.0, 128
    %8547 = vxpose.xlu0.b32.cont [6/16] 0.0, 128
    %8548 = vxpose.xlu0.b32.cont [7/16] 0.0, 128
    %8549 = vxpose.xlu0.b32.cont [8/16] 0.0, 128
    %8550 = vxpose.xlu0.b32.cont [9/16] 0.0, 128
    %8551 = vxpose.xlu0.b32.cont [10/16] 0.0, 128
    %8552 = vxpose.xlu0.b32.cont [11/16] 0.0, 128
    %8553 = vxpose.xlu0.b32.cont [12/16] 0.0, 128
    %8554 = vxpose.xlu0.b32.cont [13/16] 0.0, 128
    %8555 = vxpose.xlu0.b32.cont [14/16] 0.0, 128
    %8556 = vxpose.xlu0.b32.cont [15/16] 0.0, 128
    %8557 = vxpose.xlu0.b32.end [16/16] 0.0, 128
    %v8558 = vpop.trf.xlu0
    %v8559 = vpop.trf.xlu0
    %v8560 = vpop.trf.xlu0
    %v8561 = vpop.trf.xlu0
    %v8562 = vpop.trf.xlu0
    %v8563 = vpop.trf.xlu0
    %v8564 = vpop.trf.xlu0
    %v8565 = vpop.trf.xlu0
    %v8566 = vpop.trf.xlu0
    %v8567 = vpop.trf.xlu0
    %v8568 = vpop.trf.xlu0
    %v8569 = vpop.trf.xlu0
    %v8570 = vpop.trf.xlu0
    %v8571 = vpop.trf.xlu0
    %v8572 = vpop.trf.xlu0
    %v8573 = vpop.trf.xlu0
    %v8575 = vsel %vm291, %v8558, 0
    %v8578 = vsel %vm291, %v8559, 0
    %v8581 = vsel %vm291, %v8560, 0
    %v8584 = vsel %vm291, %v8561, 0
    %8586 = vmatprep.subr.mxu0 0.0
    %8587 = vmatpush1.msra.mxu0 0.0
    %8588 = vmatprep.subr.mxu0 0.0
    %8589 = vmatpush1.msra.mxu0 0.0
    %8590 = vmatprep.subr.mxu0 0.0
    %8591 = vmatpush1.msra.mxu0 0.0
    %8592 = vmatprep.subr.mxu0 0.0
    %8593 = vmatpush1.msra.mxu0 0.0
    %8594 = vmatprep.subr.mxu0 0.0
    %8595 = vmatpush1.msra.mxu0 0.0
    %8596 = vmatprep.subr.mxu0 0.0
    %8597 = vmatpush1.msra.mxu0 0.0
    %8598 = vmatprep.subr.mxu0 0.0
    %8599 = vmatpush1.msra.mxu0 0.0
    %8600 = vmatprep.subr.mxu0 0.0
    %8601 = vmatpush1.msra.mxu0 0.0
    %8602 = vmatprep.subr.mxu0 0.0
    %8603 = vmatpush1.msra.mxu0 0.0
    %8604 = vmatprep.subr.mxu0 0.0
    %8605 = vmatpush1.msra.mxu0 0.0
    %8606 = vmatprep.subr.mxu0 0.0
    %8607 = vmatpush1.msra.mxu0 0.0
    %8608 = vmatprep.subr.mxu0 0.0
    %8609 = vmatpush1.msra.mxu0 0.0
    %8610 = vmatprep.subr.mxu0 0.0
    %8611 = vmatpush1.msra.mxu0 0.0
    %8612 = vmatprep.subr.mxu0 0.0
    %8613 = vmatpush1.msra.mxu0 0.0
    %8614 = vmatprep.subr.mxu0 0.0
    %8615 = vmatpush1.msra.mxu0 0.0
    %8616 = vmatprep.subr.mxu0 0.0
    %8617 = vmatpush1.msra.mxu0 %v8318
    %8618 = vmatprep.subr.mxu0 0.0
    %8619 = vmatpush2.msra.mxu0 0.0
    %8620 = vmatprep.subr.mxu0 0.0
    %8621 = vmatpush2.msra.mxu0 0.0
    %8622 = vmatprep.subr.mxu0 0.0
    %8623 = vmatpush2.msra.mxu0 0.0
    %8624 = vmatprep.subr.mxu0 0.0
    %8625 = vmatpush2.msra.mxu0 0.0
    %8626 = vmatprep.subr.mxu0 0.0
    %8627 = vmatpush2.msra.mxu0 0.0
    %8628 = vmatprep.subr.mxu0 0.0
    %8629 = vmatpush2.msra.mxu0 0.0
    %8630 = vmatprep.subr.mxu0 0.0
    %8631 = vmatpush2.msra.mxu0 0.0
    %8632 = vmatprep.subr.mxu0 0.0
    %8633 = vmatpush2.msra.mxu0 0.0
    %8634 = vmatprep.subr.mxu0 0.0
    %8635 = vmatpush2.msra.mxu0 0.0
    %8636 = vmatprep.subr.mxu0 0.0
    %8637 = vmatpush2.msra.mxu0 0.0
    %8638 = vmatprep.subr.mxu0 0.0
    %8639 = vmatpush2.msra.mxu0 0.0
    %8640 = vmatprep.subr.mxu0 0.0
    %8641 = vmatpush2.msra.mxu0 0.0
    %8642 = vmatprep.subr.mxu0 0.0
    %8643 = vmatpush2.msra.mxu0 0.0
    %8644 = vmatprep.subr.mxu0 0.0
    %8645 = vmatpush2.msra.mxu0 0.0
    %8646 = vmatprep.subr.mxu0 0.0
    %8647 = vmatpush2.msra.mxu0 0.0
    %8648 = vmatprep.subr.mxu0 0.0
    %8649 = vmatpush2.msra.mxu0 0.0
    %8650 = vmatprep.mubr.f32.mxu0 0.0
    %8651 = vmatmul.mubr.f32.gmra.mxu0 %v8575
    %v8652 = vpop.f32.mrf.mxu0
    %v8653 = vadd.f32 0.0, %v8652
    %v8654 = vpop.f32.mrf.mxu0
    %8655 = vmatprep.mubr.f32.mxu0 0.0
    %8656 = vmatmul.mubr.f32.gmra.mxu0 %v8578
    %v8657 = vpop.f32.mrf.mxu0
    %v8658 = vadd.f32 0.0, %v8657
    %v8659 = vpop.f32.mrf.mxu0
    %8660 = vmatprep.mubr.f32.mxu0 0.0
    %8661 = vmatmul.mubr.f32.gmra.mxu0 %v8581
    %v8662 = vpop.f32.mrf.mxu0
    %v8663 = vadd.f32 0.0, %v8662
    %v8664 = vpop.f32.mrf.mxu0
    %8665 = vmatprep.mubr.f32.mxu0 0.0
    %8666 = vmatmul.mubr.f32.gmra.mxu0 %v8584
    %v8667 = vpop.f32.mrf.mxu0
    %v8668 = vadd.f32 0.0, %v8667
    %v8669 = vpop.f32.mrf.mxu0
    %8670 = vdwg.mxu0
    %v8671 = vadd.f32 %v7208, %v8653
    %v8672 = vadd.f32 %v7209, %v8658
    %v8673 = vadd.f32 %v7210, %v8663
    %v8674 = vadd.f32 %v7211, %v8668
    %v8675 = vsel %vm179, %v8318, 0.0
    %v8676 = vrot.slane %v8675, 4
    %v8677 = vadd.f32 %v8675, %v8676
    %v8678 = vrot.slane %v8677, 2
    %v8679 = vadd.f32 %v8677, %v8678
    %v8680 = vrot.slane %v8679, 1
    %v8681 = vadd.f32 %v8679, %v8680
    %v8682 = vadd.f32 %v7219, %v8681
    %8683 = vxpose.xlu0.b32.start [1/16] %v7861, 128
    %8684 = vxpose.xlu0.b32.cont [2/16] 0.0, 128
    %8685 = vxpose.xlu0.b32.cont [3/16] 0.0, 128
    %8686 = vxpose.xlu0.b32.cont [4/16] 0.0, 128
    %8687 = vxpose.xlu0.b32.cont [5/16] 0.0, 128
    %8688 = vxpose.xlu0.b32.cont [6/16] 0.0, 128
    %8689 = vxpose.xlu0.b32.cont [7/16] 0.0, 128
    %8690 = vxpose.xlu0.b32.cont [8/16] 0.0, 128
    %8691 = vxpose.xlu0.b32.cont [9/16] 0.0, 128
    %8692 = vxpose.xlu0.b32.cont [10/16] 0.0, 128
    %8693 = vxpose.xlu0.b32.cont [11/16] 0.0, 128
    %8694 = vxpose.xlu0.b32.cont [12/16] 0.0, 128
    %8695 = vxpose.xlu0.b32.cont [13/16] 0.0, 128
    %8696 = vxpose.xlu0.b32.cont [14/16] 0.0, 128
    %8697 = vxpose.xlu0.b32.cont [15/16] 0.0, 128
    %8698 = vxpose.xlu0.b32.end [16/16] 0.0, 128
    %v8699 = vpop.trf.xlu0
    %v8700 = vpop.trf.xlu0
    %v8701 = vpop.trf.xlu0
    %v8702 = vpop.trf.xlu0
    %v8703 = vpop.trf.xlu0
    %v8704 = vpop.trf.xlu0
    %v8705 = vpop.trf.xlu0
    %v8706 = vpop.trf.xlu0
    %v8707 = vpop.trf.xlu0
    %v8708 = vpop.trf.xlu0
    %v8709 = vpop.trf.xlu0
    %v8710 = vpop.trf.xlu0
    %v8711 = vpop.trf.xlu0
    %v8712 = vpop.trf.xlu0
    %v8713 = vpop.trf.xlu0
    %v8714 = vpop.trf.xlu0
    %v8716 = vsel %vm291, %v8699, 0
    %v8719 = vsel %vm291, %v8700, 0
    %v8722 = vsel %vm291, %v8701, 0
    %v8725 = vsel %vm291, %v8702, 0
    %8727 = vmatprep.subr.mxu0 0.0
    %8728 = vmatpush1.msra.mxu0 0.0
    %8729 = vmatprep.subr.mxu0 0.0
    %8730 = vmatpush1.msra.mxu0 0.0
    %8731 = vmatprep.subr.mxu0 0.0
    %8732 = vmatpush1.msra.mxu0 0.0
    %8733 = vmatprep.subr.mxu0 0.0
    %8734 = vmatpush1.msra.mxu0 0.0
    %8735 = vmatprep.subr.mxu0 0.0
    %8736 = vmatpush1.msra.mxu0 0.0
    %8737 = vmatprep.subr.mxu0 0.0
    %8738 = vmatpush1.msra.mxu0 0.0
    %8739 = vmatprep.subr.mxu0 0.0
    %8740 = vmatpush1.msra.mxu0 0.0
    %8741 = vmatprep.subr.mxu0 0.0
    %8742 = vmatpush1.msra.mxu0 0.0
    %8743 = vmatprep.subr.mxu0 0.0
    %8744 = vmatpush1.msra.mxu0 0.0
    %8745 = vmatprep.subr.mxu0 0.0
    %8746 = vmatpush1.msra.mxu0 0.0
    %8747 = vmatprep.subr.mxu0 0.0
    %8748 = vmatpush1.msra.mxu0 0.0
    %8749 = vmatprep.subr.mxu0 0.0
    %8750 = vmatpush1.msra.mxu0 0.0
    %8751 = vmatprep.subr.mxu0 0.0
    %8752 = vmatpush1.msra.mxu0 0.0
    %8753 = vmatprep.subr.mxu0 0.0
    %8754 = vmatpush1.msra.mxu0 0.0
    %8755 = vmatprep.subr.mxu0 0.0
    %8756 = vmatpush1.msra.mxu0 0.0
    %8757 = vmatprep.subr.mxu0 0.0
    %8758 = vmatpush1.msra.mxu0 %v8394
    %8759 = vmatprep.subr.mxu0 0.0
    %8760 = vmatpush2.msra.mxu0 0.0
    %8761 = vmatprep.subr.mxu0 0.0
    %8762 = vmatpush2.msra.mxu0 0.0
    %8763 = vmatprep.subr.mxu0 0.0
    %8764 = vmatpush2.msra.mxu0 0.0
    %8765 = vmatprep.subr.mxu0 0.0
    %8766 = vmatpush2.msra.mxu0 0.0
    %8767 = vmatprep.subr.mxu0 0.0
    %8768 = vmatpush2.msra.mxu0 0.0
    %8769 = vmatprep.subr.mxu0 0.0
    %8770 = vmatpush2.msra.mxu0 0.0
    %8771 = vmatprep.subr.mxu0 0.0
    %8772 = vmatpush2.msra.mxu0 0.0
    %8773 = vmatprep.subr.mxu0 0.0
    %8774 = vmatpush2.msra.mxu0 0.0
    %8775 = vmatprep.subr.mxu0 0.0
    %8776 = vmatpush2.msra.mxu0 0.0
    %8777 = vmatprep.subr.mxu0 0.0
    %8778 = vmatpush2.msra.mxu0 0.0
    %8779 = vmatprep.subr.mxu0 0.0
    %8780 = vmatpush2.msra.mxu0 0.0
    %8781 = vmatprep.subr.mxu0 0.0
    %8782 = vmatpush2.msra.mxu0 0.0
    %8783 = vmatprep.subr.mxu0 0.0
    %8784 = vmatpush2.msra.mxu0 0.0
    %8785 = vmatprep.subr.mxu0 0.0
    %8786 = vmatpush2.msra.mxu0 0.0
    %8787 = vmatprep.subr.mxu0 0.0
    %8788 = vmatpush2.msra.mxu0 0.0
    %8789 = vmatprep.subr.mxu0 0.0
    %8790 = vmatpush2.msra.mxu0 0.0
    %8791 = vmatprep.mubr.f32.mxu0 0.0
    %8792 = vmatmul.mubr.f32.gmra.mxu0 %v8716
    %v8793 = vpop.f32.mrf.mxu0
    %v8794 = vadd.f32 0.0, %v8793
    %v8795 = vpop.f32.mrf.mxu0
    %8796 = vmatprep.mubr.f32.mxu0 0.0
    %8797 = vmatmul.mubr.f32.gmra.mxu0 %v8719
    %v8798 = vpop.f32.mrf.mxu0
    %v8799 = vadd.f32 0.0, %v8798
    %v8800 = vpop.f32.mrf.mxu0
    %8801 = vmatprep.mubr.f32.mxu0 0.0
    %8802 = vmatmul.mubr.f32.gmra.mxu0 %v8722
    %v8803 = vpop.f32.mrf.mxu0
    %v8804 = vadd.f32 0.0, %v8803
    %v8805 = vpop.f32.mrf.mxu0
    %8806 = vmatprep.mubr.f32.mxu0 0.0
    %8807 = vmatmul.mubr.f32.gmra.mxu0 %v8725
    %v8808 = vpop.f32.mrf.mxu0
    %v8809 = vadd.f32 0.0, %v8808
    %v8810 = vpop.f32.mrf.mxu0
    %8811 = vdwg.mxu0
    %v8812 = vadd.f32 %v7438, %v8794
    %v8813 = vadd.f32 %v7439, %v8799
    %v8814 = vadd.f32 %v7440, %v8804
    %v8815 = vadd.f32 %v7441, %v8809
    %v8816 = vsel %vm374, %v8394, 0.0
    %v8817 = vrot.slane %v8816, 4
    %v8818 = vadd.f32 %v8816, %v8817
    %v8819 = vrot.slane %v8818, 2
    %v8820 = vadd.f32 %v8818, %v8819
    %v8821 = vrot.slane %v8820, 1
    %v8822 = vadd.f32 %v8820, %v8821
    %v8823 = vadd.f32 %v7449, %v8822
    %8824 = vxpose.xlu0.b32.start [1/16] %v7785, 128
    %8825 = vxpose.xlu0.b32.cont [2/16] 0.0, 128
    %8826 = vxpose.xlu0.b32.cont [3/16] 0.0, 128
    %8827 = vxpose.xlu0.b32.cont [4/16] 0.0, 128
    %8828 = vxpose.xlu0.b32.cont [5/16] 0.0, 128
    %8829 = vxpose.xlu0.b32.cont [6/16] 0.0, 128
    %8830 = vxpose.xlu0.b32.cont [7/16] 0.0, 128
    %8831 = vxpose.xlu0.b32.cont [8/16] 0.0, 128
    %8832 = vxpose.xlu0.b32.cont [9/16] 0.0, 128
    %8833 = vxpose.xlu0.b32.cont [10/16] 0.0, 128
    %8834 = vxpose.xlu0.b32.cont [11/16] 0.0, 128
    %8835 = vxpose.xlu0.b32.cont [12/16] 0.0, 128
    %8836 = vxpose.xlu0.b32.cont [13/16] 0.0, 128
    %8837 = vxpose.xlu0.b32.cont [14/16] 0.0, 128
    %8838 = vxpose.xlu0.b32.cont [15/16] 0.0, 128
    %8839 = vxpose.xlu0.b32.end [16/16] 0.0, 128
    %v8840 = vpop.trf.xlu0
    %v8841 = vpop.trf.xlu0
    %v8842 = vpop.trf.xlu0
    %v8843 = vpop.trf.xlu0
    %v8844 = vpop.trf.xlu0
    %v8845 = vpop.trf.xlu0
    %v8846 = vpop.trf.xlu0
    %v8847 = vpop.trf.xlu0
    %v8848 = vpop.trf.xlu0
    %v8849 = vpop.trf.xlu0
    %v8850 = vpop.trf.xlu0
    %v8851 = vpop.trf.xlu0
    %v8852 = vpop.trf.xlu0
    %v8853 = vpop.trf.xlu0
    %v8854 = vpop.trf.xlu0
    %v8855 = vpop.trf.xlu0
    %v8857 = vsel %vm291, %v8840, 0
    %8859 = vmatprep.subr.mxu0 0.0
    %8860 = vmatpush1.msra.mxu0 0.0
    %8861 = vmatprep.subr.mxu0 0.0
    %8862 = vmatpush1.msra.mxu0 0.0
    %8863 = vmatprep.subr.mxu0 0.0
    %8864 = vmatpush1.msra.mxu0 0.0
    %8865 = vmatprep.subr.mxu0 0.0
    %8866 = vmatpush1.msra.mxu0 0.0
    %8867 = vmatprep.subr.mxu0 0.0
    %8868 = vmatpush1.msra.mxu0 0.0
    %8869 = vmatprep.subr.mxu0 0.0
    %8870 = vmatpush1.msra.mxu0 0.0
    %8871 = vmatprep.subr.mxu0 0.0
    %8872 = vmatpush1.msra.mxu0 0.0
    %8873 = vmatprep.subr.mxu0 0.0
    %8874 = vmatpush1.msra.mxu0 0.0
    %8875 = vmatprep.subr.mxu0 0.0
    %8876 = vmatpush1.msra.mxu0 0.0
    %8877 = vmatprep.subr.mxu0 0.0
    %8878 = vmatpush1.msra.mxu0 0.0
    %8879 = vmatprep.subr.mxu0 0.0
    %8880 = vmatpush1.msra.mxu0 0.0
    %8881 = vmatprep.subr.mxu0 0.0
    %8882 = vmatpush1.msra.mxu0 0.0
    %8883 = vmatprep.subr.mxu0 0.0
    %8884 = vmatpush1.msra.mxu0 0.0
    %8885 = vmatprep.subr.mxu0 0.0
    %8886 = vmatpush1.msra.mxu0 0.0
    %8887 = vmatprep.subr.mxu0 0.0
    %8888 = vmatpush1.msra.mxu0 0.0
    %8889 = vmatprep.subr.mxu0 0.0
    %8890 = vmatpush1.msra.mxu0 %v8468
    %8891 = vmatprep.subr.mxu0 0.0
    %8892 = vmatpush2.msra.mxu0 0.0
    %8893 = vmatprep.subr.mxu0 0.0
    %8894 = vmatpush2.msra.mxu0 0.0
    %8895 = vmatprep.subr.mxu0 0.0
    %8896 = vmatpush2.msra.mxu0 0.0
    %8897 = vmatprep.subr.mxu0 0.0
    %8898 = vmatpush2.msra.mxu0 0.0
    %8899 = vmatprep.subr.mxu0 0.0
    %8900 = vmatpush2.msra.mxu0 0.0
    %8901 = vmatprep.subr.mxu0 0.0
    %8902 = vmatpush2.msra.mxu0 0.0
    %8903 = vmatprep.subr.mxu0 0.0
    %8904 = vmatpush2.msra.mxu0 0.0
    %8905 = vmatprep.subr.mxu0 0.0
    %8906 = vmatpush2.msra.mxu0 0.0
    %8907 = vmatprep.subr.mxu0 0.0
    %8908 = vmatpush2.msra.mxu0 0.0
    %8909 = vmatprep.subr.mxu0 0.0
    %8910 = vmatpush2.msra.mxu0 0.0
    %8911 = vmatprep.subr.mxu0 0.0
    %8912 = vmatpush2.msra.mxu0 0.0
    %8913 = vmatprep.subr.mxu0 0.0
    %8914 = vmatpush2.msra.mxu0 0.0
    %8915 = vmatprep.subr.mxu0 0.0
    %8916 = vmatpush2.msra.mxu0 0.0
    %8917 = vmatprep.subr.mxu0 0.0
    %8918 = vmatpush2.msra.mxu0 0.0
    %8919 = vmatprep.subr.mxu0 0.0
    %8920 = vmatpush2.msra.mxu0 0.0
    %8921 = vmatprep.subr.mxu0 0.0
    %8922 = vmatpush2.msra.mxu0 0.0
    %8923 = vmatprep.mubr.f32.mxu0 0.0
    %8924 = vmatmul.mubr.f32.gmra.mxu0 %v8857
    %v8925 = vpop.f32.mrf.mxu0
    %v8926 = vadd.f32 0.0, %v8925
    %v8927 = vpop.f32.mrf.mxu0
    %8928 = vdwg.mxu0
    %v8929 = vadd.f32 %v7591, %v8926
    %v8930 = vsel %vm374, %v8468, 0.0
    %v8931 = vrot.slane %v8930, 4
    %v8932 = vadd.f32 %v8930, %v8931
    %v8933 = vrot.slane %v8932, 2
    %v8934 = vadd.f32 %v8932, %v8933
    %v8935 = vrot.slane %v8934, 1
    %v8936 = vadd.f32 %v8934, %v8935
    %v8937 = vadd.f32 %v7599, %v8936
    %8938 = vxpose.xlu0.b32.start [1/16] %v7686, 128
    %8939 = vxpose.xlu0.b32.cont [2/16] 0.0, 128
    %8940 = vxpose.xlu0.b32.cont [3/16] 0.0, 128
    %8941 = vxpose.xlu0.b32.cont [4/16] 0.0, 128
    %8942 = vxpose.xlu0.b32.cont [5/16] 0.0, 128
    %8943 = vxpose.xlu0.b32.cont [6/16] 0.0, 128
    %8944 = vxpose.xlu0.b32.cont [7/16] 0.0, 128
    %8945 = vxpose.xlu0.b32.cont [8/16] 0.0, 128
    %8946 = vxpose.xlu0.b32.cont [9/16] 0.0, 128
    %8947 = vxpose.xlu0.b32.cont [10/16] 0.0, 128
    %8948 = vxpose.xlu0.b32.cont [11/16] 0.0, 128
    %8949 = vxpose.xlu0.b32.cont [12/16] 0.0, 128
    %8950 = vxpose.xlu0.b32.cont [13/16] 0.0, 128
    %8951 = vxpose.xlu0.b32.cont [14/16] 0.0, 128
    %8952 = vxpose.xlu0.b32.cont [15/16] 0.0, 128
    %8953 = vxpose.xlu0.b32.end [16/16] 0.0, 128
    %v8954 = vpop.trf.xlu0
    %v8955 = vpop.trf.xlu0
    %v8956 = vpop.trf.xlu0
    %v8957 = vpop.trf.xlu0
    %v8958 = vpop.trf.xlu0
    %v8959 = vpop.trf.xlu0
    %v8960 = vpop.trf.xlu0
    %v8961 = vpop.trf.xlu0
    %v8962 = vpop.trf.xlu0
    %v8963 = vpop.trf.xlu0
    %v8964 = vpop.trf.xlu0
    %v8965 = vpop.trf.xlu0
    %v8966 = vpop.trf.xlu0
    %v8967 = vpop.trf.xlu0
    %v8968 = vpop.trf.xlu0
    %v8969 = vpop.trf.xlu0
    %8971 = vrot.lane.b32.xlu0 %v8539, 122
    %v8972 = vpop.permute.xlu0 %8971
    %v8975 = vsel %vm291, %v8954, 0
    %8977 = vmatprep.subr.mxu0 0.0
    %8978 = vmatpush1.msra.mxu0 0.0
    %8979 = vmatprep.subr.mxu0 0.0
    %8980 = vmatpush1.msra.mxu0 0.0
    %8981 = vmatprep.subr.mxu0 0.0
    %8982 = vmatpush1.msra.mxu0 0.0
    %8983 = vmatprep.subr.mxu0 0.0
    %8984 = vmatpush1.msra.mxu0 0.0
    %8985 = vmatprep.subr.mxu0 0.0
    %8986 = vmatpush1.msra.mxu0 0.0
    %8987 = vmatprep.subr.mxu0 0.0
    %8988 = vmatpush1.msra.mxu0 0.0
    %8989 = vmatprep.subr.mxu0 0.0
    %8990 = vmatpush1.msra.mxu0 0.0
    %8991 = vmatprep.subr.mxu0 0.0
    %8992 = vmatpush1.msra.mxu0 0.0
    %8993 = vmatprep.subr.mxu0 0.0
    %8994 = vmatpush1.msra.mxu0 0.0
    %8995 = vmatprep.subr.mxu0 0.0
    %8996 = vmatpush1.msra.mxu0 0.0
    %8997 = vmatprep.subr.mxu0 0.0
    %8998 = vmatpush1.msra.mxu0 0.0
    %8999 = vmatprep.subr.mxu0 0.0
    %9000 = vmatpush1.msra.mxu0 0.0
    %9001 = vmatprep.subr.mxu0 0.0
    %9002 = vmatpush1.msra.mxu0 0.0
    %9003 = vmatprep.subr.mxu0 0.0
    %9004 = vmatpush1.msra.mxu0 0.0
    %9005 = vmatprep.subr.mxu0 0.0
    %9006 = vmatpush1.msra.mxu0 0.0
    %9007 = vmatprep.subr.mxu0 0.0
    %9008 = vmatpush1.msra.mxu0 %v8972
    %9009 = vmatprep.subr.mxu0 0.0
    %9010 = vmatpush2.msra.mxu0 0.0
    %9011 = vmatprep.subr.mxu0 0.0
    %9012 = vmatpush2.msra.mxu0 0.0
    %9013 = vmatprep.subr.mxu0 0.0
    %9014 = vmatpush2.msra.mxu0 0.0
    %9015 = vmatprep.subr.mxu0 0.0
    %9016 = vmatpush2.msra.mxu0 0.0
    %9017 = vmatprep.subr.mxu0 0.0
    %9018 = vmatpush2.msra.mxu0 0.0
    %9019 = vmatprep.subr.mxu0 0.0
    %9020 = vmatpush2.msra.mxu0 0.0
    %9021 = vmatprep.subr.mxu0 0.0
    %9022 = vmatpush2.msra.mxu0 0.0
    %9023 = vmatprep.subr.mxu0 0.0
    %9024 = vmatpush2.msra.mxu0 0.0
    %9025 = vmatprep.subr.mxu0 0.0
    %9026 = vmatpush2.msra.mxu0 0.0
    %9027 = vmatprep.subr.mxu0 0.0
    %9028 = vmatpush2.msra.mxu0 0.0
    %9029 = vmatprep.subr.mxu0 0.0
    %9030 = vmatpush2.msra.mxu0 0.0
    %9031 = vmatprep.subr.mxu0 0.0
    %9032 = vmatpush2.msra.mxu0 0.0
    %9033 = vmatprep.subr.mxu0 0.0
    %9034 = vmatpush2.msra.mxu0 0.0
    %9035 = vmatprep.subr.mxu0 0.0
    %9036 = vmatpush2.msra.mxu0 0.0
    %9037 = vmatprep.subr.mxu0 0.0
    %9038 = vmatpush2.msra.mxu0 0.0
    %9039 = vmatprep.subr.mxu0 0.0
    %9040 = vmatpush2.msra.mxu0 0.0
    %9041 = vmatprep.mubr.f32.mxu0 0.0
    %9042 = vmatmul.mubr.f32.gmra.mxu0 %v8975
    %v9043 = vpop.f32.mrf.mxu0
    %v9044 = vadd.f32 0.0, %v9043
    %v9045 = vpop.f32.mrf.mxu0
    %9046 = vdwg.mxu0
    %v9047 = vadd.f32 %v7674, %v9044
    %v9048 = vadd.f32 %v3585, %v4328
    %v9049 = vadd.f32 %v9048, %v8238
    %v9050 = vlaneseq
    %v9051 = vshrl.u32 %v9050, 7
    %v9052 = vsub.s32 0, %v9051
    %v9053 = vrot.slane %v9049, %v9052
    %9055 = vrot.lane.b32.xlu0 %v8207, 2
    %v9056 = vpop.permute.xlu0 %9055
    %9059 = vrot.lane.b32.xlu0 %v9053, 3
    %v9060 = vpop.permute.xlu0 %9059
    %9063 = vrot.lane.b32.xlu0 %v8238, 4
    %v9064 = vpop.permute.xlu0 %9063
    %9066 = vrot.lane.b32.xlu0 %v7764, 5
    %v9067 = vpop.permute.xlu0 %9066
    %v9069 = vsel %vm179, %v8008, %v9056
    %vm9070 = vcmask 23552
    %v9071 = vsel %vm9070, %v9069, %v9060
    %v9072 = vsel %vm281, %v9071, %v9064
    %vm9073 = vcmask 39936
    %v9074 = vsel %vm9073, %v9072, %v9067
    %vm9075 = vcmask 56320
    %v9076 = vsel %vm9075, %v9074, 0.0
    %9077 = vst [vmem:[%s49] sm:$0xff] %v9076
    %vm9078 = vcmask 9216
    %9079 = vst.msk [vmem:[#allocation8] sm:$0x3] %vm9078, %v9047
    %9080 = vst.msk [vmem:[#allocation9] sm:$0xff] %vm374, %v8929
    %vm9081 = vcmask 253952
    %9082 = vst.msk [vmem:[#allocation11] sm:$0x1] %vm9081, %v8937
    %9083 = vst.msk [vmem:[#allocation12] sm:$0xff] %vm374, %v8812
    %9084 = vst.msk [vmem:[#allocation12 + $0x8] sm:$0xff] %vm374, %v8813
    %9085 = vst.msk [vmem:[#allocation12 + $0x10] sm:$0xff] %vm374, %v8814
    %9086 = vst.msk [vmem:[#allocation12 + $0x18] sm:$0xff] %vm374, %v8815
    %9087 = vst.msk [vmem:[#allocation14] sm:$0x1] %vm9081, %v8823
    %9088 = vst.msk [vmem:[%s61] sm:$0xff] %vm179, %v8671
    %9089 = vst.msk [vmem:[%s61 + $0x8] sm:$0xff] %vm179, %v8672
    %9090 = vst.msk [vmem:[%s61 + $0x10] sm:$0xff] %vm179, %v8673
    %9091 = vst.msk [vmem:[%s61 + $0x18] sm:$0xff] %vm179, %v8674
    %9092 = vst.msk [vmem:[#allocation15] sm:$0x1] %vm4325, %v8682
    // Predicated region
    $region102: #{unrolled_optimizer_forward.1} parent=1 // pred_check
      _
    $region103: #{unrolled_optimizer_forward.1} parent=1 // pred_check_branch
      %9094 = sbr.rel (0) target = $region105
    $region104: #{unrolled_optimizer_forward.1} parent=1 // pred_region
      _
    $region105: #{unrolled_optimizer_forward.1} parent=1 // pred_fallthru
      _
    // Predicated region
    $region106: #{unrolled_optimizer_forward.1} parent=1 // pred_check
      _
    $region107: #{unrolled_optimizer_forward.1} parent=1 // pred_check_branch
      %9096 = sbr.rel (0) target = $region109
    $region108: #{unrolled_optimizer_forward.1} parent=1 // pred_region
      %s9098 = ssub.s32 32, 32
      %9099 = vsyncadd [#allocation6], %s9098
      %s9101 = sshll.u32 [#allocation8], 4
      %s9102 = int_to_ptr.vmem [resolvable:$true] %s9101
      %9104 = dma.vmem_to_hbm [thread:$0]  %s9102, 32, %s51, [#allocation6]
    $region109: #{unrolled_optimizer_forward.1} parent=1 // pred_fallthru
      _
    // Predicated region
    $region110: #{unrolled_optimizer_forward.1} parent=1 // pred_check
      _
    $region111: #{unrolled_optimizer_forward.1} parent=1 // pred_check_branch
      %9106 = sbr.rel (0) target = $region113
    $region112: #{unrolled_optimizer_forward.1} parent=1 // pred_region
      %s9108 = ssub.s32 128, 128
      %9109 = vsyncadd [#allocation10], %s9108
      %s9111 = sshll.u32 [#allocation9], 4
      %s9112 = int_to_ptr.vmem [resolvable:$true] %s9111
      %9114 = dma.vmem_to_hbm [thread:$0]  %s9112, 128, %s53, [#allocation10]
    $region113: #{unrolled_optimizer_forward.1} parent=1 // pred_fallthru
      _
    // Predicated region
    $region114: #{unrolled_optimizer_forward.1} parent=1 // pred_check
      _
    $region115: #{unrolled_optimizer_forward.1} parent=1 // pred_check_branch
      %9116 = sbr.rel (0) target = $region117
    $region116: #{unrolled_optimizer_forward.1} parent=1 // pred_region
      %s9118 = ssub.s32 16, 16
      %9119 = vsyncadd [#allocation10], %s9118
      %s9121 = sshll.u32 [#allocation11], 4
      %s9122 = int_to_ptr.vmem [resolvable:$true] %s9121
      %9124 = dma.vmem_to_hbm [thread:$0]  %s9122, 16, %s55, [#allocation10]
    $region117: #{unrolled_optimizer_forward.1} parent=1 // pred_fallthru
      _
    // Predicated region
    $region118: #{unrolled_optimizer_forward.1} parent=1 // pred_check
      _
    $region119: #{unrolled_optimizer_forward.1} parent=1 // pred_check_branch
      %9126 = sbr.rel (0) target = $region121
    $region120: #{unrolled_optimizer_forward.1} parent=1 // pred_region
      %s9128 = ssub.s32 512, 512
      %9129 = vsyncadd [#allocation13], %s9128
      %s9130 = sshll.u32 [#allocation12], 4
      %s9131 = int_to_ptr.vmem [resolvable:$true] %s9130
      %9136 = dma.vmem_to_hbm [thread:$0]  %s9131, 512, %s57, [#allocation13], 128, 128, 8
    $region121: #{unrolled_optimizer_forward.1} parent=1 // pred_fallthru
      _
    // Predicated region
    $region122: #{unrolled_optimizer_forward.1} parent=1 // pred_check
      _
    $region123: #{unrolled_optimizer_forward.1} parent=1 // pred_check_branch
      %9138 = sbr.rel (0) target = $region125
    $region124: #{unrolled_optimizer_forward.1} parent=1 // pred_region
      %s9140 = ssub.s32 16, 16
      %9141 = vsyncadd [#allocation13], %s9140
      %s9143 = sshll.u32 [#allocation14], 4
      %s9144 = int_to_ptr.vmem [resolvable:$true] %s9143
      %9146 = dma.vmem_to_hbm [thread:$0]  %s9144, 16, %s59, [#allocation13]
    $region125: #{unrolled_optimizer_forward.1} parent=1 // pred_fallthru
      _
    // Predicated region
    $region126: #{unrolled_optimizer_forward.1} parent=1 // pred_check
      _
    $region127: #{unrolled_optimizer_forward.1} parent=1 // pred_check_branch
      %9148 = sbr.rel (0) target = $region129
    $region128: #{unrolled_optimizer_forward.1} parent=1 // pred_region
      _
    $region129: #{unrolled_optimizer_forward.1} parent=1 // pred_fallthru
      _
    // Predicated region
    $region130: #{unrolled_optimizer_forward.1} parent=1 // pred_check
      _
    $region131: #{unrolled_optimizer_forward.1} parent=1 // pred_check_branch
      %9150 = sbr.rel (0) target = $region133
    $region132: #{unrolled_optimizer_forward.1} parent=1 // pred_region
      %s9152 = ssub.s32 16, 16
      %9153 = vsyncadd [#allocation16], %s9152
      %s9155 = sshll.u32 [#allocation15], 4
      %s9156 = int_to_ptr.vmem [resolvable:$true] %s9155
      %9158 = dma.vmem_to_hbm [thread:$0]  %s9156, 16, %s63, [#allocation16]
    $region133: #{unrolled_optimizer_forward.1} parent=1 // pred_fallthru
      _
    // Predicated region
    $region134: #{unrolled_optimizer_forward.1} parent=1 // pred_check
      _
    $region135: #{unrolled_optimizer_forward.1} parent=1 // pred_check_branch
      %9160 = sbr.rel (0) target = $region137
    $region136: #{unrolled_optimizer_forward.1} parent=1 // pred_region
      _
    $region137: #{unrolled_optimizer_forward.1} parent=1 // pred_fallthru
      _
    // Predicated region
    $region138: #{unrolled_optimizer_forward.1} parent=1 // pred_check
      _
    $region139: #{unrolled_optimizer_forward.1} parent=1 // pred_check_branch
      %9162 = sbr.rel (0) target = $region141
    $region140: #{unrolled_optimizer_forward.1} parent=1 // pred_region
      %9163 = dma.done [#allocation6], 32
    $region141: #{unrolled_optimizer_forward.1} parent=1 // pred_fallthru
      _
    // Predicated region
    $region142: #{unrolled_optimizer_forward.1} parent=1 // pred_check
      _
    $region143: #{unrolled_optimizer_forward.1} parent=1 // pred_check_branch
      %9165 = sbr.rel (0) target = $region145
    $region144: #{unrolled_optimizer_forward.1} parent=1 // pred_region
      %9166 = dma.done [#allocation10], 128
    $region145: #{unrolled_optimizer_forward.1} parent=1 // pred_fallthru
      _
    // Predicated region
    $region146: #{unrolled_optimizer_forward.1} parent=1 // pred_check
      _
    $region147: #{unrolled_optimizer_forward.1} parent=1 // pred_check_branch
      %9168 = sbr.rel (0) target = $region149
    $region148: #{unrolled_optimizer_forward.1} parent=1 // pred_region
      %9169 = dma.done [#allocation10], 16
    $region149: #{unrolled_optimizer_forward.1} parent=1 // pred_fallthru
      _
    // Predicated region
    $region150: #{unrolled_optimizer_forward.1} parent=1 // pred_check
      _
    $region151: #{unrolled_optimizer_forward.1} parent=1 // pred_check_branch
      %9171 = sbr.rel (0) target = $region153
    $region152: #{unrolled_optimizer_forward.1} parent=1 // pred_region
      %9172 = dma.done [#allocation13], 512
    $region153: #{unrolled_optimizer_forward.1} parent=1 // pred_fallthru
      _
    // Predicated region
    $region154: #{unrolled_optimizer_forward.1} parent=1 // pred_check
      _
    $region155: #{unrolled_optimizer_forward.1} parent=1 // pred_check_branch
      %9174 = sbr.rel (0) target = $region157
    $region156: #{unrolled_optimizer_forward.1} parent=1 // pred_region
      %9175 = dma.done [#allocation13], 16
    $region157: #{unrolled_optimizer_forward.1} parent=1 // pred_fallthru
      _
    // Predicated region
    $region158: #{unrolled_optimizer_forward.1} parent=1 // pred_check
      _
    $region159: #{unrolled_optimizer_forward.1} parent=1 // pred_check_branch
      %9177 = sbr.rel (0) target = $region161
    $region160: #{unrolled_optimizer_forward.1} parent=1 // pred_region
      _
    $region161: #{unrolled_optimizer_forward.1} parent=1 // pred_fallthru
      _
    // Predicated region
    $region162: #{unrolled_optimizer_forward.1} parent=1 // pred_check
      _
    $region163: #{unrolled_optimizer_forward.1} parent=1 // pred_check_branch
      %9179 = sbr.rel (0) target = $region165
    $region164: #{unrolled_optimizer_forward.1} parent=1 // pred_region
      %9180 = dma.done [#allocation16], 16
    $region165: #{unrolled_optimizer_forward.1} parent=1 // pred_fallthru
      _
    %9181 = vsyncpa [#allocation6], 1
    %9182 = vsyncpa [#allocation10], 1
    %9183 = vsyncpa [#allocation13], 1
    %9184 = vsyncpa [#allocation16], 1
    %9185 = vsyncpa [#allocation7], 1

</llo_original>
